<compile_context>
chip_gen: v6e
topology: v6e:2x2x1
jax: 0.10.0
libtpu: 0.0.40
codegen_flags: <defaults>
</compile_context>

<pallas_src>
import functools
import math

import jax
import jax.numpy as jnp
import numpy as np
from jax.experimental import pallas as pl
from jax.experimental.pallas import tpu as pltpu


def _round_up(x, m):
    return ((x + m - 1) // m) * m


# ----------------------------------------------------------------------------
# Fused kernel:  out = maybe_relu((x @ w) * scale + shift (+ residual))
# Grid = (M tiles, N tiles, K tiles); K is a reduction with a VMEM accumulator.
# ----------------------------------------------------------------------------
def _fused_matmul_kernel(x_ref, w_ref, s_ref, b_ref, *rest, relu, has_residual):
    if has_residual:
        r_ref, o_ref, acc_ref = rest
    else:
        o_ref, acc_ref = rest

    @pl.when(pl.program_id(2) == 0)
    def _():
        acc_ref[...] = jnp.zeros_like(acc_ref)

    acc_ref[...] += jnp.dot(x_ref[...], w_ref[...],
                            preferred_element_type=jnp.float32)

    @pl.when(pl.program_id(2) == pl.num_programs(2) - 1)
    def _():
        y = acc_ref[...] * s_ref[...] + b_ref[...]
        if has_residual:
            y = y + r_ref[...]
        if relu:
            y = jnp.maximum(y, 0.0)
        o_ref[...] = y.astype(o_ref.dtype)


def fused_matmul(x, w, scale, shift, residual=None, *, relu):
    """(M,K)@(K,N) with fused BN scale/shift, optional residual and ReLU."""
    M, K = x.shape
    _, N = w.shape

    tm = min(256, _round_up(M, 8))
    m_pad = _round_up(M, tm)
    tn = min(256, _round_up(N, 128))
    n_pad = _round_up(N, tn)
    if K <= 1536:                       # single K step for small contractions
        tk = _round_up(K, 128)
        k_pad = tk
    else:                               # tiled K reduction for large C_in*k*k
        tk = 512
        k_pad = _round_up(K, tk)

    xp = jnp.pad(x, ((0, m_pad - M), (0, k_pad - K)))
    wp = jnp.pad(w, ((0, k_pad - K), (0, n_pad - N)))
    sp = jnp.pad(scale.reshape(1, -1), ((0, 0), (0, n_pad - N)))
    bp = jnp.pad(shift.reshape(1, -1), ((0, 0), (0, n_pad - N)))

    in_specs = [
        pl.BlockSpec((tm, tk), lambda i, j, k: (i, k)),
        pl.BlockSpec((tk, tn), lambda i, j, k: (k, j)),
        pl.BlockSpec((1, tn), lambda i, j, k: (0, j)),
        pl.BlockSpec((1, tn), lambda i, j, k: (0, j)),
    ]
    args = [xp, wp, sp, bp]
    has_residual = residual is not None
    if has_residual:
        rp = jnp.pad(residual, ((0, m_pad - M), (0, n_pad - N)))
        in_specs.append(pl.BlockSpec((tm, tn), lambda i, j, k: (i, j)))
        args.append(rp)

    kernel = functools.partial(_fused_matmul_kernel, relu=relu,
                               has_residual=has_residual)
    out = pl.pallas_call(
        kernel,
        out_shape=jax.ShapeDtypeStruct((m_pad, n_pad), jnp.float32),
        grid=(m_pad // tm, n_pad // tn, k_pad // tk),
        in_specs=in_specs,
        out_specs=pl.BlockSpec((tm, tn), lambda i, j, k: (i, j)),
        scratch_shapes=[pltpu.VMEM((tm, tn), jnp.float32)],
        compiler_params=pltpu.CompilerParams(
            dimension_semantics=("parallel", "parallel", "arbitrary")),
    )(*args)
    return out[:M, :N]


# ----------------------------------------------------------------------------
# MaxPool 3x3 stride 2 pad 1 (tap-max) and global average pool kernels
# ----------------------------------------------------------------------------
def _maxpool_kernel(x_ref, o_ref, *, taps):
    out = x_ref[0]
    for t in range(1, taps):
        out = jnp.maximum(out, x_ref[t])
    o_ref[...] = out


def _avgpool_kernel(x_ref, o_ref, *, inv_hw):
    o_ref[...] = (jnp.sum(x_ref[...], axis=1) * inv_hw).astype(o_ref.dtype)


def _extract_taps(x, ksize, stride, pad, pad_value=0.0):
    """x: NHWC.  Returns list of k*k shifted views (N, Ho, Wo, C) and (Ho, Wo)."""
    n, h, w, c = x.shape
    ho = (h + 2 * pad - ksize) // stride + 1
    wo = (w + 2 * pad - ksize) // stride + 1
    xp = jnp.pad(x, ((0, 0), (pad, pad), (pad, pad), (0, 0)),
                 constant_values=pad_value)
    taps = []
    for dy in range(ksize):
        for dx in range(ksize):
            taps.append(xp[:, dy:dy + stride * (ho - 1) + 1:stride,
                           dx:dx + stride * (wo - 1) + 1:stride, :])
    return taps, (ho, wo)


def max_pool_3x3_s2(x):
    n, h, w, c = x.shape
    neg = float(np.finfo(np.float32).min)
    taps, (ho, wo) = _extract_taps(x, 3, 2, 1, neg)
    m = n * ho * wo
    stacked = jnp.stack([t.reshape(m, c) for t in taps], axis=0)   # (9, M, C)
    out = pl.pallas_call(
        functools.partial(_maxpool_kernel, taps=9),
        out_shape=jax.ShapeDtypeStruct((m, c), jnp.float32),
        grid=(1,),
        in_specs=[pl.BlockSpec((9, m, c), lambda i: (0, 0, 0))],
        out_specs=pl.BlockSpec((m, c), lambda i: (0, 0)),
    )(stacked)
    return out.reshape(n, ho, wo, c)


def global_avg_pool(x):
    # x.view(N, C, -1).mean(dim=2) in NHWC terms: mean over (H*W).
    n, h, w, c = x.shape
    xf = x.reshape(n, h * w, c)
    return pl.pallas_call(
        functools.partial(_avgpool_kernel, inv_hw=1.0 / float(h * w)),
        out_shape=jax.ShapeDtypeStruct((n, c), jnp.float32),
        grid=(1,),
        in_specs=[pl.BlockSpec((n, h * w, c), lambda i: (0, 0, 0))],
        out_specs=pl.BlockSpec((n, c), lambda i: (0, 0)),
    )(xf)


# ----------------------------------------------------------------------------
# Conv2d(+BN+ReLU+residual) wrapper: im2col (layout only) + fused Pallas matmul
# ----------------------------------------------------------------------------
def conv_bn(x, w, scale, shift, *, stride, pad, relu, residual=None):
    """x: NHWC; w: (kh, kw, cin, cout)."""
    n = x.shape[0]
    kh, kw, cin, cout = w.shape
    taps, (ho, wo) = _extract_taps(x, kh, stride, pad, 0.0)
    patches = jnp.stack(taps, axis=3).reshape(n * ho * wo, kh * kw * cin)
    wmat = w.reshape(kh * kw * cin, cout)
    res2d = None if residual is None else residual.reshape(n * ho * wo, cout)
    y = fused_matmul(patches, wmat, scale, shift, res2d, relu=relu)
    return y.reshape(n, ho, wo, cout)


def basic_block(x, blk, stride, has_down):
    # out = relu(bn2(conv2(relu(bn1(conv1(x))))) + shortcut(x))
    out = conv_bn(x, blk["w1"], *blk["bn1"], stride=stride, pad=1, relu=True)
    if has_down:
        identity = conv_bn(x, blk["wd"], *blk["bnd"], stride=stride, pad=0,
                           relu=False)
    else:
        identity = x
    out = conv_bn(out, blk["w2"], *blk["bn2"], stride=1, pad=1, relu=True,
                  residual=identity)
    return out


def resnet_forward(params, x_nchw, config):
    x = jnp.transpose(x_nchw, (0, 2, 3, 1))            # NCHW -> NHWC (lane-dense C)
    x = conv_bn(x, params["stem_w"], *params["stem_bn"],
                stride=2, pad=3, relu=True)             # conv1 + bn1 + relu
    x = max_pool_3x3_s2(x)                              # maxpool
    for blk, (stride, has_down) in zip(params["blocks"], config):
        x = basic_block(x, blk, stride, has_down)       # layer1..layer4
    return global_avg_pool(x)                           # (N, 512)


# ----------------------------------------------------------------------------
# Parameter construction (matches ResNetBase init: conv ~ N(0, sqrt(2/n)),
# BN weight=1 / bias=0, BasicBlock with expansion=1).
# ----------------------------------------------------------------------------
def _init_conv(key, kh, kw, cin, cout):
    n = kh * kw * cout
    std = math.sqrt(2.0 / n)
    return std * jax.random.normal(key, (kh, kw, cin, cout), dtype=jnp.float32)


def _init_bn(c, eps=1e-5):
    gamma = jnp.ones((c,), jnp.float32)
    beta = jnp.zeros((c,), jnp.float32)
    mean = jnp.zeros((c,), jnp.float32)
    var = jnp.ones((c,), jnp.float32)
    scale = gamma / jnp.sqrt(var + eps)
    shift = beta - mean * scale
    return scale, shift


def build_resnet_params(key, layers):
    keys = iter(jax.random.split(key, 64))
    params = {"stem_w": _init_conv(next(keys), 7, 7, 3, 64),
              "stem_bn": _init_bn(64),
              "blocks": []}
    config = []          # static per-block (stride, has_downsample)
    inplanes = 64
    for stage, (planes, nblocks) in enumerate(zip((64, 128, 256, 512), layers)):
        stage_stride = 1 if stage == 0 else 2
        for b in range(nblocks):
            s = stage_stride if b == 0 else 1
            has_down = (s != 1) or (inplanes != planes)   # expansion = 1
            blk = {
                "w1": _init_conv(next(keys), 3, 3, inplanes, planes),
                "bn1": _init_bn(planes),
                "w2": _init_conv(next(keys), 3, 3, planes, planes),
                "bn2": _init_bn(planes),
            }
            if has_down:
                blk["wd"] = _init_conv(next(keys), 1, 1, inplanes, planes)
                blk["bnd"] = _init_bn(planes)
            params["blocks"].append(blk)
            config.append((s, has_down))
            inplanes = planes
    return params, tuple(config)


# ----------------------------------------------------------------------------
if __name__ == "__main__":
    # ResNetBase(block=BasicBlock (expansion=1), layers=[1, 1, 1, 1]),
    # input x: (batch=2, 3, 32, 32)  ->  output (2, 512).
    layers = (1, 1, 1, 1)

    key = jax.random.PRNGKey(0)
    k_params, k_x = jax.random.split(key)
    params, config = build_resnet_params(k_params, layers)
    x = jax.random.normal(k_x, (2, 3, 32, 32), dtype=jnp.float32)

    fwd = jax.jit(lambda p, xx: resnet_forward(p, xx, config))
    out = jax.block_until_ready(fwd(params, x))

    assert out.shape == (2, 512)
    assert np.all(np.isfinite(np.asarray(out)))
    print("KERNEL_OK")
</pallas_src>

<mosaic_0001>
module attributes {stable_mosaic.version = 11 : i64} {
  func.func @_fused_matmul_kernel(%arg0: i32, %arg1: i32, %arg2: i32, %arg3: memref<256x256xf32, #tpu.memory_space<vmem>>, %arg4: memref<256x128xf32, #tpu.memory_space<vmem>>, %arg5: memref<1x128xf32, #tpu.memory_space<vmem>>, %arg6: memref<1x128xf32, #tpu.memory_space<vmem>>, %arg7: memref<256x128xf32, #tpu.memory_space<vmem>>, %arg8: memref<256x128xf32, #tpu.memory_space<vmem>>) attributes {dimension_semantics = [#tpu.dimension_semantics<parallel>, #tpu.dimension_semantics<parallel>, #tpu.dimension_semantics<arbitrary>], iteration_bounds = array<i64: 2, 1, 1>, scalar_prefetch = 0 : i64, scratch_operands = 1 : i64, tpu.core_type = #tpu.core_type<tc>, window_params = [{transform_indices = @transform_0, window_bounds = array<i64: 256, 256>}, {transform_indices = @transform_1, window_bounds = array<i64: 256, 128>}, {transform_indices = @transform_2, window_bounds = array<i64: 1, 128>}, {transform_indices = @transform_3, window_bounds = array<i64: 1, 128>}, {transform_indices = @transform_4, window_bounds = array<i64: 256, 128>}]} {
    %c0_i32 = arith.constant 0 : i32
    %0 = arith.cmpi eq, %arg2, %c0_i32 : i32
    %1 = arith.extui %0 : i1 to i32
    %c0_i32_0 = arith.constant 0 : i32
    %2 = arith.cmpi ne, %1, %c0_i32_0 : i32
    scf.if %2 {
      %cst_10 = arith.constant 0.000000e+00 : f32
      %12 = vector.broadcast %cst_10 : f32 to vector<256x128xf32>
      %c0_11 = arith.constant 0 : index
      %c0_12 = arith.constant 0 : index
      %13 = vector.load %arg8[%c0_11, %c0_12] : memref<256x128xf32, #tpu.memory_space<vmem>>, vector<256x128xf32>
      tpu.vector_store %arg8[%c0_11, %c0_12], %12 {strides = array<i32>} : memref<256x128xf32, #tpu.memory_space<vmem>>, vector<256x128xf32>,
    } else {
    }
    %c0 = arith.constant 0 : index
    %c0_1 = arith.constant 0 : index
    %3 = vector.load %arg8[%c0, %c0_1] : memref<256x128xf32, #tpu.memory_space<vmem>>, vector<256x128xf32>
    %c0_2 = arith.constant 0 : index
    %c0_3 = arith.constant 0 : index
    %4 = vector.load %arg3[%c0_2, %c0_3] : memref<256x256xf32, #tpu.memory_space<vmem>>, vector<256x256xf32>
    %c0_4 = arith.constant 0 : index
    %c0_5 = arith.constant 0 : index
    %5 = vector.load %arg4[%c0_4, %c0_5] : memref<256x128xf32, #tpu.memory_space<vmem>>, vector<256x128xf32>
    %cst = arith.constant dense<0.000000e+00> : vector<256x128xf32>
    %6 = tpu.matmul %4, %5, %cst {dimension_numbers = #tpu.dot_dimension_numbers<[1], [0], [0], [1], [0, 0, 1, 1], [], []>} : vector<256x256xf32>, vector<256x128xf32>, vector<256x128xf32> -> vector<256x128xf32>
    %7 = arith.addf %3, %6 : vector<256x128xf32>
    %c0_6 = arith.constant 0 : index
    %c0_7 = arith.constant 0 : index
    %8 = vector.load %arg8[%c0_6, %c0_7] : memref<256x128xf32, #tpu.memory_space<vmem>>, vector<256x128xf32>
    tpu.vector_store %arg8[%c0_6, %c0_7], %7 {strides = array<i32>} : memref<256x128xf32, #tpu.memory_space<vmem>>, vector<256x128xf32>,
    %c0_i32_8 = arith.constant 0 : i32
    %9 = arith.cmpi eq, %arg2, %c0_i32_8 : i32
    %10 = arith.extui %9 : i1 to i32
    %c0_i32_9 = arith.constant 0 : i32
    %11 = arith.cmpi ne, %10, %c0_i32_9 : i32
    scf.if %11 {
      %c0_10 = arith.constant 0 : index
      %c0_11 = arith.constant 0 : index
      %12 = vector.load %arg8[%c0_10, %c0_11] : memref<256x128xf32, #tpu.memory_space<vmem>>, vector<256x128xf32>
      %c0_12 = arith.constant 0 : index
      %c0_13 = arith.constant 0 : index
      %13 = vector.load %arg5[%c0_12, %c0_13] : memref<1x128xf32, #tpu.memory_space<vmem>>, vector<1x128xf32>
      %14 = vector.broadcast %13 : vector<1x128xf32> to vector<256x128xf32>
      %15 = arith.mulf %12, %14 : vector<256x128xf32>
      %c0_14 = arith.constant 0 : index
      %c0_15 = arith.constant 0 : index
      %16 = vector.load %arg6[%c0_14, %c0_15] : memref<1x128xf32, #tpu.memory_space<vmem>>, vector<1x128xf32>
      %17 = vector.broadcast %16 : vector<1x128xf32> to vector<256x128xf32>
      %18 = arith.addf %15, %17 : vector<256x128xf32>
      %cst_16 = arith.constant 0.000000e+00 : f32
      %19 = vector.broadcast %cst_16 : f32 to vector<256x128xf32>
      %20 = arith.maximumf %18, %19 : vector<256x128xf32>
      %c0_17 = arith.constant 0 : index
      %c0_18 = arith.constant 0 : index
      %21 = vector.load %arg7[%c0_17, %c0_18] : memref<256x128xf32, #tpu.memory_space<vmem>>, vector<256x128xf32>
      tpu.vector_store %arg7[%c0_17, %c0_18], %20 {strides = array<i32>} : memref<256x128xf32, #tpu.memory_space<vmem>>, vector<256x128xf32>,
    } else {
    }
    return
  }
  func.func @transform_0(%arg0: i32, %arg1: i32, %arg2: i32) -> (i32, i32) {
    %c0_i32 = arith.constant 0 : i32
    return %arg0, %arg2 : i32, i32
  }
  func.func @transform_1(%arg0: i32, %arg1: i32, %arg2: i32) -> (i32, i32) {
    %c0_i32 = arith.constant 0 : i32
    return %arg2, %arg1 : i32, i32
  }
  func.func @transform_2(%arg0: i32, %arg1: i32, %arg2: i32) -> (i32, i32) {
    %c0_i32 = arith.constant 0 : i32
    %c0_i32_0 = arith.constant 0 : i32
    return %c0_i32, %arg1 : i32, i32
  }
  func.func @transform_3(%arg0: i32, %arg1: i32, %arg2: i32) -> (i32, i32) {
    %c0_i32 = arith.constant 0 : i32
    %c0_i32_0 = arith.constant 0 : i32
    return %c0_i32, %arg1 : i32, i32
  }
  func.func @transform_4(%arg0: i32, %arg1: i32, %arg2: i32) -> (i32, i32) {
    %c0_i32 = arith.constant 0 : i32
    return %arg0, %arg1 : i32, i32
  }
}

module attributes {stable_mosaic.version = 11 : i64} {
  func.func @_maxpool_kernel(%arg0: i32, %arg1: memref<9x128x64xf32, #tpu.memory_space<vmem>>, %arg2: memref<128x64xf32, #tpu.memory_space<vmem>>) attributes {dimension_semantics = [#tpu.dimension_semantics<arbitrary>], iteration_bounds = array<i64: 1>, scalar_prefetch = 0 : i64, scratch_operands = 0 : i64, tpu.core_type = #tpu.core_type<tc>, window_params = [{pipeline_mode = #tpu.pipeline_mode<synchronous>, transform_indices = @transform_0, window_bounds = array<i64: 9, 128, 64>}, {pipeline_mode = #tpu.pipeline_mode<synchronous>, transform_indices = @transform_1, window_bounds = array<i64: 128, 64>}]} {
    %c0 = arith.constant 0 : index
    %c0_0 = arith.constant 0 : index
    %c0_1 = arith.constant 0 : index
    %0 = vector.load %arg1[%c0, %c0_0, %c0_1] : memref<9x128x64xf32, #tpu.memory_space<vmem>>, vector<1x128x64xf32>
    %1 = vector.shape_cast %0 : vector<1x128x64xf32> to vector<128x64xf32>
    %c1 = arith.constant 1 : index
    %c0_2 = arith.constant 0 : index
    %c0_3 = arith.constant 0 : index
    %2 = vector.load %arg1[%c1, %c0_2, %c0_3] : memref<9x128x64xf32, #tpu.memory_space<vmem>>, vector<1x128x64xf32>
    %3 = vector.shape_cast %2 : vector<1x128x64xf32> to vector<128x64xf32>
    %4 = arith.maximumf %1, %3 : vector<128x64xf32>
    %c2 = arith.constant 2 : index
    %c0_4 = arith.constant 0 : index
    %c0_5 = arith.constant 0 : index
    %5 = vector.load %arg1[%c2, %c0_4, %c0_5] : memref<9x128x64xf32, #tpu.memory_space<vmem>>, vector<1x128x64xf32>
    %6 = vector.shape_cast %5 : vector<1x128x64xf32> to vector<128x64xf32>
    %7 = arith.maximumf %4, %6 : vector<128x64xf32>
    %c3 = arith.constant 3 : index
    %c0_6 = arith.constant 0 : index
    %c0_7 = arith.constant 0 : index
    %8 = vector.load %arg1[%c3, %c0_6, %c0_7] : memref<9x128x64xf32, #tpu.memory_space<vmem>>, vector<1x128x64xf32>
    %9 = vector.shape_cast %8 : vector<1x128x64xf32> to vector<128x64xf32>
    %10 = arith.maximumf %7, %9 : vector<128x64xf32>
    %c4 = arith.constant 4 : index
    %c0_8 = arith.constant 0 : index
    %c0_9 = arith.constant 0 : index
    %11 = vector.load %arg1[%c4, %c0_8, %c0_9] : memref<9x128x64xf32, #tpu.memory_space<vmem>>, vector<1x128x64xf32>
    %12 = vector.shape_cast %11 : vector<1x128x64xf32> to vector<128x64xf32>
    %13 = arith.maximumf %10, %12 : vector<128x64xf32>
    %c5 = arith.constant 5 : index
    %c0_10 = arith.constant 0 : index
    %c0_11 = arith.constant 0 : index
    %14 = vector.load %arg1[%c5, %c0_10, %c0_11] : memref<9x128x64xf32, #tpu.memory_space<vmem>>, vector<1x128x64xf32>
    %15 = vector.shape_cast %14 : vector<1x128x64xf32> to vector<128x64xf32>
    %16 = arith.maximumf %13, %15 : vector<128x64xf32>
    %c6 = arith.constant 6 : index
    %c0_12 = arith.constant 0 : index
    %c0_13 = arith.constant 0 : index
    %17 = vector.load %arg1[%c6, %c0_12, %c0_13] : memref<9x128x64xf32, #tpu.memory_space<vmem>>, vector<1x128x64xf32>
    %18 = vector.shape_cast %17 : vector<1x128x64xf32> to vector<128x64xf32>
    %19 = arith.maximumf %16, %18 : vector<128x64xf32>
    %c7 = arith.constant 7 : index
    %c0_14 = arith.constant 0 : index
    %c0_15 = arith.constant 0 : index
    %20 = vector.load %arg1[%c7, %c0_14, %c0_15] : memref<9x128x64xf32, #tpu.memory_space<vmem>>, vector<1x128x64xf32>
    %21 = vector.shape_cast %20 : vector<1x128x64xf32> to vector<128x64xf32>
    %22 = arith.maximumf %19, %21 : vector<128x64xf32>
    %c8 = arith.constant 8 : index
    %c0_16 = arith.constant 0 : index
    %c0_17 = arith.constant 0 : index
    %23 = vector.load %arg1[%c8, %c0_16, %c0_17] : memref<9x128x64xf32, #tpu.memory_space<vmem>>, vector<1x128x64xf32>
    %24 = vector.shape_cast %23 : vector<1x128x64xf32> to vector<128x64xf32>
    %25 = arith.maximumf %22, %24 : vector<128x64xf32>
    %c0_18 = arith.constant 0 : index
    %c0_19 = arith.constant 0 : index
    %26 = vector.load %arg2[%c0_18, %c0_19] : memref<128x64xf32, #tpu.memory_space<vmem>>, vector<128x64xf32>
    tpu.vector_store %arg2[%c0_18, %c0_19], %25 {strides = array<i32>} : memref<128x64xf32, #tpu.memory_space<vmem>>, vector<128x64xf32>,
    return
  }
  func.func @transform_0(%arg0: i32) -> (i32, i32, i32) {
    %c0_i32 = arith.constant 0 : i32
    %c0_i32_0 = arith.constant 0 : i32
    %c0_i32_1 = arith.constant 0 : i32
    %c0_i32_2 = arith.constant 0 : i32
    return %c0_i32, %c0_i32_0, %c0_i32_1 : i32, i32, i32
  }
  func.func @transform_1(%arg0: i32) -> (i32, i32) {
    %c0_i32 = arith.constant 0 : i32
    %c0_i32_0 = arith.constant 0 : i32
    %c0_i32_1 = arith.constant 0 : i32
    return %c0_i32, %c0_i32_0 : i32, i32
  }
}

module attributes {stable_mosaic.version = 11 : i64} {
  func.func @_fused_matmul_kernel(%arg0: i32, %arg1: i32, %arg2: i32, %arg3: memref<128x640xf32, #tpu.memory_space<vmem>>, %arg4: memref<640x128xf32, #tpu.memory_space<vmem>>, %arg5: memref<1x128xf32, #tpu.memory_space<vmem>>, %arg6: memref<1x128xf32, #tpu.memory_space<vmem>>, %arg7: memref<128x128xf32, #tpu.memory_space<vmem>>, %arg8: memref<128x128xf32, #tpu.memory_space<vmem>>) attributes {dimension_semantics = [#tpu.dimension_semantics<parallel>, #tpu.dimension_semantics<parallel>, #tpu.dimension_semantics<arbitrary>], iteration_bounds = array<i64: 1, 1, 1>, scalar_prefetch = 0 : i64, scratch_operands = 1 : i64, tpu.core_type = #tpu.core_type<tc>, window_params = [{transform_indices = @transform_0, window_bounds = array<i64: 128, 640>}, {transform_indices = @transform_1, window_bounds = array<i64: 640, 128>}, {transform_indices = @transform_2, window_bounds = array<i64: 1, 128>}, {transform_indices = @transform_3, window_bounds = array<i64: 1, 128>}, {transform_indices = @transform_4, window_bounds = array<i64: 128, 128>}]} {
    %c0_i32 = arith.constant 0 : i32
    %0 = arith.cmpi eq, %arg2, %c0_i32 : i32
    %1 = arith.extui %0 : i1 to i32
    %c0_i32_0 = arith.constant 0 : i32
    %2 = arith.cmpi ne, %1, %c0_i32_0 : i32
    scf.if %2 {
      %cst_10 = arith.constant 0.000000e+00 : f32
      %12 = vector.broadcast %cst_10 : f32 to vector<128x128xf32>
      %c0_11 = arith.constant 0 : index
      %c0_12 = arith.constant 0 : index
      %13 = vector.load %arg8[%c0_11, %c0_12] : memref<128x128xf32, #tpu.memory_space<vmem>>, vector<128x128xf32>
      tpu.vector_store %arg8[%c0_11, %c0_12], %12 {strides = array<i32>} : memref<128x128xf32, #tpu.memory_space<vmem>>, vector<128x128xf32>,
    } else {
    }
    %c0 = arith.constant 0 : index
    %c0_1 = arith.constant 0 : index
    %3 = vector.load %arg8[%c0, %c0_1] : memref<128x128xf32, #tpu.memory_space<vmem>>, vector<128x128xf32>
    %c0_2 = arith.constant 0 : index
    %c0_3 = arith.constant 0 : index
    %4 = vector.load %arg3[%c0_2, %c0_3] : memref<128x640xf32, #tpu.memory_space<vmem>>, vector<128x640xf32>
    %c0_4 = arith.constant 0 : index
    %c0_5 = arith.constant 0 : index
    %5 = vector.load %arg4[%c0_4, %c0_5] : memref<640x128xf32, #tpu.memory_space<vmem>>, vector<640x128xf32>
    %cst = arith.constant dense<0.000000e+00> : vector<128x128xf32>
    %6 = tpu.matmul %4, %5, %cst {dimension_numbers = #tpu.dot_dimension_numbers<[1], [0], [0], [1], [0, 0, 1, 1], [], []>} : vector<128x640xf32>, vector<640x128xf32>, vector<128x128xf32> -> vector<128x128xf32>
    %7 = arith.addf %3, %6 : vector<128x128xf32>
    %c0_6 = arith.constant 0 : index
    %c0_7 = arith.constant 0 : index
    %8 = vector.load %arg8[%c0_6, %c0_7] : memref<128x128xf32, #tpu.memory_space<vmem>>, vector<128x128xf32>
    tpu.vector_store %arg8[%c0_6, %c0_7], %7 {strides = array<i32>} : memref<128x128xf32, #tpu.memory_space<vmem>>, vector<128x128xf32>,
    %c0_i32_8 = arith.constant 0 : i32
    %9 = arith.cmpi eq, %arg2, %c0_i32_8 : i32
    %10 = arith.extui %9 : i1 to i32
    %c0_i32_9 = arith.constant 0 : i32
    %11 = arith.cmpi ne, %10, %c0_i32_9 : i32
    scf.if %11 {
      %c0_10 = arith.constant 0 : index
      %c0_11 = arith.constant 0 : index
      %12 = vector.load %arg8[%c0_10, %c0_11] : memref<128x128xf32, #tpu.memory_space<vmem>>, vector<128x128xf32>
      %c0_12 = arith.constant 0 : index
      %c0_13 = arith.constant 0 : index
      %13 = vector.load %arg5[%c0_12, %c0_13] : memref<1x128xf32, #tpu.memory_space<vmem>>, vector<1x128xf32>
      %14 = vector.broadcast %13 : vector<1x128xf32> to vector<128x128xf32>
      %15 = arith.mulf %12, %14 : vector<128x128xf32>
      %c0_14 = arith.constant 0 : index
      %c0_15 = arith.constant 0 : index
      %16 = vector.load %arg6[%c0_14, %c0_15] : memref<1x128xf32, #tpu.memory_space<vmem>>, vector<1x128xf32>
      %17 = vector.broadcast %16 : vector<1x128xf32> to vector<128x128xf32>
      %18 = arith.addf %15, %17 : vector<128x128xf32>
      %cst_16 = arith.constant 0.000000e+00 : f32
      %19 = vector.broadcast %cst_16 : f32 to vector<128x128xf32>
      %20 = arith.maximumf %18, %19 : vector<128x128xf32>
      %c0_17 = arith.constant 0 : index
      %c0_18 = arith.constant 0 : index
      %21 = vector.load %arg7[%c0_17, %c0_18] : memref<128x128xf32, #tpu.memory_space<vmem>>, vector<128x128xf32>
      tpu.vector_store %arg7[%c0_17, %c0_18], %20 {strides = array<i32>} : memref<128x128xf32, #tpu.memory_space<vmem>>, vector<128x128xf32>,
    } else {
    }
    return
  }
  func.func @transform_0(%arg0: i32, %arg1: i32, %arg2: i32) -> (i32, i32) {
    %c0_i32 = arith.constant 0 : i32
    return %arg0, %arg2 : i32, i32
  }
  func.func @transform_1(%arg0: i32, %arg1: i32, %arg2: i32) -> (i32, i32) {
    %c0_i32 = arith.constant 0 : i32
    return %arg2, %arg1 : i32, i32
  }
  func.func @transform_2(%arg0: i32, %arg1: i32, %arg2: i32) -> (i32, i32) {
    %c0_i32 = arith.constant 0 : i32
    %c0_i32_0 = arith.constant 0 : i32
    return %c0_i32, %arg1 : i32, i32
  }
  func.func @transform_3(%arg0: i32, %arg1: i32, %arg2: i32) -> (i32, i32) {
    %c0_i32 = arith.constant 0 : i32
    %c0_i32_0 = arith.constant 0 : i32
    return %c0_i32, %arg1 : i32, i32
  }
  func.func @transform_4(%arg0: i32, %arg1: i32, %arg2: i32) -> (i32, i32) {
    %c0_i32 = arith.constant 0 : i32
    return %arg0, %arg1 : i32, i32
  }
}

module attributes {stable_mosaic.version = 11 : i64} {
  func.func @_fused_matmul_kernel(%arg0: i32, %arg1: i32, %arg2: i32, %arg3: memref<128x640xf32, #tpu.memory_space<vmem>>, %arg4: memref<640x128xf32, #tpu.memory_space<vmem>>, %arg5: memref<1x128xf32, #tpu.memory_space<vmem>>, %arg6: memref<1x128xf32, #tpu.memory_space<vmem>>, %arg7: memref<128x128xf32, #tpu.memory_space<vmem>>, %arg8: memref<128x128xf32, #tpu.memory_space<vmem>>, %arg9: memref<128x128xf32, #tpu.memory_space<vmem>>) attributes {dimension_semantics = [#tpu.dimension_semantics<parallel>, #tpu.dimension_semantics<parallel>, #tpu.dimension_semantics<arbitrary>], iteration_bounds = array<i64: 1, 1, 1>, scalar_prefetch = 0 : i64, scratch_operands = 1 : i64, tpu.core_type = #tpu.core_type<tc>, window_params = [{transform_indices = @transform_0, window_bounds = array<i64: 128, 640>}, {transform_indices = @transform_1, window_bounds = array<i64: 640, 128>}, {transform_indices = @transform_2, window_bounds = array<i64: 1, 128>}, {transform_indices = @transform_3, window_bounds = array<i64: 1, 128>}, {transform_indices = @transform_4, window_bounds = array<i64: 128, 128>}, {transform_indices = @transform_5, window_bounds = array<i64: 128, 128>}]} {
    %c0_i32 = arith.constant 0 : i32
    %0 = arith.cmpi eq, %arg2, %c0_i32 : i32
    %1 = arith.extui %0 : i1 to i32
    %c0_i32_0 = arith.constant 0 : i32
    %2 = arith.cmpi ne, %1, %c0_i32_0 : i32
    scf.if %2 {
      %cst_10 = arith.constant 0.000000e+00 : f32
      %12 = vector.broadcast %cst_10 : f32 to vector<128x128xf32>
      %c0_11 = arith.constant 0 : index
      %c0_12 = arith.constant 0 : index
      %13 = vector.load %arg9[%c0_11, %c0_12] : memref<128x128xf32, #tpu.memory_space<vmem>>, vector<128x128xf32>
      tpu.vector_store %arg9[%c0_11, %c0_12], %12 {strides = array<i32>} : memref<128x128xf32, #tpu.memory_space<vmem>>, vector<128x128xf32>,
    } else {
    }
    %c0 = arith.constant 0 : index
    %c0_1 = arith.constant 0 : index
    %3 = vector.load %arg9[%c0, %c0_1] : memref<128x128xf32, #tpu.memory_space<vmem>>, vector<128x128xf32>
    %c0_2 = arith.constant 0 : index
    %c0_3 = arith.constant 0 : index
    %4 = vector.load %arg3[%c0_2, %c0_3] : memref<128x640xf32, #tpu.memory_space<vmem>>, vector<128x640xf32>
    %c0_4 = arith.constant 0 : index
    %c0_5 = arith.constant 0 : index
    %5 = vector.load %arg4[%c0_4, %c0_5] : memref<640x128xf32, #tpu.memory_space<vmem>>, vector<640x128xf32>
    %cst = arith.constant dense<0.000000e+00> : vector<128x128xf32>
    %6 = tpu.matmul %4, %5, %cst {dimension_numbers = #tpu.dot_dimension_numbers<[1], [0], [0], [1], [0, 0, 1, 1], [], []>} : vector<128x640xf32>, vector<640x128xf32>, vector<128x128xf32> -> vector<128x128xf32>
    %7 = arith.addf %3, %6 : vector<128x128xf32>
    %c0_6 = arith.constant 0 : index
    %c0_7 = arith.constant 0 : index
    %8 = vector.load %arg9[%c0_6, %c0_7] : memref<128x128xf32, #tpu.memory_space<vmem>>, vector<128x128xf32>
    tpu.vector_store %arg9[%c0_6, %c0_7], %7 {strides = array<i32>} : memref<128x128xf32, #tpu.memory_space<vmem>>, vector<128x128xf32>,
    %c0_i32_8 = arith.constant 0 : i32
    %9 = arith.cmpi eq, %arg2, %c0_i32_8 : i32
    %10 = arith.extui %9 : i1 to i32
    %c0_i32_9 = arith.constant 0 : i32
    %11 = arith.cmpi ne, %10, %c0_i32_9 : i32
    scf.if %11 {
      %c0_10 = arith.constant 0 : index
      %c0_11 = arith.constant 0 : index
      %12 = vector.load %arg9[%c0_10, %c0_11] : memref<128x128xf32, #tpu.memory_space<vmem>>, vector<128x128xf32>
      %c0_12 = arith.constant 0 : index
      %c0_13 = arith.constant 0 : index
      %13 = vector.load %arg5[%c0_12, %c0_13] : memref<1x128xf32, #tpu.memory_space<vmem>>, vector<1x128xf32>
      %14 = vector.broadcast %13 : vector<1x128xf32> to vector<128x128xf32>
      %15 = arith.mulf %12, %14 : vector<128x128xf32>
      %c0_14 = arith.constant 0 : index
      %c0_15 = arith.constant 0 : index
      %16 = vector.load %arg6[%c0_14, %c0_15] : memref<1x128xf32, #tpu.memory_space<vmem>>, vector<1x128xf32>
      %17 = vector.broadcast %16 : vector<1x128xf32> to vector<128x128xf32>
      %18 = arith.addf %15, %17 : vector<128x128xf32>
      %c0_16 = arith.constant 0 : index
      %c0_17 = arith.constant 0 : index
      %19 = vector.load %arg7[%c0_16, %c0_17] : memref<128x128xf32, #tpu.memory_space<vmem>>, vector<128x128xf32>
      %20 = arith.addf %18, %19 : vector<128x128xf32>
      %cst_18 = arith.constant 0.000000e+00 : f32
      %21 = vector.broadcast %cst_18 : f32 to vector<128x128xf32>
      %22 = arith.maximumf %20, %21 : vector<128x128xf32>
      %c0_19 = arith.constant 0 : index
      %c0_20 = arith.constant 0 : index
      %23 = vector.load %arg8[%c0_19, %c0_20] : memref<128x128xf32, #tpu.memory_space<vmem>>, vector<128x128xf32>
      tpu.vector_store %arg8[%c0_19, %c0_20], %22 {strides = array<i32>} : memref<128x128xf32, #tpu.memory_space<vmem>>, vector<128x128xf32>,
    } else {
    }
    return
  }
  func.func @transform_0(%arg0: i32, %arg1: i32, %arg2: i32) -> (i32, i32) {
    %c0_i32 = arith.constant 0 : i32
    return %arg0, %arg2 : i32, i32
  }
  func.func @transform_1(%arg0: i32, %arg1: i32, %arg2: i32) -> (i32, i32) {
    %c0_i32 = arith.constant 0 : i32
    return %arg2, %arg1 : i32, i32
  }
  func.func @transform_2(%arg0: i32, %arg1: i32, %arg2: i32) -> (i32, i32) {
    %c0_i32 = arith.constant 0 : i32
    %c0_i32_0 = arith.constant 0 : i32
    return %c0_i32, %arg1 : i32, i32
  }
  func.func @transform_3(%arg0: i32, %arg1: i32, %arg2: i32) -> (i32, i32) {
    %c0_i32 = arith.constant 0 : i32
    %c0_i32_0 = arith.constant 0 : i32
    return %c0_i32, %arg1 : i32, i32
  }
  func.func @transform_4(%arg0: i32, %arg1: i32, %arg2: i32) -> (i32, i32) {
    %c0_i32 = arith.constant 0 : i32
    return %arg0, %arg1 : i32, i32
  }
  func.func @transform_5(%arg0: i32, %arg1: i32, %arg2: i32) -> (i32, i32) {
    %c0_i32 = arith.constant 0 : i32
    return %arg0, %arg1 : i32, i32
  }
}

module attributes {stable_mosaic.version = 11 : i64} {
  func.func @_fused_matmul_kernel(%arg0: i32, %arg1: i32, %arg2: i32, %arg3: memref<32x640xf32, #tpu.memory_space<vmem>>, %arg4: memref<640x128xf32, #tpu.memory_space<vmem>>, %arg5: memref<1x128xf32, #tpu.memory_space<vmem>>, %arg6: memref<1x128xf32, #tpu.memory_space<vmem>>, %arg7: memref<32x128xf32, #tpu.memory_space<vmem>>, %arg8: memref<32x128xf32, #tpu.memory_space<vmem>>) attributes {dimension_semantics = [#tpu.dimension_semantics<parallel>, #tpu.dimension_semantics<parallel>, #tpu.dimension_semantics<arbitrary>], iteration_bounds = array<i64: 1, 1, 1>, scalar_prefetch = 0 : i64, scratch_operands = 1 : i64, tpu.core_type = #tpu.core_type<tc>, window_params = [{transform_indices = @transform_0, window_bounds = array<i64: 32, 640>}, {transform_indices = @transform_1, window_bounds = array<i64: 640, 128>}, {transform_indices = @transform_2, window_bounds = array<i64: 1, 128>}, {transform_indices = @transform_3, window_bounds = array<i64: 1, 128>}, {transform_indices = @transform_4, window_bounds = array<i64: 32, 128>}]} {
    %c0_i32 = arith.constant 0 : i32
    %0 = arith.cmpi eq, %arg2, %c0_i32 : i32
    %1 = arith.extui %0 : i1 to i32
    %c0_i32_0 = arith.constant 0 : i32
    %2 = arith.cmpi ne, %1, %c0_i32_0 : i32
    scf.if %2 {
      %cst_10 = arith.constant 0.000000e+00 : f32
      %12 = vector.broadcast %cst_10 : f32 to vector<32x128xf32>
      %c0_11 = arith.constant 0 : index
      %c0_12 = arith.constant 0 : index
      %13 = vector.load %arg8[%c0_11, %c0_12] : memref<32x128xf32, #tpu.memory_space<vmem>>, vector<32x128xf32>
      tpu.vector_store %arg8[%c0_11, %c0_12], %12 {strides = array<i32>} : memref<32x128xf32, #tpu.memory_space<vmem>>, vector<32x128xf32>,
    } else {
    }
    %c0 = arith.constant 0 : index
    %c0_1 = arith.constant 0 : index
    %3 = vector.load %arg8[%c0, %c0_1] : memref<32x128xf32, #tpu.memory_space<vmem>>, vector<32x128xf32>
    %c0_2 = arith.constant 0 : index
    %c0_3 = arith.constant 0 : index
    %4 = vector.load %arg3[%c0_2, %c0_3] : memref<32x640xf32, #tpu.memory_space<vmem>>, vector<32x640xf32>
    %c0_4 = arith.constant 0 : index
    %c0_5 = arith.constant 0 : index
    %5 = vector.load %arg4[%c0_4, %c0_5] : memref<640x128xf32, #tpu.memory_space<vmem>>, vector<640x128xf32>
    %cst = arith.constant dense<0.000000e+00> : vector<32x128xf32>
    %6 = tpu.matmul %4, %5, %cst {dimension_numbers = #tpu.dot_dimension_numbers<[1], [0], [0], [1], [0, 0, 1, 1], [], []>} : vector<32x640xf32>, vector<640x128xf32>, vector<32x128xf32> -> vector<32x128xf32>
    %7 = arith.addf %3, %6 : vector<32x128xf32>
    %c0_6 = arith.constant 0 : index
    %c0_7 = arith.constant 0 : index
    %8 = vector.load %arg8[%c0_6, %c0_7] : memref<32x128xf32, #tpu.memory_space<vmem>>, vector<32x128xf32>
    tpu.vector_store %arg8[%c0_6, %c0_7], %7 {strides = array<i32>} : memref<32x128xf32, #tpu.memory_space<vmem>>, vector<32x128xf32>,
    %c0_i32_8 = arith.constant 0 : i32
    %9 = arith.cmpi eq, %arg2, %c0_i32_8 : i32
    %10 = arith.extui %9 : i1 to i32
    %c0_i32_9 = arith.constant 0 : i32
    %11 = arith.cmpi ne, %10, %c0_i32_9 : i32
    scf.if %11 {
      %c0_10 = arith.constant 0 : index
      %c0_11 = arith.constant 0 : index
      %12 = vector.load %arg8[%c0_10, %c0_11] : memref<32x128xf32, #tpu.memory_space<vmem>>, vector<32x128xf32>
      %c0_12 = arith.constant 0 : index
      %c0_13 = arith.constant 0 : index
      %13 = vector.load %arg5[%c0_12, %c0_13] : memref<1x128xf32, #tpu.memory_space<vmem>>, vector<1x128xf32>
      %14 = vector.broadcast %13 : vector<1x128xf32> to vector<32x128xf32>
      %15 = arith.mulf %12, %14 : vector<32x128xf32>
      %c0_14 = arith.constant 0 : index
      %c0_15 = arith.constant 0 : index
      %16 = vector.load %arg6[%c0_14, %c0_15] : memref<1x128xf32, #tpu.memory_space<vmem>>, vector<1x128xf32>
      %17 = vector.broadcast %16 : vector<1x128xf32> to vector<32x128xf32>
      %18 = arith.addf %15, %17 : vector<32x128xf32>
      %cst_16 = arith.constant 0.000000e+00 : f32
      %19 = vector.broadcast %cst_16 : f32 to vector<32x128xf32>
      %20 = arith.maximumf %18, %19 : vector<32x128xf32>
      %c0_17 = arith.constant 0 : index
      %c0_18 = arith.constant 0 : index
      %21 = vector.load %arg7[%c0_17, %c0_18] : memref<32x128xf32, #tpu.memory_space<vmem>>, vector<32x128xf32>
      tpu.vector_store %arg7[%c0_17, %c0_18], %20 {strides = array<i32>} : memref<32x128xf32, #tpu.memory_space<vmem>>, vector<32x128xf32>,
    } else {
    }
    return
  }
  func.func @transform_0(%arg0: i32, %arg1: i32, %arg2: i32) -> (i32, i32) {
    %c0_i32 = arith.constant 0 : i32
    return %arg0, %arg2 : i32, i32
  }
  func.func @transform_1(%arg0: i32, %arg1: i32, %arg2: i32) -> (i32, i32) {
    %c0_i32 = arith.constant 0 : i32
    return %arg2, %arg1 : i32, i32
  }
  func.func @transform_2(%arg0: i32, %arg1: i32, %arg2: i32) -> (i32, i32) {
    %c0_i32 = arith.constant 0 : i32
    %c0_i32_0 = arith.constant 0 : i32
    return %c0_i32, %arg1 : i32, i32
  }
  func.func @transform_3(%arg0: i32, %arg1: i32, %arg2: i32) -> (i32, i32) {
    %c0_i32 = arith.constant 0 : i32
    %c0_i32_0 = arith.constant 0 : i32
    return %c0_i32, %arg1 : i32, i32
  }
  func.func @transform_4(%arg0: i32, %arg1: i32, %arg2: i32) -> (i32, i32) {
    %c0_i32 = arith.constant 0 : i32
    return %arg0, %arg1 : i32, i32
  }
}

module attributes {stable_mosaic.version = 11 : i64} {
  func.func @_fused_matmul_kernel(%arg0: i32, %arg1: i32, %arg2: i32, %arg3: memref<32x128xf32, #tpu.memory_space<vmem>>, %arg4: memref<128x128xf32, #tpu.memory_space<vmem>>, %arg5: memref<1x128xf32, #tpu.memory_space<vmem>>, %arg6: memref<1x128xf32, #tpu.memory_space<vmem>>, %arg7: memref<32x128xf32, #tpu.memory_space<vmem>>, %arg8: memref<32x128xf32, #tpu.memory_space<vmem>>) attributes {dimension_semantics = [#tpu.dimension_semantics<parallel>, #tpu.dimension_semantics<parallel>, #tpu.dimension_semantics<arbitrary>], iteration_bounds = array<i64: 1, 1, 1>, scalar_prefetch = 0 : i64, scratch_operands = 1 : i64, tpu.core_type = #tpu.core_type<tc>, window_params = [{transform_indices = @transform_0, window_bounds = array<i64: 32, 128>}, {transform_indices = @transform_1, window_bounds = array<i64: 128, 128>}, {transform_indices = @transform_2, window_bounds = array<i64: 1, 128>}, {transform_indices = @transform_3, window_bounds = array<i64: 1, 128>}, {transform_indices = @transform_4, window_bounds = array<i64: 32, 128>}]} {
    %c0_i32 = arith.constant 0 : i32
    %0 = arith.cmpi eq, %arg2, %c0_i32 : i32
    %1 = arith.extui %0 : i1 to i32
    %c0_i32_0 = arith.constant 0 : i32
    %2 = arith.cmpi ne, %1, %c0_i32_0 : i32
    scf.if %2 {
      %cst_10 = arith.constant 0.000000e+00 : f32
      %12 = vector.broadcast %cst_10 : f32 to vector<32x128xf32>
      %c0_11 = arith.constant 0 : index
      %c0_12 = arith.constant 0 : index
      %13 = vector.load %arg8[%c0_11, %c0_12] : memref<32x128xf32, #tpu.memory_space<vmem>>, vector<32x128xf32>
      tpu.vector_store %arg8[%c0_11, %c0_12], %12 {strides = array<i32>} : memref<32x128xf32, #tpu.memory_space<vmem>>, vector<32x128xf32>,
    } else {
    }
    %c0 = arith.constant 0 : index
    %c0_1 = arith.constant 0 : index
    %3 = vector.load %arg8[%c0, %c0_1] : memref<32x128xf32, #tpu.memory_space<vmem>>, vector<32x128xf32>
    %c0_2 = arith.constant 0 : index
    %c0_3 = arith.constant 0 : index
    %4 = vector.load %arg3[%c0_2, %c0_3] : memref<32x128xf32, #tpu.memory_space<vmem>>, vector<32x128xf32>
    %c0_4 = arith.constant 0 : index
    %c0_5 = arith.constant 0 : index
    %5 = vector.load %arg4[%c0_4, %c0_5] : memref<128x128xf32, #tpu.memory_space<vmem>>, vector<128x128xf32>
    %cst = arith.constant dense<0.000000e+00> : vector<32x128xf32>
    %6 = tpu.matmul %4, %5, %cst {dimension_numbers = #tpu.dot_dimension_numbers<[1], [0], [0], [1], [0, 0, 1, 1], [], []>} : vector<32x128xf32>, vector<128x128xf32>, vector<32x128xf32> -> vector<32x128xf32>
    %7 = arith.addf %3, %6 : vector<32x128xf32>
    %c0_6 = arith.constant 0 : index
    %c0_7 = arith.constant 0 : index
    %8 = vector.load %arg8[%c0_6, %c0_7] : memref<32x128xf32, #tpu.memory_space<vmem>>, vector<32x128xf32>
    tpu.vector_store %arg8[%c0_6, %c0_7], %7 {strides = array<i32>} : memref<32x128xf32, #tpu.memory_space<vmem>>, vector<32x128xf32>,
    %c0_i32_8 = arith.constant 0 : i32
    %9 = arith.cmpi eq, %arg2, %c0_i32_8 : i32
    %10 = arith.extui %9 : i1 to i32
    %c0_i32_9 = arith.constant 0 : i32
    %11 = arith.cmpi ne, %10, %c0_i32_9 : i32
    scf.if %11 {
      %c0_10 = arith.constant 0 : index
      %c0_11 = arith.constant 0 : index
      %12 = vector.load %arg8[%c0_10, %c0_11] : memref<32x128xf32, #tpu.memory_space<vmem>>, vector<32x128xf32>
      %c0_12 = arith.constant 0 : index
      %c0_13 = arith.constant 0 : index
      %13 = vector.load %arg5[%c0_12, %c0_13] : memref<1x128xf32, #tpu.memory_space<vmem>>, vector<1x128xf32>
      %14 = vector.broadcast %13 : vector<1x128xf32> to vector<32x128xf32>
      %15 = arith.mulf %12, %14 : vector<32x128xf32>
      %c0_14 = arith.constant 0 : index
      %c0_15 = arith.constant 0 : index
      %16 = vector.load %arg6[%c0_14, %c0_15] : memref<1x128xf32, #tpu.memory_space<vmem>>, vector<1x128xf32>
      %17 = vector.broadcast %16 : vector<1x128xf32> to vector<32x128xf32>
      %18 = arith.addf %15, %17 : vector<32x128xf32>
      %c0_16 = arith.constant 0 : index
      %c0_17 = arith.constant 0 : index
      %19 = vector.load %arg7[%c0_16, %c0_17] : memref<32x128xf32, #tpu.memory_space<vmem>>, vector<32x128xf32>
      tpu.vector_store %arg7[%c0_16, %c0_17], %18 {strides = array<i32>} : memref<32x128xf32, #tpu.memory_space<vmem>>, vector<32x128xf32>,
    } else {
    }
    return
  }
  func.func @transform_0(%arg0: i32, %arg1: i32, %arg2: i32) -> (i32, i32) {
    %c0_i32 = arith.constant 0 : i32
    return %arg0, %arg2 : i32, i32
  }
  func.func @transform_1(%arg0: i32, %arg1: i32, %arg2: i32) -> (i32, i32) {
    %c0_i32 = arith.constant 0 : i32
    return %arg2, %arg1 : i32, i32
  }
  func.func @transform_2(%arg0: i32, %arg1: i32, %arg2: i32) -> (i32, i32) {
    %c0_i32 = arith.constant 0 : i32
    %c0_i32_0 = arith.constant 0 : i32
    return %c0_i32, %arg1 : i32, i32
  }
  func.func @transform_3(%arg0: i32, %arg1: i32, %arg2: i32) -> (i32, i32) {
    %c0_i32 = arith.constant 0 : i32
    %c0_i32_0 = arith.constant 0 : i32
    return %c0_i32, %arg1 : i32, i32
  }
  func.func @transform_4(%arg0: i32, %arg1: i32, %arg2: i32) -> (i32, i32) {
    %c0_i32 = arith.constant 0 : i32
    return %arg0, %arg1 : i32, i32
  }
}

module attributes {stable_mosaic.version = 11 : i64} {
  func.func @_fused_matmul_kernel(%arg0: i32, %arg1: i32, %arg2: i32, %arg3: memref<32x1152xf32, #tpu.memory_space<vmem>>, %arg4: memref<1152x128xf32, #tpu.memory_space<vmem>>, %arg5: memref<1x128xf32, #tpu.memory_space<vmem>>, %arg6: memref<1x128xf32, #tpu.memory_space<vmem>>, %arg7: memref<32x128xf32, #tpu.memory_space<vmem>>, %arg8: memref<32x128xf32, #tpu.memory_space<vmem>>, %arg9: memref<32x128xf32, #tpu.memory_space<vmem>>) attributes {dimension_semantics = [#tpu.dimension_semantics<parallel>, #tpu.dimension_semantics<parallel>, #tpu.dimension_semantics<arbitrary>], iteration_bounds = array<i64: 1, 1, 1>, scalar_prefetch = 0 : i64, scratch_operands = 1 : i64, tpu.core_type = #tpu.core_type<tc>, window_params = [{transform_indices = @transform_0, window_bounds = array<i64: 32, 1152>}, {transform_indices = @transform_1, window_bounds = array<i64: 1152, 128>}, {transform_indices = @transform_2, window_bounds = array<i64: 1, 128>}, {transform_indices = @transform_3, window_bounds = array<i64: 1, 128>}, {transform_indices = @transform_4, window_bounds = array<i64: 32, 128>}, {transform_indices = @transform_5, window_bounds = array<i64: 32, 128>}]} {
    %c0_i32 = arith.constant 0 : i32
    %0 = arith.cmpi eq, %arg2, %c0_i32 : i32
    %1 = arith.extui %0 : i1 to i32
    %c0_i32_0 = arith.constant 0 : i32
    %2 = arith.cmpi ne, %1, %c0_i32_0 : i32
    scf.if %2 {
      %cst_10 = arith.constant 0.000000e+00 : f32
      %12 = vector.broadcast %cst_10 : f32 to vector<32x128xf32>
      %c0_11 = arith.constant 0 : index
      %c0_12 = arith.constant 0 : index
      %13 = vector.load %arg9[%c0_11, %c0_12] : memref<32x128xf32, #tpu.memory_space<vmem>>, vector<32x128xf32>
      tpu.vector_store %arg9[%c0_11, %c0_12], %12 {strides = array<i32>} : memref<32x128xf32, #tpu.memory_space<vmem>>, vector<32x128xf32>,
    } else {
    }
    %c0 = arith.constant 0 : index
    %c0_1 = arith.constant 0 : index
    %3 = vector.load %arg9[%c0, %c0_1] : memref<32x128xf32, #tpu.memory_space<vmem>>, vector<32x128xf32>
    %c0_2 = arith.constant 0 : index
    %c0_3 = arith.constant 0 : index
    %4 = vector.load %arg3[%c0_2, %c0_3] : memref<32x1152xf32, #tpu.memory_space<vmem>>, vector<32x1152xf32>
    %c0_4 = arith.constant 0 : index
    %c0_5 = arith.constant 0 : index
    %5 = vector.load %arg4[%c0_4, %c0_5] : memref<1152x128xf32, #tpu.memory_space<vmem>>, vector<1152x128xf32>
    %cst = arith.constant dense<0.000000e+00> : vector<32x128xf32>
    %6 = tpu.matmul %4, %5, %cst {dimension_numbers = #tpu.dot_dimension_numbers<[1], [0], [0], [1], [0, 0, 1, 1], [], []>} : vector<32x1152xf32>, vector<1152x128xf32>, vector<32x128xf32> -> vector<32x128xf32>
    %7 = arith.addf %3, %6 : vector<32x128xf32>
    %c0_6 = arith.constant 0 : index
    %c0_7 = arith.constant 0 : index
    %8 = vector.load %arg9[%c0_6, %c0_7] : memref<32x128xf32, #tpu.memory_space<vmem>>, vector<32x128xf32>
    tpu.vector_store %arg9[%c0_6, %c0_7], %7 {strides = array<i32>} : memref<32x128xf32, #tpu.memory_space<vmem>>, vector<32x128xf32>,
    %c0_i32_8 = arith.constant 0 : i32
    %9 = arith.cmpi eq, %arg2, %c0_i32_8 : i32
    %10 = arith.extui %9 : i1 to i32
    %c0_i32_9 = arith.constant 0 : i32
    %11 = arith.cmpi ne, %10, %c0_i32_9 : i32
    scf.if %11 {
      %c0_10 = arith.constant 0 : index
      %c0_11 = arith.constant 0 : index
      %12 = vector.load %arg9[%c0_10, %c0_11] : memref<32x128xf32, #tpu.memory_space<vmem>>, vector<32x128xf32>
      %c0_12 = arith.constant 0 : index
      %c0_13 = arith.constant 0 : index
      %13 = vector.load %arg5[%c0_12, %c0_13] : memref<1x128xf32, #tpu.memory_space<vmem>>, vector<1x128xf32>
      %14 = vector.broadcast %13 : vector<1x128xf32> to vector<32x128xf32>
      %15 = arith.mulf %12, %14 : vector<32x128xf32>
      %c0_14 = arith.constant 0 : index
      %c0_15 = arith.constant 0 : index
      %16 = vector.load %arg6[%c0_14, %c0_15] : memref<1x128xf32, #tpu.memory_space<vmem>>, vector<1x128xf32>
      %17 = vector.broadcast %16 : vector<1x128xf32> to vector<32x128xf32>
      %18 = arith.addf %15, %17 : vector<32x128xf32>
      %c0_16 = arith.constant 0 : index
      %c0_17 = arith.constant 0 : index
      %19 = vector.load %arg7[%c0_16, %c0_17] : memref<32x128xf32, #tpu.memory_space<vmem>>, vector<32x128xf32>
      %20 = arith.addf %18, %19 : vector<32x128xf32>
      %cst_18 = arith.constant 0.000000e+00 : f32
      %21 = vector.broadcast %cst_18 : f32 to vector<32x128xf32>
      %22 = arith.maximumf %20, %21 : vector<32x128xf32>
      %c0_19 = arith.constant 0 : index
      %c0_20 = arith.constant 0 : index
      %23 = vector.load %arg8[%c0_19, %c0_20] : memref<32x128xf32, #tpu.memory_space<vmem>>, vector<32x128xf32>
      tpu.vector_store %arg8[%c0_19, %c0_20], %22 {strides = array<i32>} : memref<32x128xf32, #tpu.memory_space<vmem>>, vector<32x128xf32>,
    } else {
    }
    return
  }
  func.func @transform_0(%arg0: i32, %arg1: i32, %arg2: i32) -> (i32, i32) {
    %c0_i32 = arith.constant 0 : i32
    return %arg0, %arg2 : i32, i32
  }
  func.func @transform_1(%arg0: i32, %arg1: i32, %arg2: i32) -> (i32, i32) {
    %c0_i32 = arith.constant 0 : i32
    return %arg2, %arg1 : i32, i32
  }
  func.func @transform_2(%arg0: i32, %arg1: i32, %arg2: i32) -> (i32, i32) {
    %c0_i32 = arith.constant 0 : i32
    %c0_i32_0 = arith.constant 0 : i32
    return %c0_i32, %arg1 : i32, i32
  }
  func.func @transform_3(%arg0: i32, %arg1: i32, %arg2: i32) -> (i32, i32) {
    %c0_i32 = arith.constant 0 : i32
    %c0_i32_0 = arith.constant 0 : i32
    return %c0_i32, %arg1 : i32, i32
  }
  func.func @transform_4(%arg0: i32, %arg1: i32, %arg2: i32) -> (i32, i32) {
    %c0_i32 = arith.constant 0 : i32
    return %arg0, %arg1 : i32, i32
  }
  func.func @transform_5(%arg0: i32, %arg1: i32, %arg2: i32) -> (i32, i32) {
    %c0_i32 = arith.constant 0 : i32
    return %arg0, %arg1 : i32, i32
  }
}

module attributes {stable_mosaic.version = 11 : i64} {
  func.func @_fused_matmul_kernel(%arg0: i32, %arg1: i32, %arg2: i32, %arg3: memref<8x1152xf32, #tpu.memory_space<vmem>>, %arg4: memref<1152x256xf32, #tpu.memory_space<vmem>>, %arg5: memref<1x256xf32, #tpu.memory_space<vmem>>, %arg6: memref<1x256xf32, #tpu.memory_space<vmem>>, %arg7: memref<8x256xf32, #tpu.memory_space<vmem>>, %arg8: memref<8x256xf32, #tpu.memory_space<vmem>>) attributes {dimension_semantics = [#tpu.dimension_semantics<parallel>, #tpu.dimension_semantics<parallel>, #tpu.dimension_semantics<arbitrary>], iteration_bounds = array<i64: 1, 1, 1>, scalar_prefetch = 0 : i64, scratch_operands = 1 : i64, tpu.core_type = #tpu.core_type<tc>, window_params = [{transform_indices = @transform_0, window_bounds = array<i64: 8, 1152>}, {transform_indices = @transform_1, window_bounds = array<i64: 1152, 256>}, {transform_indices = @transform_2, window_bounds = array<i64: 1, 256>}, {transform_indices = @transform_3, window_bounds = array<i64: 1, 256>}, {transform_indices = @transform_4, window_bounds = array<i64: 8, 256>}]} {
    %c0_i32 = arith.constant 0 : i32
    %0 = arith.cmpi eq, %arg2, %c0_i32 : i32
    %1 = arith.extui %0 : i1 to i32
    %c0_i32_0 = arith.constant 0 : i32
    %2 = arith.cmpi ne, %1, %c0_i32_0 : i32
    scf.if %2 {
      %cst_10 = arith.constant 0.000000e+00 : f32
      %12 = vector.broadcast %cst_10 : f32 to vector<8x256xf32>
      %c0_11 = arith.constant 0 : index
      %c0_12 = arith.constant 0 : index
      %13 = vector.load %arg8[%c0_11, %c0_12] : memref<8x256xf32, #tpu.memory_space<vmem>>, vector<8x256xf32>
      tpu.vector_store %arg8[%c0_11, %c0_12], %12 {strides = array<i32>} : memref<8x256xf32, #tpu.memory_space<vmem>>, vector<8x256xf32>,
    } else {
    }
    %c0 = arith.constant 0 : index
    %c0_1 = arith.constant 0 : index
    %3 = vector.load %arg8[%c0, %c0_1] : memref<8x256xf32, #tpu.memory_space<vmem>>, vector<8x256xf32>
    %c0_2 = arith.constant 0 : index
    %c0_3 = arith.constant 0 : index
    %4 = vector.load %arg3[%c0_2, %c0_3] : memref<8x1152xf32, #tpu.memory_space<vmem>>, vector<8x1152xf32>
    %c0_4 = arith.constant 0 : index
    %c0_5 = arith.constant 0 : index
    %5 = vector.load %arg4[%c0_4, %c0_5] : memref<1152x256xf32, #tpu.memory_space<vmem>>, vector<1152x256xf32>
    %cst = arith.constant dense<0.000000e+00> : vector<8x256xf32>
    %6 = tpu.matmul %4, %5, %cst {dimension_numbers = #tpu.dot_dimension_numbers<[1], [0], [0], [1], [0, 0, 1, 1], [], []>} : vector<8x1152xf32>, vector<1152x256xf32>, vector<8x256xf32> -> vector<8x256xf32>
    %7 = arith.addf %3, %6 : vector<8x256xf32>
    %c0_6 = arith.constant 0 : index
    %c0_7 = arith.constant 0 : index
    %8 = vector.load %arg8[%c0_6, %c0_7] : memref<8x256xf32, #tpu.memory_space<vmem>>, vector<8x256xf32>
    tpu.vector_store %arg8[%c0_6, %c0_7], %7 {strides = array<i32>} : memref<8x256xf32, #tpu.memory_space<vmem>>, vector<8x256xf32>,
    %c0_i32_8 = arith.constant 0 : i32
    %9 = arith.cmpi eq, %arg2, %c0_i32_8 : i32
    %10 = arith.extui %9 : i1 to i32
    %c0_i32_9 = arith.constant 0 : i32
    %11 = arith.cmpi ne, %10, %c0_i32_9 : i32
    scf.if %11 {
      %c0_10 = arith.constant 0 : index
      %c0_11 = arith.constant 0 : index
      %12 = vector.load %arg8[%c0_10, %c0_11] : memref<8x256xf32, #tpu.memory_space<vmem>>, vector<8x256xf32>
      %c0_12 = arith.constant 0 : index
      %c0_13 = arith.constant 0 : index
      %13 = vector.load %arg5[%c0_12, %c0_13] : memref<1x256xf32, #tpu.memory_space<vmem>>, vector<1x256xf32>
      %14 = vector.broadcast %13 : vector<1x256xf32> to vector<8x256xf32>
      %15 = arith.mulf %12, %14 : vector<8x256xf32>
      %c0_14 = arith.constant 0 : index
      %c0_15 = arith.constant 0 : index
      %16 = vector.load %arg6[%c0_14, %c0_15] : memref<1x256xf32, #tpu.memory_space<vmem>>, vector<1x256xf32>
      %17 = vector.broadcast %16 : vector<1x256xf32> to vector<8x256xf32>
      %18 = arith.addf %15, %17 : vector<8x256xf32>
      %cst_16 = arith.constant 0.000000e+00 : f32
      %19 = vector.broadcast %cst_16 : f32 to vector<8x256xf32>
      %20 = arith.maximumf %18, %19 : vector<8x256xf32>
      %c0_17 = arith.constant 0 : index
      %c0_18 = arith.constant 0 : index
      %21 = vector.load %arg7[%c0_17, %c0_18] : memref<8x256xf32, #tpu.memory_space<vmem>>, vector<8x256xf32>
      tpu.vector_store %arg7[%c0_17, %c0_18], %20 {strides = array<i32>} : memref<8x256xf32, #tpu.memory_space<vmem>>, vector<8x256xf32>,
    } else {
    }
    return
  }
  func.func @transform_0(%arg0: i32, %arg1: i32, %arg2: i32) -> (i32, i32) {
    %c0_i32 = arith.constant 0 : i32
    return %arg0, %arg2 : i32, i32
  }
  func.func @transform_1(%arg0: i32, %arg1: i32, %arg2: i32) -> (i32, i32) {
    %c0_i32 = arith.constant 0 : i32
    return %arg2, %arg1 : i32, i32
  }
  func.func @transform_2(%arg0: i32, %arg1: i32, %arg2: i32) -> (i32, i32) {
    %c0_i32 = arith.constant 0 : i32
    %c0_i32_0 = arith.constant 0 : i32
    return %c0_i32, %arg1 : i32, i32
  }
  func.func @transform_3(%arg0: i32, %arg1: i32, %arg2: i32) -> (i32, i32) {
    %c0_i32 = arith.constant 0 : i32
    %c0_i32_0 = arith.constant 0 : i32
    return %c0_i32, %arg1 : i32, i32
  }
  func.func @transform_4(%arg0: i32, %arg1: i32, %arg2: i32) -> (i32, i32) {
    %c0_i32 = arith.constant 0 : i32
    return %arg0, %arg1 : i32, i32
  }
}

module attributes {stable_mosaic.version = 11 : i64} {
  func.func @_fused_matmul_kernel(%arg0: i32, %arg1: i32, %arg2: i32, %arg3: memref<8x128xf32, #tpu.memory_space<vmem>>, %arg4: memref<128x256xf32, #tpu.memory_space<vmem>>, %arg5: memref<1x256xf32, #tpu.memory_space<vmem>>, %arg6: memref<1x256xf32, #tpu.memory_space<vmem>>, %arg7: memref<8x256xf32, #tpu.memory_space<vmem>>, %arg8: memref<8x256xf32, #tpu.memory_space<vmem>>) attributes {dimension_semantics = [#tpu.dimension_semantics<parallel>, #tpu.dimension_semantics<parallel>, #tpu.dimension_semantics<arbitrary>], iteration_bounds = array<i64: 1, 1, 1>, scalar_prefetch = 0 : i64, scratch_operands = 1 : i64, tpu.core_type = #tpu.core_type<tc>, window_params = [{transform_indices = @transform_0, window_bounds = array<i64: 8, 128>}, {transform_indices = @transform_1, window_bounds = array<i64: 128, 256>}, {transform_indices = @transform_2, window_bounds = array<i64: 1, 256>}, {transform_indices = @transform_3, window_bounds = array<i64: 1, 256>}, {transform_indices = @transform_4, window_bounds = array<i64: 8, 256>}]} {
    %c0_i32 = arith.constant 0 : i32
    %0 = arith.cmpi eq, %arg2, %c0_i32 : i32
    %1 = arith.extui %0 : i1 to i32
    %c0_i32_0 = arith.constant 0 : i32
    %2 = arith.cmpi ne, %1, %c0_i32_0 : i32
    scf.if %2 {
      %cst_10 = arith.constant 0.000000e+00 : f32
      %12 = vector.broadcast %cst_10 : f32 to vector<8x256xf32>
      %c0_11 = arith.constant 0 : index
      %c0_12 = arith.constant 0 : index
      %13 = vector.load %arg8[%c0_11, %c0_12] : memref<8x256xf32, #tpu.memory_space<vmem>>, vector<8x256xf32>
      tpu.vector_store %arg8[%c0_11, %c0_12], %12 {strides = array<i32>} : memref<8x256xf32, #tpu.memory_space<vmem>>, vector<8x256xf32>,
    } else {
    }
    %c0 = arith.constant 0 : index
    %c0_1 = arith.constant 0 : index
    %3 = vector.load %arg8[%c0, %c0_1] : memref<8x256xf32, #tpu.memory_space<vmem>>, vector<8x256xf32>
    %c0_2 = arith.constant 0 : index
    %c0_3 = arith.constant 0 : index
    %4 = vector.load %arg3[%c0_2, %c0_3] : memref<8x128xf32, #tpu.memory_space<vmem>>, vector<8x128xf32>
    %c0_4 = arith.constant 0 : index
    %c0_5 = arith.constant 0 : index
    %5 = vector.load %arg4[%c0_4, %c0_5] : memref<128x256xf32, #tpu.memory_space<vmem>>, vector<128x256xf32>
    %cst = arith.constant dense<0.000000e+00> : vector<8x256xf32>
    %6 = tpu.matmul %4, %5, %cst {dimension_numbers = #tpu.dot_dimension_numbers<[1], [0], [0], [1], [0, 0, 1, 1], [], []>} : vector<8x128xf32>, vector<128x256xf32>, vector<8x256xf32> -> vector<8x256xf32>
    %7 = arith.addf %3, %6 : vector<8x256xf32>
    %c0_6 = arith.constant 0 : index
    %c0_7 = arith.constant 0 : index
    %8 = vector.load %arg8[%c0_6, %c0_7] : memref<8x256xf32, #tpu.memory_space<vmem>>, vector<8x256xf32>
    tpu.vector_store %arg8[%c0_6, %c0_7], %7 {strides = array<i32>} : memref<8x256xf32, #tpu.memory_space<vmem>>, vector<8x256xf32>,
    %c0_i32_8 = arith.constant 0 : i32
    %9 = arith.cmpi eq, %arg2, %c0_i32_8 : i32
    %10 = arith.extui %9 : i1 to i32
    %c0_i32_9 = arith.constant 0 : i32
    %11 = arith.cmpi ne, %10, %c0_i32_9 : i32
    scf.if %11 {
      %c0_10 = arith.constant 0 : index
      %c0_11 = arith.constant 0 : index
      %12 = vector.load %arg8[%c0_10, %c0_11] : memref<8x256xf32, #tpu.memory_space<vmem>>, vector<8x256xf32>
      %c0_12 = arith.constant 0 : index
      %c0_13 = arith.constant 0 : index
      %13 = vector.load %arg5[%c0_12, %c0_13] : memref<1x256xf32, #tpu.memory_space<vmem>>, vector<1x256xf32>
      %14 = vector.broadcast %13 : vector<1x256xf32> to vector<8x256xf32>
      %15 = arith.mulf %12, %14 : vector<8x256xf32>
      %c0_14 = arith.constant 0 : index
      %c0_15 = arith.constant 0 : index
      %16 = vector.load %arg6[%c0_14, %c0_15] : memref<1x256xf32, #tpu.memory_space<vmem>>, vector<1x256xf32>
      %17 = vector.broadcast %16 : vector<1x256xf32> to vector<8x256xf32>
      %18 = arith.addf %15, %17 : vector<8x256xf32>
      %c0_16 = arith.constant 0 : index
      %c0_17 = arith.constant 0 : index
      %19 = vector.load %arg7[%c0_16, %c0_17] : memref<8x256xf32, #tpu.memory_space<vmem>>, vector<8x256xf32>
      tpu.vector_store %arg7[%c0_16, %c0_17], %18 {strides = array<i32>} : memref<8x256xf32, #tpu.memory_space<vmem>>, vector<8x256xf32>,
    } else {
    }
    return
  }
  func.func @transform_0(%arg0: i32, %arg1: i32, %arg2: i32) -> (i32, i32) {
    %c0_i32 = arith.constant 0 : i32
    return %arg0, %arg2 : i32, i32
  }
  func.func @transform_1(%arg0: i32, %arg1: i32, %arg2: i32) -> (i32, i32) {
    %c0_i32 = arith.constant 0 : i32
    return %arg2, %arg1 : i32, i32
  }
  func.func @transform_2(%arg0: i32, %arg1: i32, %arg2: i32) -> (i32, i32) {
    %c0_i32 = arith.constant 0 : i32
    %c0_i32_0 = arith.constant 0 : i32
    return %c0_i32, %arg1 : i32, i32
  }
  func.func @transform_3(%arg0: i32, %arg1: i32, %arg2: i32) -> (i32, i32) {
    %c0_i32 = arith.constant 0 : i32
    %c0_i32_0 = arith.constant 0 : i32
    return %c0_i32, %arg1 : i32, i32
  }
  func.func @transform_4(%arg0: i32, %arg1: i32, %arg2: i32) -> (i32, i32) {
    %c0_i32 = arith.constant 0 : i32
    return %arg0, %arg1 : i32, i32
  }
}

module attributes {stable_mosaic.version = 11 : i64} {
  func.func @_fused_matmul_kernel(%arg0: i32, %arg1: i32, %arg2: i32, %arg3: memref<8x512xf32, #tpu.memory_space<vmem>>, %arg4: memref<512x256xf32, #tpu.memory_space<vmem>>, %arg5: memref<1x256xf32, #tpu.memory_space<vmem>>, %arg6: memref<1x256xf32, #tpu.memory_space<vmem>>, %arg7: memref<8x256xf32, #tpu.memory_space<vmem>>, %arg8: memref<8x256xf32, #tpu.memory_space<vmem>>, %arg9: memref<8x256xf32, #tpu.memory_space<vmem>>) attributes {dimension_semantics = [#tpu.dimension_semantics<parallel>, #tpu.dimension_semantics<parallel>, #tpu.dimension_semantics<arbitrary>], iteration_bounds = array<i64: 1, 1, 5>, scalar_prefetch = 0 : i64, scratch_operands = 1 : i64, tpu.core_type = #tpu.core_type<tc>, window_params = [{transform_indices = @transform_0, window_bounds = array<i64: 8, 512>}, {transform_indices = @transform_1, window_bounds = array<i64: 512, 256>}, {transform_indices = @transform_2, window_bounds = array<i64: 1, 256>}, {transform_indices = @transform_3, window_bounds = array<i64: 1, 256>}, {transform_indices = @transform_4, window_bounds = array<i64: 8, 256>}, {transform_indices = @transform_5, window_bounds = array<i64: 8, 256>}]} {
    %c0_i32 = arith.constant 0 : i32
    %0 = arith.cmpi eq, %arg2, %c0_i32 : i32
    %1 = arith.extui %0 : i1 to i32
    %c0_i32_0 = arith.constant 0 : i32
    %2 = arith.cmpi ne, %1, %c0_i32_0 : i32
    scf.if %2 {
      %cst_9 = arith.constant 0.000000e+00 : f32
      %12 = vector.broadcast %cst_9 : f32 to vector<8x256xf32>
      %c0_10 = arith.constant 0 : index
      %c0_11 = arith.constant 0 : index
      %13 = vector.load %arg9[%c0_10, %c0_11] : memref<8x256xf32, #tpu.memory_space<vmem>>, vector<8x256xf32>
      tpu.vector_store %arg9[%c0_10, %c0_11], %12 {strides = array<i32>} : memref<8x256xf32, #tpu.memory_space<vmem>>, vector<8x256xf32>,
    } else {
    }
    %c0 = arith.constant 0 : index
    %c0_1 = arith.constant 0 : index
    %3 = vector.load %arg9[%c0, %c0_1] : memref<8x256xf32, #tpu.memory_space<vmem>>, vector<8x256xf32>
    %c0_2 = arith.constant 0 : index
    %c0_3 = arith.constant 0 : index
    %4 = vector.load %arg3[%c0_2, %c0_3] : memref<8x512xf32, #tpu.memory_space<vmem>>, vector<8x512xf32>
    %c0_4 = arith.constant 0 : index
    %c0_5 = arith.constant 0 : index
    %5 = vector.load %arg4[%c0_4, %c0_5] : memref<512x256xf32, #tpu.memory_space<vmem>>, vector<512x256xf32>
    %cst = arith.constant dense<0.000000e+00> : vector<8x256xf32>
    %6 = tpu.matmul %4, %5, %cst {dimension_numbers = #tpu.dot_dimension_numbers<[1], [0], [0], [1], [0, 0, 1, 1], [], []>} : vector<8x512xf32>, vector<512x256xf32>, vector<8x256xf32> -> vector<8x256xf32>
    %7 = arith.addf %3, %6 : vector<8x256xf32>
    %c0_6 = arith.constant 0 : index
    %c0_7 = arith.constant 0 : index
    %8 = vector.load %arg9[%c0_6, %c0_7] : memref<8x256xf32, #tpu.memory_space<vmem>>, vector<8x256xf32>
    tpu.vector_store %arg9[%c0_6, %c0_7], %7 {strides = array<i32>} : memref<8x256xf32, #tpu.memory_space<vmem>>, vector<8x256xf32>,
    %c4_i32 = arith.constant 4 : i32
    %9 = arith.cmpi eq, %arg2, %c4_i32 : i32
    %10 = arith.extui %9 : i1 to i32
    %c0_i32_8 = arith.constant 0 : i32
    %11 = arith.cmpi ne, %10, %c0_i32_8 : i32
    scf.if %11 {
      %c0_9 = arith.constant 0 : index
      %c0_10 = arith.constant 0 : index
      %12 = vector.load %arg9[%c0_9, %c0_10] : memref<8x256xf32, #tpu.memory_space<vmem>>, vector<8x256xf32>
      %c0_11 = arith.constant 0 : index
      %c0_12 = arith.constant 0 : index
      %13 = vector.load %arg5[%c0_11, %c0_12] : memref<1x256xf32, #tpu.memory_space<vmem>>, vector<1x256xf32>
      %14 = vector.broadcast %13 : vector<1x256xf32> to vector<8x256xf32>
      %15 = arith.mulf %12, %14 : vector<8x256xf32>
      %c0_13 = arith.constant 0 : index
      %c0_14 = arith.constant 0 : index
      %16 = vector.load %arg6[%c0_13, %c0_14] : memref<1x256xf32, #tpu.memory_space<vmem>>, vector<1x256xf32>
      %17 = vector.broadcast %16 : vector<1x256xf32> to vector<8x256xf32>
      %18 = arith.addf %15, %17 : vector<8x256xf32>
      %c0_15 = arith.constant 0 : index
      %c0_16 = arith.constant 0 : index
      %19 = vector.load %arg7[%c0_15, %c0_16] : memref<8x256xf32, #tpu.memory_space<vmem>>, vector<8x256xf32>
      %20 = arith.addf %18, %19 : vector<8x256xf32>
      %cst_17 = arith.constant 0.000000e+00 : f32
      %21 = vector.broadcast %cst_17 : f32 to vector<8x256xf32>
      %22 = arith.maximumf %20, %21 : vector<8x256xf32>
      %c0_18 = arith.constant 0 : index
      %c0_19 = arith.constant 0 : index
      %23 = vector.load %arg8[%c0_18, %c0_19] : memref<8x256xf32, #tpu.memory_space<vmem>>, vector<8x256xf32>
      tpu.vector_store %arg8[%c0_18, %c0_19], %22 {strides = array<i32>} : memref<8x256xf32, #tpu.memory_space<vmem>>, vector<8x256xf32>,
    } else {
    }
    return
  }
  func.func @transform_0(%arg0: i32, %arg1: i32, %arg2: i32) -> (i32, i32) {
    %c0_i32 = arith.constant 0 : i32
    return %arg0, %arg2 : i32, i32
  }
  func.func @transform_1(%arg0: i32, %arg1: i32, %arg2: i32) -> (i32, i32) {
    %c0_i32 = arith.constant 0 : i32
    return %arg2, %arg1 : i32, i32
  }
  func.func @transform_2(%arg0: i32, %arg1: i32, %arg2: i32) -> (i32, i32) {
    %c0_i32 = arith.constant 0 : i32
    %c0_i32_0 = arith.constant 0 : i32
    return %c0_i32, %arg1 : i32, i32
  }
  func.func @transform_3(%arg0: i32, %arg1: i32, %arg2: i32) -> (i32, i32) {
    %c0_i32 = arith.constant 0 : i32
    %c0_i32_0 = arith.constant 0 : i32
    return %c0_i32, %arg1 : i32, i32
  }
  func.func @transform_4(%arg0: i32, %arg1: i32, %arg2: i32) -> (i32, i32) {
    %c0_i32 = arith.constant 0 : i32
    return %arg0, %arg1 : i32, i32
  }
  func.func @transform_5(%arg0: i32, %arg1: i32, %arg2: i32) -> (i32, i32) {
    %c0_i32 = arith.constant 0 : i32
    return %arg0, %arg1 : i32, i32
  }
}

module attributes {stable_mosaic.version = 11 : i64} {
  func.func @_fused_matmul_kernel(%arg0: i32, %arg1: i32, %arg2: i32, %arg3: memref<8x512xf32, #tpu.memory_space<vmem>>, %arg4: memref<512x256xf32, #tpu.memory_space<vmem>>, %arg5: memref<1x256xf32, #tpu.memory_space<vmem>>, %arg6: memref<1x256xf32, #tpu.memory_space<vmem>>, %arg7: memref<8x256xf32, #tpu.memory_space<vmem>>, %arg8: memref<8x256xf32, #tpu.memory_space<vmem>>) attributes {dimension_semantics = [#tpu.dimension_semantics<parallel>, #tpu.dimension_semantics<parallel>, #tpu.dimension_semantics<arbitrary>], iteration_bounds = array<i64: 1, 2, 5>, scalar_prefetch = 0 : i64, scratch_operands = 1 : i64, tpu.core_type = #tpu.core_type<tc>, window_params = [{transform_indices = @transform_0, window_bounds = array<i64: 8, 512>}, {transform_indices = @transform_1, window_bounds = array<i64: 512, 256>}, {transform_indices = @transform_2, window_bounds = array<i64: 1, 256>}, {transform_indices = @transform_3, window_bounds = array<i64: 1, 256>}, {transform_indices = @transform_4, window_bounds = array<i64: 8, 256>}]} {
    %c0_i32 = arith.constant 0 : i32
    %0 = arith.cmpi eq, %arg2, %c0_i32 : i32
    %1 = arith.extui %0 : i1 to i32
    %c0_i32_0 = arith.constant 0 : i32
    %2 = arith.cmpi ne, %1, %c0_i32_0 : i32
    scf.if %2 {
      %cst_9 = arith.constant 0.000000e+00 : f32
      %12 = vector.broadcast %cst_9 : f32 to vector<8x256xf32>
      %c0_10 = arith.constant 0 : index
      %c0_11 = arith.constant 0 : index
      %13 = vector.load %arg8[%c0_10, %c0_11] : memref<8x256xf32, #tpu.memory_space<vmem>>, vector<8x256xf32>
      tpu.vector_store %arg8[%c0_10, %c0_11], %12 {strides = array<i32>} : memref<8x256xf32, #tpu.memory_space<vmem>>, vector<8x256xf32>,
    } else {
    }
    %c0 = arith.constant 0 : index
    %c0_1 = arith.constant 0 : index
    %3 = vector.load %arg8[%c0, %c0_1] : memref<8x256xf32, #tpu.memory_space<vmem>>, vector<8x256xf32>
    %c0_2 = arith.constant 0 : index
    %c0_3 = arith.constant 0 : index
    %4 = vector.load %arg3[%c0_2, %c0_3] : memref<8x512xf32, #tpu.memory_space<vmem>>, vector<8x512xf32>
    %c0_4 = arith.constant 0 : index
    %c0_5 = arith.constant 0 : index
    %5 = vector.load %arg4[%c0_4, %c0_5] : memref<512x256xf32, #tpu.memory_space<vmem>>, vector<512x256xf32>
    %cst = arith.constant dense<0.000000e+00> : vector<8x256xf32>
    %6 = tpu.matmul %4, %5, %cst {dimension_numbers = #tpu.dot_dimension_numbers<[1], [0], [0], [1], [0, 0, 1, 1], [], []>} : vector<8x512xf32>, vector<512x256xf32>, vector<8x256xf32> -> vector<8x256xf32>
    %7 = arith.addf %3, %6 : vector<8x256xf32>
    %c0_6 = arith.constant 0 : index
    %c0_7 = arith.constant 0 : index
    %8 = vector.load %arg8[%c0_6, %c0_7] : memref<8x256xf32, #tpu.memory_space<vmem>>, vector<8x256xf32>
    tpu.vector_store %arg8[%c0_6, %c0_7], %7 {strides = array<i32>} : memref<8x256xf32, #tpu.memory_space<vmem>>, vector<8x256xf32>,
    %c4_i32 = arith.constant 4 : i32
    %9 = arith.cmpi eq, %arg2, %c4_i32 : i32
    %10 = arith.extui %9 : i1 to i32
    %c0_i32_8 = arith.constant 0 : i32
    %11 = arith.cmpi ne, %10, %c0_i32_8 : i32
    scf.if %11 {
      %c0_9 = arith.constant 0 : index
      %c0_10 = arith.constant 0 : index
      %12 = vector.load %arg8[%c0_9, %c0_10] : memref<8x256xf32, #tpu.memory_space<vmem>>, vector<8x256xf32>
      %c0_11 = arith.constant 0 : index
      %c0_12 = arith.constant 0 : index
      %13 = vector.load %arg5[%c0_11, %c0_12] : memref<1x256xf32, #tpu.memory_space<vmem>>, vector<1x256xf32>
      %14 = vector.broadcast %13 : vector<1x256xf32> to vector<8x256xf32>
      %15 = arith.mulf %12, %14 : vector<8x256xf32>
      %c0_13 = arith.constant 0 : index
      %c0_14 = arith.constant 0 : index
      %16 = vector.load %arg6[%c0_13, %c0_14] : memref<1x256xf32, #tpu.memory_space<vmem>>, vector<1x256xf32>
      %17 = vector.broadcast %16 : vector<1x256xf32> to vector<8x256xf32>
      %18 = arith.addf %15, %17 : vector<8x256xf32>
      %cst_15 = arith.constant 0.000000e+00 : f32
      %19 = vector.broadcast %cst_15 : f32 to vector<8x256xf32>
      %20 = arith.maximumf %18, %19 : vector<8x256xf32>
      %c0_16 = arith.constant 0 : index
      %c0_17 = arith.constant 0 : index
      %21 = vector.load %arg7[%c0_16, %c0_17] : memref<8x256xf32, #tpu.memory_space<vmem>>, vector<8x256xf32>
      tpu.vector_store %arg7[%c0_16, %c0_17], %20 {strides = array<i32>} : memref<8x256xf32, #tpu.memory_space<vmem>>, vector<8x256xf32>,
    } else {
    }
    return
  }
  func.func @transform_0(%arg0: i32, %arg1: i32, %arg2: i32) -> (i32, i32) {
    %c0_i32 = arith.constant 0 : i32
    return %arg0, %arg2 : i32, i32
  }
  func.func @transform_1(%arg0: i32, %arg1: i32, %arg2: i32) -> (i32, i32) {
    %c0_i32 = arith.constant 0 : i32
    return %arg2, %arg1 : i32, i32
  }
  func.func @transform_2(%arg0: i32, %arg1: i32, %arg2: i32) -> (i32, i32) {
    %c0_i32 = arith.constant 0 : i32
    %c0_i32_0 = arith.constant 0 : i32
    return %c0_i32, %arg1 : i32, i32
  }
  func.func @transform_3(%arg0: i32, %arg1: i32, %arg2: i32) -> (i32, i32) {
    %c0_i32 = arith.constant 0 : i32
    %c0_i32_0 = arith.constant 0 : i32
    return %c0_i32, %arg1 : i32, i32
  }
  func.func @transform_4(%arg0: i32, %arg1: i32, %arg2: i32) -> (i32, i32) {
    %c0_i32 = arith.constant 0 : i32
    return %arg0, %arg1 : i32, i32
  }
}

module attributes {stable_mosaic.version = 11 : i64} {
  func.func @_fused_matmul_kernel(%arg0: i32, %arg1: i32, %arg2: i32, %arg3: memref<8x256xf32, #tpu.memory_space<vmem>>, %arg4: memref<256x256xf32, #tpu.memory_space<vmem>>, %arg5: memref<1x256xf32, #tpu.memory_space<vmem>>, %arg6: memref<1x256xf32, #tpu.memory_space<vmem>>, %arg7: memref<8x256xf32, #tpu.memory_space<vmem>>, %arg8: memref<8x256xf32, #tpu.memory_space<vmem>>) attributes {dimension_semantics = [#tpu.dimension_semantics<parallel>, #tpu.dimension_semantics<parallel>, #tpu.dimension_semantics<arbitrary>], iteration_bounds = array<i64: 1, 2, 1>, scalar_prefetch = 0 : i64, scratch_operands = 1 : i64, tpu.core_type = #tpu.core_type<tc>, window_params = [{transform_indices = @transform_0, window_bounds = array<i64: 8, 256>}, {transform_indices = @transform_1, window_bounds = array<i64: 256, 256>}, {transform_indices = @transform_2, window_bounds = array<i64: 1, 256>}, {transform_indices = @transform_3, window_bounds = array<i64: 1, 256>}, {transform_indices = @transform_4, window_bounds = array<i64: 8, 256>}]} {
    %c0_i32 = arith.constant 0 : i32
    %0 = arith.cmpi eq, %arg2, %c0_i32 : i32
    %1 = arith.extui %0 : i1 to i32
    %c0_i32_0 = arith.constant 0 : i32
    %2 = arith.cmpi ne, %1, %c0_i32_0 : i32
    scf.if %2 {
      %cst_10 = arith.constant 0.000000e+00 : f32
      %12 = vector.broadcast %cst_10 : f32 to vector<8x256xf32>
      %c0_11 = arith.constant 0 : index
      %c0_12 = arith.constant 0 : index
      %13 = vector.load %arg8[%c0_11, %c0_12] : memref<8x256xf32, #tpu.memory_space<vmem>>, vector<8x256xf32>
      tpu.vector_store %arg8[%c0_11, %c0_12], %12 {strides = array<i32>} : memref<8x256xf32, #tpu.memory_space<vmem>>, vector<8x256xf32>,
    } else {
    }
    %c0 = arith.constant 0 : index
    %c0_1 = arith.constant 0 : index
    %3 = vector.load %arg8[%c0, %c0_1] : memref<8x256xf32, #tpu.memory_space<vmem>>, vector<8x256xf32>
    %c0_2 = arith.constant 0 : index
    %c0_3 = arith.constant 0 : index
    %4 = vector.load %arg3[%c0_2, %c0_3] : memref<8x256xf32, #tpu.memory_space<vmem>>, vector<8x256xf32>
    %c0_4 = arith.constant 0 : index
    %c0_5 = arith.constant 0 : index
    %5 = vector.load %arg4[%c0_4, %c0_5] : memref<256x256xf32, #tpu.memory_space<vmem>>, vector<256x256xf32>
    %cst = arith.constant dense<0.000000e+00> : vector<8x256xf32>
    %6 = tpu.matmul %4, %5, %cst {dimension_numbers = #tpu.dot_dimension_numbers<[1], [0], [0], [1], [0, 0, 1, 1], [], []>} : vector<8x256xf32>, vector<256x256xf32>, vector<8x256xf32> -> vector<8x256xf32>
    %7 = arith.addf %3, %6 : vector<8x256xf32>
    %c0_6 = arith.constant 0 : index
    %c0_7 = arith.constant 0 : index
    %8 = vector.load %arg8[%c0_6, %c0_7] : memref<8x256xf32, #tpu.memory_space<vmem>>, vector<8x256xf32>
    tpu.vector_store %arg8[%c0_6, %c0_7], %7 {strides = array<i32>} : memref<8x256xf32, #tpu.memory_space<vmem>>, vector<8x256xf32>,
    %c0_i32_8 = arith.constant 0 : i32
    %9 = arith.cmpi eq, %arg2, %c0_i32_8 : i32
    %10 = arith.extui %9 : i1 to i32
    %c0_i32_9 = arith.constant 0 : i32
    %11 = arith.cmpi ne, %10, %c0_i32_9 : i32
    scf.if %11 {
      %c0_10 = arith.constant 0 : index
      %c0_11 = arith.constant 0 : index
      %12 = vector.load %arg8[%c0_10, %c0_11] : memref<8x256xf32, #tpu.memory_space<vmem>>, vector<8x256xf32>
      %c0_12 = arith.constant 0 : index
      %c0_13 = arith.constant 0 : index
      %13 = vector.load %arg5[%c0_12, %c0_13] : memref<1x256xf32, #tpu.memory_space<vmem>>, vector<1x256xf32>
      %14 = vector.broadcast %13 : vector<1x256xf32> to vector<8x256xf32>
      %15 = arith.mulf %12, %14 : vector<8x256xf32>
      %c0_14 = arith.constant 0 : index
      %c0_15 = arith.constant 0 : index
      %16 = vector.load %arg6[%c0_14, %c0_15] : memref<1x256xf32, #tpu.memory_space<vmem>>, vector<1x256xf32>
      %17 = vector.broadcast %16 : vector<1x256xf32> to vector<8x256xf32>
      %18 = arith.addf %15, %17 : vector<8x256xf32>
      %c0_16 = arith.constant 0 : index
      %c0_17 = arith.constant 0 : index
      %19 = vector.load %arg7[%c0_16, %c0_17] : memref<8x256xf32, #tpu.memory_space<vmem>>, vector<8x256xf32>
      tpu.vector_store %arg7[%c0_16, %c0_17], %18 {strides = array<i32>} : memref<8x256xf32, #tpu.memory_space<vmem>>, vector<8x256xf32>,
    } else {
    }
    return
  }
  func.func @transform_0(%arg0: i32, %arg1: i32, %arg2: i32) -> (i32, i32) {
    %c0_i32 = arith.constant 0 : i32
    return %arg0, %arg2 : i32, i32
  }
  func.func @transform_1(%arg0: i32, %arg1: i32, %arg2: i32) -> (i32, i32) {
    %c0_i32 = arith.constant 0 : i32
    return %arg2, %arg1 : i32, i32
  }
  func.func @transform_2(%arg0: i32, %arg1: i32, %arg2: i32) -> (i32, i32) {
    %c0_i32 = arith.constant 0 : i32
    %c0_i32_0 = arith.constant 0 : i32
    return %c0_i32, %arg1 : i32, i32
  }
  func.func @transform_3(%arg0: i32, %arg1: i32, %arg2: i32) -> (i32, i32) {
    %c0_i32 = arith.constant 0 : i32
    %c0_i32_0 = arith.constant 0 : i32
    return %c0_i32, %arg1 : i32, i32
  }
  func.func @transform_4(%arg0: i32, %arg1: i32, %arg2: i32) -> (i32, i32) {
    %c0_i32 = arith.constant 0 : i32
    return %arg0, %arg1 : i32, i32
  }
}

module attributes {stable_mosaic.version = 11 : i64} {
  func.func @_fused_matmul_kernel(%arg0: i32, %arg1: i32, %arg2: i32, %arg3: memref<8x512xf32, #tpu.memory_space<vmem>>, %arg4: memref<512x256xf32, #tpu.memory_space<vmem>>, %arg5: memref<1x256xf32, #tpu.memory_space<vmem>>, %arg6: memref<1x256xf32, #tpu.memory_space<vmem>>, %arg7: memref<8x256xf32, #tpu.memory_space<vmem>>, %arg8: memref<8x256xf32, #tpu.memory_space<vmem>>, %arg9: memref<8x256xf32, #tpu.memory_space<vmem>>) attributes {dimension_semantics = [#tpu.dimension_semantics<parallel>, #tpu.dimension_semantics<parallel>, #tpu.dimension_semantics<arbitrary>], iteration_bounds = array<i64: 1, 2, 9>, scalar_prefetch = 0 : i64, scratch_operands = 1 : i64, tpu.core_type = #tpu.core_type<tc>, window_params = [{transform_indices = @transform_0, window_bounds = array<i64: 8, 512>}, {transform_indices = @transform_1, window_bounds = array<i64: 512, 256>}, {transform_indices = @transform_2, window_bounds = array<i64: 1, 256>}, {transform_indices = @transform_3, window_bounds = array<i64: 1, 256>}, {transform_indices = @transform_4, window_bounds = array<i64: 8, 256>}, {transform_indices = @transform_5, window_bounds = array<i64: 8, 256>}]} {
    %c0_i32 = arith.constant 0 : i32
    %0 = arith.cmpi eq, %arg2, %c0_i32 : i32
    %1 = arith.extui %0 : i1 to i32
    %c0_i32_0 = arith.constant 0 : i32
    %2 = arith.cmpi ne, %1, %c0_i32_0 : i32
    scf.if %2 {
      %cst_9 = arith.constant 0.000000e+00 : f32
      %12 = vector.broadcast %cst_9 : f32 to vector<8x256xf32>
      %c0_10 = arith.constant 0 : index
      %c0_11 = arith.constant 0 : index
      %13 = vector.load %arg9[%c0_10, %c0_11] : memref<8x256xf32, #tpu.memory_space<vmem>>, vector<8x256xf32>
      tpu.vector_store %arg9[%c0_10, %c0_11], %12 {strides = array<i32>} : memref<8x256xf32, #tpu.memory_space<vmem>>, vector<8x256xf32>,
    } else {
    }
    %c0 = arith.constant 0 : index
    %c0_1 = arith.constant 0 : index
    %3 = vector.load %arg9[%c0, %c0_1] : memref<8x256xf32, #tpu.memory_space<vmem>>, vector<8x256xf32>
    %c0_2 = arith.constant 0 : index
    %c0_3 = arith.constant 0 : index
    %4 = vector.load %arg3[%c0_2, %c0_3] : memref<8x512xf32, #tpu.memory_space<vmem>>, vector<8x512xf32>
    %c0_4 = arith.constant 0 : index
    %c0_5 = arith.constant 0 : index
    %5 = vector.load %arg4[%c0_4, %c0_5] : memref<512x256xf32, #tpu.memory_space<vmem>>, vector<512x256xf32>
    %cst = arith.constant dense<0.000000e+00> : vector<8x256xf32>
    %6 = tpu.matmul %4, %5, %cst {dimension_numbers = #tpu.dot_dimension_numbers<[1], [0], [0], [1], [0, 0, 1, 1], [], []>} : vector<8x512xf32>, vector<512x256xf32>, vector<8x256xf32> -> vector<8x256xf32>
    %7 = arith.addf %3, %6 : vector<8x256xf32>
    %c0_6 = arith.constant 0 : index
    %c0_7 = arith.constant 0 : index
    %8 = vector.load %arg9[%c0_6, %c0_7] : memref<8x256xf32, #tpu.memory_space<vmem>>, vector<8x256xf32>
    tpu.vector_store %arg9[%c0_6, %c0_7], %7 {strides = array<i32>} : memref<8x256xf32, #tpu.memory_space<vmem>>, vector<8x256xf32>,
    %c8_i32 = arith.constant 8 : i32
    %9 = arith.cmpi eq, %arg2, %c8_i32 : i32
    %10 = arith.extui %9 : i1 to i32
    %c0_i32_8 = arith.constant 0 : i32
    %11 = arith.cmpi ne, %10, %c0_i32_8 : i32
    scf.if %11 {
      %c0_9 = arith.constant 0 : index
      %c0_10 = arith.constant 0 : index
      %12 = vector.load %arg9[%c0_9, %c0_10] : memref<8x256xf32, #tpu.memory_space<vmem>>, vector<8x256xf32>
      %c0_11 = arith.constant 0 : index
      %c0_12 = arith.constant 0 : index
      %13 = vector.load %arg5[%c0_11, %c0_12] : memref<1x256xf32, #tpu.memory_space<vmem>>, vector<1x256xf32>
      %14 = vector.broadcast %13 : vector<1x256xf32> to vector<8x256xf32>
      %15 = arith.mulf %12, %14 : vector<8x256xf32>
      %c0_13 = arith.constant 0 : index
      %c0_14 = arith.constant 0 : index
      %16 = vector.load %arg6[%c0_13, %c0_14] : memref<1x256xf32, #tpu.memory_space<vmem>>, vector<1x256xf32>
      %17 = vector.broadcast %16 : vector<1x256xf32> to vector<8x256xf32>
      %18 = arith.addf %15, %17 : vector<8x256xf32>
      %c0_15 = arith.constant 0 : index
      %c0_16 = arith.constant 0 : index
      %19 = vector.load %arg7[%c0_15, %c0_16] : memref<8x256xf32, #tpu.memory_space<vmem>>, vector<8x256xf32>
      %20 = arith.addf %18, %19 : vector<8x256xf32>
      %cst_17 = arith.constant 0.000000e+00 : f32
      %21 = vector.broadcast %cst_17 : f32 to vector<8x256xf32>
      %22 = arith.maximumf %20, %21 : vector<8x256xf32>
      %c0_18 = arith.constant 0 : index
      %c0_19 = arith.constant 0 : index
      %23 = vector.load %arg8[%c0_18, %c0_19] : memref<8x256xf32, #tpu.memory_space<vmem>>, vector<8x256xf32>
      tpu.vector_store %arg8[%c0_18, %c0_19], %22 {strides = array<i32>} : memref<8x256xf32, #tpu.memory_space<vmem>>, vector<8x256xf32>,
    } else {
    }
    return
  }
  func.func @transform_0(%arg0: i32, %arg1: i32, %arg2: i32) -> (i32, i32) {
    %c0_i32 = arith.constant 0 : i32
    return %arg0, %arg2 : i32, i32
  }
  func.func @transform_1(%arg0: i32, %arg1: i32, %arg2: i32) -> (i32, i32) {
    %c0_i32 = arith.constant 0 : i32
    return %arg2, %arg1 : i32, i32
  }
  func.func @transform_2(%arg0: i32, %arg1: i32, %arg2: i32) -> (i32, i32) {
    %c0_i32 = arith.constant 0 : i32
    %c0_i32_0 = arith.constant 0 : i32
    return %c0_i32, %arg1 : i32, i32
  }
  func.func @transform_3(%arg0: i32, %arg1: i32, %arg2: i32) -> (i32, i32) {
    %c0_i32 = arith.constant 0 : i32
    %c0_i32_0 = arith.constant 0 : i32
    return %c0_i32, %arg1 : i32, i32
  }
  func.func @transform_4(%arg0: i32, %arg1: i32, %arg2: i32) -> (i32, i32) {
    %c0_i32 = arith.constant 0 : i32
    return %arg0, %arg1 : i32, i32
  }
  func.func @transform_5(%arg0: i32, %arg1: i32, %arg2: i32) -> (i32, i32) {
    %c0_i32 = arith.constant 0 : i32
    return %arg0, %arg1 : i32, i32
  }
}

module attributes {stable_mosaic.version = 11 : i64} {
  func.func @_avgpool_kernel(%arg0: i32, %arg1: memref<2x1x512xf32, #tpu.memory_space<vmem>>, %arg2: memref<2x512xf32, #tpu.memory_space<vmem>>) attributes {dimension_semantics = [#tpu.dimension_semantics<arbitrary>], iteration_bounds = array<i64: 1>, scalar_prefetch = 0 : i64, scratch_operands = 0 : i64, tpu.core_type = #tpu.core_type<tc>, window_params = [{pipeline_mode = #tpu.pipeline_mode<synchronous>, transform_indices = @transform_0, window_bounds = array<i64: 2, 1, 512>}, {pipeline_mode = #tpu.pipeline_mode<synchronous>, transform_indices = @transform_1, window_bounds = array<i64: 2, 512>}]} {
    %c0 = arith.constant 0 : index
    %c0_0 = arith.constant 0 : index
    %c0_1 = arith.constant 0 : index
    %0 = vector.load %arg1[%c0, %c0_0, %c0_1] : memref<2x1x512xf32, #tpu.memory_space<vmem>>, vector<2x1x512xf32>
    %cst = arith.constant dense<0.000000e+00> : vector<2x512xf32>
    %1 = vector.multi_reduction <add>, %0, %cst [1] : vector<2x1x512xf32> to vector<2x512xf32>
    %cst_2 = arith.constant 1.000000e+00 : f32
    %2 = vector.broadcast %cst_2 : f32 to vector<2x512xf32>
    %3 = arith.mulf %1, %2 : vector<2x512xf32>
    %c0_3 = arith.constant 0 : index
    %c0_4 = arith.constant 0 : index
    %4 = vector.load %arg2[%c0_3, %c0_4] : memref<2x512xf32, #tpu.memory_space<vmem>>, vector<2x512xf32>
    tpu.vector_store %arg2[%c0_3, %c0_4], %3 {strides = array<i32>} : memref<2x512xf32, #tpu.memory_space<vmem>>, vector<2x512xf32>,
    return
  }
  func.func @transform_0(%arg0: i32) -> (i32, i32, i32) {
    %c0_i32 = arith.constant 0 : i32
    %c0_i32_0 = arith.constant 0 : i32
    %c0_i32_1 = arith.constant 0 : i32
    %c0_i32_2 = arith.constant 0 : i32
    return %c0_i32, %c0_i32_0, %c0_i32_1 : i32, i32, i32
  }
  func.func @transform_1(%arg0: i32) -> (i32, i32) {
    %c0_i32 = arith.constant 0 : i32
    %c0_i32_0 = arith.constant 0 : i32
    %c0_i32_1 = arith.constant 0 : i32
    return %c0_i32, %c0_i32_0 : i32, i32
  }
}

</mosaic_0001>

<llo_original>
// kernel: _lambda_.15
$region0: #{_lambda_.15}
  #allocation0 [shape = 'u32[]', space=smem, size = 0x4, offset = 0x4, fixed_abs, tag = 'smem constant byte address 0x4 - core index']
  #allocation1 [shape = 'u32[144,128]{1,0:T(1,128)}', space=vmem, size = 0x12000, scoped, tag = 'internal scratch']
  %s0 = inlined_call_operand.vmem [shape: f32[9,128,64], index: 0, kind: input, shape index: {}]
  %s1 = inlined_call_operand.vmem [shape: f32[128,64], index: 1, kind: output, shape index: {}]
  %s2 = sld [smem:[#allocation0]]
  $region14: #{_lambda_.15} parent=0
    _
  %s4 = ssub.s32 1, %s2
  %s5 = scalar_select 0, %s4, %s2
  // Predicated region
  $region2: #{_lambda_.15} parent=0 // pred_check
    _
  $region3: #{_lambda_.15} parent=0 // pred_check_branch
    %7 = sbr.rel (0) target = $region5
  $region4: #{_lambda_.15} parent=0 // pred_region
    _
  $region5: #{_lambda_.15} parent=0 // pred_fallthru
    _
  %v8 = vld [vmem:[%s0] sm:$0xff]
  %v9 = vld [vmem:[%s0 + $0x8] sm:$0xff]
  %v10 = vld [vmem:[%s0 + $0x10] sm:$0xff]
  %v11 = vld [vmem:[%s0 + $0x18] sm:$0xff]
  %v12 = vld [vmem:[%s0 + $0x20] sm:$0xff]
  %v13 = vld [vmem:[%s0 + $0x28] sm:$0xff]
  %v14 = vld [vmem:[%s0 + $0x30] sm:$0xff]
  %v15 = vld [vmem:[%s0 + $0x38] sm:$0xff]
  %v16 = vld [vmem:[%s0 + $0x40] sm:$0xff]
  %v17 = vld [vmem:[%s0 + $0x48] sm:$0xff]
  %v18 = vld [vmem:[%s0 + $0x50] sm:$0xff]
  %v19 = vld [vmem:[%s0 + $0x58] sm:$0xff]
  %v20 = vld [vmem:[%s0 + $0x60] sm:$0xff]
  %v21 = vld [vmem:[%s0 + $0x68] sm:$0xff]
  %v22 = vld [vmem:[%s0 + $0x70] sm:$0xff]
  %v23 = vld [vmem:[%s0 + $0x78] sm:$0xff]
  %s24 = scalar_lea.vmem %s0, 128
  %v25 = vld [vmem:[%s24] sm:$0xff]
  %v26 = vld [vmem:[%s24 + $0x8] sm:$0xff]
  %v27 = vld [vmem:[%s24 + $0x10] sm:$0xff]
  %v28 = vld [vmem:[%s24 + $0x18] sm:$0xff]
  %v29 = vld [vmem:[%s24 + $0x20] sm:$0xff]
  %v30 = vld [vmem:[%s24 + $0x28] sm:$0xff]
  %v31 = vld [vmem:[%s24 + $0x30] sm:$0xff]
  %v32 = vld [vmem:[%s24 + $0x38] sm:$0xff]
  %v33 = vld [vmem:[%s24 + $0x40] sm:$0xff]
  %v34 = vld [vmem:[%s24 + $0x48] sm:$0xff]
  %v35 = vld [vmem:[%s24 + $0x50] sm:$0xff]
  %v36 = vld [vmem:[%s24 + $0x58] sm:$0xff]
  %v37 = vld [vmem:[%s24 + $0x60] sm:$0xff]
  %v38 = vld [vmem:[%s24 + $0x68] sm:$0xff]
  %v39 = vld [vmem:[%s24 + $0x70] sm:$0xff]
  %v40 = vld [vmem:[%s24 + $0x78] sm:$0xff]
  %v41 = vmax.f32 %v8, %v25
  %v42 = vmax.f32 %v9, %v26
  %v43 = vmax.f32 %v10, %v27
  %v44 = vmax.f32 %v11, %v28
  %v45 = vmax.f32 %v12, %v29
  %v46 = vmax.f32 %v13, %v30
  %v47 = vmax.f32 %v14, %v31
  %v48 = vmax.f32 %v15, %v32
  %v49 = vmax.f32 %v16, %v33
  %v50 = vmax.f32 %v17, %v34
  %v51 = vmax.f32 %v18, %v35
  %v52 = vmax.f32 %v19, %v36
  %v53 = vmax.f32 %v20, %v37
  %v54 = vmax.f32 %v21, %v38
  %v55 = vmax.f32 %v22, %v39
  %v56 = vmax.f32 %v23, %v40
  %s57 = scalar_lea.vmem %s0, 256
  %v58 = vld [vmem:[%s57] sm:$0xff]
  %v59 = vld [vmem:[%s57 + $0x8] sm:$0xff]
  %v60 = vld [vmem:[%s57 + $0x10] sm:$0xff]
  %v61 = vld [vmem:[%s57 + $0x18] sm:$0xff]
  %v62 = vld [vmem:[%s57 + $0x20] sm:$0xff]
  %v63 = vld [vmem:[%s57 + $0x28] sm:$0xff]
  %v64 = vld [vmem:[%s57 + $0x30] sm:$0xff]
  %v65 = vld [vmem:[%s57 + $0x38] sm:$0xff]
  %v66 = vld [vmem:[%s57 + $0x40] sm:$0xff]
  %v67 = vld [vmem:[%s57 + $0x48] sm:$0xff]
  %v68 = vld [vmem:[%s57 + $0x50] sm:$0xff]
  %v69 = vld [vmem:[%s57 + $0x58] sm:$0xff]
  %v70 = vld [vmem:[%s57 + $0x60] sm:$0xff]
  %v71 = vld [vmem:[%s57 + $0x68] sm:$0xff]
  %v72 = vld [vmem:[%s57 + $0x70] sm:$0xff]
  %v73 = vld [vmem:[%s57 + $0x78] sm:$0xff]
  %v74 = vmax.f32 %v41, %v58
  %v75 = vmax.f32 %v42, %v59
  %v76 = vmax.f32 %v43, %v60
  %v77 = vmax.f32 %v44, %v61
  %v78 = vmax.f32 %v45, %v62
  %v79 = vmax.f32 %v46, %v63
  %v80 = vmax.f32 %v47, %v64
  %v81 = vmax.f32 %v48, %v65
  %v82 = vmax.f32 %v49, %v66
  %v83 = vmax.f32 %v50, %v67
  %v84 = vmax.f32 %v51, %v68
  %v85 = vmax.f32 %v52, %v69
  %v86 = vmax.f32 %v53, %v70
  %v87 = vmax.f32 %v54, %v71
  %v88 = vmax.f32 %v55, %v72
  %v89 = vmax.f32 %v56, %v73
  %s90 = scalar_lea.vmem %s0, 384
  %v91 = vld [vmem:[%s90] sm:$0xff]
  %v92 = vld [vmem:[%s90 + $0x8] sm:$0xff]
  %v93 = vld [vmem:[%s90 + $0x10] sm:$0xff]
  %v94 = vld [vmem:[%s90 + $0x18] sm:$0xff]
  %v95 = vld [vmem:[%s90 + $0x20] sm:$0xff]
  %v96 = vld [vmem:[%s90 + $0x28] sm:$0xff]
  %v97 = vld [vmem:[%s90 + $0x30] sm:$0xff]
  %v98 = vld [vmem:[%s90 + $0x38] sm:$0xff]
  %v99 = vld [vmem:[%s90 + $0x40] sm:$0xff]
  %v100 = vld [vmem:[%s90 + $0x48] sm:$0xff]
  %v101 = vld [vmem:[%s90 + $0x50] sm:$0xff]
  %v102 = vld [vmem:[%s90 + $0x58] sm:$0xff]
  %v103 = vld [vmem:[%s90 + $0x60] sm:$0xff]
  %v104 = vld [vmem:[%s90 + $0x68] sm:$0xff]
  %v105 = vld [vmem:[%s90 + $0x70] sm:$0xff]
  %v106 = vld [vmem:[%s90 + $0x78] sm:$0xff]
  %v107 = vmax.f32 %v74, %v91
  %v108 = vmax.f32 %v75, %v92
  %v109 = vmax.f32 %v76, %v93
  %v110 = vmax.f32 %v77, %v94
  %v111 = vmax.f32 %v78, %v95
  %v112 = vmax.f32 %v79, %v96
  %v113 = vmax.f32 %v80, %v97
  %v114 = vmax.f32 %v81, %v98
  %v115 = vmax.f32 %v82, %v99
  %v116 = vmax.f32 %v83, %v100
  %v117 = vmax.f32 %v84, %v101
  %v118 = vmax.f32 %v85, %v102
  %v119 = vmax.f32 %v86, %v103
  %v120 = vmax.f32 %v87, %v104
  %v121 = vmax.f32 %v88, %v105
  %v122 = vmax.f32 %v89, %v106
  %s123 = scalar_lea.vmem %s0, 512
  %v124 = vld [vmem:[%s123] sm:$0xff]
  %v125 = vld [vmem:[%s123 + $0x8] sm:$0xff]
  %v126 = vld [vmem:[%s123 + $0x10] sm:$0xff]
  %v127 = vld [vmem:[%s123 + $0x18] sm:$0xff]
  %v128 = vld [vmem:[%s123 + $0x20] sm:$0xff]
  %v129 = vld [vmem:[%s123 + $0x28] sm:$0xff]
  %v130 = vld [vmem:[%s123 + $0x30] sm:$0xff]
  %v131 = vld [vmem:[%s123 + $0x38] sm:$0xff]
  %v132 = vld [vmem:[%s123 + $0x40] sm:$0xff]
  %v133 = vld [vmem:[%s123 + $0x48] sm:$0xff]
  %v134 = vld [vmem:[%s123 + $0x50] sm:$0xff]
  %v135 = vld [vmem:[%s123 + $0x58] sm:$0xff]
  %v136 = vld [vmem:[%s123 + $0x60] sm:$0xff]
  %v137 = vld [vmem:[%s123 + $0x68] sm:$0xff]
  %v138 = vld [vmem:[%s123 + $0x70] sm:$0xff]
  %v139 = vld [vmem:[%s123 + $0x78] sm:$0xff]
  %v140 = vmax.f32 %v107, %v124
  %v141 = vmax.f32 %v108, %v125
  %v142 = vmax.f32 %v109, %v126
  %v143 = vmax.f32 %v110, %v127
  %v144 = vmax.f32 %v111, %v128
  %v145 = vmax.f32 %v112, %v129
  %v146 = vmax.f32 %v113, %v130
  %v147 = vmax.f32 %v114, %v131
  %v148 = vmax.f32 %v115, %v132
  %v149 = vmax.f32 %v116, %v133
  %v150 = vmax.f32 %v117, %v134
  %v151 = vmax.f32 %v118, %v135
  %v152 = vmax.f32 %v119, %v136
  %v153 = vmax.f32 %v120, %v137
  %v154 = vmax.f32 %v121, %v138
  %v155 = vmax.f32 %v122, %v139
  %s156 = scalar_lea.vmem %s0, 640
  %v157 = vld [vmem:[%s156] sm:$0xff]
  %v158 = vld [vmem:[%s156 + $0x8] sm:$0xff]
  %v159 = vld [vmem:[%s156 + $0x10] sm:$0xff]
  %v160 = vld [vmem:[%s156 + $0x18] sm:$0xff]
  %v161 = vld [vmem:[%s156 + $0x20] sm:$0xff]
  %v162 = vld [vmem:[%s156 + $0x28] sm:$0xff]
  %v163 = vld [vmem:[%s156 + $0x30] sm:$0xff]
  %v164 = vld [vmem:[%s156 + $0x38] sm:$0xff]
  %v165 = vld [vmem:[%s156 + $0x40] sm:$0xff]
  %v166 = vld [vmem:[%s156 + $0x48] sm:$0xff]
  %v167 = vld [vmem:[%s156 + $0x50] sm:$0xff]
  %v168 = vld [vmem:[%s156 + $0x58] sm:$0xff]
  %v169 = vld [vmem:[%s156 + $0x60] sm:$0xff]
  %v170 = vld [vmem:[%s156 + $0x68] sm:$0xff]
  %v171 = vld [vmem:[%s156 + $0x70] sm:$0xff]
  %v172 = vld [vmem:[%s156 + $0x78] sm:$0xff]
  %v173 = vmax.f32 %v140, %v157
  %v174 = vmax.f32 %v141, %v158
  %v175 = vmax.f32 %v142, %v159
  %v176 = vmax.f32 %v143, %v160
  %v177 = vmax.f32 %v144, %v161
  %v178 = vmax.f32 %v145, %v162
  %v179 = vmax.f32 %v146, %v163
  %v180 = vmax.f32 %v147, %v164
  %v181 = vmax.f32 %v148, %v165
  %v182 = vmax.f32 %v149, %v166
  %v183 = vmax.f32 %v150, %v167
  %v184 = vmax.f32 %v151, %v168
  %v185 = vmax.f32 %v152, %v169
  %v186 = vmax.f32 %v153, %v170
  %v187 = vmax.f32 %v154, %v171
  %v188 = vmax.f32 %v155, %v172
  %s189 = scalar_lea.vmem %s0, 768
  %v190 = vld [vmem:[%s189] sm:$0xff]
  %v191 = vld [vmem:[%s189 + $0x8] sm:$0xff]
  %v192 = vld [vmem:[%s189 + $0x10] sm:$0xff]
  %v193 = vld [vmem:[%s189 + $0x18] sm:$0xff]
  %v194 = vld [vmem:[%s189 + $0x20] sm:$0xff]
  %v195 = vld [vmem:[%s189 + $0x28] sm:$0xff]
  %v196 = vld [vmem:[%s189 + $0x30] sm:$0xff]
  %v197 = vld [vmem:[%s189 + $0x38] sm:$0xff]
  %v198 = vld [vmem:[%s189 + $0x40] sm:$0xff]
  %v199 = vld [vmem:[%s189 + $0x48] sm:$0xff]
  %v200 = vld [vmem:[%s189 + $0x50] sm:$0xff]
  %v201 = vld [vmem:[%s189 + $0x58] sm:$0xff]
  %v202 = vld [vmem:[%s189 + $0x60] sm:$0xff]
  %v203 = vld [vmem:[%s189 + $0x68] sm:$0xff]
  %v204 = vld [vmem:[%s189 + $0x70] sm:$0xff]
  %v205 = vld [vmem:[%s189 + $0x78] sm:$0xff]
  %v206 = vmax.f32 %v173, %v190
  %v207 = vmax.f32 %v174, %v191
  %v208 = vmax.f32 %v175, %v192
  %v209 = vmax.f32 %v176, %v193
  %v210 = vmax.f32 %v177, %v194
  %v211 = vmax.f32 %v178, %v195
  %v212 = vmax.f32 %v179, %v196
  %v213 = vmax.f32 %v180, %v197
  %v214 = vmax.f32 %v181, %v198
  %v215 = vmax.f32 %v182, %v199
  %v216 = vmax.f32 %v183, %v200
  %v217 = vmax.f32 %v184, %v201
  %v218 = vmax.f32 %v185, %v202
  %v219 = vmax.f32 %v186, %v203
  %v220 = vmax.f32 %v187, %v204
  %v221 = vmax.f32 %v188, %v205
  %s222 = scalar_lea.vmem %s0, 896
  %v223 = vld [vmem:[%s222] sm:$0xff]
  %v224 = vld [vmem:[%s222 + $0x8] sm:$0xff]
  %v225 = vld [vmem:[%s222 + $0x10] sm:$0xff]
  %v226 = vld [vmem:[%s222 + $0x18] sm:$0xff]
  %v227 = vld [vmem:[%s222 + $0x20] sm:$0xff]
  %v228 = vld [vmem:[%s222 + $0x28] sm:$0xff]
  %v229 = vld [vmem:[%s222 + $0x30] sm:$0xff]
  %v230 = vld [vmem:[%s222 + $0x38] sm:$0xff]
  %v231 = vld [vmem:[%s222 + $0x40] sm:$0xff]
  %v232 = vld [vmem:[%s222 + $0x48] sm:$0xff]
  %v233 = vld [vmem:[%s222 + $0x50] sm:$0xff]
  %v234 = vld [vmem:[%s222 + $0x58] sm:$0xff]
  %v235 = vld [vmem:[%s222 + $0x60] sm:$0xff]
  %v236 = vld [vmem:[%s222 + $0x68] sm:$0xff]
  %v237 = vld [vmem:[%s222 + $0x70] sm:$0xff]
  %v238 = vld [vmem:[%s222 + $0x78] sm:$0xff]
  %v239 = vmax.f32 %v206, %v223
  %v240 = vmax.f32 %v207, %v224
  %v241 = vmax.f32 %v208, %v225
  %v242 = vmax.f32 %v209, %v226
  %v243 = vmax.f32 %v210, %v227
  %v244 = vmax.f32 %v211, %v228
  %v245 = vmax.f32 %v212, %v229
  %v246 = vmax.f32 %v213, %v230
  %v247 = vmax.f32 %v214, %v231
  %v248 = vmax.f32 %v215, %v232
  %v249 = vmax.f32 %v216, %v233
  %v250 = vmax.f32 %v217, %v234
  %v251 = vmax.f32 %v218, %v235
  %v252 = vmax.f32 %v219, %v236
  %v253 = vmax.f32 %v220, %v237
  %v254 = vmax.f32 %v221, %v238
  %s255 = scalar_lea.vmem %s0, 1024
  %v256 = vld [vmem:[%s255] sm:$0xff]
  %v257 = vld [vmem:[%s255 + $0x8] sm:$0xff]
  %v258 = vld [vmem:[%s255 + $0x10] sm:$0xff]
  %v259 = vld [vmem:[%s255 + $0x18] sm:$0xff]
  %v260 = vld [vmem:[%s255 + $0x20] sm:$0xff]
  %v261 = vld [vmem:[%s255 + $0x28] sm:$0xff]
  %v262 = vld [vmem:[%s255 + $0x30] sm:$0xff]
  %v263 = vld [vmem:[%s255 + $0x38] sm:$0xff]
  %v264 = vld [vmem:[%s255 + $0x40] sm:$0xff]
  %v265 = vld [vmem:[%s255 + $0x48] sm:$0xff]
  %v266 = vld [vmem:[%s255 + $0x50] sm:$0xff]
  %v267 = vld [vmem:[%s255 + $0x58] sm:$0xff]
  %v268 = vld [vmem:[%s255 + $0x60] sm:$0xff]
  %v269 = vld [vmem:[%s255 + $0x68] sm:$0xff]
  %v270 = vld [vmem:[%s255 + $0x70] sm:$0xff]
  %v271 = vld [vmem:[%s255 + $0x78] sm:$0xff]
  %v272 = vmax.f32 %v239, %v256
  %v273 = vmax.f32 %v240, %v257
  %v274 = vmax.f32 %v241, %v258
  %v275 = vmax.f32 %v242, %v259
  %v276 = vmax.f32 %v243, %v260
  %v277 = vmax.f32 %v244, %v261
  %v278 = vmax.f32 %v245, %v262
  %v279 = vmax.f32 %v246, %v263
  %v280 = vmax.f32 %v247, %v264
  %v281 = vmax.f32 %v248, %v265
  %v282 = vmax.f32 %v249, %v266
  %v283 = vmax.f32 %v250, %v267
  %v284 = vmax.f32 %v251, %v268
  %v285 = vmax.f32 %v252, %v269
  %v286 = vmax.f32 %v253, %v270
  %v287 = vmax.f32 %v254, %v271
  %vm288 = vcmask 523264
  %289 = vst.msk [vmem:[%s1] sm:$0xff] %vm288, %v272
  %290 = vst.msk [vmem:[%s1 + $0x8] sm:$0xff] %vm288, %v273
  %291 = vst.msk [vmem:[%s1 + $0x10] sm:$0xff] %vm288, %v274
  %292 = vst.msk [vmem:[%s1 + $0x18] sm:$0xff] %vm288, %v275
  %293 = vst.msk [vmem:[%s1 + $0x20] sm:$0xff] %vm288, %v276
  %294 = vst.msk [vmem:[%s1 + $0x28] sm:$0xff] %vm288, %v277
  %295 = vst.msk [vmem:[%s1 + $0x30] sm:$0xff] %vm288, %v278
  %296 = vst.msk [vmem:[%s1 + $0x38] sm:$0xff] %vm288, %v279
  %297 = vst.msk [vmem:[%s1 + $0x40] sm:$0xff] %vm288, %v280
  %298 = vst.msk [vmem:[%s1 + $0x48] sm:$0xff] %vm288, %v281
  %299 = vst.msk [vmem:[%s1 + $0x50] sm:$0xff] %vm288, %v282
  %300 = vst.msk [vmem:[%s1 + $0x58] sm:$0xff] %vm288, %v283
  %301 = vst.msk [vmem:[%s1 + $0x60] sm:$0xff] %vm288, %v284
  %302 = vst.msk [vmem:[%s1 + $0x68] sm:$0xff] %vm288, %v285
  %303 = vst.msk [vmem:[%s1 + $0x70] sm:$0xff] %vm288, %v286
  %304 = vst.msk [vmem:[%s1 + $0x78] sm:$0xff] %vm288, %v287
  // Predicated region
  $region6: #{_lambda_.15} parent=0 // pred_check
    _
  $region7: #{_lambda_.15} parent=0 // pred_check_branch
    %306 = sbr.rel (0) target = $region9
  $region8: #{_lambda_.15} parent=0 // pred_region
    _
  $region9: #{_lambda_.15} parent=0 // pred_fallthru
    _
  // Predicated region
  $region10: #{_lambda_.15} parent=0 // pred_check
    _
  $region11: #{_lambda_.15} parent=0 // pred_check_branch
    %308 = sbr.rel (0) target = $region13
  $region12: #{_lambda_.15} parent=0 // pred_region
    _
  $region13: #{_lambda_.15} parent=0 // pred_fallthru
    _

// kernel: _lambda_.14
$region0: #{_lambda_.14}
  #allocation0 [shape = 'u32[]', space=smem, size = 0x4, offset = 0x4, fixed_abs, tag = 'smem constant byte address 0x4 - core index']
  #allocation1 [shape = 'u32[144,128]{1,0:T(1,128)}', space=vmem, size = 0x12000, scoped, tag = 'internal scratch']
  #allocation2 [shape = 'f32[256,128]{1,0:T(8,128)}', space=vmem, size = 0x20000, scoped, tag = 'scratch operand']
  %s0 = inlined_call_operand.vmem [shape: f32[512,256], index: 0, kind: input, shape index: {}]
  %s1 = inlined_call_operand.vmem [shape: f32[256,128], index: 1, kind: input, shape index: {}]
  %s2 = inlined_call_operand.vmem [shape: f32[1,128], index: 2, kind: input, shape index: {}]
  %s3 = inlined_call_operand.vmem [shape: f32[1,128], index: 3, kind: input, shape index: {}]
  %s4 = inlined_call_operand.vmem [shape: f32[512,128], index: 4, kind: output, shape index: {}]
  %s5 = sld [smem:[#allocation0]]
  $region57: #{_lambda_.14} parent=0
    _
  %s7 = ssub.s32 1, %s5
  %s8 = scalar_select 0, %s7, %s5
  loop: start=0, step=1, limit=4
  $region2: #{_lambda_.14} parent=0 // loop_pre_header
    _
  $region3: #{_lambda_.14} parent=0 // loop_header
    %s10 = sphi 0, %s14
    %p11 = scmp.ge.s32.totalorder %s10, 4
    %s17 = sphi 0, %s36
    %s18 = sphi 0, %s32
    %s19 = sphi 0, %s28
    %s20 = sphi 0, %s17
    %s21 = sphi 0, %s18
    %s22 = sphi 0, %s19
    %s23 = sphi 0, %s20
    %s24 = sphi 0, %s21
    %s25 = sphi 0, %s22
    %s41 = sphi 0, %s43
    %s44 = sphi 0, %s41
    %s45 = sphi 0, %s44
    %s61 = sphi 0, %s45
    %s69 = sphi 0, %s71
    %s72 = sphi 0, %s69
    %s73 = sphi 0, %s72
    %s89 = sphi 0, %s73
    %s95 = sphi 0, %s97
    %s98 = sphi 0, %s95
    %s99 = sphi 0, %s98
    %s115 = sphi 0, %s99
    %s121 = sphi 0, %s123
    %s124 = sphi 0, %s121
    %s125 = sphi 0, %s124
    %s141 = sphi 0, %s125
    %s149 = sphi 0, %s151
    %s152 = sphi 0, %s149
    %s153 = sphi 0, %s152
    %s169 = sphi 0, %s153
  $region4: #{_lambda_.14} parent=0 // loop_header_branch
    %13 = sbr.rel (%p11) target = $region8
  $region5: #{_lambda_.14} parent=0 // loop_body
    %s15 = ssub.s32 %s10, 1
    %s16 = ssub.s32 %s10, 2
    %s26 = sadd.s32 1, %s19
    %p27 = scmp.ge.s32.totalorder %s26, 1
    %s28 = scalar_select %p27, 0, %s26
    %s29 = sadd.s32 1, %s18
    %s30 = scalar_select %p27, %s29, %s18
    %p31 = scmp.ge.s32.totalorder %s30, 1
    %s32 = scalar_select %p31, 0, %s30
    %s33 = sadd.s32 1, %s17
    %s34 = scalar_select %p31, %s33, %s17
    %p35 = scmp.ge.s32.totalorder %s34, 2
    %s36 = scalar_select %p35, 0, %s34
    %s37 = ssub.s32 %s17, %s36
    %s38 = ssub.s32 %s19, %s28
    %s39 = sor.u32 %s37, %s38
    %p40 = scmp.eq.s32.totalorder %s39, 0
    %s42 = sadd.s32 %s41, 1
    %s43 = scalar_select %p40, %s41, %s42
    %p46 = pneg %p40
    %p47 = scmp.eq.s32.totalorder %s10, 1
    %p48 = por %p46, %p47
    %p49 = scmp.ne.s32.totalorder %s41, %s44
    %p50 = scmp.eq.s32.totalorder %s10, 0
    %p51 = por %p49, %p50
    %p52 = scmp.ne.s32.totalorder %s41, %s44
    %p53 = scmp.eq.s32.totalorder %s15, 1
    %p54 = por %p52, %p53
    %p55 = scmp.ne.s32.totalorder %s44, %s45
    %p56 = scmp.eq.s32.totalorder %s15, 0
    %p57 = por %p55, %p56
    %p58 = scmp.ne.s32.totalorder %s44, %s45
    %p59 = scmp.eq.s32.totalorder %s16, 1
    %p60 = por %p58, %p59
    %p62 = scmp.ne.s32.totalorder %s45, %s61
    %p63 = scmp.eq.s32.totalorder %s16, 0
    %p64 = por %p62, %p63
    %s65 = ssub.s32 %s19, %s28
    %s66 = ssub.s32 %s18, %s32
    %s67 = sor.u32 %s65, %s66
    %p68 = scmp.eq.s32.totalorder %s67, 0
    %s70 = sadd.s32 %s69, 1
    %s71 = scalar_select %p68, %s69, %s70
    %p74 = pneg %p68
    %p75 = scmp.eq.s32.totalorder %s10, 1
    %p76 = por %p74, %p75
    %p77 = scmp.ne.s32.totalorder %s69, %s72
    %p78 = scmp.eq.s32.totalorder %s10, 0
    %p79 = por %p77, %p78
    %p80 = scmp.ne.s32.totalorder %s69, %s72
    %p81 = scmp.eq.s32.totalorder %s15, 1
    %p82 = por %p80, %p81
    %p83 = scmp.ne.s32.totalorder %s72, %s73
    %p84 = scmp.eq.s32.totalorder %s15, 0
    %p85 = por %p83, %p84
    %p86 = scmp.ne.s32.totalorder %s72, %s73
    %p87 = scmp.eq.s32.totalorder %s16, 1
    %p88 = por %p86, %p87
    %p90 = scmp.ne.s32.totalorder %s73, %s89
    %p91 = scmp.eq.s32.totalorder %s16, 0
    %p92 = por %p90, %p91
    %s93 = ssub.s32 %s18, %s32
    %p94 = scmp.eq.s32.totalorder %s93, 0
    %s96 = sadd.s32 %s95, 1
    %s97 = scalar_select %p94, %s95, %s96
    %p100 = pneg %p94
    %p101 = scmp.eq.s32.totalorder %s10, 1
    %p102 = por %p100, %p101
    %p103 = scmp.ne.s32.totalorder %s95, %s98
    %p104 = scmp.eq.s32.totalorder %s10, 0
    %p105 = por %p103, %p104
    %p106 = scmp.ne.s32.totalorder %s95, %s98
    %p107 = scmp.eq.s32.totalorder %s15, 1
    %p108 = por %p106, %p107
    %p109 = scmp.ne.s32.totalorder %s98, %s99
    %p110 = scmp.eq.s32.totalorder %s15, 0
    %p111 = por %p109, %p110
    %p112 = scmp.ne.s32.totalorder %s98, %s99
    %p113 = scmp.eq.s32.totalorder %s16, 1
    %p114 = por %p112, %p113
    %p116 = scmp.ne.s32.totalorder %s99, %s115
    %p117 = scmp.eq.s32.totalorder %s16, 0
    %p118 = por %p116, %p117
    %s119 = ssub.s32 %s18, %s32
    %p120 = scmp.eq.s32.totalorder %s119, 0
    %s122 = sadd.s32 %s121, 1
    %s123 = scalar_select %p120, %s121, %s122
    %p126 = pneg %p120
    %p127 = scmp.eq.s32.totalorder %s10, 1
    %p128 = por %p126, %p127
    %p129 = scmp.ne.s32.totalorder %s121, %s124
    %p130 = scmp.eq.s32.totalorder %s10, 0
    %p131 = por %p129, %p130
    %p132 = scmp.ne.s32.totalorder %s121, %s124
    %p133 = scmp.eq.s32.totalorder %s15, 1
    %p134 = por %p132, %p133
    %p135 = scmp.ne.s32.totalorder %s124, %s125
    %p136 = scmp.eq.s32.totalorder %s15, 0
    %p137 = por %p135, %p136
    %p138 = scmp.ne.s32.totalorder %s124, %s125
    %p139 = scmp.eq.s32.totalorder %s16, 1
    %p140 = por %p138, %p139
    %p142 = scmp.ne.s32.totalorder %s125, %s141
    %p143 = scmp.eq.s32.totalorder %s16, 0
    %p144 = por %p142, %p143
    %s145 = ssub.s32 %s17, %s36
    %s146 = ssub.s32 %s18, %s32
    %s147 = sor.u32 %s145, %s146
    %p148 = scmp.eq.s32.totalorder %s147, 0
    %s150 = sadd.s32 %s149, 1
    %s151 = scalar_select %p148, %s149, %s150
    %p154 = pneg %p148
    %p155 = scmp.eq.s32.totalorder %s10, 1
    %p156 = por %p154, %p155
    %p157 = scmp.ne.s32.totalorder %s149, %s152
    %p158 = scmp.eq.s32.totalorder %s10, 0
    %p159 = por %p157, %p158
    %p160 = scmp.ne.s32.totalorder %s149, %s152
    %p161 = scmp.eq.s32.totalorder %s15, 1
    %p162 = por %p160, %p161
    %p163 = scmp.ne.s32.totalorder %s152, %s153
    %p164 = scmp.eq.s32.totalorder %s15, 0
    %p165 = por %p163, %p164
    %p166 = scmp.ne.s32.totalorder %s152, %s153
    %p167 = scmp.eq.s32.totalorder %s16, 1
    %p168 = por %p166, %p167
    %p170 = scmp.ne.s32.totalorder %s153, %s169
    %p171 = scmp.eq.s32.totalorder %s16, 0
    %p172 = por %p170, %p171
    %p173 = scmp.le.s32.totalorder 1, %s10
    %p174 = scmp.lt.s32.totalorder %s10, 3
    %p175 = pnand %p173, %p174
    %p176 = pneg %p175
    // Predicated region
    $region9: #{_lambda_.14} parent=5 // pred_check
      _
    $region10: #{_lambda_.14} parent=5 // pred_check_branch
      %178 = sbr.rel (%p175) target = $region12
    $region11: #{_lambda_.14} parent=5 // pred_region
      %s179 = ssub.s32 %s10, 1
      // Predicated region
      $region13: #{_lambda_.14} parent=11 // pred_check
        %p180 = pneg %p85
      $region14: #{_lambda_.14} parent=11 // pred_check_branch
        %182 = sbr.rel (%p180) target = $region16
      $region15: #{_lambda_.14} parent=11 // pred_region
        %s183 = smul.u32 32, %s22
        %p184 = scmp.lt.s32.totalorder %s183, 31
        %s185 = scalar_select %p184, %s183, 31
        %p186 = scmp.lt.s32.totalorder %s21, 0
        %s187 = scalar_select %p186, %s21, 0
        %s188 = sadd.s32 %s187, %s185
        %s189 = smul.addr %s188, 8
        %s190 = scalar_lea.vmem %s1, %s189
        %s191 = smul.u32 32, %s22
      $region16: #{_lambda_.14} parent=11 // pred_fallthru
        _
      // Predicated region
      $region17: #{_lambda_.14} parent=11 // pred_check
        %p192 = pneg %p111
      $region18: #{_lambda_.14} parent=11 // pred_check_branch
        %194 = sbr.rel (%p192) target = $region20
      $region19: #{_lambda_.14} parent=11 // pred_region
        %p195 = scmp.lt.s32.totalorder %s21, 0
        %s196 = scalar_select %p195, %s21, 0
        %s197 = scalar_lea.vmem %s2, %s196
      $region20: #{_lambda_.14} parent=11 // pred_fallthru
        _
      // Predicated region
      $region21: #{_lambda_.14} parent=11 // pred_check
        %p198 = pneg %p137
      $region22: #{_lambda_.14} parent=11 // pred_check_branch
        %200 = sbr.rel (%p198) target = $region24
      $region23: #{_lambda_.14} parent=11 // pred_region
        %p201 = scmp.lt.s32.totalorder %s21, 0
        %s202 = scalar_select %p201, %s21, 0
        %s203 = scalar_lea.vmem %s3, %s202
      $region24: #{_lambda_.14} parent=11 // pred_fallthru
        _
    $region12: #{_lambda_.14} parent=5 // pred_fallthru
      _
    %p204 = scmp.lt.s32.totalorder %s10, 2
    // Predicated region
    $region25: #{_lambda_.14} parent=5 // pred_check
      %p205 = pneg %p204
    $region26: #{_lambda_.14} parent=5 // pred_check_branch
      %207 = sbr.rel (%p205) target = $region28
    $region27: #{_lambda_.14} parent=5 // pred_region
      // Predicated region
      $region29: #{_lambda_.14} parent=27 // pred_check
        %p208 = pneg %p51
      $region30: #{_lambda_.14} parent=27 // pred_check_branch
        %210 = sbr.rel (%p208) target = $region32
      $region31: #{_lambda_.14} parent=27 // pred_region
        %s211 = smul.u32 32, %s17
        %s212 = smul.u32 2, %s19
        %p213 = scmp.lt.s32.totalorder %s211, 63
        %s214 = scalar_select %p213, %s211, 63
        %p215 = scmp.lt.s32.totalorder %s212, 1
        %s216 = scalar_select %p215, %s212, 1
        %s217 = smul.addr %s214, 2
        %s218 = sadd.s32 %s216, %s217
        %s219 = smul.addr %s218, 8
        %s220 = scalar_lea.vmem %s0, %s219
        %s221 = smul.u32 32, %s17
        %s222 = smul.u32 2, %s19
      $region32: #{_lambda_.14} parent=27 // pred_fallthru
        _
    $region28: #{_lambda_.14} parent=5 // pred_fallthru
      _
    %p223 = scmp.le.s32.totalorder 1, %s10
    %p224 = scmp.lt.s32.totalorder %s10, 3
    %p225 = pnand %p223, %p224
    %p226 = pneg %p225
    // Predicated region
    $region33: #{_lambda_.14} parent=5 // pred_check
      _
    $region34: #{_lambda_.14} parent=5 // pred_check_branch
      %228 = sbr.rel (%p225) target = $region36
    $region35: #{_lambda_.14} parent=5 // pred_region
      %s229 = ssub.s32 %s10, 1
      %s230 = smul.u32 32, %s20
      %s231 = smul.u32 2, %s22
      %p232 = scmp.lt.s32.totalorder %s230, 63
      %s233 = scalar_select %p232, %s230, 63
      %p234 = scmp.lt.s32.totalorder %s231, 1
      %s235 = scalar_select %p234, %s231, 1
      %s236 = smul.addr %s233, 2
      %s237 = sadd.s32 %s235, %s236
      %s238 = smul.addr %s237, 8
      %s239 = scalar_lea.vmem %s0, %s238
      %p240 = pneg %p57
      %p241 = pneg %p54
      %s242 = smul.u32 32, %s22
      %p243 = scmp.lt.s32.totalorder %s242, 31
      %s244 = scalar_select %p243, %s242, 31
      %p245 = scmp.lt.s32.totalorder %s21, 0
      %s246 = scalar_select %p245, %s21, 0
      %s247 = sadd.s32 %s246, %s244
      %s248 = smul.addr %s247, 8
      %s249 = scalar_lea.vmem %s1, %s248
      %p250 = pneg %p85
      %p251 = pneg %p82
      %p252 = scmp.lt.s32.totalorder %s21, 0
      %s253 = scalar_select %p252, %s21, 0
      %s254 = scalar_lea.vmem %s2, %s253
      %p255 = pneg %p111
      %p256 = pneg %p108
      %p257 = scmp.lt.s32.totalorder %s21, 0
      %s258 = scalar_select %p257, %s21, 0
      %s259 = scalar_lea.vmem %s3, %s258
      %p260 = pneg %p137
      %p261 = pneg %p134
      %p262 = pneg %p165
      %p263 = pneg %p162
      %s264 = smul.u32 32, %s20
      %p265 = scmp.lt.s32.totalorder %s264, 63
      %s266 = scalar_select %p265, %s264, 63
      %p267 = scmp.lt.s32.totalorder %s21, 0
      %s268 = scalar_select %p267, %s21, 0
      %s269 = sadd.s32 %s268, %s266
      %s270 = smul.addr %s269, 8
      %s271 = scalar_lea.vmem %s4, %s270
      %s272 = smul.u32 32, %s20
      %s273 = smul.u32 2, %s22
      %p274 = scmp.lt.s32.totalorder %s272, 63
      %s275 = scalar_select %p274, %s272, 63
      %p276 = scmp.lt.s32.totalorder %s273, 1
      %s277 = scalar_select %p276, %s273, 1
      %s278 = smul.addr %s275, 2
      %s279 = sadd.s32 %s277, %s278
      %s280 = smul.addr %s279, 8
      %s281 = scalar_lea.vmem %s0, %s280
      %s282 = smul.u32 32, %s20
      %s283 = smul.u32 2, %s22
      %s284 = smul.u32 32, %s22
      %p285 = scmp.lt.s32.totalorder %s284, 31
      %s286 = scalar_select %p285, %s284, 31
      %p287 = scmp.lt.s32.totalorder %s21, 0
      %s288 = scalar_select %p287, %s21, 0
      %s289 = sadd.s32 %s288, %s286
      %s290 = smul.addr %s289, 8
      %s291 = scalar_lea.vmem %s1, %s290
      %s292 = smul.u32 32, %s22
      %p293 = scmp.lt.s32.totalorder %s21, 0
      %s294 = scalar_select %p293, %s21, 0
      %s295 = scalar_lea.vmem %s2, %s294
      %p296 = scmp.lt.s32.totalorder %s21, 0
      %s297 = scalar_select %p296, %s21, 0
      %s298 = scalar_lea.vmem %s3, %s297
      %s299 = smul.u32 32, %s20
      %p300 = scmp.lt.s32.totalorder %s299, 63
      %s301 = scalar_select %p300, %s299, 63
      %p302 = scmp.lt.s32.totalorder %s21, 0
      %s303 = scalar_select %p302, %s21, 0
      %s304 = sadd.s32 %s303, %s301
      %s305 = smul.addr %s304, 8
      %s306 = scalar_lea.vmem %s4, %s305
      %s307 = smul.u32 32, %s20
      %p308 = scmp.eq.s32.totalorder %s22, 0
      // Predicated region
      $region37: #{_lambda_.14} parent=35 // pred_check
        %p309 = pneg %p308
      $region38: #{_lambda_.14} parent=35 // pred_check_branch
        %311 = sbr.rel (%p309) target = $region40
      $region39: #{_lambda_.14} parent=35 // pred_region
        %312 = vst [vmem:[#allocation2] sm:$0xff] 0.0
        %313 = vst [vmem:[#allocation2 + $0x8] sm:$0xff] 0.0
        %314 = vst [vmem:[#allocation2 + $0x10] sm:$0xff] 0.0
        %315 = vst [vmem:[#allocation2 + $0x18] sm:$0xff] 0.0
        %316 = vst [vmem:[#allocation2 + $0x20] sm:$0xff] 0.0
        %317 = vst [vmem:[#allocation2 + $0x28] sm:$0xff] 0.0
        %318 = vst [vmem:[#allocation2 + $0x30] sm:$0xff] 0.0
        %319 = vst [vmem:[#allocation2 + $0x38] sm:$0xff] 0.0
        %320 = vst [vmem:[#allocation2 + $0x40] sm:$0xff] 0.0
        %321 = vst [vmem:[#allocation2 + $0x48] sm:$0xff] 0.0
        %322 = vst [vmem:[#allocation2 + $0x50] sm:$0xff] 0.0
        %323 = vst [vmem:[#allocation2 + $0x58] sm:$0xff] 0.0
        %324 = vst [vmem:[#allocation2 + $0x60] sm:$0xff] 0.0
        %325 = vst [vmem:[#allocation2 + $0x68] sm:$0xff] 0.0
        %326 = vst [vmem:[#allocation2 + $0x70] sm:$0xff] 0.0
        %327 = vst [vmem:[#allocation2 + $0x78] sm:$0xff] 0.0
        %328 = vst [vmem:[#allocation2 + $0x80] sm:$0xff] 0.0
        %329 = vst [vmem:[#allocation2 + $0x88] sm:$0xff] 0.0
        %330 = vst [vmem:[#allocation2 + $0x90] sm:$0xff] 0.0
        %331 = vst [vmem:[#allocation2 + $0x98] sm:$0xff] 0.0
        %332 = vst [vmem:[#allocation2 + $0xa0] sm:$0xff] 0.0
        %333 = vst [vmem:[#allocation2 + $0xa8] sm:$0xff] 0.0
        %334 = vst [vmem:[#allocation2 + $0xb0] sm:$0xff] 0.0
        %335 = vst [vmem:[#allocation2 + $0xb8] sm:$0xff] 0.0
        %336 = vst [vmem:[#allocation2 + $0xc0] sm:$0xff] 0.0
        %337 = vst [vmem:[#allocation2 + $0xc8] sm:$0xff] 0.0
        %338 = vst [vmem:[#allocation2 + $0xd0] sm:$0xff] 0.0
        %339 = vst [vmem:[#allocation2 + $0xd8] sm:$0xff] 0.0
        %340 = vst [vmem:[#allocation2 + $0xe0] sm:$0xff] 0.0
        %341 = vst [vmem:[#allocation2 + $0xe8] sm:$0xff] 0.0
        %342 = vst [vmem:[#allocation2 + $0xf0] sm:$0xff] 0.0
        %343 = vst [vmem:[#allocation2 + $0xf8] sm:$0xff] 0.0
      $region40: #{_lambda_.14} parent=35 // pred_fallthru
        _
      %v344 = vld [vmem:[#allocation2] sm:$0xff]
      %v345 = vld [vmem:[#allocation2 + $0x8] sm:$0xff]
      %v346 = vld [vmem:[#allocation2 + $0x10] sm:$0xff]
      %v347 = vld [vmem:[#allocation2 + $0x18] sm:$0xff]
      %v348 = vld [vmem:[#allocation2 + $0x20] sm:$0xff]
      %v349 = vld [vmem:[#allocation2 + $0x28] sm:$0xff]
      %v350 = vld [vmem:[#allocation2 + $0x30] sm:$0xff]
      %v351 = vld [vmem:[#allocation2 + $0x38] sm:$0xff]
      %v352 = vld [vmem:[#allocation2 + $0x40] sm:$0xff]
      %v353 = vld [vmem:[#allocation2 + $0x48] sm:$0xff]
      %v354 = vld [vmem:[#allocation2 + $0x50] sm:$0xff]
      %v355 = vld [vmem:[#allocation2 + $0x58] sm:$0xff]
      %v356 = vld [vmem:[#allocation2 + $0x60] sm:$0xff]
      %v357 = vld [vmem:[#allocation2 + $0x68] sm:$0xff]
      %v358 = vld [vmem:[#allocation2 + $0x70] sm:$0xff]
      %v359 = vld [vmem:[#allocation2 + $0x78] sm:$0xff]
      %v360 = vld [vmem:[#allocation2 + $0x80] sm:$0xff]
      %v361 = vld [vmem:[#allocation2 + $0x88] sm:$0xff]
      %v362 = vld [vmem:[#allocation2 + $0x90] sm:$0xff]
      %v363 = vld [vmem:[#allocation2 + $0x98] sm:$0xff]
      %v364 = vld [vmem:[#allocation2 + $0xa0] sm:$0xff]
      %v365 = vld [vmem:[#allocation2 + $0xa8] sm:$0xff]
      %v366 = vld [vmem:[#allocation2 + $0xb0] sm:$0xff]
      %v367 = vld [vmem:[#allocation2 + $0xb8] sm:$0xff]
      %v368 = vld [vmem:[#allocation2 + $0xc0] sm:$0xff]
      %v369 = vld [vmem:[#allocation2 + $0xc8] sm:$0xff]
      %v370 = vld [vmem:[#allocation2 + $0xd0] sm:$0xff]
      %v371 = vld [vmem:[#allocation2 + $0xd8] sm:$0xff]
      %v372 = vld [vmem:[#allocation2 + $0xe0] sm:$0xff]
      %v373 = vld [vmem:[#allocation2 + $0xe8] sm:$0xff]
      %v374 = vld [vmem:[#allocation2 + $0xf0] sm:$0xff]
      %v375 = vld [vmem:[#allocation2 + $0xf8] sm:$0xff]
      %v376 = vld [vmem:[%s281] sm:$0xff]
      %v377 = vld [vmem:[%s281 + $0x8] sm:$0xff]
      %v378 = vld [vmem:[%s281 + $0x10] sm:$0xff]
      %v379 = vld [vmem:[%s281 + $0x18] sm:$0xff]
      %v380 = vld [vmem:[%s281 + $0x20] sm:$0xff]
      %v381 = vld [vmem:[%s281 + $0x28] sm:$0xff]
      %v382 = vld [vmem:[%s281 + $0x30] sm:$0xff]
      %v383 = vld [vmem:[%s281 + $0x38] sm:$0xff]
      %v384 = vld [vmem:[%s281 + $0x40] sm:$0xff]
      %v385 = vld [vmem:[%s281 + $0x48] sm:$0xff]
      %v386 = vld [vmem:[%s281 + $0x50] sm:$0xff]
      %v387 = vld [vmem:[%s281 + $0x58] sm:$0xff]
      %v388 = vld [vmem:[%s281 + $0x60] sm:$0xff]
      %v389 = vld [vmem:[%s281 + $0x68] sm:$0xff]
      %v390 = vld [vmem:[%s281 + $0x70] sm:$0xff]
      %v391 = vld [vmem:[%s281 + $0x78] sm:$0xff]
      %v392 = vld [vmem:[%s281 + $0x80] sm:$0xff]
      %v393 = vld [vmem:[%s281 + $0x88] sm:$0xff]
      %v394 = vld [vmem:[%s281 + $0x90] sm:$0xff]
      %v395 = vld [vmem:[%s281 + $0x98] sm:$0xff]
      %v396 = vld [vmem:[%s281 + $0xa0] sm:$0xff]
      %v397 = vld [vmem:[%s281 + $0xa8] sm:$0xff]
      %v398 = vld [vmem:[%s281 + $0xb0] sm:$0xff]
      %v399 = vld [vmem:[%s281 + $0xb8] sm:$0xff]
      %v400 = vld [vmem:[%s281 + $0xc0] sm:$0xff]
      %v401 = vld [vmem:[%s281 + $0xc8] sm:$0xff]
      %v402 = vld [vmem:[%s281 + $0xd0] sm:$0xff]
      %v403 = vld [vmem:[%s281 + $0xd8] sm:$0xff]
      %v404 = vld [vmem:[%s281 + $0xe0] sm:$0xff]
      %v405 = vld [vmem:[%s281 + $0xe8] sm:$0xff]
      %v406 = vld [vmem:[%s281 + $0xf0] sm:$0xff]
      %v407 = vld [vmem:[%s281 + $0xf8] sm:$0xff]
      %v408 = vld [vmem:[%s281 + $0x100] sm:$0xff]
      %v409 = vld [vmem:[%s281 + $0x108] sm:$0xff]
      %v410 = vld [vmem:[%s281 + $0x110] sm:$0xff]
      %v411 = vld [vmem:[%s281 + $0x118] sm:$0xff]
      %v412 = vld [vmem:[%s281 + $0x120] sm:$0xff]
      %v413 = vld [vmem:[%s281 + $0x128] sm:$0xff]
      %v414 = vld [vmem:[%s281 + $0x130] sm:$0xff]
      %v415 = vld [vmem:[%s281 + $0x138] sm:$0xff]
      %v416 = vld [vmem:[%s281 + $0x140] sm:$0xff]
      %v417 = vld [vmem:[%s281 + $0x148] sm:$0xff]
      %v418 = vld [vmem:[%s281 + $0x150] sm:$0xff]
      %v419 = vld [vmem:[%s281 + $0x158] sm:$0xff]
      %v420 = vld [vmem:[%s281 + $0x160] sm:$0xff]
      %v421 = vld [vmem:[%s281 + $0x168] sm:$0xff]
      %v422 = vld [vmem:[%s281 + $0x170] sm:$0xff]
      %v423 = vld [vmem:[%s281 + $0x178] sm:$0xff]
      %v424 = vld [vmem:[%s281 + $0x180] sm:$0xff]
      %v425 = vld [vmem:[%s281 + $0x188] sm:$0xff]
      %v426 = vld [vmem:[%s281 + $0x190] sm:$0xff]
      %v427 = vld [vmem:[%s281 + $0x198] sm:$0xff]
      %v428 = vld [vmem:[%s281 + $0x1a0] sm:$0xff]
      %v429 = vld [vmem:[%s281 + $0x1a8] sm:$0xff]
      %v430 = vld [vmem:[%s281 + $0x1b0] sm:$0xff]
      %v431 = vld [vmem:[%s281 + $0x1b8] sm:$0xff]
      %v432 = vld [vmem:[%s281 + $0x1c0] sm:$0xff]
      %v433 = vld [vmem:[%s281 + $0x1c8] sm:$0xff]
      %v434 = vld [vmem:[%s281 + $0x1d0] sm:$0xff]
      %v435 = vld [vmem:[%s281 + $0x1d8] sm:$0xff]
      %v436 = vld [vmem:[%s281 + $0x1e0] sm:$0xff]
      %v437 = vld [vmem:[%s281 + $0x1e8] sm:$0xff]
      %v438 = vld [vmem:[%s281 + $0x1f0] sm:$0xff]
      %v439 = vld [vmem:[%s281 + $0x1f8] sm:$0xff]
      %v440 = vld [vmem:[%s291] sm:$0xff]
      %v441 = vld [vmem:[%s291 + $0x8] sm:$0xff]
      %v442 = vld [vmem:[%s291 + $0x10] sm:$0xff]
      %v443 = vld [vmem:[%s291 + $0x18] sm:$0xff]
      %v444 = vld [vmem:[%s291 + $0x20] sm:$0xff]
      %v445 = vld [vmem:[%s291 + $0x28] sm:$0xff]
      %v446 = vld [vmem:[%s291 + $0x30] sm:$0xff]
      %v447 = vld [vmem:[%s291 + $0x38] sm:$0xff]
      %v448 = vld [vmem:[%s291 + $0x40] sm:$0xff]
      %v449 = vld [vmem:[%s291 + $0x48] sm:$0xff]
      %v450 = vld [vmem:[%s291 + $0x50] sm:$0xff]
      %v451 = vld [vmem:[%s291 + $0x58] sm:$0xff]
      %v452 = vld [vmem:[%s291 + $0x60] sm:$0xff]
      %v453 = vld [vmem:[%s291 + $0x68] sm:$0xff]
      %v454 = vld [vmem:[%s291 + $0x70] sm:$0xff]
      %v455 = vld [vmem:[%s291 + $0x78] sm:$0xff]
      %v456 = vld [vmem:[%s291 + $0x80] sm:$0xff]
      %v457 = vld [vmem:[%s291 + $0x88] sm:$0xff]
      %v458 = vld [vmem:[%s291 + $0x90] sm:$0xff]
      %v459 = vld [vmem:[%s291 + $0x98] sm:$0xff]
      %v460 = vld [vmem:[%s291 + $0xa0] sm:$0xff]
      %v461 = vld [vmem:[%s291 + $0xa8] sm:$0xff]
      %v462 = vld [vmem:[%s291 + $0xb0] sm:$0xff]
      %v463 = vld [vmem:[%s291 + $0xb8] sm:$0xff]
      %v464 = vld [vmem:[%s291 + $0xc0] sm:$0xff]
      %v465 = vld [vmem:[%s291 + $0xc8] sm:$0xff]
      %v466 = vld [vmem:[%s291 + $0xd0] sm:$0xff]
      %v467 = vld [vmem:[%s291 + $0xd8] sm:$0xff]
      %v468 = vld [vmem:[%s291 + $0xe0] sm:$0xff]
      %v469 = vld [vmem:[%s291 + $0xe8] sm:$0xff]
      %v470 = vld [vmem:[%s291 + $0xf0] sm:$0xff]
      %v471 = vld [vmem:[%s291 + $0xf8] sm:$0xff]
      %472 = vmatprep.subr.mxu0 0.0
      %473 = vmatpush1.msra.mxu0 %v455
      %474 = vmatprep.subr.mxu0 0.0
      %475 = vmatpush1.msra.mxu0 %v454
      %476 = vmatprep.subr.mxu0 0.0
      %477 = vmatpush1.msra.mxu0 %v453
      %478 = vmatprep.subr.mxu0 0.0
      %479 = vmatpush1.msra.mxu0 %v452
      %480 = vmatprep.subr.mxu0 0.0
      %481 = vmatpush1.msra.mxu0 %v451
      %482 = vmatprep.subr.mxu0 0.0
      %483 = vmatpush1.msra.mxu0 %v450
      %484 = vmatprep.subr.mxu0 0.0
      %485 = vmatpush1.msra.mxu0 %v449
      %486 = vmatprep.subr.mxu0 0.0
      %487 = vmatpush1.msra.mxu0 %v448
      %488 = vmatprep.subr.mxu0 0.0
      %489 = vmatpush1.msra.mxu0 %v447
      %490 = vmatprep.subr.mxu0 0.0
      %491 = vmatpush1.msra.mxu0 %v446
      %492 = vmatprep.subr.mxu0 0.0
      %493 = vmatpush1.msra.mxu0 %v445
      %494 = vmatprep.subr.mxu0 0.0
      %495 = vmatpush1.msra.mxu0 %v444
      %496 = vmatprep.subr.mxu0 0.0
      %497 = vmatpush1.msra.mxu0 %v443
      %498 = vmatprep.subr.mxu0 0.0
      %499 = vmatpush1.msra.mxu0 %v442
      %500 = vmatprep.subr.mxu0 0.0
      %501 = vmatpush1.msra.mxu0 %v441
      %502 = vmatprep.subr.mxu0 0.0
      %503 = vmatpush1.msra.mxu0 %v440
      %504 = vmatprep.subr.mxu0 0.0
      %505 = vmatpush2.msra.mxu0 %v471
      %506 = vmatprep.subr.mxu0 0.0
      %507 = vmatpush2.msra.mxu0 %v470
      %508 = vmatprep.subr.mxu0 0.0
      %509 = vmatpush2.msra.mxu0 %v469
      %510 = vmatprep.subr.mxu0 0.0
      %511 = vmatpush2.msra.mxu0 %v468
      %512 = vmatprep.subr.mxu0 0.0
      %513 = vmatpush2.msra.mxu0 %v467
      %514 = vmatprep.subr.mxu0 0.0
      %515 = vmatpush2.msra.mxu0 %v466
      %516 = vmatprep.subr.mxu0 0.0
      %517 = vmatpush2.msra.mxu0 %v465
      %518 = vmatprep.subr.mxu0 0.0
      %519 = vmatpush2.msra.mxu0 %v464
      %520 = vmatprep.subr.mxu0 0.0
      %521 = vmatpush2.msra.mxu0 %v463
      %522 = vmatprep.subr.mxu0 0.0
      %523 = vmatpush2.msra.mxu0 %v462
      %524 = vmatprep.subr.mxu0 0.0
      %525 = vmatpush2.msra.mxu0 %v461
      %526 = vmatprep.subr.mxu0 0.0
      %527 = vmatpush2.msra.mxu0 %v460
      %528 = vmatprep.subr.mxu0 0.0
      %529 = vmatpush2.msra.mxu0 %v459
      %530 = vmatprep.subr.mxu0 0.0
      %531 = vmatpush2.msra.mxu0 %v458
      %532 = vmatprep.subr.mxu0 0.0
      %533 = vmatpush2.msra.mxu0 %v457
      %534 = vmatprep.subr.mxu0 0.0
      %535 = vmatpush2.msra.mxu0 %v456
      %536 = vmatprep.mubr.f32.mxu0 %v377
      %537 = vmatmul.mubr.f32.gmra.mxu0 %v376
      %v538 = vpop.f32.mrf.mxu0
      %v539 = vadd.f32 0.0, %v538
      %v540 = vpop.f32.mrf.mxu0
      %541 = vmatprep.mubr.f32.mxu0 %v379
      %542 = vmatmul.mubr.f32.gmra.mxu0 %v378
      %v543 = vpop.f32.mrf.mxu0
      %v544 = vadd.f32 0.0, %v543
      %v545 = vpop.f32.mrf.mxu0
      %546 = vmatprep.mubr.f32.mxu0 %v381
      %547 = vmatmul.mubr.f32.gmra.mxu0 %v380
      %v548 = vpop.f32.mrf.mxu0
      %v549 = vadd.f32 0.0, %v548
      %v550 = vpop.f32.mrf.mxu0
      %551 = vmatprep.mubr.f32.mxu0 %v383
      %552 = vmatmul.mubr.f32.gmra.mxu0 %v382
      %v553 = vpop.f32.mrf.mxu0
      %v554 = vadd.f32 0.0, %v553
      %v555 = vpop.f32.mrf.mxu0
      %556 = vmatprep.mubr.f32.mxu0 %v385
      %557 = vmatmul.mubr.f32.gmra.mxu0 %v384
      %v558 = vpop.f32.mrf.mxu0
      %v559 = vadd.f32 0.0, %v558
      %v560 = vpop.f32.mrf.mxu0
      %561 = vmatprep.mubr.f32.mxu0 %v387
      %562 = vmatmul.mubr.f32.gmra.mxu0 %v386
      %v563 = vpop.f32.mrf.mxu0
      %v564 = vadd.f32 0.0, %v563
      %v565 = vpop.f32.mrf.mxu0
      %566 = vmatprep.mubr.f32.mxu0 %v389
      %567 = vmatmul.mubr.f32.gmra.mxu0 %v388
      %v568 = vpop.f32.mrf.mxu0
      %v569 = vadd.f32 0.0, %v568
      %v570 = vpop.f32.mrf.mxu0
      %571 = vmatprep.mubr.f32.mxu0 %v391
      %572 = vmatmul.mubr.f32.gmra.mxu0 %v390
      %v573 = vpop.f32.mrf.mxu0
      %v574 = vadd.f32 0.0, %v573
      %v575 = vpop.f32.mrf.mxu0
      %576 = vmatprep.mubr.f32.mxu0 %v393
      %577 = vmatmul.mubr.f32.gmra.mxu0 %v392
      %v578 = vpop.f32.mrf.mxu0
      %v579 = vadd.f32 0.0, %v578
      %v580 = vpop.f32.mrf.mxu0
      %581 = vmatprep.mubr.f32.mxu0 %v395
      %582 = vmatmul.mubr.f32.gmra.mxu0 %v394
      %v583 = vpop.f32.mrf.mxu0
      %v584 = vadd.f32 0.0, %v583
      %v585 = vpop.f32.mrf.mxu0
      %586 = vmatprep.mubr.f32.mxu0 %v397
      %587 = vmatmul.mubr.f32.gmra.mxu0 %v396
      %v588 = vpop.f32.mrf.mxu0
      %v589 = vadd.f32 0.0, %v588
      %v590 = vpop.f32.mrf.mxu0
      %591 = vmatprep.mubr.f32.mxu0 %v399
      %592 = vmatmul.mubr.f32.gmra.mxu0 %v398
      %v593 = vpop.f32.mrf.mxu0
      %v594 = vadd.f32 0.0, %v593
      %v595 = vpop.f32.mrf.mxu0
      %596 = vmatprep.mubr.f32.mxu0 %v401
      %597 = vmatmul.mubr.f32.gmra.mxu0 %v400
      %v598 = vpop.f32.mrf.mxu0
      %v599 = vadd.f32 0.0, %v598
      %v600 = vpop.f32.mrf.mxu0
      %601 = vmatprep.mubr.f32.mxu0 %v403
      %602 = vmatmul.mubr.f32.gmra.mxu0 %v402
      %v603 = vpop.f32.mrf.mxu0
      %v604 = vadd.f32 0.0, %v603
      %v605 = vpop.f32.mrf.mxu0
      %606 = vmatprep.mubr.f32.mxu0 %v405
      %607 = vmatmul.mubr.f32.gmra.mxu0 %v404
      %v608 = vpop.f32.mrf.mxu0
      %v609 = vadd.f32 0.0, %v608
      %v610 = vpop.f32.mrf.mxu0
      %611 = vmatprep.mubr.f32.mxu0 %v407
      %612 = vmatmul.mubr.f32.gmra.mxu0 %v406
      %v613 = vpop.f32.mrf.mxu0
      %v614 = vadd.f32 0.0, %v613
      %v615 = vpop.f32.mrf.mxu0
      %616 = vmatprep.mubr.f32.mxu0 %v409
      %617 = vmatmul.mubr.f32.gmra.mxu0 %v408
      %v618 = vpop.f32.mrf.mxu0
      %v619 = vadd.f32 0.0, %v618
      %v620 = vpop.f32.mrf.mxu0
      %621 = vmatprep.mubr.f32.mxu0 %v411
      %622 = vmatmul.mubr.f32.gmra.mxu0 %v410
      %v623 = vpop.f32.mrf.mxu0
      %v624 = vadd.f32 0.0, %v623
      %v625 = vpop.f32.mrf.mxu0
      %626 = vmatprep.mubr.f32.mxu0 %v413
      %627 = vmatmul.mubr.f32.gmra.mxu0 %v412
      %v628 = vpop.f32.mrf.mxu0
      %v629 = vadd.f32 0.0, %v628
      %v630 = vpop.f32.mrf.mxu0
      %631 = vmatprep.mubr.f32.mxu0 %v415
      %632 = vmatmul.mubr.f32.gmra.mxu0 %v414
      %v633 = vpop.f32.mrf.mxu0
      %v634 = vadd.f32 0.0, %v633
      %v635 = vpop.f32.mrf.mxu0
      %636 = vmatprep.mubr.f32.mxu0 %v417
      %637 = vmatmul.mubr.f32.gmra.mxu0 %v416
      %v638 = vpop.f32.mrf.mxu0
      %v639 = vadd.f32 0.0, %v638
      %v640 = vpop.f32.mrf.mxu0
      %641 = vmatprep.mubr.f32.mxu0 %v419
      %642 = vmatmul.mubr.f32.gmra.mxu0 %v418
      %v643 = vpop.f32.mrf.mxu0
      %v644 = vadd.f32 0.0, %v643
      %v645 = vpop.f32.mrf.mxu0
      %646 = vmatprep.mubr.f32.mxu0 %v421
      %647 = vmatmul.mubr.f32.gmra.mxu0 %v420
      %v648 = vpop.f32.mrf.mxu0
      %v649 = vadd.f32 0.0, %v648
      %v650 = vpop.f32.mrf.mxu0
      %651 = vmatprep.mubr.f32.mxu0 %v423
      %652 = vmatmul.mubr.f32.gmra.mxu0 %v422
      %v653 = vpop.f32.mrf.mxu0
      %v654 = vadd.f32 0.0, %v653
      %v655 = vpop.f32.mrf.mxu0
      %656 = vmatprep.mubr.f32.mxu0 %v425
      %657 = vmatmul.mubr.f32.gmra.mxu0 %v424
      %v658 = vpop.f32.mrf.mxu0
      %v659 = vadd.f32 0.0, %v658
      %v660 = vpop.f32.mrf.mxu0
      %661 = vmatprep.mubr.f32.mxu0 %v427
      %662 = vmatmul.mubr.f32.gmra.mxu0 %v426
      %v663 = vpop.f32.mrf.mxu0
      %v664 = vadd.f32 0.0, %v663
      %v665 = vpop.f32.mrf.mxu0
      %666 = vmatprep.mubr.f32.mxu0 %v429
      %667 = vmatmul.mubr.f32.gmra.mxu0 %v428
      %v668 = vpop.f32.mrf.mxu0
      %v669 = vadd.f32 0.0, %v668
      %v670 = vpop.f32.mrf.mxu0
      %671 = vmatprep.mubr.f32.mxu0 %v431
      %672 = vmatmul.mubr.f32.gmra.mxu0 %v430
      %v673 = vpop.f32.mrf.mxu0
      %v674 = vadd.f32 0.0, %v673
      %v675 = vpop.f32.mrf.mxu0
      %676 = vmatprep.mubr.f32.mxu0 %v433
      %677 = vmatmul.mubr.f32.gmra.mxu0 %v432
      %v678 = vpop.f32.mrf.mxu0
      %v679 = vadd.f32 0.0, %v678
      %v680 = vpop.f32.mrf.mxu0
      %681 = vmatprep.mubr.f32.mxu0 %v435
      %682 = vmatmul.mubr.f32.gmra.mxu0 %v434
      %v683 = vpop.f32.mrf.mxu0
      %v684 = vadd.f32 0.0, %v683
      %v685 = vpop.f32.mrf.mxu0
      %686 = vmatprep.mubr.f32.mxu0 %v437
      %687 = vmatmul.mubr.f32.gmra.mxu0 %v436
      %v688 = vpop.f32.mrf.mxu0
      %v689 = vadd.f32 0.0, %v688
      %v690 = vpop.f32.mrf.mxu0
      %691 = vmatprep.mubr.f32.mxu0 %v439
      %692 = vmatmul.mubr.f32.gmra.mxu0 %v438
      %v693 = vpop.f32.mrf.mxu0
      %v694 = vadd.f32 0.0, %v693
      %v695 = vpop.f32.mrf.mxu0
      %696 = vdwg.mxu0
      %v697 = vadd.f32 %v344, %v539
      %v698 = vadd.f32 %v345, %v544
      %v699 = vadd.f32 %v346, %v549
      %v700 = vadd.f32 %v347, %v554
      %v701 = vadd.f32 %v348, %v559
      %v702 = vadd.f32 %v349, %v564
      %v703 = vadd.f32 %v350, %v569
      %v704 = vadd.f32 %v351, %v574
      %v705 = vadd.f32 %v352, %v579
      %v706 = vadd.f32 %v353, %v584
      %v707 = vadd.f32 %v354, %v589
      %v708 = vadd.f32 %v355, %v594
      %v709 = vadd.f32 %v356, %v599
      %v710 = vadd.f32 %v357, %v604
      %v711 = vadd.f32 %v358, %v609
      %v712 = vadd.f32 %v359, %v614
      %v713 = vadd.f32 %v360, %v619
      %v714 = vadd.f32 %v361, %v624
      %v715 = vadd.f32 %v362, %v629
      %v716 = vadd.f32 %v363, %v634
      %v717 = vadd.f32 %v364, %v639
      %v718 = vadd.f32 %v365, %v644
      %v719 = vadd.f32 %v366, %v649
      %v720 = vadd.f32 %v367, %v654
      %v721 = vadd.f32 %v368, %v659
      %v722 = vadd.f32 %v369, %v664
      %v723 = vadd.f32 %v370, %v669
      %v724 = vadd.f32 %v371, %v674
      %v725 = vadd.f32 %v372, %v679
      %v726 = vadd.f32 %v373, %v684
      %v727 = vadd.f32 %v374, %v689
      %v728 = vadd.f32 %v375, %v694
      %729 = vst [vmem:[#allocation2] sm:$0xff] %v697
      %730 = vst [vmem:[#allocation2 + $0x8] sm:$0xff] %v698
      %731 = vst [vmem:[#allocation2 + $0x10] sm:$0xff] %v699
      %732 = vst [vmem:[#allocation2 + $0x18] sm:$0xff] %v700
      %733 = vst [vmem:[#allocation2 + $0x20] sm:$0xff] %v701
      %734 = vst [vmem:[#allocation2 + $0x28] sm:$0xff] %v702
      %735 = vst [vmem:[#allocation2 + $0x30] sm:$0xff] %v703
      %736 = vst [vmem:[#allocation2 + $0x38] sm:$0xff] %v704
      %737 = vst [vmem:[#allocation2 + $0x40] sm:$0xff] %v705
      %738 = vst [vmem:[#allocation2 + $0x48] sm:$0xff] %v706
      %739 = vst [vmem:[#allocation2 + $0x50] sm:$0xff] %v707
      %740 = vst [vmem:[#allocation2 + $0x58] sm:$0xff] %v708
      %741 = vst [vmem:[#allocation2 + $0x60] sm:$0xff] %v709
      %742 = vst [vmem:[#allocation2 + $0x68] sm:$0xff] %v710
      %743 = vst [vmem:[#allocation2 + $0x70] sm:$0xff] %v711
      %744 = vst [vmem:[#allocation2 + $0x78] sm:$0xff] %v712
      %745 = vst [vmem:[#allocation2 + $0x80] sm:$0xff] %v713
      %746 = vst [vmem:[#allocation2 + $0x88] sm:$0xff] %v714
      %747 = vst [vmem:[#allocation2 + $0x90] sm:$0xff] %v715
      %748 = vst [vmem:[#allocation2 + $0x98] sm:$0xff] %v716
      %749 = vst [vmem:[#allocation2 + $0xa0] sm:$0xff] %v717
      %750 = vst [vmem:[#allocation2 + $0xa8] sm:$0xff] %v718
      %751 = vst [vmem:[#allocation2 + $0xb0] sm:$0xff] %v719
      %752 = vst [vmem:[#allocation2 + $0xb8] sm:$0xff] %v720
      %753 = vst [vmem:[#allocation2 + $0xc0] sm:$0xff] %v721
      %754 = vst [vmem:[#allocation2 + $0xc8] sm:$0xff] %v722
      %755 = vst [vmem:[#allocation2 + $0xd0] sm:$0xff] %v723
      %756 = vst [vmem:[#allocation2 + $0xd8] sm:$0xff] %v724
      %757 = vst [vmem:[#allocation2 + $0xe0] sm:$0xff] %v725
      %758 = vst [vmem:[#allocation2 + $0xe8] sm:$0xff] %v726
      %759 = vst [vmem:[#allocation2 + $0xf0] sm:$0xff] %v727
      %760 = vst [vmem:[#allocation2 + $0xf8] sm:$0xff] %v728
      // Predicated region
      $region41: #{_lambda_.14} parent=35 // pred_check
        %p761 = pneg %p308
      $region42: #{_lambda_.14} parent=35 // pred_check_branch
        %763 = sbr.rel (%p761) target = $region44
      $region43: #{_lambda_.14} parent=35 // pred_region
        %v764 = vld [vmem:[#allocation2] sm:$0xff]
        %v765 = vld [vmem:[#allocation2 + $0x8] sm:$0xff]
        %v766 = vld [vmem:[#allocation2 + $0x10] sm:$0xff]
        %v767 = vld [vmem:[#allocation2 + $0x18] sm:$0xff]
        %v768 = vld [vmem:[#allocation2 + $0x20] sm:$0xff]
        %v769 = vld [vmem:[#allocation2 + $0x28] sm:$0xff]
        %v770 = vld [vmem:[#allocation2 + $0x30] sm:$0xff]
        %v771 = vld [vmem:[#allocation2 + $0x38] sm:$0xff]
        %v772 = vld [vmem:[#allocation2 + $0x40] sm:$0xff]
        %v773 = vld [vmem:[#allocation2 + $0x48] sm:$0xff]
        %v774 = vld [vmem:[#allocation2 + $0x50] sm:$0xff]
        %v775 = vld [vmem:[#allocation2 + $0x58] sm:$0xff]
        %v776 = vld [vmem:[#allocation2 + $0x60] sm:$0xff]
        %v777 = vld [vmem:[#allocation2 + $0x68] sm:$0xff]
        %v778 = vld [vmem:[#allocation2 + $0x70] sm:$0xff]
        %v779 = vld [vmem:[#allocation2 + $0x78] sm:$0xff]
        %v780 = vld [vmem:[#allocation2 + $0x80] sm:$0xff]
        %v781 = vld [vmem:[#allocation2 + $0x88] sm:$0xff]
        %v782 = vld [vmem:[#allocation2 + $0x90] sm:$0xff]
        %v783 = vld [vmem:[#allocation2 + $0x98] sm:$0xff]
        %v784 = vld [vmem:[#allocation2 + $0xa0] sm:$0xff]
        %v785 = vld [vmem:[#allocation2 + $0xa8] sm:$0xff]
        %v786 = vld [vmem:[#allocation2 + $0xb0] sm:$0xff]
        %v787 = vld [vmem:[#allocation2 + $0xb8] sm:$0xff]
        %v788 = vld [vmem:[#allocation2 + $0xc0] sm:$0xff]
        %v789 = vld [vmem:[#allocation2 + $0xc8] sm:$0xff]
        %v790 = vld [vmem:[#allocation2 + $0xd0] sm:$0xff]
        %v791 = vld [vmem:[#allocation2 + $0xd8] sm:$0xff]
        %v792 = vld [vmem:[#allocation2 + $0xe0] sm:$0xff]
        %v793 = vld [vmem:[#allocation2 + $0xe8] sm:$0xff]
        %v794 = vld [vmem:[#allocation2 + $0xf0] sm:$0xff]
        %v795 = vld [vmem:[#allocation2 + $0xf8] sm:$0xff]
        %v796 = vld [vmem:[%s295] sm:$0x1]
        %v798 = vlaneseq
        %v799 = vshrl.u32 %v798, 7
        %v800 = vsub.s32 0, %v799
        %v801 = vrot.slane %v796, %v800
        %v803 = vmul.f32 %v764, %v801
        %v804 = vmul.f32 %v765, %v801
        %v805 = vmul.f32 %v766, %v801
        %v806 = vmul.f32 %v767, %v801
        %v807 = vmul.f32 %v768, %v801
        %v808 = vmul.f32 %v769, %v801
        %v809 = vmul.f32 %v770, %v801
        %v810 = vmul.f32 %v771, %v801
        %v811 = vmul.f32 %v772, %v801
        %v812 = vmul.f32 %v773, %v801
        %v813 = vmul.f32 %v774, %v801
        %v814 = vmul.f32 %v775, %v801
        %v815 = vmul.f32 %v776, %v801
        %v816 = vmul.f32 %v777, %v801
        %v817 = vmul.f32 %v778, %v801
        %v818 = vmul.f32 %v779, %v801
        %v819 = vmul.f32 %v780, %v801
        %v820 = vmul.f32 %v781, %v801
        %v821 = vmul.f32 %v782, %v801
        %v822 = vmul.f32 %v783, %v801
        %v823 = vmul.f32 %v784, %v801
        %v824 = vmul.f32 %v785, %v801
        %v825 = vmul.f32 %v786, %v801
        %v826 = vmul.f32 %v787, %v801
        %v827 = vmul.f32 %v788, %v801
        %v828 = vmul.f32 %v789, %v801
        %v829 = vmul.f32 %v790, %v801
        %v830 = vmul.f32 %v791, %v801
        %v831 = vmul.f32 %v792, %v801
        %v832 = vmul.f32 %v793, %v801
        %v833 = vmul.f32 %v794, %v801
        %v834 = vmul.f32 %v795, %v801
        %v835 = vld [vmem:[%s298] sm:$0x1]
        %v837 = vlaneseq
        %v838 = vshrl.u32 %v837, 7
        %v839 = vsub.s32 0, %v838
        %v840 = vrot.slane %v835, %v839
        %v842 = vadd.f32 %v803, %v840
        %v843 = vadd.f32 %v804, %v840
        %v844 = vadd.f32 %v805, %v840
        %v845 = vadd.f32 %v806, %v840
        %v846 = vadd.f32 %v807, %v840
        %v847 = vadd.f32 %v808, %v840
        %v848 = vadd.f32 %v809, %v840
        %v849 = vadd.f32 %v810, %v840
        %v850 = vadd.f32 %v811, %v840
        %v851 = vadd.f32 %v812, %v840
        %v852 = vadd.f32 %v813, %v840
        %v853 = vadd.f32 %v814, %v840
        %v854 = vadd.f32 %v815, %v840
        %v855 = vadd.f32 %v816, %v840
        %v856 = vadd.f32 %v817, %v840
        %v857 = vadd.f32 %v818, %v840
        %v858 = vadd.f32 %v819, %v840
        %v859 = vadd.f32 %v820, %v840
        %v860 = vadd.f32 %v821, %v840
        %v861 = vadd.f32 %v822, %v840
        %v862 = vadd.f32 %v823, %v840
        %v863 = vadd.f32 %v824, %v840
        %v864 = vadd.f32 %v825, %v840
        %v865 = vadd.f32 %v826, %v840
        %v866 = vadd.f32 %v827, %v840
        %v867 = vadd.f32 %v828, %v840
        %v868 = vadd.f32 %v829, %v840
        %v869 = vadd.f32 %v830, %v840
        %v870 = vadd.f32 %v831, %v840
        %v871 = vadd.f32 %v832, %v840
        %v872 = vadd.f32 %v833, %v840
        %v873 = vadd.f32 %v834, %v840
        %v874 = vmax.f32 %v842, 0.0
        %v875 = vmax.f32 %v843, 0.0
        %v876 = vmax.f32 %v844, 0.0
        %v877 = vmax.f32 %v845, 0.0
        %v878 = vmax.f32 %v846, 0.0
        %v879 = vmax.f32 %v847, 0.0
        %v880 = vmax.f32 %v848, 0.0
        %v881 = vmax.f32 %v849, 0.0
        %v882 = vmax.f32 %v850, 0.0
        %v883 = vmax.f32 %v851, 0.0
        %v884 = vmax.f32 %v852, 0.0
        %v885 = vmax.f32 %v853, 0.0
        %v886 = vmax.f32 %v854, 0.0
        %v887 = vmax.f32 %v855, 0.0
        %v888 = vmax.f32 %v856, 0.0
        %v889 = vmax.f32 %v857, 0.0
        %v890 = vmax.f32 %v858, 0.0
        %v891 = vmax.f32 %v859, 0.0
        %v892 = vmax.f32 %v860, 0.0
        %v893 = vmax.f32 %v861, 0.0
        %v894 = vmax.f32 %v862, 0.0
        %v895 = vmax.f32 %v863, 0.0
        %v896 = vmax.f32 %v864, 0.0
        %v897 = vmax.f32 %v865, 0.0
        %v898 = vmax.f32 %v866, 0.0
        %v899 = vmax.f32 %v867, 0.0
        %v900 = vmax.f32 %v868, 0.0
        %v901 = vmax.f32 %v869, 0.0
        %v902 = vmax.f32 %v870, 0.0
        %v903 = vmax.f32 %v871, 0.0
        %v904 = vmax.f32 %v872, 0.0
        %v905 = vmax.f32 %v873, 0.0
        %906 = vst [vmem:[%s306] sm:$0xff] %v874
        %907 = vst [vmem:[%s306 + $0x8] sm:$0xff] %v875
        %908 = vst [vmem:[%s306 + $0x10] sm:$0xff] %v876
        %909 = vst [vmem:[%s306 + $0x18] sm:$0xff] %v877
        %910 = vst [vmem:[%s306 + $0x20] sm:$0xff] %v878
        %911 = vst [vmem:[%s306 + $0x28] sm:$0xff] %v879
        %912 = vst [vmem:[%s306 + $0x30] sm:$0xff] %v880
        %913 = vst [vmem:[%s306 + $0x38] sm:$0xff] %v881
        %914 = vst [vmem:[%s306 + $0x40] sm:$0xff] %v882
        %915 = vst [vmem:[%s306 + $0x48] sm:$0xff] %v883
        %916 = vst [vmem:[%s306 + $0x50] sm:$0xff] %v884
        %917 = vst [vmem:[%s306 + $0x58] sm:$0xff] %v885
        %918 = vst [vmem:[%s306 + $0x60] sm:$0xff] %v886
        %919 = vst [vmem:[%s306 + $0x68] sm:$0xff] %v887
        %920 = vst [vmem:[%s306 + $0x70] sm:$0xff] %v888
        %921 = vst [vmem:[%s306 + $0x78] sm:$0xff] %v889
        %922 = vst [vmem:[%s306 + $0x80] sm:$0xff] %v890
        %923 = vst [vmem:[%s306 + $0x88] sm:$0xff] %v891
        %924 = vst [vmem:[%s306 + $0x90] sm:$0xff] %v892
        %925 = vst [vmem:[%s306 + $0x98] sm:$0xff] %v893
        %926 = vst [vmem:[%s306 + $0xa0] sm:$0xff] %v894
        %927 = vst [vmem:[%s306 + $0xa8] sm:$0xff] %v895
        %928 = vst [vmem:[%s306 + $0xb0] sm:$0xff] %v896
        %929 = vst [vmem:[%s306 + $0xb8] sm:$0xff] %v897
        %930 = vst [vmem:[%s306 + $0xc0] sm:$0xff] %v898
        %931 = vst [vmem:[%s306 + $0xc8] sm:$0xff] %v899
        %932 = vst [vmem:[%s306 + $0xd0] sm:$0xff] %v900
        %933 = vst [vmem:[%s306 + $0xd8] sm:$0xff] %v901
        %934 = vst [vmem:[%s306 + $0xe0] sm:$0xff] %v902
        %935 = vst [vmem:[%s306 + $0xe8] sm:$0xff] %v903
        %936 = vst [vmem:[%s306 + $0xf0] sm:$0xff] %v904
        %937 = vst [vmem:[%s306 + $0xf8] sm:$0xff] %v905
      $region44: #{_lambda_.14} parent=35 // pred_fallthru
        _
      %s938 = smul.u32 32, %s20
      %p939 = scmp.lt.s32.totalorder %s938, 63
      %s940 = scalar_select %p939, %s938, 63
      %p941 = scmp.lt.s32.totalorder %s21, 0
      %s942 = scalar_select %p941, %s21, 0
      %s943 = sadd.s32 %s942, %s940
      %s944 = smul.addr %s943, 8
      %s945 = scalar_lea.vmem %s4, %s944
      // Predicated region
      $region45: #{_lambda_.14} parent=35 // pred_check
        %p946 = pneg %p162
      $region46: #{_lambda_.14} parent=35 // pred_check_branch
        %948 = sbr.rel (%p946) target = $region48
      $region47: #{_lambda_.14} parent=35 // pred_region
        %s949 = smul.u32 32, %s20
      $region48: #{_lambda_.14} parent=35 // pred_fallthru
        _
    $region36: #{_lambda_.14} parent=5 // pred_fallthru
      _
    %p950 = scmp.le.s32.totalorder 2, %s10
    // Predicated region
    $region49: #{_lambda_.14} parent=5 // pred_check
      %p951 = pneg %p950
    $region50: #{_lambda_.14} parent=5 // pred_check_branch
      %953 = sbr.rel (%p951) target = $region52
    $region51: #{_lambda_.14} parent=5 // pred_region
      %s954 = ssub.s32 %s10, 2
      // Predicated region
      $region53: #{_lambda_.14} parent=51 // pred_check
        %p955 = pneg %p168
      $region54: #{_lambda_.14} parent=51 // pred_check_branch
        %957 = sbr.rel (%p955) target = $region56
      $region55: #{_lambda_.14} parent=51 // pred_region
        %s958 = smul.u32 32, %s23
        %p959 = scmp.lt.s32.totalorder %s958, 63
        %s960 = scalar_select %p959, %s958, 63
        %p961 = scmp.lt.s32.totalorder %s24, 0
        %s962 = scalar_select %p961, %s24, 0
        %s963 = sadd.s32 %s962, %s960
        %s964 = smul.addr %s963, 8
        %s965 = scalar_lea.vmem %s4, %s964
      $region56: #{_lambda_.14} parent=51 // pred_fallthru
        _
    $region52: #{_lambda_.14} parent=5 // pred_fallthru
      _
  $region6: #{_lambda_.14} parent=0 // loop_footer
    %s14 = sadd.s32 1, %s10
  $region7: #{_lambda_.14} parent=0 // loop_footer_branch
    %9 = sbr.rel target = $region3
  $region8: #{_lambda_.14} parent=0 // loop_exit
    _

// kernel: _lambda_.16
$region0: #{_lambda_.16}
  #allocation0 [shape = 'u32[]', space=smem, size = 0x4, offset = 0x4, fixed_abs, tag = 'smem constant byte address 0x4 - core index']
  #allocation1 [shape = 'u32[144,128]{1,0:T(1,128)}', space=vmem, size = 0x12000, scoped, tag = 'internal scratch']
  #allocation2 [shape = 'f32[128,128]{1,0:T(8,128)}', space=vmem, size = 0x10000, scoped, tag = 'scratch operand']
  %s0 = inlined_call_operand.vmem [shape: f32[128,640], index: 0, kind: input, shape index: {}]
  %s1 = inlined_call_operand.vmem [shape: f32[640,128], index: 1, kind: input, shape index: {}]
  %s2 = inlined_call_operand.vmem [shape: f32[1,128], index: 2, kind: input, shape index: {}]
  %s3 = inlined_call_operand.vmem [shape: f32[1,128], index: 3, kind: input, shape index: {}]
  %s4 = inlined_call_operand.vmem [shape: f32[128,128], index: 4, kind: output, shape index: {}]
  %s5 = sld [smem:[#allocation0]]
  $region34: #{_lambda_.16} parent=0
    _
  %s7 = ssub.s32 1, %s5
  %s8 = scalar_select 0, %s7, %s5
  // Predicated region
  $region2: #{_lambda_.16} parent=0 // pred_check
    _
  $region3: #{_lambda_.16} parent=0 // pred_check_branch
    %10 = sbr.rel (0) target = $region5
  $region4: #{_lambda_.16} parent=0 // pred_region
    _
  $region5: #{_lambda_.16} parent=0 // pred_fallthru
    _
  // Predicated region
  $region6: #{_lambda_.16} parent=0 // pred_check
    _
  $region7: #{_lambda_.16} parent=0 // pred_check_branch
    %12 = sbr.rel (0) target = $region9
  $region8: #{_lambda_.16} parent=0 // pred_region
    _
  $region9: #{_lambda_.16} parent=0 // pred_fallthru
    _
  // Predicated region
  $region10: #{_lambda_.16} parent=0 // pred_check
    _
  $region11: #{_lambda_.16} parent=0 // pred_check_branch
    %14 = sbr.rel (0) target = $region13
  $region12: #{_lambda_.16} parent=0 // pred_region
    _
  $region13: #{_lambda_.16} parent=0 // pred_fallthru
    _
  // Predicated region
  $region14: #{_lambda_.16} parent=0 // pred_check
    _
  $region15: #{_lambda_.16} parent=0 // pred_check_branch
    %16 = sbr.rel (0) target = $region17
  $region16: #{_lambda_.16} parent=0 // pred_region
    _
  $region17: #{_lambda_.16} parent=0 // pred_fallthru
    _
  %p17 = scmp.eq.s32.totalorder 0, 0
  // Predicated region
  $region18: #{_lambda_.16} parent=0 // pred_check
    %p18 = pneg %p17
  $region19: #{_lambda_.16} parent=0 // pred_check_branch
    %20 = sbr.rel (%p18) target = $region21
  $region20: #{_lambda_.16} parent=0 // pred_region
    %21 = vst [vmem:[#allocation2] sm:$0xff] 0.0
    %22 = vst [vmem:[#allocation2 + $0x8] sm:$0xff] 0.0
    %23 = vst [vmem:[#allocation2 + $0x10] sm:$0xff] 0.0
    %24 = vst [vmem:[#allocation2 + $0x18] sm:$0xff] 0.0
    %25 = vst [vmem:[#allocation2 + $0x20] sm:$0xff] 0.0
    %26 = vst [vmem:[#allocation2 + $0x28] sm:$0xff] 0.0
    %27 = vst [vmem:[#allocation2 + $0x30] sm:$0xff] 0.0
    %28 = vst [vmem:[#allocation2 + $0x38] sm:$0xff] 0.0
    %29 = vst [vmem:[#allocation2 + $0x40] sm:$0xff] 0.0
    %30 = vst [vmem:[#allocation2 + $0x48] sm:$0xff] 0.0
    %31 = vst [vmem:[#allocation2 + $0x50] sm:$0xff] 0.0
    %32 = vst [vmem:[#allocation2 + $0x58] sm:$0xff] 0.0
    %33 = vst [vmem:[#allocation2 + $0x60] sm:$0xff] 0.0
    %34 = vst [vmem:[#allocation2 + $0x68] sm:$0xff] 0.0
    %35 = vst [vmem:[#allocation2 + $0x70] sm:$0xff] 0.0
    %36 = vst [vmem:[#allocation2 + $0x78] sm:$0xff] 0.0
  $region21: #{_lambda_.16} parent=0 // pred_fallthru
    _
  %v37 = vld [vmem:[#allocation2] sm:$0xff]
  %v38 = vld [vmem:[#allocation2 + $0x8] sm:$0xff]
  %v39 = vld [vmem:[#allocation2 + $0x10] sm:$0xff]
  %v40 = vld [vmem:[#allocation2 + $0x18] sm:$0xff]
  %v41 = vld [vmem:[#allocation2 + $0x20] sm:$0xff]
  %v42 = vld [vmem:[#allocation2 + $0x28] sm:$0xff]
  %v43 = vld [vmem:[#allocation2 + $0x30] sm:$0xff]
  %v44 = vld [vmem:[#allocation2 + $0x38] sm:$0xff]
  %v45 = vld [vmem:[#allocation2 + $0x40] sm:$0xff]
  %v46 = vld [vmem:[#allocation2 + $0x48] sm:$0xff]
  %v47 = vld [vmem:[#allocation2 + $0x50] sm:$0xff]
  %v48 = vld [vmem:[#allocation2 + $0x58] sm:$0xff]
  %v49 = vld [vmem:[#allocation2 + $0x60] sm:$0xff]
  %v50 = vld [vmem:[#allocation2 + $0x68] sm:$0xff]
  %v51 = vld [vmem:[#allocation2 + $0x70] sm:$0xff]
  %v52 = vld [vmem:[#allocation2 + $0x78] sm:$0xff]
  %v53 = vld [vmem:[%s0] sm:$0xff]
  %v54 = vld [vmem:[%s0 + $0x8] sm:$0xff]
  %v55 = vld [vmem:[%s0 + $0x10] sm:$0xff]
  %v56 = vld [vmem:[%s0 + $0x18] sm:$0xff]
  %v57 = vld [vmem:[%s0 + $0x20] sm:$0xff]
  %v58 = vld [vmem:[%s0 + $0x28] sm:$0xff]
  %v59 = vld [vmem:[%s0 + $0x30] sm:$0xff]
  %v60 = vld [vmem:[%s0 + $0x38] sm:$0xff]
  %v61 = vld [vmem:[%s0 + $0x40] sm:$0xff]
  %v62 = vld [vmem:[%s0 + $0x48] sm:$0xff]
  %v63 = vld [vmem:[%s0 + $0x50] sm:$0xff]
  %v64 = vld [vmem:[%s0 + $0x58] sm:$0xff]
  %v65 = vld [vmem:[%s0 + $0x60] sm:$0xff]
  %v66 = vld [vmem:[%s0 + $0x68] sm:$0xff]
  %v67 = vld [vmem:[%s0 + $0x70] sm:$0xff]
  %v68 = vld [vmem:[%s0 + $0x78] sm:$0xff]
  %v69 = vld [vmem:[%s0 + $0x80] sm:$0xff]
  %v70 = vld [vmem:[%s0 + $0x88] sm:$0xff]
  %v71 = vld [vmem:[%s0 + $0x90] sm:$0xff]
  %v72 = vld [vmem:[%s0 + $0x98] sm:$0xff]
  %v73 = vld [vmem:[%s0 + $0xa0] sm:$0xff]
  %v74 = vld [vmem:[%s0 + $0xa8] sm:$0xff]
  %v75 = vld [vmem:[%s0 + $0xb0] sm:$0xff]
  %v76 = vld [vmem:[%s0 + $0xb8] sm:$0xff]
  %v77 = vld [vmem:[%s0 + $0xc0] sm:$0xff]
  %v78 = vld [vmem:[%s0 + $0xc8] sm:$0xff]
  %v79 = vld [vmem:[%s0 + $0xd0] sm:$0xff]
  %v80 = vld [vmem:[%s0 + $0xd8] sm:$0xff]
  %v81 = vld [vmem:[%s0 + $0xe0] sm:$0xff]
  %v82 = vld [vmem:[%s0 + $0xe8] sm:$0xff]
  %v83 = vld [vmem:[%s0 + $0xf0] sm:$0xff]
  %v84 = vld [vmem:[%s0 + $0xf8] sm:$0xff]
  %v85 = vld [vmem:[%s0 + $0x100] sm:$0xff]
  %v86 = vld [vmem:[%s0 + $0x108] sm:$0xff]
  %v87 = vld [vmem:[%s0 + $0x110] sm:$0xff]
  %v88 = vld [vmem:[%s0 + $0x118] sm:$0xff]
  %v89 = vld [vmem:[%s0 + $0x120] sm:$0xff]
  %v90 = vld [vmem:[%s0 + $0x128] sm:$0xff]
  %v91 = vld [vmem:[%s0 + $0x130] sm:$0xff]
  %v92 = vld [vmem:[%s0 + $0x138] sm:$0xff]
  %v93 = vld [vmem:[%s0 + $0x140] sm:$0xff]
  %v94 = vld [vmem:[%s0 + $0x148] sm:$0xff]
  %v95 = vld [vmem:[%s0 + $0x150] sm:$0xff]
  %v96 = vld [vmem:[%s0 + $0x158] sm:$0xff]
  %v97 = vld [vmem:[%s0 + $0x160] sm:$0xff]
  %v98 = vld [vmem:[%s0 + $0x168] sm:$0xff]
  %v99 = vld [vmem:[%s0 + $0x170] sm:$0xff]
  %v100 = vld [vmem:[%s0 + $0x178] sm:$0xff]
  %v101 = vld [vmem:[%s0 + $0x180] sm:$0xff]
  %v102 = vld [vmem:[%s0 + $0x188] sm:$0xff]
  %v103 = vld [vmem:[%s0 + $0x190] sm:$0xff]
  %v104 = vld [vmem:[%s0 + $0x198] sm:$0xff]
  %v105 = vld [vmem:[%s0 + $0x1a0] sm:$0xff]
  %v106 = vld [vmem:[%s0 + $0x1a8] sm:$0xff]
  %v107 = vld [vmem:[%s0 + $0x1b0] sm:$0xff]
  %v108 = vld [vmem:[%s0 + $0x1b8] sm:$0xff]
  %v109 = vld [vmem:[%s0 + $0x1c0] sm:$0xff]
  %v110 = vld [vmem:[%s0 + $0x1c8] sm:$0xff]
  %v111 = vld [vmem:[%s0 + $0x1d0] sm:$0xff]
  %v112 = vld [vmem:[%s0 + $0x1d8] sm:$0xff]
  %v113 = vld [vmem:[%s0 + $0x1e0] sm:$0xff]
  %v114 = vld [vmem:[%s0 + $0x1e8] sm:$0xff]
  %v115 = vld [vmem:[%s0 + $0x1f0] sm:$0xff]
  %v116 = vld [vmem:[%s0 + $0x1f8] sm:$0xff]
  %v117 = vld [vmem:[%s0 + $0x200] sm:$0xff]
  %v118 = vld [vmem:[%s0 + $0x208] sm:$0xff]
  %v119 = vld [vmem:[%s0 + $0x210] sm:$0xff]
  %v120 = vld [vmem:[%s0 + $0x218] sm:$0xff]
  %v121 = vld [vmem:[%s0 + $0x220] sm:$0xff]
  %v122 = vld [vmem:[%s0 + $0x228] sm:$0xff]
  %v123 = vld [vmem:[%s0 + $0x230] sm:$0xff]
  %v124 = vld [vmem:[%s0 + $0x238] sm:$0xff]
  %v125 = vld [vmem:[%s0 + $0x240] sm:$0xff]
  %v126 = vld [vmem:[%s0 + $0x248] sm:$0xff]
  %v127 = vld [vmem:[%s0 + $0x250] sm:$0xff]
  %v128 = vld [vmem:[%s0 + $0x258] sm:$0xff]
  %v129 = vld [vmem:[%s0 + $0x260] sm:$0xff]
  %v130 = vld [vmem:[%s0 + $0x268] sm:$0xff]
  %v131 = vld [vmem:[%s0 + $0x270] sm:$0xff]
  %v132 = vld [vmem:[%s0 + $0x278] sm:$0xff]
  %v133 = vld [vmem:[%s1] sm:$0xff]
  %v134 = vld [vmem:[%s1 + $0x8] sm:$0xff]
  %v135 = vld [vmem:[%s1 + $0x10] sm:$0xff]
  %v136 = vld [vmem:[%s1 + $0x18] sm:$0xff]
  %v137 = vld [vmem:[%s1 + $0x20] sm:$0xff]
  %v138 = vld [vmem:[%s1 + $0x28] sm:$0xff]
  %v139 = vld [vmem:[%s1 + $0x30] sm:$0xff]
  %v140 = vld [vmem:[%s1 + $0x38] sm:$0xff]
  %v141 = vld [vmem:[%s1 + $0x40] sm:$0xff]
  %v142 = vld [vmem:[%s1 + $0x48] sm:$0xff]
  %v143 = vld [vmem:[%s1 + $0x50] sm:$0xff]
  %v144 = vld [vmem:[%s1 + $0x58] sm:$0xff]
  %v145 = vld [vmem:[%s1 + $0x60] sm:$0xff]
  %v146 = vld [vmem:[%s1 + $0x68] sm:$0xff]
  %v147 = vld [vmem:[%s1 + $0x70] sm:$0xff]
  %v148 = vld [vmem:[%s1 + $0x78] sm:$0xff]
  %v149 = vld [vmem:[%s1 + $0x80] sm:$0xff]
  %v150 = vld [vmem:[%s1 + $0x88] sm:$0xff]
  %v151 = vld [vmem:[%s1 + $0x90] sm:$0xff]
  %v152 = vld [vmem:[%s1 + $0x98] sm:$0xff]
  %v153 = vld [vmem:[%s1 + $0xa0] sm:$0xff]
  %v154 = vld [vmem:[%s1 + $0xa8] sm:$0xff]
  %v155 = vld [vmem:[%s1 + $0xb0] sm:$0xff]
  %v156 = vld [vmem:[%s1 + $0xb8] sm:$0xff]
  %v157 = vld [vmem:[%s1 + $0xc0] sm:$0xff]
  %v158 = vld [vmem:[%s1 + $0xc8] sm:$0xff]
  %v159 = vld [vmem:[%s1 + $0xd0] sm:$0xff]
  %v160 = vld [vmem:[%s1 + $0xd8] sm:$0xff]
  %v161 = vld [vmem:[%s1 + $0xe0] sm:$0xff]
  %v162 = vld [vmem:[%s1 + $0xe8] sm:$0xff]
  %v163 = vld [vmem:[%s1 + $0xf0] sm:$0xff]
  %v164 = vld [vmem:[%s1 + $0xf8] sm:$0xff]
  %v165 = vld [vmem:[%s1 + $0x100] sm:$0xff]
  %v166 = vld [vmem:[%s1 + $0x108] sm:$0xff]
  %v167 = vld [vmem:[%s1 + $0x110] sm:$0xff]
  %v168 = vld [vmem:[%s1 + $0x118] sm:$0xff]
  %v169 = vld [vmem:[%s1 + $0x120] sm:$0xff]
  %v170 = vld [vmem:[%s1 + $0x128] sm:$0xff]
  %v171 = vld [vmem:[%s1 + $0x130] sm:$0xff]
  %v172 = vld [vmem:[%s1 + $0x138] sm:$0xff]
  %v173 = vld [vmem:[%s1 + $0x140] sm:$0xff]
  %v174 = vld [vmem:[%s1 + $0x148] sm:$0xff]
  %v175 = vld [vmem:[%s1 + $0x150] sm:$0xff]
  %v176 = vld [vmem:[%s1 + $0x158] sm:$0xff]
  %v177 = vld [vmem:[%s1 + $0x160] sm:$0xff]
  %v178 = vld [vmem:[%s1 + $0x168] sm:$0xff]
  %v179 = vld [vmem:[%s1 + $0x170] sm:$0xff]
  %v180 = vld [vmem:[%s1 + $0x178] sm:$0xff]
  %v181 = vld [vmem:[%s1 + $0x180] sm:$0xff]
  %v182 = vld [vmem:[%s1 + $0x188] sm:$0xff]
  %v183 = vld [vmem:[%s1 + $0x190] sm:$0xff]
  %v184 = vld [vmem:[%s1 + $0x198] sm:$0xff]
  %v185 = vld [vmem:[%s1 + $0x1a0] sm:$0xff]
  %v186 = vld [vmem:[%s1 + $0x1a8] sm:$0xff]
  %v187 = vld [vmem:[%s1 + $0x1b0] sm:$0xff]
  %v188 = vld [vmem:[%s1 + $0x1b8] sm:$0xff]
  %v189 = vld [vmem:[%s1 + $0x1c0] sm:$0xff]
  %v190 = vld [vmem:[%s1 + $0x1c8] sm:$0xff]
  %v191 = vld [vmem:[%s1 + $0x1d0] sm:$0xff]
  %v192 = vld [vmem:[%s1 + $0x1d8] sm:$0xff]
  %v193 = vld [vmem:[%s1 + $0x1e0] sm:$0xff]
  %v194 = vld [vmem:[%s1 + $0x1e8] sm:$0xff]
  %v195 = vld [vmem:[%s1 + $0x1f0] sm:$0xff]
  %v196 = vld [vmem:[%s1 + $0x1f8] sm:$0xff]
  %v197 = vld [vmem:[%s1 + $0x200] sm:$0xff]
  %v198 = vld [vmem:[%s1 + $0x208] sm:$0xff]
  %v199 = vld [vmem:[%s1 + $0x210] sm:$0xff]
  %v200 = vld [vmem:[%s1 + $0x218] sm:$0xff]
  %v201 = vld [vmem:[%s1 + $0x220] sm:$0xff]
  %v202 = vld [vmem:[%s1 + $0x228] sm:$0xff]
  %v203 = vld [vmem:[%s1 + $0x230] sm:$0xff]
  %v204 = vld [vmem:[%s1 + $0x238] sm:$0xff]
  %v205 = vld [vmem:[%s1 + $0x240] sm:$0xff]
  %v206 = vld [vmem:[%s1 + $0x248] sm:$0xff]
  %v207 = vld [vmem:[%s1 + $0x250] sm:$0xff]
  %v208 = vld [vmem:[%s1 + $0x258] sm:$0xff]
  %v209 = vld [vmem:[%s1 + $0x260] sm:$0xff]
  %v210 = vld [vmem:[%s1 + $0x268] sm:$0xff]
  %v211 = vld [vmem:[%s1 + $0x270] sm:$0xff]
  %v212 = vld [vmem:[%s1 + $0x278] sm:$0xff]
  %213 = vmatprep.subr.mxu0 0.0
  %214 = vmatpush1.msra.mxu0 %v148
  %215 = vmatprep.subr.mxu0 0.0
  %216 = vmatpush1.msra.mxu0 %v147
  %217 = vmatprep.subr.mxu0 0.0
  %218 = vmatpush1.msra.mxu0 %v146
  %219 = vmatprep.subr.mxu0 0.0
  %220 = vmatpush1.msra.mxu0 %v145
  %221 = vmatprep.subr.mxu0 0.0
  %222 = vmatpush1.msra.mxu0 %v144
  %223 = vmatprep.subr.mxu0 0.0
  %224 = vmatpush1.msra.mxu0 %v143
  %225 = vmatprep.subr.mxu0 0.0
  %226 = vmatpush1.msra.mxu0 %v142
  %227 = vmatprep.subr.mxu0 0.0
  %228 = vmatpush1.msra.mxu0 %v141
  %229 = vmatprep.subr.mxu0 0.0
  %230 = vmatpush1.msra.mxu0 %v140
  %231 = vmatprep.subr.mxu0 0.0
  %232 = vmatpush1.msra.mxu0 %v139
  %233 = vmatprep.subr.mxu0 0.0
  %234 = vmatpush1.msra.mxu0 %v138
  %235 = vmatprep.subr.mxu0 0.0
  %236 = vmatpush1.msra.mxu0 %v137
  %237 = vmatprep.subr.mxu0 0.0
  %238 = vmatpush1.msra.mxu0 %v136
  %239 = vmatprep.subr.mxu0 0.0
  %240 = vmatpush1.msra.mxu0 %v135
  %241 = vmatprep.subr.mxu0 0.0
  %242 = vmatpush1.msra.mxu0 %v134
  %243 = vmatprep.subr.mxu0 0.0
  %244 = vmatpush1.msra.mxu0 %v133
  %245 = vmatprep.subr.mxu0 0.0
  %246 = vmatpush2.msra.mxu0 %v164
  %247 = vmatprep.subr.mxu0 0.0
  %248 = vmatpush2.msra.mxu0 %v163
  %249 = vmatprep.subr.mxu0 0.0
  %250 = vmatpush2.msra.mxu0 %v162
  %251 = vmatprep.subr.mxu0 0.0
  %252 = vmatpush2.msra.mxu0 %v161
  %253 = vmatprep.subr.mxu0 0.0
  %254 = vmatpush2.msra.mxu0 %v160
  %255 = vmatprep.subr.mxu0 0.0
  %256 = vmatpush2.msra.mxu0 %v159
  %257 = vmatprep.subr.mxu0 0.0
  %258 = vmatpush2.msra.mxu0 %v158
  %259 = vmatprep.subr.mxu0 0.0
  %260 = vmatpush2.msra.mxu0 %v157
  %261 = vmatprep.subr.mxu0 0.0
  %262 = vmatpush2.msra.mxu0 %v156
  %263 = vmatprep.subr.mxu0 0.0
  %264 = vmatpush2.msra.mxu0 %v155
  %265 = vmatprep.subr.mxu0 0.0
  %266 = vmatpush2.msra.mxu0 %v154
  %267 = vmatprep.subr.mxu0 0.0
  %268 = vmatpush2.msra.mxu0 %v153
  %269 = vmatprep.subr.mxu0 0.0
  %270 = vmatpush2.msra.mxu0 %v152
  %271 = vmatprep.subr.mxu0 0.0
  %272 = vmatpush2.msra.mxu0 %v151
  %273 = vmatprep.subr.mxu0 0.0
  %274 = vmatpush2.msra.mxu0 %v150
  %275 = vmatprep.subr.mxu0 0.0
  %276 = vmatpush2.msra.mxu0 %v149
  %277 = vmatprep.mubr.f32.mxu0 %v54
  %278 = vmatmul.mubr.f32.gmra.mxu0 %v53
  %v279 = vpop.f32.mrf.mxu0
  %v280 = vadd.f32 0.0, %v279
  %v281 = vpop.f32.mrf.mxu0
  %282 = vmatprep.mubr.f32.mxu0 %v59
  %283 = vmatmul.mubr.f32.gmra.mxu0 %v58
  %v284 = vpop.f32.mrf.mxu0
  %v285 = vadd.f32 0.0, %v284
  %v286 = vpop.f32.mrf.mxu0
  %287 = vmatprep.mubr.f32.mxu0 %v64
  %288 = vmatmul.mubr.f32.gmra.mxu0 %v63
  %v289 = vpop.f32.mrf.mxu0
  %v290 = vadd.f32 0.0, %v289
  %v291 = vpop.f32.mrf.mxu0
  %292 = vmatprep.mubr.f32.mxu0 %v69
  %293 = vmatmul.mubr.f32.gmra.mxu0 %v68
  %v294 = vpop.f32.mrf.mxu0
  %v295 = vadd.f32 0.0, %v294
  %v296 = vpop.f32.mrf.mxu0
  %297 = vmatprep.mubr.f32.mxu0 %v74
  %298 = vmatmul.mubr.f32.gmra.mxu0 %v73
  %v299 = vpop.f32.mrf.mxu0
  %v300 = vadd.f32 0.0, %v299
  %v301 = vpop.f32.mrf.mxu0
  %302 = vmatprep.mubr.f32.mxu0 %v79
  %303 = vmatmul.mubr.f32.gmra.mxu0 %v78
  %v304 = vpop.f32.mrf.mxu0
  %v305 = vadd.f32 0.0, %v304
  %v306 = vpop.f32.mrf.mxu0
  %307 = vmatprep.mubr.f32.mxu0 %v84
  %308 = vmatmul.mubr.f32.gmra.mxu0 %v83
  %v309 = vpop.f32.mrf.mxu0
  %v310 = vadd.f32 0.0, %v309
  %v311 = vpop.f32.mrf.mxu0
  %312 = vmatprep.mubr.f32.mxu0 %v89
  %313 = vmatmul.mubr.f32.gmra.mxu0 %v88
  %v314 = vpop.f32.mrf.mxu0
  %v315 = vadd.f32 0.0, %v314
  %v316 = vpop.f32.mrf.mxu0
  %317 = vmatprep.mubr.f32.mxu0 %v94
  %318 = vmatmul.mubr.f32.gmra.mxu0 %v93
  %v319 = vpop.f32.mrf.mxu0
  %v320 = vadd.f32 0.0, %v319
  %v321 = vpop.f32.mrf.mxu0
  %322 = vmatprep.mubr.f32.mxu0 %v99
  %323 = vmatmul.mubr.f32.gmra.mxu0 %v98
  %v324 = vpop.f32.mrf.mxu0
  %v325 = vadd.f32 0.0, %v324
  %v326 = vpop.f32.mrf.mxu0
  %327 = vmatprep.mubr.f32.mxu0 %v104
  %328 = vmatmul.mubr.f32.gmra.mxu0 %v103
  %v329 = vpop.f32.mrf.mxu0
  %v330 = vadd.f32 0.0, %v329
  %v331 = vpop.f32.mrf.mxu0
  %332 = vmatprep.mubr.f32.mxu0 %v109
  %333 = vmatmul.mubr.f32.gmra.mxu0 %v108
  %v334 = vpop.f32.mrf.mxu0
  %v335 = vadd.f32 0.0, %v334
  %v336 = vpop.f32.mrf.mxu0
  %337 = vmatprep.mubr.f32.mxu0 %v114
  %338 = vmatmul.mubr.f32.gmra.mxu0 %v113
  %v339 = vpop.f32.mrf.mxu0
  %v340 = vadd.f32 0.0, %v339
  %v341 = vpop.f32.mrf.mxu0
  %342 = vmatprep.mubr.f32.mxu0 %v119
  %343 = vmatmul.mubr.f32.gmra.mxu0 %v118
  %v344 = vpop.f32.mrf.mxu0
  %v345 = vadd.f32 0.0, %v344
  %v346 = vpop.f32.mrf.mxu0
  %347 = vmatprep.mubr.f32.mxu0 %v124
  %348 = vmatmul.mubr.f32.gmra.mxu0 %v123
  %v349 = vpop.f32.mrf.mxu0
  %v350 = vadd.f32 0.0, %v349
  %v351 = vpop.f32.mrf.mxu0
  %352 = vmatprep.mubr.f32.mxu0 %v129
  %353 = vmatmul.mubr.f32.gmra.mxu0 %v128
  %v354 = vpop.f32.mrf.mxu0
  %v355 = vadd.f32 0.0, %v354
  %v356 = vpop.f32.mrf.mxu0
  %357 = vdwg.mxu0
  %358 = vmatprep.subr.mxu0 0.0
  %359 = vmatpush1.msra.mxu0 %v180
  %360 = vmatprep.subr.mxu0 0.0
  %361 = vmatpush1.msra.mxu0 %v179
  %362 = vmatprep.subr.mxu0 0.0
  %363 = vmatpush1.msra.mxu0 %v178
  %364 = vmatprep.subr.mxu0 0.0
  %365 = vmatpush1.msra.mxu0 %v177
  %366 = vmatprep.subr.mxu0 0.0
  %367 = vmatpush1.msra.mxu0 %v176
  %368 = vmatprep.subr.mxu0 0.0
  %369 = vmatpush1.msra.mxu0 %v175
  %370 = vmatprep.subr.mxu0 0.0
  %371 = vmatpush1.msra.mxu0 %v174
  %372 = vmatprep.subr.mxu0 0.0
  %373 = vmatpush1.msra.mxu0 %v173
  %374 = vmatprep.subr.mxu0 0.0
  %375 = vmatpush1.msra.mxu0 %v172
  %376 = vmatprep.subr.mxu0 0.0
  %377 = vmatpush1.msra.mxu0 %v171
  %378 = vmatprep.subr.mxu0 0.0
  %379 = vmatpush1.msra.mxu0 %v170
  %380 = vmatprep.subr.mxu0 0.0
  %381 = vmatpush1.msra.mxu0 %v169
  %382 = vmatprep.subr.mxu0 0.0
  %383 = vmatpush1.msra.mxu0 %v168
  %384 = vmatprep.subr.mxu0 0.0
  %385 = vmatpush1.msra.mxu0 %v167
  %386 = vmatprep.subr.mxu0 0.0
  %387 = vmatpush1.msra.mxu0 %v166
  %388 = vmatprep.subr.mxu0 0.0
  %389 = vmatpush1.msra.mxu0 %v165
  %390 = vmatprep.subr.mxu0 0.0
  %391 = vmatpush2.msra.mxu0 %v196
  %392 = vmatprep.subr.mxu0 0.0
  %393 = vmatpush2.msra.mxu0 %v195
  %394 = vmatprep.subr.mxu0 0.0
  %395 = vmatpush2.msra.mxu0 %v194
  %396 = vmatprep.subr.mxu0 0.0
  %397 = vmatpush2.msra.mxu0 %v193
  %398 = vmatprep.subr.mxu0 0.0
  %399 = vmatpush2.msra.mxu0 %v192
  %400 = vmatprep.subr.mxu0 0.0
  %401 = vmatpush2.msra.mxu0 %v191
  %402 = vmatprep.subr.mxu0 0.0
  %403 = vmatpush2.msra.mxu0 %v190
  %404 = vmatprep.subr.mxu0 0.0
  %405 = vmatpush2.msra.mxu0 %v189
  %406 = vmatprep.subr.mxu0 0.0
  %407 = vmatpush2.msra.mxu0 %v188
  %408 = vmatprep.subr.mxu0 0.0
  %409 = vmatpush2.msra.mxu0 %v187
  %410 = vmatprep.subr.mxu0 0.0
  %411 = vmatpush2.msra.mxu0 %v186
  %412 = vmatprep.subr.mxu0 0.0
  %413 = vmatpush2.msra.mxu0 %v185
  %414 = vmatprep.subr.mxu0 0.0
  %415 = vmatpush2.msra.mxu0 %v184
  %416 = vmatprep.subr.mxu0 0.0
  %417 = vmatpush2.msra.mxu0 %v183
  %418 = vmatprep.subr.mxu0 0.0
  %419 = vmatpush2.msra.mxu0 %v182
  %420 = vmatprep.subr.mxu0 0.0
  %421 = vmatpush2.msra.mxu0 %v181
  %422 = vmatprep.mubr.f32.mxu0 %v56
  %423 = vmatmul.mubr.f32.gmra.mxu0 %v55
  %v424 = vpop.f32.mrf.mxu0
  %v425 = vadd.f32 %v280, %v424
  %v426 = vpop.f32.mrf.mxu0
  %427 = vmatprep.mubr.f32.mxu0 %v61
  %428 = vmatmul.mubr.f32.gmra.mxu0 %v60
  %v429 = vpop.f32.mrf.mxu0
  %v430 = vadd.f32 %v285, %v429
  %v431 = vpop.f32.mrf.mxu0
  %432 = vmatprep.mubr.f32.mxu0 %v66
  %433 = vmatmul.mubr.f32.gmra.mxu0 %v65
  %v434 = vpop.f32.mrf.mxu0
  %v435 = vadd.f32 %v290, %v434
  %v436 = vpop.f32.mrf.mxu0
  %437 = vmatprep.mubr.f32.mxu0 %v71
  %438 = vmatmul.mubr.f32.gmra.mxu0 %v70
  %v439 = vpop.f32.mrf.mxu0
  %v440 = vadd.f32 %v295, %v439
  %v441 = vpop.f32.mrf.mxu0
  %442 = vmatprep.mubr.f32.mxu0 %v76
  %443 = vmatmul.mubr.f32.gmra.mxu0 %v75
  %v444 = vpop.f32.mrf.mxu0
  %v445 = vadd.f32 %v300, %v444
  %v446 = vpop.f32.mrf.mxu0
  %447 = vmatprep.mubr.f32.mxu0 %v81
  %448 = vmatmul.mubr.f32.gmra.mxu0 %v80
  %v449 = vpop.f32.mrf.mxu0
  %v450 = vadd.f32 %v305, %v449
  %v451 = vpop.f32.mrf.mxu0
  %452 = vmatprep.mubr.f32.mxu0 %v86
  %453 = vmatmul.mubr.f32.gmra.mxu0 %v85
  %v454 = vpop.f32.mrf.mxu0
  %v455 = vadd.f32 %v310, %v454
  %v456 = vpop.f32.mrf.mxu0
  %457 = vmatprep.mubr.f32.mxu0 %v91
  %458 = vmatmul.mubr.f32.gmra.mxu0 %v90
  %v459 = vpop.f32.mrf.mxu0
  %v460 = vadd.f32 %v315, %v459
  %v461 = vpop.f32.mrf.mxu0
  %462 = vmatprep.mubr.f32.mxu0 %v96
  %463 = vmatmul.mubr.f32.gmra.mxu0 %v95
  %v464 = vpop.f32.mrf.mxu0
  %v465 = vadd.f32 %v320, %v464
  %v466 = vpop.f32.mrf.mxu0
  %467 = vmatprep.mubr.f32.mxu0 %v101
  %468 = vmatmul.mubr.f32.gmra.mxu0 %v100
  %v469 = vpop.f32.mrf.mxu0
  %v470 = vadd.f32 %v325, %v469
  %v471 = vpop.f32.mrf.mxu0
  %472 = vmatprep.mubr.f32.mxu0 %v106
  %473 = vmatmul.mubr.f32.gmra.mxu0 %v105
  %v474 = vpop.f32.mrf.mxu0
  %v475 = vadd.f32 %v330, %v474
  %v476 = vpop.f32.mrf.mxu0
  %477 = vmatprep.mubr.f32.mxu0 %v111
  %478 = vmatmul.mubr.f32.gmra.mxu0 %v110
  %v479 = vpop.f32.mrf.mxu0
  %v480 = vadd.f32 %v335, %v479
  %v481 = vpop.f32.mrf.mxu0
  %482 = vmatprep.mubr.f32.mxu0 %v116
  %483 = vmatmul.mubr.f32.gmra.mxu0 %v115
  %v484 = vpop.f32.mrf.mxu0
  %v485 = vadd.f32 %v340, %v484
  %v486 = vpop.f32.mrf.mxu0
  %487 = vmatprep.mubr.f32.mxu0 %v121
  %488 = vmatmul.mubr.f32.gmra.mxu0 %v120
  %v489 = vpop.f32.mrf.mxu0
  %v490 = vadd.f32 %v345, %v489
  %v491 = vpop.f32.mrf.mxu0
  %492 = vmatprep.mubr.f32.mxu0 %v126
  %493 = vmatmul.mubr.f32.gmra.mxu0 %v125
  %v494 = vpop.f32.mrf.mxu0
  %v495 = vadd.f32 %v350, %v494
  %v496 = vpop.f32.mrf.mxu0
  %497 = vmatprep.mubr.f32.mxu0 %v131
  %498 = vmatmul.mubr.f32.gmra.mxu0 %v130
  %v499 = vpop.f32.mrf.mxu0
  %v500 = vadd.f32 %v355, %v499
  %v501 = vpop.f32.mrf.mxu0
  %502 = vdwg.mxu0
  %503 = vmatprep.subr.mxu0 0.0
  %504 = vmatpush1.msra.mxu0 %v212
  %505 = vmatprep.subr.mxu0 0.0
  %506 = vmatpush1.msra.mxu0 %v211
  %507 = vmatprep.subr.mxu0 0.0
  %508 = vmatpush1.msra.mxu0 %v210
  %509 = vmatprep.subr.mxu0 0.0
  %510 = vmatpush1.msra.mxu0 %v209
  %511 = vmatprep.subr.mxu0 0.0
  %512 = vmatpush1.msra.mxu0 %v208
  %513 = vmatprep.subr.mxu0 0.0
  %514 = vmatpush1.msra.mxu0 %v207
  %515 = vmatprep.subr.mxu0 0.0
  %516 = vmatpush1.msra.mxu0 %v206
  %517 = vmatprep.subr.mxu0 0.0
  %518 = vmatpush1.msra.mxu0 %v205
  %519 = vmatprep.subr.mxu0 0.0
  %520 = vmatpush1.msra.mxu0 %v204
  %521 = vmatprep.subr.mxu0 0.0
  %522 = vmatpush1.msra.mxu0 %v203
  %523 = vmatprep.subr.mxu0 0.0
  %524 = vmatpush1.msra.mxu0 %v202
  %525 = vmatprep.subr.mxu0 0.0
  %526 = vmatpush1.msra.mxu0 %v201
  %527 = vmatprep.subr.mxu0 0.0
  %528 = vmatpush1.msra.mxu0 %v200
  %529 = vmatprep.subr.mxu0 0.0
  %530 = vmatpush1.msra.mxu0 %v199
  %531 = vmatprep.subr.mxu0 0.0
  %532 = vmatpush1.msra.mxu0 %v198
  %533 = vmatprep.subr.mxu0 0.0
  %534 = vmatpush1.msra.mxu0 %v197
  %535 = vmatprep.subr.mxu0 0.0
  %536 = vmatpush2.msra.mxu0 0.0
  %537 = vmatprep.subr.mxu0 0.0
  %538 = vmatpush2.msra.mxu0 0.0
  %539 = vmatprep.subr.mxu0 0.0
  %540 = vmatpush2.msra.mxu0 0.0
  %541 = vmatprep.subr.mxu0 0.0
  %542 = vmatpush2.msra.mxu0 0.0
  %543 = vmatprep.subr.mxu0 0.0
  %544 = vmatpush2.msra.mxu0 0.0
  %545 = vmatprep.subr.mxu0 0.0
  %546 = vmatpush2.msra.mxu0 0.0
  %547 = vmatprep.subr.mxu0 0.0
  %548 = vmatpush2.msra.mxu0 0.0
  %549 = vmatprep.subr.mxu0 0.0
  %550 = vmatpush2.msra.mxu0 0.0
  %551 = vmatprep.subr.mxu0 0.0
  %552 = vmatpush2.msra.mxu0 0.0
  %553 = vmatprep.subr.mxu0 0.0
  %554 = vmatpush2.msra.mxu0 0.0
  %555 = vmatprep.subr.mxu0 0.0
  %556 = vmatpush2.msra.mxu0 0.0
  %557 = vmatprep.subr.mxu0 0.0
  %558 = vmatpush2.msra.mxu0 0.0
  %559 = vmatprep.subr.mxu0 0.0
  %560 = vmatpush2.msra.mxu0 0.0
  %561 = vmatprep.subr.mxu0 0.0
  %562 = vmatpush2.msra.mxu0 0.0
  %563 = vmatprep.subr.mxu0 0.0
  %564 = vmatpush2.msra.mxu0 0.0
  %565 = vmatprep.subr.mxu0 0.0
  %566 = vmatpush2.msra.mxu0 0.0
  %567 = vmatprep.mubr.f32.mxu0 0.0
  %568 = vmatmul.mubr.f32.gmra.mxu0 %v57
  %v569 = vpop.f32.mrf.mxu0
  %v570 = vadd.f32 %v425, %v569
  %v571 = vpop.f32.mrf.mxu0
  %572 = vmatprep.mubr.f32.mxu0 0.0
  %573 = vmatmul.mubr.f32.gmra.mxu0 %v62
  %v574 = vpop.f32.mrf.mxu0
  %v575 = vadd.f32 %v430, %v574
  %v576 = vpop.f32.mrf.mxu0
  %577 = vmatprep.mubr.f32.mxu0 0.0
  %578 = vmatmul.mubr.f32.gmra.mxu0 %v67
  %v579 = vpop.f32.mrf.mxu0
  %v580 = vadd.f32 %v435, %v579
  %v581 = vpop.f32.mrf.mxu0
  %582 = vmatprep.mubr.f32.mxu0 0.0
  %583 = vmatmul.mubr.f32.gmra.mxu0 %v72
  %v584 = vpop.f32.mrf.mxu0
  %v585 = vadd.f32 %v440, %v584
  %v586 = vpop.f32.mrf.mxu0
  %587 = vmatprep.mubr.f32.mxu0 0.0
  %588 = vmatmul.mubr.f32.gmra.mxu0 %v77
  %v589 = vpop.f32.mrf.mxu0
  %v590 = vadd.f32 %v445, %v589
  %v591 = vpop.f32.mrf.mxu0
  %592 = vmatprep.mubr.f32.mxu0 0.0
  %593 = vmatmul.mubr.f32.gmra.mxu0 %v82
  %v594 = vpop.f32.mrf.mxu0
  %v595 = vadd.f32 %v450, %v594
  %v596 = vpop.f32.mrf.mxu0
  %597 = vmatprep.mubr.f32.mxu0 0.0
  %598 = vmatmul.mubr.f32.gmra.mxu0 %v87
  %v599 = vpop.f32.mrf.mxu0
  %v600 = vadd.f32 %v455, %v599
  %v601 = vpop.f32.mrf.mxu0
  %602 = vmatprep.mubr.f32.mxu0 0.0
  %603 = vmatmul.mubr.f32.gmra.mxu0 %v92
  %v604 = vpop.f32.mrf.mxu0
  %v605 = vadd.f32 %v460, %v604
  %v606 = vpop.f32.mrf.mxu0
  %607 = vmatprep.mubr.f32.mxu0 0.0
  %608 = vmatmul.mubr.f32.gmra.mxu0 %v97
  %v609 = vpop.f32.mrf.mxu0
  %v610 = vadd.f32 %v465, %v609
  %v611 = vpop.f32.mrf.mxu0
  %612 = vmatprep.mubr.f32.mxu0 0.0
  %613 = vmatmul.mubr.f32.gmra.mxu0 %v102
  %v614 = vpop.f32.mrf.mxu0
  %v615 = vadd.f32 %v470, %v614
  %v616 = vpop.f32.mrf.mxu0
  %617 = vmatprep.mubr.f32.mxu0 0.0
  %618 = vmatmul.mubr.f32.gmra.mxu0 %v107
  %v619 = vpop.f32.mrf.mxu0
  %v620 = vadd.f32 %v475, %v619
  %v621 = vpop.f32.mrf.mxu0
  %622 = vmatprep.mubr.f32.mxu0 0.0
  %623 = vmatmul.mubr.f32.gmra.mxu0 %v112
  %v624 = vpop.f32.mrf.mxu0
  %v625 = vadd.f32 %v480, %v624
  %v626 = vpop.f32.mrf.mxu0
  %627 = vmatprep.mubr.f32.mxu0 0.0
  %628 = vmatmul.mubr.f32.gmra.mxu0 %v117
  %v629 = vpop.f32.mrf.mxu0
  %v630 = vadd.f32 %v485, %v629
  %v631 = vpop.f32.mrf.mxu0
  %632 = vmatprep.mubr.f32.mxu0 0.0
  %633 = vmatmul.mubr.f32.gmra.mxu0 %v122
  %v634 = vpop.f32.mrf.mxu0
  %v635 = vadd.f32 %v490, %v634
  %v636 = vpop.f32.mrf.mxu0
  %637 = vmatprep.mubr.f32.mxu0 0.0
  %638 = vmatmul.mubr.f32.gmra.mxu0 %v127
  %v639 = vpop.f32.mrf.mxu0
  %v640 = vadd.f32 %v495, %v639
  %v641 = vpop.f32.mrf.mxu0
  %642 = vmatprep.mubr.f32.mxu0 0.0
  %643 = vmatmul.mubr.f32.gmra.mxu0 %v132
  %v644 = vpop.f32.mrf.mxu0
  %v645 = vadd.f32 %v500, %v644
  %v646 = vpop.f32.mrf.mxu0
  %647 = vdwg.mxu0
  %v648 = vadd.f32 %v37, %v570
  %v649 = vadd.f32 %v38, %v575
  %v650 = vadd.f32 %v39, %v580
  %v651 = vadd.f32 %v40, %v585
  %v652 = vadd.f32 %v41, %v590
  %v653 = vadd.f32 %v42, %v595
  %v654 = vadd.f32 %v43, %v600
  %v655 = vadd.f32 %v44, %v605
  %v656 = vadd.f32 %v45, %v610
  %v657 = vadd.f32 %v46, %v615
  %v658 = vadd.f32 %v47, %v620
  %v659 = vadd.f32 %v48, %v625
  %v660 = vadd.f32 %v49, %v630
  %v661 = vadd.f32 %v50, %v635
  %v662 = vadd.f32 %v51, %v640
  %v663 = vadd.f32 %v52, %v645
  %664 = vst [vmem:[#allocation2] sm:$0xff] %v648
  %665 = vst [vmem:[#allocation2 + $0x8] sm:$0xff] %v649
  %666 = vst [vmem:[#allocation2 + $0x10] sm:$0xff] %v650
  %667 = vst [vmem:[#allocation2 + $0x18] sm:$0xff] %v651
  %668 = vst [vmem:[#allocation2 + $0x20] sm:$0xff] %v652
  %669 = vst [vmem:[#allocation2 + $0x28] sm:$0xff] %v653
  %670 = vst [vmem:[#allocation2 + $0x30] sm:$0xff] %v654
  %671 = vst [vmem:[#allocation2 + $0x38] sm:$0xff] %v655
  %672 = vst [vmem:[#allocation2 + $0x40] sm:$0xff] %v656
  %673 = vst [vmem:[#allocation2 + $0x48] sm:$0xff] %v657
  %674 = vst [vmem:[#allocation2 + $0x50] sm:$0xff] %v658
  %675 = vst [vmem:[#allocation2 + $0x58] sm:$0xff] %v659
  %676 = vst [vmem:[#allocation2 + $0x60] sm:$0xff] %v660
  %677 = vst [vmem:[#allocation2 + $0x68] sm:$0xff] %v661
  %678 = vst [vmem:[#allocation2 + $0x70] sm:$0xff] %v662
  %679 = vst [vmem:[#allocation2 + $0x78] sm:$0xff] %v663
  // Predicated region
  $region22: #{_lambda_.16} parent=0 // pred_check
    %p680 = pneg %p17
  $region23: #{_lambda_.16} parent=0 // pred_check_branch
    %682 = sbr.rel (%p680) target = $region25
  $region24: #{_lambda_.16} parent=0 // pred_region
    %v683 = vld [vmem:[#allocation2] sm:$0xff]
    %v684 = vld [vmem:[#allocation2 + $0x8] sm:$0xff]
    %v685 = vld [vmem:[#allocation2 + $0x10] sm:$0xff]
    %v686 = vld [vmem:[#allocation2 + $0x18] sm:$0xff]
    %v687 = vld [vmem:[#allocation2 + $0x20] sm:$0xff]
    %v688 = vld [vmem:[#allocation2 + $0x28] sm:$0xff]
    %v689 = vld [vmem:[#allocation2 + $0x30] sm:$0xff]
    %v690 = vld [vmem:[#allocation2 + $0x38] sm:$0xff]
    %v691 = vld [vmem:[#allocation2 + $0x40] sm:$0xff]
    %v692 = vld [vmem:[#allocation2 + $0x48] sm:$0xff]
    %v693 = vld [vmem:[#allocation2 + $0x50] sm:$0xff]
    %v694 = vld [vmem:[#allocation2 + $0x58] sm:$0xff]
    %v695 = vld [vmem:[#allocation2 + $0x60] sm:$0xff]
    %v696 = vld [vmem:[#allocation2 + $0x68] sm:$0xff]
    %v697 = vld [vmem:[#allocation2 + $0x70] sm:$0xff]
    %v698 = vld [vmem:[#allocation2 + $0x78] sm:$0xff]
    %v699 = vld [vmem:[%s2] sm:$0x1]
    %v701 = vlaneseq
    %v702 = vshrl.u32 %v701, 7
    %v703 = vsub.s32 0, %v702
    %v704 = vrot.slane %v699, %v703
    %v706 = vmul.f32 %v683, %v704
    %v707 = vmul.f32 %v684, %v704
    %v708 = vmul.f32 %v685, %v704
    %v709 = vmul.f32 %v686, %v704
    %v710 = vmul.f32 %v687, %v704
    %v711 = vmul.f32 %v688, %v704
    %v712 = vmul.f32 %v689, %v704
    %v713 = vmul.f32 %v690, %v704
    %v714 = vmul.f32 %v691, %v704
    %v715 = vmul.f32 %v692, %v704
    %v716 = vmul.f32 %v693, %v704
    %v717 = vmul.f32 %v694, %v704
    %v718 = vmul.f32 %v695, %v704
    %v719 = vmul.f32 %v696, %v704
    %v720 = vmul.f32 %v697, %v704
    %v721 = vmul.f32 %v698, %v704
    %v722 = vld [vmem:[%s3] sm:$0x1]
    %v724 = vlaneseq
    %v725 = vshrl.u32 %v724, 7
    %v726 = vsub.s32 0, %v725
    %v727 = vrot.slane %v722, %v726
    %v729 = vadd.f32 %v706, %v727
    %v730 = vadd.f32 %v707, %v727
    %v731 = vadd.f32 %v708, %v727
    %v732 = vadd.f32 %v709, %v727
    %v733 = vadd.f32 %v710, %v727
    %v734 = vadd.f32 %v711, %v727
    %v735 = vadd.f32 %v712, %v727
    %v736 = vadd.f32 %v713, %v727
    %v737 = vadd.f32 %v714, %v727
    %v738 = vadd.f32 %v715, %v727
    %v739 = vadd.f32 %v716, %v727
    %v740 = vadd.f32 %v717, %v727
    %v741 = vadd.f32 %v718, %v727
    %v742 = vadd.f32 %v719, %v727
    %v743 = vadd.f32 %v720, %v727
    %v744 = vadd.f32 %v721, %v727
    %v745 = vmax.f32 %v729, 0.0
    %v746 = vmax.f32 %v730, 0.0
    %v747 = vmax.f32 %v731, 0.0
    %v748 = vmax.f32 %v732, 0.0
    %v749 = vmax.f32 %v733, 0.0
    %v750 = vmax.f32 %v734, 0.0
    %v751 = vmax.f32 %v735, 0.0
    %v752 = vmax.f32 %v736, 0.0
    %v753 = vmax.f32 %v737, 0.0
    %v754 = vmax.f32 %v738, 0.0
    %v755 = vmax.f32 %v739, 0.0
    %v756 = vmax.f32 %v740, 0.0
    %v757 = vmax.f32 %v741, 0.0
    %v758 = vmax.f32 %v742, 0.0
    %v759 = vmax.f32 %v743, 0.0
    %v760 = vmax.f32 %v744, 0.0
    %761 = vst [vmem:[%s4] sm:$0xff] %v745
    %762 = vst [vmem:[%s4 + $0x8] sm:$0xff] %v746
    %763 = vst [vmem:[%s4 + $0x10] sm:$0xff] %v747
    %764 = vst [vmem:[%s4 + $0x18] sm:$0xff] %v748
    %765 = vst [vmem:[%s4 + $0x20] sm:$0xff] %v749
    %766 = vst [vmem:[%s4 + $0x28] sm:$0xff] %v750
    %767 = vst [vmem:[%s4 + $0x30] sm:$0xff] %v751
    %768 = vst [vmem:[%s4 + $0x38] sm:$0xff] %v752
    %769 = vst [vmem:[%s4 + $0x40] sm:$0xff] %v753
    %770 = vst [vmem:[%s4 + $0x48] sm:$0xff] %v754
    %771 = vst [vmem:[%s4 + $0x50] sm:$0xff] %v755
    %772 = vst [vmem:[%s4 + $0x58] sm:$0xff] %v756
    %773 = vst [vmem:[%s4 + $0x60] sm:$0xff] %v757
    %774 = vst [vmem:[%s4 + $0x68] sm:$0xff] %v758
    %775 = vst [vmem:[%s4 + $0x70] sm:$0xff] %v759
    %776 = vst [vmem:[%s4 + $0x78] sm:$0xff] %v760
  $region25: #{_lambda_.16} parent=0 // pred_fallthru
    _
  // Predicated region
  $region26: #{_lambda_.16} parent=0 // pred_check
    _
  $region27: #{_lambda_.16} parent=0 // pred_check_branch
    %778 = sbr.rel (0) target = $region29
  $region28: #{_lambda_.16} parent=0 // pred_region
    _
  $region29: #{_lambda_.16} parent=0 // pred_fallthru
    _
  // Predicated region
  $region30: #{_lambda_.16} parent=0 // pred_check
    _
  $region31: #{_lambda_.16} parent=0 // pred_check_branch
    %780 = sbr.rel (0) target = $region33
  $region32: #{_lambda_.16} parent=0 // pred_region
    _
  $region33: #{_lambda_.16} parent=0 // pred_fallthru
    _

// kernel: _lambda_.17
$region0: #{_lambda_.17}
  #allocation0 [shape = 'u32[]', space=smem, size = 0x4, offset = 0x4, fixed_abs, tag = 'smem constant byte address 0x4 - core index']
  #allocation1 [shape = 'u32[144,128]{1,0:T(1,128)}', space=vmem, size = 0x12000, scoped, tag = 'internal scratch']
  #allocation2 [shape = 'f32[128,128]{1,0:T(8,128)}', space=vmem, size = 0x10000, scoped, tag = 'scratch operand']
  %s0 = inlined_call_operand.vmem [shape: f32[128,640], index: 0, kind: input, shape index: {}]
  %s1 = inlined_call_operand.vmem [shape: f32[640,128], index: 1, kind: input, shape index: {}]
  %s2 = inlined_call_operand.vmem [shape: f32[1,128], index: 2, kind: input, shape index: {}]
  %s3 = inlined_call_operand.vmem [shape: f32[1,128], index: 3, kind: input, shape index: {}]
  %s4 = inlined_call_operand.vmem [shape: f32[128,128], index: 4, kind: input, shape index: {}]
  %s5 = inlined_call_operand.vmem [shape: f32[128,128], index: 5, kind: output, shape index: {}]
  %s6 = sld [smem:[#allocation0]]
  $region38: #{_lambda_.17} parent=0
    _
  %s8 = ssub.s32 1, %s6
  %s9 = scalar_select 0, %s8, %s6
  // Predicated region
  $region2: #{_lambda_.17} parent=0 // pred_check
    _
  $region3: #{_lambda_.17} parent=0 // pred_check_branch
    %11 = sbr.rel (0) target = $region5
  $region4: #{_lambda_.17} parent=0 // pred_region
    _
  $region5: #{_lambda_.17} parent=0 // pred_fallthru
    _
  // Predicated region
  $region6: #{_lambda_.17} parent=0 // pred_check
    _
  $region7: #{_lambda_.17} parent=0 // pred_check_branch
    %13 = sbr.rel (0) target = $region9
  $region8: #{_lambda_.17} parent=0 // pred_region
    _
  $region9: #{_lambda_.17} parent=0 // pred_fallthru
    _
  // Predicated region
  $region10: #{_lambda_.17} parent=0 // pred_check
    _
  $region11: #{_lambda_.17} parent=0 // pred_check_branch
    %15 = sbr.rel (0) target = $region13
  $region12: #{_lambda_.17} parent=0 // pred_region
    _
  $region13: #{_lambda_.17} parent=0 // pred_fallthru
    _
  // Predicated region
  $region14: #{_lambda_.17} parent=0 // pred_check
    _
  $region15: #{_lambda_.17} parent=0 // pred_check_branch
    %17 = sbr.rel (0) target = $region17
  $region16: #{_lambda_.17} parent=0 // pred_region
    _
  $region17: #{_lambda_.17} parent=0 // pred_fallthru
    _
  // Predicated region
  $region18: #{_lambda_.17} parent=0 // pred_check
    _
  $region19: #{_lambda_.17} parent=0 // pred_check_branch
    %19 = sbr.rel (0) target = $region21
  $region20: #{_lambda_.17} parent=0 // pred_region
    _
  $region21: #{_lambda_.17} parent=0 // pred_fallthru
    _
  %p20 = scmp.eq.s32.totalorder 0, 0
  // Predicated region
  $region22: #{_lambda_.17} parent=0 // pred_check
    %p21 = pneg %p20
  $region23: #{_lambda_.17} parent=0 // pred_check_branch
    %23 = sbr.rel (%p21) target = $region25
  $region24: #{_lambda_.17} parent=0 // pred_region
    %24 = vst [vmem:[#allocation2] sm:$0xff] 0.0
    %25 = vst [vmem:[#allocation2 + $0x8] sm:$0xff] 0.0
    %26 = vst [vmem:[#allocation2 + $0x10] sm:$0xff] 0.0
    %27 = vst [vmem:[#allocation2 + $0x18] sm:$0xff] 0.0
    %28 = vst [vmem:[#allocation2 + $0x20] sm:$0xff] 0.0
    %29 = vst [vmem:[#allocation2 + $0x28] sm:$0xff] 0.0
    %30 = vst [vmem:[#allocation2 + $0x30] sm:$0xff] 0.0
    %31 = vst [vmem:[#allocation2 + $0x38] sm:$0xff] 0.0
    %32 = vst [vmem:[#allocation2 + $0x40] sm:$0xff] 0.0
    %33 = vst [vmem:[#allocation2 + $0x48] sm:$0xff] 0.0
    %34 = vst [vmem:[#allocation2 + $0x50] sm:$0xff] 0.0
    %35 = vst [vmem:[#allocation2 + $0x58] sm:$0xff] 0.0
    %36 = vst [vmem:[#allocation2 + $0x60] sm:$0xff] 0.0
    %37 = vst [vmem:[#allocation2 + $0x68] sm:$0xff] 0.0
    %38 = vst [vmem:[#allocation2 + $0x70] sm:$0xff] 0.0
    %39 = vst [vmem:[#allocation2 + $0x78] sm:$0xff] 0.0
  $region25: #{_lambda_.17} parent=0 // pred_fallthru
    _
  %v40 = vld [vmem:[#allocation2] sm:$0xff]
  %v41 = vld [vmem:[#allocation2 + $0x8] sm:$0xff]
  %v42 = vld [vmem:[#allocation2 + $0x10] sm:$0xff]
  %v43 = vld [vmem:[#allocation2 + $0x18] sm:$0xff]
  %v44 = vld [vmem:[#allocation2 + $0x20] sm:$0xff]
  %v45 = vld [vmem:[#allocation2 + $0x28] sm:$0xff]
  %v46 = vld [vmem:[#allocation2 + $0x30] sm:$0xff]
  %v47 = vld [vmem:[#allocation2 + $0x38] sm:$0xff]
  %v48 = vld [vmem:[#allocation2 + $0x40] sm:$0xff]
  %v49 = vld [vmem:[#allocation2 + $0x48] sm:$0xff]
  %v50 = vld [vmem:[#allocation2 + $0x50] sm:$0xff]
  %v51 = vld [vmem:[#allocation2 + $0x58] sm:$0xff]
  %v52 = vld [vmem:[#allocation2 + $0x60] sm:$0xff]
  %v53 = vld [vmem:[#allocation2 + $0x68] sm:$0xff]
  %v54 = vld [vmem:[#allocation2 + $0x70] sm:$0xff]
  %v55 = vld [vmem:[#allocation2 + $0x78] sm:$0xff]
  %v56 = vld [vmem:[%s0] sm:$0xff]
  %v57 = vld [vmem:[%s0 + $0x8] sm:$0xff]
  %v58 = vld [vmem:[%s0 + $0x10] sm:$0xff]
  %v59 = vld [vmem:[%s0 + $0x18] sm:$0xff]
  %v60 = vld [vmem:[%s0 + $0x20] sm:$0xff]
  %v61 = vld [vmem:[%s0 + $0x28] sm:$0xff]
  %v62 = vld [vmem:[%s0 + $0x30] sm:$0xff]
  %v63 = vld [vmem:[%s0 + $0x38] sm:$0xff]
  %v64 = vld [vmem:[%s0 + $0x40] sm:$0xff]
  %v65 = vld [vmem:[%s0 + $0x48] sm:$0xff]
  %v66 = vld [vmem:[%s0 + $0x50] sm:$0xff]
  %v67 = vld [vmem:[%s0 + $0x58] sm:$0xff]
  %v68 = vld [vmem:[%s0 + $0x60] sm:$0xff]
  %v69 = vld [vmem:[%s0 + $0x68] sm:$0xff]
  %v70 = vld [vmem:[%s0 + $0x70] sm:$0xff]
  %v71 = vld [vmem:[%s0 + $0x78] sm:$0xff]
  %v72 = vld [vmem:[%s0 + $0x80] sm:$0xff]
  %v73 = vld [vmem:[%s0 + $0x88] sm:$0xff]
  %v74 = vld [vmem:[%s0 + $0x90] sm:$0xff]
  %v75 = vld [vmem:[%s0 + $0x98] sm:$0xff]
  %v76 = vld [vmem:[%s0 + $0xa0] sm:$0xff]
  %v77 = vld [vmem:[%s0 + $0xa8] sm:$0xff]
  %v78 = vld [vmem:[%s0 + $0xb0] sm:$0xff]
  %v79 = vld [vmem:[%s0 + $0xb8] sm:$0xff]
  %v80 = vld [vmem:[%s0 + $0xc0] sm:$0xff]
  %v81 = vld [vmem:[%s0 + $0xc8] sm:$0xff]
  %v82 = vld [vmem:[%s0 + $0xd0] sm:$0xff]
  %v83 = vld [vmem:[%s0 + $0xd8] sm:$0xff]
  %v84 = vld [vmem:[%s0 + $0xe0] sm:$0xff]
  %v85 = vld [vmem:[%s0 + $0xe8] sm:$0xff]
  %v86 = vld [vmem:[%s0 + $0xf0] sm:$0xff]
  %v87 = vld [vmem:[%s0 + $0xf8] sm:$0xff]
  %v88 = vld [vmem:[%s0 + $0x100] sm:$0xff]
  %v89 = vld [vmem:[%s0 + $0x108] sm:$0xff]
  %v90 = vld [vmem:[%s0 + $0x110] sm:$0xff]
  %v91 = vld [vmem:[%s0 + $0x118] sm:$0xff]
  %v92 = vld [vmem:[%s0 + $0x120] sm:$0xff]
  %v93 = vld [vmem:[%s0 + $0x128] sm:$0xff]
  %v94 = vld [vmem:[%s0 + $0x130] sm:$0xff]
  %v95 = vld [vmem:[%s0 + $0x138] sm:$0xff]
  %v96 = vld [vmem:[%s0 + $0x140] sm:$0xff]
  %v97 = vld [vmem:[%s0 + $0x148] sm:$0xff]
  %v98 = vld [vmem:[%s0 + $0x150] sm:$0xff]
  %v99 = vld [vmem:[%s0 + $0x158] sm:$0xff]
  %v100 = vld [vmem:[%s0 + $0x160] sm:$0xff]
  %v101 = vld [vmem:[%s0 + $0x168] sm:$0xff]
  %v102 = vld [vmem:[%s0 + $0x170] sm:$0xff]
  %v103 = vld [vmem:[%s0 + $0x178] sm:$0xff]
  %v104 = vld [vmem:[%s0 + $0x180] sm:$0xff]
  %v105 = vld [vmem:[%s0 + $0x188] sm:$0xff]
  %v106 = vld [vmem:[%s0 + $0x190] sm:$0xff]
  %v107 = vld [vmem:[%s0 + $0x198] sm:$0xff]
  %v108 = vld [vmem:[%s0 + $0x1a0] sm:$0xff]
  %v109 = vld [vmem:[%s0 + $0x1a8] sm:$0xff]
  %v110 = vld [vmem:[%s0 + $0x1b0] sm:$0xff]
  %v111 = vld [vmem:[%s0 + $0x1b8] sm:$0xff]
  %v112 = vld [vmem:[%s0 + $0x1c0] sm:$0xff]
  %v113 = vld [vmem:[%s0 + $0x1c8] sm:$0xff]
  %v114 = vld [vmem:[%s0 + $0x1d0] sm:$0xff]
  %v115 = vld [vmem:[%s0 + $0x1d8] sm:$0xff]
  %v116 = vld [vmem:[%s0 + $0x1e0] sm:$0xff]
  %v117 = vld [vmem:[%s0 + $0x1e8] sm:$0xff]
  %v118 = vld [vmem:[%s0 + $0x1f0] sm:$0xff]
  %v119 = vld [vmem:[%s0 + $0x1f8] sm:$0xff]
  %v120 = vld [vmem:[%s0 + $0x200] sm:$0xff]
  %v121 = vld [vmem:[%s0 + $0x208] sm:$0xff]
  %v122 = vld [vmem:[%s0 + $0x210] sm:$0xff]
  %v123 = vld [vmem:[%s0 + $0x218] sm:$0xff]
  %v124 = vld [vmem:[%s0 + $0x220] sm:$0xff]
  %v125 = vld [vmem:[%s0 + $0x228] sm:$0xff]
  %v126 = vld [vmem:[%s0 + $0x230] sm:$0xff]
  %v127 = vld [vmem:[%s0 + $0x238] sm:$0xff]
  %v128 = vld [vmem:[%s0 + $0x240] sm:$0xff]
  %v129 = vld [vmem:[%s0 + $0x248] sm:$0xff]
  %v130 = vld [vmem:[%s0 + $0x250] sm:$0xff]
  %v131 = vld [vmem:[%s0 + $0x258] sm:$0xff]
  %v132 = vld [vmem:[%s0 + $0x260] sm:$0xff]
  %v133 = vld [vmem:[%s0 + $0x268] sm:$0xff]
  %v134 = vld [vmem:[%s0 + $0x270] sm:$0xff]
  %v135 = vld [vmem:[%s0 + $0x278] sm:$0xff]
  %v136 = vld [vmem:[%s1] sm:$0xff]
  %v137 = vld [vmem:[%s1 + $0x8] sm:$0xff]
  %v138 = vld [vmem:[%s1 + $0x10] sm:$0xff]
  %v139 = vld [vmem:[%s1 + $0x18] sm:$0xff]
  %v140 = vld [vmem:[%s1 + $0x20] sm:$0xff]
  %v141 = vld [vmem:[%s1 + $0x28] sm:$0xff]
  %v142 = vld [vmem:[%s1 + $0x30] sm:$0xff]
  %v143 = vld [vmem:[%s1 + $0x38] sm:$0xff]
  %v144 = vld [vmem:[%s1 + $0x40] sm:$0xff]
  %v145 = vld [vmem:[%s1 + $0x48] sm:$0xff]
  %v146 = vld [vmem:[%s1 + $0x50] sm:$0xff]
  %v147 = vld [vmem:[%s1 + $0x58] sm:$0xff]
  %v148 = vld [vmem:[%s1 + $0x60] sm:$0xff]
  %v149 = vld [vmem:[%s1 + $0x68] sm:$0xff]
  %v150 = vld [vmem:[%s1 + $0x70] sm:$0xff]
  %v151 = vld [vmem:[%s1 + $0x78] sm:$0xff]
  %v152 = vld [vmem:[%s1 + $0x80] sm:$0xff]
  %v153 = vld [vmem:[%s1 + $0x88] sm:$0xff]
  %v154 = vld [vmem:[%s1 + $0x90] sm:$0xff]
  %v155 = vld [vmem:[%s1 + $0x98] sm:$0xff]
  %v156 = vld [vmem:[%s1 + $0xa0] sm:$0xff]
  %v157 = vld [vmem:[%s1 + $0xa8] sm:$0xff]
  %v158 = vld [vmem:[%s1 + $0xb0] sm:$0xff]
  %v159 = vld [vmem:[%s1 + $0xb8] sm:$0xff]
  %v160 = vld [vmem:[%s1 + $0xc0] sm:$0xff]
  %v161 = vld [vmem:[%s1 + $0xc8] sm:$0xff]
  %v162 = vld [vmem:[%s1 + $0xd0] sm:$0xff]
  %v163 = vld [vmem:[%s1 + $0xd8] sm:$0xff]
  %v164 = vld [vmem:[%s1 + $0xe0] sm:$0xff]
  %v165 = vld [vmem:[%s1 + $0xe8] sm:$0xff]
  %v166 = vld [vmem:[%s1 + $0xf0] sm:$0xff]
  %v167 = vld [vmem:[%s1 + $0xf8] sm:$0xff]
  %v168 = vld [vmem:[%s1 + $0x100] sm:$0xff]
  %v169 = vld [vmem:[%s1 + $0x108] sm:$0xff]
  %v170 = vld [vmem:[%s1 + $0x110] sm:$0xff]
  %v171 = vld [vmem:[%s1 + $0x118] sm:$0xff]
  %v172 = vld [vmem:[%s1 + $0x120] sm:$0xff]
  %v173 = vld [vmem:[%s1 + $0x128] sm:$0xff]
  %v174 = vld [vmem:[%s1 + $0x130] sm:$0xff]
  %v175 = vld [vmem:[%s1 + $0x138] sm:$0xff]
  %v176 = vld [vmem:[%s1 + $0x140] sm:$0xff]
  %v177 = vld [vmem:[%s1 + $0x148] sm:$0xff]
  %v178 = vld [vmem:[%s1 + $0x150] sm:$0xff]
  %v179 = vld [vmem:[%s1 + $0x158] sm:$0xff]
  %v180 = vld [vmem:[%s1 + $0x160] sm:$0xff]
  %v181 = vld [vmem:[%s1 + $0x168] sm:$0xff]
  %v182 = vld [vmem:[%s1 + $0x170] sm:$0xff]
  %v183 = vld [vmem:[%s1 + $0x178] sm:$0xff]
  %v184 = vld [vmem:[%s1 + $0x180] sm:$0xff]
  %v185 = vld [vmem:[%s1 + $0x188] sm:$0xff]
  %v186 = vld [vmem:[%s1 + $0x190] sm:$0xff]
  %v187 = vld [vmem:[%s1 + $0x198] sm:$0xff]
  %v188 = vld [vmem:[%s1 + $0x1a0] sm:$0xff]
  %v189 = vld [vmem:[%s1 + $0x1a8] sm:$0xff]
  %v190 = vld [vmem:[%s1 + $0x1b0] sm:$0xff]
  %v191 = vld [vmem:[%s1 + $0x1b8] sm:$0xff]
  %v192 = vld [vmem:[%s1 + $0x1c0] sm:$0xff]
  %v193 = vld [vmem:[%s1 + $0x1c8] sm:$0xff]
  %v194 = vld [vmem:[%s1 + $0x1d0] sm:$0xff]
  %v195 = vld [vmem:[%s1 + $0x1d8] sm:$0xff]
  %v196 = vld [vmem:[%s1 + $0x1e0] sm:$0xff]
  %v197 = vld [vmem:[%s1 + $0x1e8] sm:$0xff]
  %v198 = vld [vmem:[%s1 + $0x1f0] sm:$0xff]
  %v199 = vld [vmem:[%s1 + $0x1f8] sm:$0xff]
  %v200 = vld [vmem:[%s1 + $0x200] sm:$0xff]
  %v201 = vld [vmem:[%s1 + $0x208] sm:$0xff]
  %v202 = vld [vmem:[%s1 + $0x210] sm:$0xff]
  %v203 = vld [vmem:[%s1 + $0x218] sm:$0xff]
  %v204 = vld [vmem:[%s1 + $0x220] sm:$0xff]
  %v205 = vld [vmem:[%s1 + $0x228] sm:$0xff]
  %v206 = vld [vmem:[%s1 + $0x230] sm:$0xff]
  %v207 = vld [vmem:[%s1 + $0x238] sm:$0xff]
  %v208 = vld [vmem:[%s1 + $0x240] sm:$0xff]
  %v209 = vld [vmem:[%s1 + $0x248] sm:$0xff]
  %v210 = vld [vmem:[%s1 + $0x250] sm:$0xff]
  %v211 = vld [vmem:[%s1 + $0x258] sm:$0xff]
  %v212 = vld [vmem:[%s1 + $0x260] sm:$0xff]
  %v213 = vld [vmem:[%s1 + $0x268] sm:$0xff]
  %v214 = vld [vmem:[%s1 + $0x270] sm:$0xff]
  %v215 = vld [vmem:[%s1 + $0x278] sm:$0xff]
  %216 = vmatprep.subr.mxu0 0.0
  %217 = vmatpush1.msra.mxu0 %v151
  %218 = vmatprep.subr.mxu0 0.0
  %219 = vmatpush1.msra.mxu0 %v150
  %220 = vmatprep.subr.mxu0 0.0
  %221 = vmatpush1.msra.mxu0 %v149
  %222 = vmatprep.subr.mxu0 0.0
  %223 = vmatpush1.msra.mxu0 %v148
  %224 = vmatprep.subr.mxu0 0.0
  %225 = vmatpush1.msra.mxu0 %v147
  %226 = vmatprep.subr.mxu0 0.0
  %227 = vmatpush1.msra.mxu0 %v146
  %228 = vmatprep.subr.mxu0 0.0
  %229 = vmatpush1.msra.mxu0 %v145
  %230 = vmatprep.subr.mxu0 0.0
  %231 = vmatpush1.msra.mxu0 %v144
  %232 = vmatprep.subr.mxu0 0.0
  %233 = vmatpush1.msra.mxu0 %v143
  %234 = vmatprep.subr.mxu0 0.0
  %235 = vmatpush1.msra.mxu0 %v142
  %236 = vmatprep.subr.mxu0 0.0
  %237 = vmatpush1.msra.mxu0 %v141
  %238 = vmatprep.subr.mxu0 0.0
  %239 = vmatpush1.msra.mxu0 %v140
  %240 = vmatprep.subr.mxu0 0.0
  %241 = vmatpush1.msra.mxu0 %v139
  %242 = vmatprep.subr.mxu0 0.0
  %243 = vmatpush1.msra.mxu0 %v138
  %244 = vmatprep.subr.mxu0 0.0
  %245 = vmatpush1.msra.mxu0 %v137
  %246 = vmatprep.subr.mxu0 0.0
  %247 = vmatpush1.msra.mxu0 %v136
  %248 = vmatprep.subr.mxu0 0.0
  %249 = vmatpush2.msra.mxu0 %v167
  %250 = vmatprep.subr.mxu0 0.0
  %251 = vmatpush2.msra.mxu0 %v166
  %252 = vmatprep.subr.mxu0 0.0
  %253 = vmatpush2.msra.mxu0 %v165
  %254 = vmatprep.subr.mxu0 0.0
  %255 = vmatpush2.msra.mxu0 %v164
  %256 = vmatprep.subr.mxu0 0.0
  %257 = vmatpush2.msra.mxu0 %v163
  %258 = vmatprep.subr.mxu0 0.0
  %259 = vmatpush2.msra.mxu0 %v162
  %260 = vmatprep.subr.mxu0 0.0
  %261 = vmatpush2.msra.mxu0 %v161
  %262 = vmatprep.subr.mxu0 0.0
  %263 = vmatpush2.msra.mxu0 %v160
  %264 = vmatprep.subr.mxu0 0.0
  %265 = vmatpush2.msra.mxu0 %v159
  %266 = vmatprep.subr.mxu0 0.0
  %267 = vmatpush2.msra.mxu0 %v158
  %268 = vmatprep.subr.mxu0 0.0
  %269 = vmatpush2.msra.mxu0 %v157
  %270 = vmatprep.subr.mxu0 0.0
  %271 = vmatpush2.msra.mxu0 %v156
  %272 = vmatprep.subr.mxu0 0.0
  %273 = vmatpush2.msra.mxu0 %v155
  %274 = vmatprep.subr.mxu0 0.0
  %275 = vmatpush2.msra.mxu0 %v154
  %276 = vmatprep.subr.mxu0 0.0
  %277 = vmatpush2.msra.mxu0 %v153
  %278 = vmatprep.subr.mxu0 0.0
  %279 = vmatpush2.msra.mxu0 %v152
  %280 = vmatprep.mubr.f32.mxu0 %v57
  %281 = vmatmul.mubr.f32.gmra.mxu0 %v56
  %v282 = vpop.f32.mrf.mxu0
  %v283 = vadd.f32 0.0, %v282
  %v284 = vpop.f32.mrf.mxu0
  %285 = vmatprep.mubr.f32.mxu0 %v62
  %286 = vmatmul.mubr.f32.gmra.mxu0 %v61
  %v287 = vpop.f32.mrf.mxu0
  %v288 = vadd.f32 0.0, %v287
  %v289 = vpop.f32.mrf.mxu0
  %290 = vmatprep.mubr.f32.mxu0 %v67
  %291 = vmatmul.mubr.f32.gmra.mxu0 %v66
  %v292 = vpop.f32.mrf.mxu0
  %v293 = vadd.f32 0.0, %v292
  %v294 = vpop.f32.mrf.mxu0
  %295 = vmatprep.mubr.f32.mxu0 %v72
  %296 = vmatmul.mubr.f32.gmra.mxu0 %v71
  %v297 = vpop.f32.mrf.mxu0
  %v298 = vadd.f32 0.0, %v297
  %v299 = vpop.f32.mrf.mxu0
  %300 = vmatprep.mubr.f32.mxu0 %v77
  %301 = vmatmul.mubr.f32.gmra.mxu0 %v76
  %v302 = vpop.f32.mrf.mxu0
  %v303 = vadd.f32 0.0, %v302
  %v304 = vpop.f32.mrf.mxu0
  %305 = vmatprep.mubr.f32.mxu0 %v82
  %306 = vmatmul.mubr.f32.gmra.mxu0 %v81
  %v307 = vpop.f32.mrf.mxu0
  %v308 = vadd.f32 0.0, %v307
  %v309 = vpop.f32.mrf.mxu0
  %310 = vmatprep.mubr.f32.mxu0 %v87
  %311 = vmatmul.mubr.f32.gmra.mxu0 %v86
  %v312 = vpop.f32.mrf.mxu0
  %v313 = vadd.f32 0.0, %v312
  %v314 = vpop.f32.mrf.mxu0
  %315 = vmatprep.mubr.f32.mxu0 %v92
  %316 = vmatmul.mubr.f32.gmra.mxu0 %v91
  %v317 = vpop.f32.mrf.mxu0
  %v318 = vadd.f32 0.0, %v317
  %v319 = vpop.f32.mrf.mxu0
  %320 = vmatprep.mubr.f32.mxu0 %v97
  %321 = vmatmul.mubr.f32.gmra.mxu0 %v96
  %v322 = vpop.f32.mrf.mxu0
  %v323 = vadd.f32 0.0, %v322
  %v324 = vpop.f32.mrf.mxu0
  %325 = vmatprep.mubr.f32.mxu0 %v102
  %326 = vmatmul.mubr.f32.gmra.mxu0 %v101
  %v327 = vpop.f32.mrf.mxu0
  %v328 = vadd.f32 0.0, %v327
  %v329 = vpop.f32.mrf.mxu0
  %330 = vmatprep.mubr.f32.mxu0 %v107
  %331 = vmatmul.mubr.f32.gmra.mxu0 %v106
  %v332 = vpop.f32.mrf.mxu0
  %v333 = vadd.f32 0.0, %v332
  %v334 = vpop.f32.mrf.mxu0
  %335 = vmatprep.mubr.f32.mxu0 %v112
  %336 = vmatmul.mubr.f32.gmra.mxu0 %v111
  %v337 = vpop.f32.mrf.mxu0
  %v338 = vadd.f32 0.0, %v337
  %v339 = vpop.f32.mrf.mxu0
  %340 = vmatprep.mubr.f32.mxu0 %v117
  %341 = vmatmul.mubr.f32.gmra.mxu0 %v116
  %v342 = vpop.f32.mrf.mxu0
  %v343 = vadd.f32 0.0, %v342
  %v344 = vpop.f32.mrf.mxu0
  %345 = vmatprep.mubr.f32.mxu0 %v122
  %346 = vmatmul.mubr.f32.gmra.mxu0 %v121
  %v347 = vpop.f32.mrf.mxu0
  %v348 = vadd.f32 0.0, %v347
  %v349 = vpop.f32.mrf.mxu0
  %350 = vmatprep.mubr.f32.mxu0 %v127
  %351 = vmatmul.mubr.f32.gmra.mxu0 %v126
  %v352 = vpop.f32.mrf.mxu0
  %v353 = vadd.f32 0.0, %v352
  %v354 = vpop.f32.mrf.mxu0
  %355 = vmatprep.mubr.f32.mxu0 %v132
  %356 = vmatmul.mubr.f32.gmra.mxu0 %v131
  %v357 = vpop.f32.mrf.mxu0
  %v358 = vadd.f32 0.0, %v357
  %v359 = vpop.f32.mrf.mxu0
  %360 = vdwg.mxu0
  %361 = vmatprep.subr.mxu0 0.0
  %362 = vmatpush1.msra.mxu0 %v183
  %363 = vmatprep.subr.mxu0 0.0
  %364 = vmatpush1.msra.mxu0 %v182
  %365 = vmatprep.subr.mxu0 0.0
  %366 = vmatpush1.msra.mxu0 %v181
  %367 = vmatprep.subr.mxu0 0.0
  %368 = vmatpush1.msra.mxu0 %v180
  %369 = vmatprep.subr.mxu0 0.0
  %370 = vmatpush1.msra.mxu0 %v179
  %371 = vmatprep.subr.mxu0 0.0
  %372 = vmatpush1.msra.mxu0 %v178
  %373 = vmatprep.subr.mxu0 0.0
  %374 = vmatpush1.msra.mxu0 %v177
  %375 = vmatprep.subr.mxu0 0.0
  %376 = vmatpush1.msra.mxu0 %v176
  %377 = vmatprep.subr.mxu0 0.0
  %378 = vmatpush1.msra.mxu0 %v175
  %379 = vmatprep.subr.mxu0 0.0
  %380 = vmatpush1.msra.mxu0 %v174
  %381 = vmatprep.subr.mxu0 0.0
  %382 = vmatpush1.msra.mxu0 %v173
  %383 = vmatprep.subr.mxu0 0.0
  %384 = vmatpush1.msra.mxu0 %v172
  %385 = vmatprep.subr.mxu0 0.0
  %386 = vmatpush1.msra.mxu0 %v171
  %387 = vmatprep.subr.mxu0 0.0
  %388 = vmatpush1.msra.mxu0 %v170
  %389 = vmatprep.subr.mxu0 0.0
  %390 = vmatpush1.msra.mxu0 %v169
  %391 = vmatprep.subr.mxu0 0.0
  %392 = vmatpush1.msra.mxu0 %v168
  %393 = vmatprep.subr.mxu0 0.0
  %394 = vmatpush2.msra.mxu0 %v199
  %395 = vmatprep.subr.mxu0 0.0
  %396 = vmatpush2.msra.mxu0 %v198
  %397 = vmatprep.subr.mxu0 0.0
  %398 = vmatpush2.msra.mxu0 %v197
  %399 = vmatprep.subr.mxu0 0.0
  %400 = vmatpush2.msra.mxu0 %v196
  %401 = vmatprep.subr.mxu0 0.0
  %402 = vmatpush2.msra.mxu0 %v195
  %403 = vmatprep.subr.mxu0 0.0
  %404 = vmatpush2.msra.mxu0 %v194
  %405 = vmatprep.subr.mxu0 0.0
  %406 = vmatpush2.msra.mxu0 %v193
  %407 = vmatprep.subr.mxu0 0.0
  %408 = vmatpush2.msra.mxu0 %v192
  %409 = vmatprep.subr.mxu0 0.0
  %410 = vmatpush2.msra.mxu0 %v191
  %411 = vmatprep.subr.mxu0 0.0
  %412 = vmatpush2.msra.mxu0 %v190
  %413 = vmatprep.subr.mxu0 0.0
  %414 = vmatpush2.msra.mxu0 %v189
  %415 = vmatprep.subr.mxu0 0.0
  %416 = vmatpush2.msra.mxu0 %v188
  %417 = vmatprep.subr.mxu0 0.0
  %418 = vmatpush2.msra.mxu0 %v187
  %419 = vmatprep.subr.mxu0 0.0
  %420 = vmatpush2.msra.mxu0 %v186
  %421 = vmatprep.subr.mxu0 0.0
  %422 = vmatpush2.msra.mxu0 %v185
  %423 = vmatprep.subr.mxu0 0.0
  %424 = vmatpush2.msra.mxu0 %v184
  %425 = vmatprep.mubr.f32.mxu0 %v59
  %426 = vmatmul.mubr.f32.gmra.mxu0 %v58
  %v427 = vpop.f32.mrf.mxu0
  %v428 = vadd.f32 %v283, %v427
  %v429 = vpop.f32.mrf.mxu0
  %430 = vmatprep.mubr.f32.mxu0 %v64
  %431 = vmatmul.mubr.f32.gmra.mxu0 %v63
  %v432 = vpop.f32.mrf.mxu0
  %v433 = vadd.f32 %v288, %v432
  %v434 = vpop.f32.mrf.mxu0
  %435 = vmatprep.mubr.f32.mxu0 %v69
  %436 = vmatmul.mubr.f32.gmra.mxu0 %v68
  %v437 = vpop.f32.mrf.mxu0
  %v438 = vadd.f32 %v293, %v437
  %v439 = vpop.f32.mrf.mxu0
  %440 = vmatprep.mubr.f32.mxu0 %v74
  %441 = vmatmul.mubr.f32.gmra.mxu0 %v73
  %v442 = vpop.f32.mrf.mxu0
  %v443 = vadd.f32 %v298, %v442
  %v444 = vpop.f32.mrf.mxu0
  %445 = vmatprep.mubr.f32.mxu0 %v79
  %446 = vmatmul.mubr.f32.gmra.mxu0 %v78
  %v447 = vpop.f32.mrf.mxu0
  %v448 = vadd.f32 %v303, %v447
  %v449 = vpop.f32.mrf.mxu0
  %450 = vmatprep.mubr.f32.mxu0 %v84
  %451 = vmatmul.mubr.f32.gmra.mxu0 %v83
  %v452 = vpop.f32.mrf.mxu0
  %v453 = vadd.f32 %v308, %v452
  %v454 = vpop.f32.mrf.mxu0
  %455 = vmatprep.mubr.f32.mxu0 %v89
  %456 = vmatmul.mubr.f32.gmra.mxu0 %v88
  %v457 = vpop.f32.mrf.mxu0
  %v458 = vadd.f32 %v313, %v457
  %v459 = vpop.f32.mrf.mxu0
  %460 = vmatprep.mubr.f32.mxu0 %v94
  %461 = vmatmul.mubr.f32.gmra.mxu0 %v93
  %v462 = vpop.f32.mrf.mxu0
  %v463 = vadd.f32 %v318, %v462
  %v464 = vpop.f32.mrf.mxu0
  %465 = vmatprep.mubr.f32.mxu0 %v99
  %466 = vmatmul.mubr.f32.gmra.mxu0 %v98
  %v467 = vpop.f32.mrf.mxu0
  %v468 = vadd.f32 %v323, %v467
  %v469 = vpop.f32.mrf.mxu0
  %470 = vmatprep.mubr.f32.mxu0 %v104
  %471 = vmatmul.mubr.f32.gmra.mxu0 %v103
  %v472 = vpop.f32.mrf.mxu0
  %v473 = vadd.f32 %v328, %v472
  %v474 = vpop.f32.mrf.mxu0
  %475 = vmatprep.mubr.f32.mxu0 %v109
  %476 = vmatmul.mubr.f32.gmra.mxu0 %v108
  %v477 = vpop.f32.mrf.mxu0
  %v478 = vadd.f32 %v333, %v477
  %v479 = vpop.f32.mrf.mxu0
  %480 = vmatprep.mubr.f32.mxu0 %v114
  %481 = vmatmul.mubr.f32.gmra.mxu0 %v113
  %v482 = vpop.f32.mrf.mxu0
  %v483 = vadd.f32 %v338, %v482
  %v484 = vpop.f32.mrf.mxu0
  %485 = vmatprep.mubr.f32.mxu0 %v119
  %486 = vmatmul.mubr.f32.gmra.mxu0 %v118
  %v487 = vpop.f32.mrf.mxu0
  %v488 = vadd.f32 %v343, %v487
  %v489 = vpop.f32.mrf.mxu0
  %490 = vmatprep.mubr.f32.mxu0 %v124
  %491 = vmatmul.mubr.f32.gmra.mxu0 %v123
  %v492 = vpop.f32.mrf.mxu0
  %v493 = vadd.f32 %v348, %v492
  %v494 = vpop.f32.mrf.mxu0
  %495 = vmatprep.mubr.f32.mxu0 %v129
  %496 = vmatmul.mubr.f32.gmra.mxu0 %v128
  %v497 = vpop.f32.mrf.mxu0
  %v498 = vadd.f32 %v353, %v497
  %v499 = vpop.f32.mrf.mxu0
  %500 = vmatprep.mubr.f32.mxu0 %v134
  %501 = vmatmul.mubr.f32.gmra.mxu0 %v133
  %v502 = vpop.f32.mrf.mxu0
  %v503 = vadd.f32 %v358, %v502
  %v504 = vpop.f32.mrf.mxu0
  %505 = vdwg.mxu0
  %506 = vmatprep.subr.mxu0 0.0
  %507 = vmatpush1.msra.mxu0 %v215
  %508 = vmatprep.subr.mxu0 0.0
  %509 = vmatpush1.msra.mxu0 %v214
  %510 = vmatprep.subr.mxu0 0.0
  %511 = vmatpush1.msra.mxu0 %v213
  %512 = vmatprep.subr.mxu0 0.0
  %513 = vmatpush1.msra.mxu0 %v212
  %514 = vmatprep.subr.mxu0 0.0
  %515 = vmatpush1.msra.mxu0 %v211
  %516 = vmatprep.subr.mxu0 0.0
  %517 = vmatpush1.msra.mxu0 %v210
  %518 = vmatprep.subr.mxu0 0.0
  %519 = vmatpush1.msra.mxu0 %v209
  %520 = vmatprep.subr.mxu0 0.0
  %521 = vmatpush1.msra.mxu0 %v208
  %522 = vmatprep.subr.mxu0 0.0
  %523 = vmatpush1.msra.mxu0 %v207
  %524 = vmatprep.subr.mxu0 0.0
  %525 = vmatpush1.msra.mxu0 %v206
  %526 = vmatprep.subr.mxu0 0.0
  %527 = vmatpush1.msra.mxu0 %v205
  %528 = vmatprep.subr.mxu0 0.0
  %529 = vmatpush1.msra.mxu0 %v204
  %530 = vmatprep.subr.mxu0 0.0
  %531 = vmatpush1.msra.mxu0 %v203
  %532 = vmatprep.subr.mxu0 0.0
  %533 = vmatpush1.msra.mxu0 %v202
  %534 = vmatprep.subr.mxu0 0.0
  %535 = vmatpush1.msra.mxu0 %v201
  %536 = vmatprep.subr.mxu0 0.0
  %537 = vmatpush1.msra.mxu0 %v200
  %538 = vmatprep.subr.mxu0 0.0
  %539 = vmatpush2.msra.mxu0 0.0
  %540 = vmatprep.subr.mxu0 0.0
  %541 = vmatpush2.msra.mxu0 0.0
  %542 = vmatprep.subr.mxu0 0.0
  %543 = vmatpush2.msra.mxu0 0.0
  %544 = vmatprep.subr.mxu0 0.0
  %545 = vmatpush2.msra.mxu0 0.0
  %546 = vmatprep.subr.mxu0 0.0
  %547 = vmatpush2.msra.mxu0 0.0
  %548 = vmatprep.subr.mxu0 0.0
  %549 = vmatpush2.msra.mxu0 0.0
  %550 = vmatprep.subr.mxu0 0.0
  %551 = vmatpush2.msra.mxu0 0.0
  %552 = vmatprep.subr.mxu0 0.0
  %553 = vmatpush2.msra.mxu0 0.0
  %554 = vmatprep.subr.mxu0 0.0
  %555 = vmatpush2.msra.mxu0 0.0
  %556 = vmatprep.subr.mxu0 0.0
  %557 = vmatpush2.msra.mxu0 0.0
  %558 = vmatprep.subr.mxu0 0.0
  %559 = vmatpush2.msra.mxu0 0.0
  %560 = vmatprep.subr.mxu0 0.0
  %561 = vmatpush2.msra.mxu0 0.0
  %562 = vmatprep.subr.mxu0 0.0
  %563 = vmatpush2.msra.mxu0 0.0
  %564 = vmatprep.subr.mxu0 0.0
  %565 = vmatpush2.msra.mxu0 0.0
  %566 = vmatprep.subr.mxu0 0.0
  %567 = vmatpush2.msra.mxu0 0.0
  %568 = vmatprep.subr.mxu0 0.0
  %569 = vmatpush2.msra.mxu0 0.0
  %570 = vmatprep.mubr.f32.mxu0 0.0
  %571 = vmatmul.mubr.f32.gmra.mxu0 %v60
  %v572 = vpop.f32.mrf.mxu0
  %v573 = vadd.f32 %v428, %v572
  %v574 = vpop.f32.mrf.mxu0
  %575 = vmatprep.mubr.f32.mxu0 0.0
  %576 = vmatmul.mubr.f32.gmra.mxu0 %v65
  %v577 = vpop.f32.mrf.mxu0
  %v578 = vadd.f32 %v433, %v577
  %v579 = vpop.f32.mrf.mxu0
  %580 = vmatprep.mubr.f32.mxu0 0.0
  %581 = vmatmul.mubr.f32.gmra.mxu0 %v70
  %v582 = vpop.f32.mrf.mxu0
  %v583 = vadd.f32 %v438, %v582
  %v584 = vpop.f32.mrf.mxu0
  %585 = vmatprep.mubr.f32.mxu0 0.0
  %586 = vmatmul.mubr.f32.gmra.mxu0 %v75
  %v587 = vpop.f32.mrf.mxu0
  %v588 = vadd.f32 %v443, %v587
  %v589 = vpop.f32.mrf.mxu0
  %590 = vmatprep.mubr.f32.mxu0 0.0
  %591 = vmatmul.mubr.f32.gmra.mxu0 %v80
  %v592 = vpop.f32.mrf.mxu0
  %v593 = vadd.f32 %v448, %v592
  %v594 = vpop.f32.mrf.mxu0
  %595 = vmatprep.mubr.f32.mxu0 0.0
  %596 = vmatmul.mubr.f32.gmra.mxu0 %v85
  %v597 = vpop.f32.mrf.mxu0
  %v598 = vadd.f32 %v453, %v597
  %v599 = vpop.f32.mrf.mxu0
  %600 = vmatprep.mubr.f32.mxu0 0.0
  %601 = vmatmul.mubr.f32.gmra.mxu0 %v90
  %v602 = vpop.f32.mrf.mxu0
  %v603 = vadd.f32 %v458, %v602
  %v604 = vpop.f32.mrf.mxu0
  %605 = vmatprep.mubr.f32.mxu0 0.0
  %606 = vmatmul.mubr.f32.gmra.mxu0 %v95
  %v607 = vpop.f32.mrf.mxu0
  %v608 = vadd.f32 %v463, %v607
  %v609 = vpop.f32.mrf.mxu0
  %610 = vmatprep.mubr.f32.mxu0 0.0
  %611 = vmatmul.mubr.f32.gmra.mxu0 %v100
  %v612 = vpop.f32.mrf.mxu0
  %v613 = vadd.f32 %v468, %v612
  %v614 = vpop.f32.mrf.mxu0
  %615 = vmatprep.mubr.f32.mxu0 0.0
  %616 = vmatmul.mubr.f32.gmra.mxu0 %v105
  %v617 = vpop.f32.mrf.mxu0
  %v618 = vadd.f32 %v473, %v617
  %v619 = vpop.f32.mrf.mxu0
  %620 = vmatprep.mubr.f32.mxu0 0.0
  %621 = vmatmul.mubr.f32.gmra.mxu0 %v110
  %v622 = vpop.f32.mrf.mxu0
  %v623 = vadd.f32 %v478, %v622
  %v624 = vpop.f32.mrf.mxu0
  %625 = vmatprep.mubr.f32.mxu0 0.0
  %626 = vmatmul.mubr.f32.gmra.mxu0 %v115
  %v627 = vpop.f32.mrf.mxu0
  %v628 = vadd.f32 %v483, %v627
  %v629 = vpop.f32.mrf.mxu0
  %630 = vmatprep.mubr.f32.mxu0 0.0
  %631 = vmatmul.mubr.f32.gmra.mxu0 %v120
  %v632 = vpop.f32.mrf.mxu0
  %v633 = vadd.f32 %v488, %v632
  %v634 = vpop.f32.mrf.mxu0
  %635 = vmatprep.mubr.f32.mxu0 0.0
  %636 = vmatmul.mubr.f32.gmra.mxu0 %v125
  %v637 = vpop.f32.mrf.mxu0
  %v638 = vadd.f32 %v493, %v637
  %v639 = vpop.f32.mrf.mxu0
  %640 = vmatprep.mubr.f32.mxu0 0.0
  %641 = vmatmul.mubr.f32.gmra.mxu0 %v130
  %v642 = vpop.f32.mrf.mxu0
  %v643 = vadd.f32 %v498, %v642
  %v644 = vpop.f32.mrf.mxu0
  %645 = vmatprep.mubr.f32.mxu0 0.0
  %646 = vmatmul.mubr.f32.gmra.mxu0 %v135
  %v647 = vpop.f32.mrf.mxu0
  %v648 = vadd.f32 %v503, %v647
  %v649 = vpop.f32.mrf.mxu0
  %650 = vdwg.mxu0
  %v651 = vadd.f32 %v40, %v573
  %v652 = vadd.f32 %v41, %v578
  %v653 = vadd.f32 %v42, %v583
  %v654 = vadd.f32 %v43, %v588
  %v655 = vadd.f32 %v44, %v593
  %v656 = vadd.f32 %v45, %v598
  %v657 = vadd.f32 %v46, %v603
  %v658 = vadd.f32 %v47, %v608
  %v659 = vadd.f32 %v48, %v613
  %v660 = vadd.f32 %v49, %v618
  %v661 = vadd.f32 %v50, %v623
  %v662 = vadd.f32 %v51, %v628
  %v663 = vadd.f32 %v52, %v633
  %v664 = vadd.f32 %v53, %v638
  %v665 = vadd.f32 %v54, %v643
  %v666 = vadd.f32 %v55, %v648
  %667 = vst [vmem:[#allocation2] sm:$0xff] %v651
  %668 = vst [vmem:[#allocation2 + $0x8] sm:$0xff] %v652
  %669 = vst [vmem:[#allocation2 + $0x10] sm:$0xff] %v653
  %670 = vst [vmem:[#allocation2 + $0x18] sm:$0xff] %v654
  %671 = vst [vmem:[#allocation2 + $0x20] sm:$0xff] %v655
  %672 = vst [vmem:[#allocation2 + $0x28] sm:$0xff] %v656
  %673 = vst [vmem:[#allocation2 + $0x30] sm:$0xff] %v657
  %674 = vst [vmem:[#allocation2 + $0x38] sm:$0xff] %v658
  %675 = vst [vmem:[#allocation2 + $0x40] sm:$0xff] %v659
  %676 = vst [vmem:[#allocation2 + $0x48] sm:$0xff] %v660
  %677 = vst [vmem:[#allocation2 + $0x50] sm:$0xff] %v661
  %678 = vst [vmem:[#allocation2 + $0x58] sm:$0xff] %v662
  %679 = vst [vmem:[#allocation2 + $0x60] sm:$0xff] %v663
  %680 = vst [vmem:[#allocation2 + $0x68] sm:$0xff] %v664
  %681 = vst [vmem:[#allocation2 + $0x70] sm:$0xff] %v665
  %682 = vst [vmem:[#allocation2 + $0x78] sm:$0xff] %v666
  // Predicated region
  $region26: #{_lambda_.17} parent=0 // pred_check
    %p683 = pneg %p20
  $region27: #{_lambda_.17} parent=0 // pred_check_branch
    %685 = sbr.rel (%p683) target = $region29
  $region28: #{_lambda_.17} parent=0 // pred_region
    %v686 = vld [vmem:[#allocation2] sm:$0xff]
    %v687 = vld [vmem:[#allocation2 + $0x8] sm:$0xff]
    %v688 = vld [vmem:[#allocation2 + $0x10] sm:$0xff]
    %v689 = vld [vmem:[#allocation2 + $0x18] sm:$0xff]
    %v690 = vld [vmem:[#allocation2 + $0x20] sm:$0xff]
    %v691 = vld [vmem:[#allocation2 + $0x28] sm:$0xff]
    %v692 = vld [vmem:[#allocation2 + $0x30] sm:$0xff]
    %v693 = vld [vmem:[#allocation2 + $0x38] sm:$0xff]
    %v694 = vld [vmem:[#allocation2 + $0x40] sm:$0xff]
    %v695 = vld [vmem:[#allocation2 + $0x48] sm:$0xff]
    %v696 = vld [vmem:[#allocation2 + $0x50] sm:$0xff]
    %v697 = vld [vmem:[#allocation2 + $0x58] sm:$0xff]
    %v698 = vld [vmem:[#allocation2 + $0x60] sm:$0xff]
    %v699 = vld [vmem:[#allocation2 + $0x68] sm:$0xff]
    %v700 = vld [vmem:[#allocation2 + $0x70] sm:$0xff]
    %v701 = vld [vmem:[#allocation2 + $0x78] sm:$0xff]
    %v702 = vld [vmem:[%s2] sm:$0x1]
    %v704 = vlaneseq
    %v705 = vshrl.u32 %v704, 7
    %v706 = vsub.s32 0, %v705
    %v707 = vrot.slane %v702, %v706
    %v709 = vmul.f32 %v686, %v707
    %v710 = vmul.f32 %v687, %v707
    %v711 = vmul.f32 %v688, %v707
    %v712 = vmul.f32 %v689, %v707
    %v713 = vmul.f32 %v690, %v707
    %v714 = vmul.f32 %v691, %v707
    %v715 = vmul.f32 %v692, %v707
    %v716 = vmul.f32 %v693, %v707
    %v717 = vmul.f32 %v694, %v707
    %v718 = vmul.f32 %v695, %v707
    %v719 = vmul.f32 %v696, %v707
    %v720 = vmul.f32 %v697, %v707
    %v721 = vmul.f32 %v698, %v707
    %v722 = vmul.f32 %v699, %v707
    %v723 = vmul.f32 %v700, %v707
    %v724 = vmul.f32 %v701, %v707
    %v725 = vld [vmem:[%s3] sm:$0x1]
    %v727 = vlaneseq
    %v728 = vshrl.u32 %v727, 7
    %v729 = vsub.s32 0, %v728
    %v730 = vrot.slane %v725, %v729
    %v732 = vadd.f32 %v709, %v730
    %v733 = vadd.f32 %v710, %v730
    %v734 = vadd.f32 %v711, %v730
    %v735 = vadd.f32 %v712, %v730
    %v736 = vadd.f32 %v713, %v730
    %v737 = vadd.f32 %v714, %v730
    %v738 = vadd.f32 %v715, %v730
    %v739 = vadd.f32 %v716, %v730
    %v740 = vadd.f32 %v717, %v730
    %v741 = vadd.f32 %v718, %v730
    %v742 = vadd.f32 %v719, %v730
    %v743 = vadd.f32 %v720, %v730
    %v744 = vadd.f32 %v721, %v730
    %v745 = vadd.f32 %v722, %v730
    %v746 = vadd.f32 %v723, %v730
    %v747 = vadd.f32 %v724, %v730
    %v748 = vld [vmem:[%s4] sm:$0xff]
    %v749 = vld [vmem:[%s4 + $0x8] sm:$0xff]
    %v750 = vld [vmem:[%s4 + $0x10] sm:$0xff]
    %v751 = vld [vmem:[%s4 + $0x18] sm:$0xff]
    %v752 = vld [vmem:[%s4 + $0x20] sm:$0xff]
    %v753 = vld [vmem:[%s4 + $0x28] sm:$0xff]
    %v754 = vld [vmem:[%s4 + $0x30] sm:$0xff]
    %v755 = vld [vmem:[%s4 + $0x38] sm:$0xff]
    %v756 = vld [vmem:[%s4 + $0x40] sm:$0xff]
    %v757 = vld [vmem:[%s4 + $0x48] sm:$0xff]
    %v758 = vld [vmem:[%s4 + $0x50] sm:$0xff]
    %v759 = vld [vmem:[%s4 + $0x58] sm:$0xff]
    %v760 = vld [vmem:[%s4 + $0x60] sm:$0xff]
    %v761 = vld [vmem:[%s4 + $0x68] sm:$0xff]
    %v762 = vld [vmem:[%s4 + $0x70] sm:$0xff]
    %v763 = vld [vmem:[%s4 + $0x78] sm:$0xff]
    %v764 = vadd.f32 %v732, %v748
    %v765 = vadd.f32 %v733, %v749
    %v766 = vadd.f32 %v734, %v750
    %v767 = vadd.f32 %v735, %v751
    %v768 = vadd.f32 %v736, %v752
    %v769 = vadd.f32 %v737, %v753
    %v770 = vadd.f32 %v738, %v754
    %v771 = vadd.f32 %v739, %v755
    %v772 = vadd.f32 %v740, %v756
    %v773 = vadd.f32 %v741, %v757
    %v774 = vadd.f32 %v742, %v758
    %v775 = vadd.f32 %v743, %v759
    %v776 = vadd.f32 %v744, %v760
    %v777 = vadd.f32 %v745, %v761
    %v778 = vadd.f32 %v746, %v762
    %v779 = vadd.f32 %v747, %v763
    %v780 = vmax.f32 %v764, 0.0
    %v781 = vmax.f32 %v765, 0.0
    %v782 = vmax.f32 %v766, 0.0
    %v783 = vmax.f32 %v767, 0.0
    %v784 = vmax.f32 %v768, 0.0
    %v785 = vmax.f32 %v769, 0.0
    %v786 = vmax.f32 %v770, 0.0
    %v787 = vmax.f32 %v771, 0.0
    %v788 = vmax.f32 %v772, 0.0
    %v789 = vmax.f32 %v773, 0.0
    %v790 = vmax.f32 %v774, 0.0
    %v791 = vmax.f32 %v775, 0.0
    %v792 = vmax.f32 %v776, 0.0
    %v793 = vmax.f32 %v777, 0.0
    %v794 = vmax.f32 %v778, 0.0
    %v795 = vmax.f32 %v779, 0.0
    %796 = vst [vmem:[%s5] sm:$0xff] %v780
    %797 = vst [vmem:[%s5 + $0x8] sm:$0xff] %v781
    %798 = vst [vmem:[%s5 + $0x10] sm:$0xff] %v782
    %799 = vst [vmem:[%s5 + $0x18] sm:$0xff] %v783
    %800 = vst [vmem:[%s5 + $0x20] sm:$0xff] %v784
    %801 = vst [vmem:[%s5 + $0x28] sm:$0xff] %v785
    %802 = vst [vmem:[%s5 + $0x30] sm:$0xff] %v786
    %803 = vst [vmem:[%s5 + $0x38] sm:$0xff] %v787
    %804 = vst [vmem:[%s5 + $0x40] sm:$0xff] %v788
    %805 = vst [vmem:[%s5 + $0x48] sm:$0xff] %v789
    %806 = vst [vmem:[%s5 + $0x50] sm:$0xff] %v790
    %807 = vst [vmem:[%s5 + $0x58] sm:$0xff] %v791
    %808 = vst [vmem:[%s5 + $0x60] sm:$0xff] %v792
    %809 = vst [vmem:[%s5 + $0x68] sm:$0xff] %v793
    %810 = vst [vmem:[%s5 + $0x70] sm:$0xff] %v794
    %811 = vst [vmem:[%s5 + $0x78] sm:$0xff] %v795
  $region29: #{_lambda_.17} parent=0 // pred_fallthru
    _
  // Predicated region
  $region30: #{_lambda_.17} parent=0 // pred_check
    _
  $region31: #{_lambda_.17} parent=0 // pred_check_branch
    %813 = sbr.rel (0) target = $region33
  $region32: #{_lambda_.17} parent=0 // pred_region
    _
  $region33: #{_lambda_.17} parent=0 // pred_fallthru
    _
  // Predicated region
  $region34: #{_lambda_.17} parent=0 // pred_check
    _
  $region35: #{_lambda_.17} parent=0 // pred_check_branch
    %815 = sbr.rel (0) target = $region37
  $region36: #{_lambda_.17} parent=0 // pred_region
    _
  $region37: #{_lambda_.17} parent=0 // pred_fallthru
    _

// kernel: _lambda_.18
$region0: #{_lambda_.18}
  #allocation0 [shape = 'u32[]', space=smem, size = 0x4, offset = 0x4, fixed_abs, tag = 'smem constant byte address 0x4 - core index']
  #allocation1 [shape = 'u32[144,128]{1,0:T(1,128)}', space=vmem, size = 0x12000, scoped, tag = 'internal scratch']
  #allocation2 [shape = 'f32[32,128]{1,0:T(8,128)}', space=vmem, size = 0x4000, scoped, tag = 'scratch operand']
  %s0 = inlined_call_operand.vmem [shape: f32[32,640], index: 0, kind: input, shape index: {}]
  %s1 = inlined_call_operand.vmem [shape: f32[640,128], index: 1, kind: input, shape index: {}]
  %s2 = inlined_call_operand.vmem [shape: f32[1,128], index: 2, kind: input, shape index: {}]
  %s3 = inlined_call_operand.vmem [shape: f32[1,128], index: 3, kind: input, shape index: {}]
  %s4 = inlined_call_operand.vmem [shape: f32[32,128], index: 4, kind: output, shape index: {}]
  %s5 = sld [smem:[#allocation0]]
  $region34: #{_lambda_.18} parent=0
    _
  %s7 = ssub.s32 1, %s5
  %s8 = scalar_select 0, %s7, %s5
  // Predicated region
  $region2: #{_lambda_.18} parent=0 // pred_check
    _
  $region3: #{_lambda_.18} parent=0 // pred_check_branch
    %10 = sbr.rel (0) target = $region5
  $region4: #{_lambda_.18} parent=0 // pred_region
    _
  $region5: #{_lambda_.18} parent=0 // pred_fallthru
    _
  // Predicated region
  $region6: #{_lambda_.18} parent=0 // pred_check
    _
  $region7: #{_lambda_.18} parent=0 // pred_check_branch
    %12 = sbr.rel (0) target = $region9
  $region8: #{_lambda_.18} parent=0 // pred_region
    _
  $region9: #{_lambda_.18} parent=0 // pred_fallthru
    _
  // Predicated region
  $region10: #{_lambda_.18} parent=0 // pred_check
    _
  $region11: #{_lambda_.18} parent=0 // pred_check_branch
    %14 = sbr.rel (0) target = $region13
  $region12: #{_lambda_.18} parent=0 // pred_region
    _
  $region13: #{_lambda_.18} parent=0 // pred_fallthru
    _
  // Predicated region
  $region14: #{_lambda_.18} parent=0 // pred_check
    _
  $region15: #{_lambda_.18} parent=0 // pred_check_branch
    %16 = sbr.rel (0) target = $region17
  $region16: #{_lambda_.18} parent=0 // pred_region
    _
  $region17: #{_lambda_.18} parent=0 // pred_fallthru
    _
  %p17 = scmp.eq.s32.totalorder 0, 0
  // Predicated region
  $region18: #{_lambda_.18} parent=0 // pred_check
    %p18 = pneg %p17
  $region19: #{_lambda_.18} parent=0 // pred_check_branch
    %20 = sbr.rel (%p18) target = $region21
  $region20: #{_lambda_.18} parent=0 // pred_region
    %21 = vst [vmem:[#allocation2] sm:$0xff] 0.0
    %22 = vst [vmem:[#allocation2 + $0x8] sm:$0xff] 0.0
    %23 = vst [vmem:[#allocation2 + $0x10] sm:$0xff] 0.0
    %24 = vst [vmem:[#allocation2 + $0x18] sm:$0xff] 0.0
  $region21: #{_lambda_.18} parent=0 // pred_fallthru
    _
  %v25 = vld [vmem:[#allocation2] sm:$0xff]
  %v26 = vld [vmem:[#allocation2 + $0x8] sm:$0xff]
  %v27 = vld [vmem:[#allocation2 + $0x10] sm:$0xff]
  %v28 = vld [vmem:[#allocation2 + $0x18] sm:$0xff]
  %v29 = vld [vmem:[%s0] sm:$0xff]
  %v30 = vld [vmem:[%s0 + $0x8] sm:$0xff]
  %v31 = vld [vmem:[%s0 + $0x10] sm:$0xff]
  %v32 = vld [vmem:[%s0 + $0x18] sm:$0xff]
  %v33 = vld [vmem:[%s0 + $0x20] sm:$0xff]
  %v34 = vld [vmem:[%s0 + $0x28] sm:$0xff]
  %v35 = vld [vmem:[%s0 + $0x30] sm:$0xff]
  %v36 = vld [vmem:[%s0 + $0x38] sm:$0xff]
  %v37 = vld [vmem:[%s0 + $0x40] sm:$0xff]
  %v38 = vld [vmem:[%s0 + $0x48] sm:$0xff]
  %v39 = vld [vmem:[%s0 + $0x50] sm:$0xff]
  %v40 = vld [vmem:[%s0 + $0x58] sm:$0xff]
  %v41 = vld [vmem:[%s0 + $0x60] sm:$0xff]
  %v42 = vld [vmem:[%s0 + $0x68] sm:$0xff]
  %v43 = vld [vmem:[%s0 + $0x70] sm:$0xff]
  %v44 = vld [vmem:[%s0 + $0x78] sm:$0xff]
  %v45 = vld [vmem:[%s0 + $0x80] sm:$0xff]
  %v46 = vld [vmem:[%s0 + $0x88] sm:$0xff]
  %v47 = vld [vmem:[%s0 + $0x90] sm:$0xff]
  %v48 = vld [vmem:[%s0 + $0x98] sm:$0xff]
  %v49 = vld [vmem:[%s1] sm:$0xff]
  %v50 = vld [vmem:[%s1 + $0x8] sm:$0xff]
  %v51 = vld [vmem:[%s1 + $0x10] sm:$0xff]
  %v52 = vld [vmem:[%s1 + $0x18] sm:$0xff]
  %v53 = vld [vmem:[%s1 + $0x20] sm:$0xff]
  %v54 = vld [vmem:[%s1 + $0x28] sm:$0xff]
  %v55 = vld [vmem:[%s1 + $0x30] sm:$0xff]
  %v56 = vld [vmem:[%s1 + $0x38] sm:$0xff]
  %v57 = vld [vmem:[%s1 + $0x40] sm:$0xff]
  %v58 = vld [vmem:[%s1 + $0x48] sm:$0xff]
  %v59 = vld [vmem:[%s1 + $0x50] sm:$0xff]
  %v60 = vld [vmem:[%s1 + $0x58] sm:$0xff]
  %v61 = vld [vmem:[%s1 + $0x60] sm:$0xff]
  %v62 = vld [vmem:[%s1 + $0x68] sm:$0xff]
  %v63 = vld [vmem:[%s1 + $0x70] sm:$0xff]
  %v64 = vld [vmem:[%s1 + $0x78] sm:$0xff]
  %v65 = vld [vmem:[%s1 + $0x80] sm:$0xff]
  %v66 = vld [vmem:[%s1 + $0x88] sm:$0xff]
  %v67 = vld [vmem:[%s1 + $0x90] sm:$0xff]
  %v68 = vld [vmem:[%s1 + $0x98] sm:$0xff]
  %v69 = vld [vmem:[%s1 + $0xa0] sm:$0xff]
  %v70 = vld [vmem:[%s1 + $0xa8] sm:$0xff]
  %v71 = vld [vmem:[%s1 + $0xb0] sm:$0xff]
  %v72 = vld [vmem:[%s1 + $0xb8] sm:$0xff]
  %v73 = vld [vmem:[%s1 + $0xc0] sm:$0xff]
  %v74 = vld [vmem:[%s1 + $0xc8] sm:$0xff]
  %v75 = vld [vmem:[%s1 + $0xd0] sm:$0xff]
  %v76 = vld [vmem:[%s1 + $0xd8] sm:$0xff]
  %v77 = vld [vmem:[%s1 + $0xe0] sm:$0xff]
  %v78 = vld [vmem:[%s1 + $0xe8] sm:$0xff]
  %v79 = vld [vmem:[%s1 + $0xf0] sm:$0xff]
  %v80 = vld [vmem:[%s1 + $0xf8] sm:$0xff]
  %v81 = vld [vmem:[%s1 + $0x100] sm:$0xff]
  %v82 = vld [vmem:[%s1 + $0x108] sm:$0xff]
  %v83 = vld [vmem:[%s1 + $0x110] sm:$0xff]
  %v84 = vld [vmem:[%s1 + $0x118] sm:$0xff]
  %v85 = vld [vmem:[%s1 + $0x120] sm:$0xff]
  %v86 = vld [vmem:[%s1 + $0x128] sm:$0xff]
  %v87 = vld [vmem:[%s1 + $0x130] sm:$0xff]
  %v88 = vld [vmem:[%s1 + $0x138] sm:$0xff]
  %v89 = vld [vmem:[%s1 + $0x140] sm:$0xff]
  %v90 = vld [vmem:[%s1 + $0x148] sm:$0xff]
  %v91 = vld [vmem:[%s1 + $0x150] sm:$0xff]
  %v92 = vld [vmem:[%s1 + $0x158] sm:$0xff]
  %v93 = vld [vmem:[%s1 + $0x160] sm:$0xff]
  %v94 = vld [vmem:[%s1 + $0x168] sm:$0xff]
  %v95 = vld [vmem:[%s1 + $0x170] sm:$0xff]
  %v96 = vld [vmem:[%s1 + $0x178] sm:$0xff]
  %v97 = vld [vmem:[%s1 + $0x180] sm:$0xff]
  %v98 = vld [vmem:[%s1 + $0x188] sm:$0xff]
  %v99 = vld [vmem:[%s1 + $0x190] sm:$0xff]
  %v100 = vld [vmem:[%s1 + $0x198] sm:$0xff]
  %v101 = vld [vmem:[%s1 + $0x1a0] sm:$0xff]
  %v102 = vld [vmem:[%s1 + $0x1a8] sm:$0xff]
  %v103 = vld [vmem:[%s1 + $0x1b0] sm:$0xff]
  %v104 = vld [vmem:[%s1 + $0x1b8] sm:$0xff]
  %v105 = vld [vmem:[%s1 + $0x1c0] sm:$0xff]
  %v106 = vld [vmem:[%s1 + $0x1c8] sm:$0xff]
  %v107 = vld [vmem:[%s1 + $0x1d0] sm:$0xff]
  %v108 = vld [vmem:[%s1 + $0x1d8] sm:$0xff]
  %v109 = vld [vmem:[%s1 + $0x1e0] sm:$0xff]
  %v110 = vld [vmem:[%s1 + $0x1e8] sm:$0xff]
  %v111 = vld [vmem:[%s1 + $0x1f0] sm:$0xff]
  %v112 = vld [vmem:[%s1 + $0x1f8] sm:$0xff]
  %v113 = vld [vmem:[%s1 + $0x200] sm:$0xff]
  %v114 = vld [vmem:[%s1 + $0x208] sm:$0xff]
  %v115 = vld [vmem:[%s1 + $0x210] sm:$0xff]
  %v116 = vld [vmem:[%s1 + $0x218] sm:$0xff]
  %v117 = vld [vmem:[%s1 + $0x220] sm:$0xff]
  %v118 = vld [vmem:[%s1 + $0x228] sm:$0xff]
  %v119 = vld [vmem:[%s1 + $0x230] sm:$0xff]
  %v120 = vld [vmem:[%s1 + $0x238] sm:$0xff]
  %v121 = vld [vmem:[%s1 + $0x240] sm:$0xff]
  %v122 = vld [vmem:[%s1 + $0x248] sm:$0xff]
  %v123 = vld [vmem:[%s1 + $0x250] sm:$0xff]
  %v124 = vld [vmem:[%s1 + $0x258] sm:$0xff]
  %v125 = vld [vmem:[%s1 + $0x260] sm:$0xff]
  %v126 = vld [vmem:[%s1 + $0x268] sm:$0xff]
  %v127 = vld [vmem:[%s1 + $0x270] sm:$0xff]
  %v128 = vld [vmem:[%s1 + $0x278] sm:$0xff]
  %129 = vmatprep.subr.mxu0 0.0
  %130 = vmatpush1.msra.mxu0 %v64
  %131 = vmatprep.subr.mxu0 0.0
  %132 = vmatpush1.msra.mxu0 %v63
  %133 = vmatprep.subr.mxu0 0.0
  %134 = vmatpush1.msra.mxu0 %v62
  %135 = vmatprep.subr.mxu0 0.0
  %136 = vmatpush1.msra.mxu0 %v61
  %137 = vmatprep.subr.mxu0 0.0
  %138 = vmatpush1.msra.mxu0 %v60
  %139 = vmatprep.subr.mxu0 0.0
  %140 = vmatpush1.msra.mxu0 %v59
  %141 = vmatprep.subr.mxu0 0.0
  %142 = vmatpush1.msra.mxu0 %v58
  %143 = vmatprep.subr.mxu0 0.0
  %144 = vmatpush1.msra.mxu0 %v57
  %145 = vmatprep.subr.mxu0 0.0
  %146 = vmatpush1.msra.mxu0 %v56
  %147 = vmatprep.subr.mxu0 0.0
  %148 = vmatpush1.msra.mxu0 %v55
  %149 = vmatprep.subr.mxu0 0.0
  %150 = vmatpush1.msra.mxu0 %v54
  %151 = vmatprep.subr.mxu0 0.0
  %152 = vmatpush1.msra.mxu0 %v53
  %153 = vmatprep.subr.mxu0 0.0
  %154 = vmatpush1.msra.mxu0 %v52
  %155 = vmatprep.subr.mxu0 0.0
  %156 = vmatpush1.msra.mxu0 %v51
  %157 = vmatprep.subr.mxu0 0.0
  %158 = vmatpush1.msra.mxu0 %v50
  %159 = vmatprep.subr.mxu0 0.0
  %160 = vmatpush1.msra.mxu0 %v49
  %161 = vmatprep.subr.mxu0 0.0
  %162 = vmatpush2.msra.mxu0 %v80
  %163 = vmatprep.subr.mxu0 0.0
  %164 = vmatpush2.msra.mxu0 %v79
  %165 = vmatprep.subr.mxu0 0.0
  %166 = vmatpush2.msra.mxu0 %v78
  %167 = vmatprep.subr.mxu0 0.0
  %168 = vmatpush2.msra.mxu0 %v77
  %169 = vmatprep.subr.mxu0 0.0
  %170 = vmatpush2.msra.mxu0 %v76
  %171 = vmatprep.subr.mxu0 0.0
  %172 = vmatpush2.msra.mxu0 %v75
  %173 = vmatprep.subr.mxu0 0.0
  %174 = vmatpush2.msra.mxu0 %v74
  %175 = vmatprep.subr.mxu0 0.0
  %176 = vmatpush2.msra.mxu0 %v73
  %177 = vmatprep.subr.mxu0 0.0
  %178 = vmatpush2.msra.mxu0 %v72
  %179 = vmatprep.subr.mxu0 0.0
  %180 = vmatpush2.msra.mxu0 %v71
  %181 = vmatprep.subr.mxu0 0.0
  %182 = vmatpush2.msra.mxu0 %v70
  %183 = vmatprep.subr.mxu0 0.0
  %184 = vmatpush2.msra.mxu0 %v69
  %185 = vmatprep.subr.mxu0 0.0
  %186 = vmatpush2.msra.mxu0 %v68
  %187 = vmatprep.subr.mxu0 0.0
  %188 = vmatpush2.msra.mxu0 %v67
  %189 = vmatprep.subr.mxu0 0.0
  %190 = vmatpush2.msra.mxu0 %v66
  %191 = vmatprep.subr.mxu0 0.0
  %192 = vmatpush2.msra.mxu0 %v65
  %193 = vmatprep.mubr.f32.mxu0 %v30
  %194 = vmatmul.mubr.f32.gmra.mxu0 %v29
  %v195 = vpop.f32.mrf.mxu0
  %v196 = vadd.f32 0.0, %v195
  %v197 = vpop.f32.mrf.mxu0
  %198 = vmatprep.mubr.f32.mxu0 %v35
  %199 = vmatmul.mubr.f32.gmra.mxu0 %v34
  %v200 = vpop.f32.mrf.mxu0
  %v201 = vadd.f32 0.0, %v200
  %v202 = vpop.f32.mrf.mxu0
  %203 = vmatprep.mubr.f32.mxu0 %v40
  %204 = vmatmul.mubr.f32.gmra.mxu0 %v39
  %v205 = vpop.f32.mrf.mxu0
  %v206 = vadd.f32 0.0, %v205
  %v207 = vpop.f32.mrf.mxu0
  %208 = vmatprep.mubr.f32.mxu0 %v45
  %209 = vmatmul.mubr.f32.gmra.mxu0 %v44
  %v210 = vpop.f32.mrf.mxu0
  %v211 = vadd.f32 0.0, %v210
  %v212 = vpop.f32.mrf.mxu0
  %213 = vdwg.mxu0
  %214 = vmatprep.subr.mxu0 0.0
  %215 = vmatpush1.msra.mxu0 %v96
  %216 = vmatprep.subr.mxu0 0.0
  %217 = vmatpush1.msra.mxu0 %v95
  %218 = vmatprep.subr.mxu0 0.0
  %219 = vmatpush1.msra.mxu0 %v94
  %220 = vmatprep.subr.mxu0 0.0
  %221 = vmatpush1.msra.mxu0 %v93
  %222 = vmatprep.subr.mxu0 0.0
  %223 = vmatpush1.msra.mxu0 %v92
  %224 = vmatprep.subr.mxu0 0.0
  %225 = vmatpush1.msra.mxu0 %v91
  %226 = vmatprep.subr.mxu0 0.0
  %227 = vmatpush1.msra.mxu0 %v90
  %228 = vmatprep.subr.mxu0 0.0
  %229 = vmatpush1.msra.mxu0 %v89
  %230 = vmatprep.subr.mxu0 0.0
  %231 = vmatpush1.msra.mxu0 %v88
  %232 = vmatprep.subr.mxu0 0.0
  %233 = vmatpush1.msra.mxu0 %v87
  %234 = vmatprep.subr.mxu0 0.0
  %235 = vmatpush1.msra.mxu0 %v86
  %236 = vmatprep.subr.mxu0 0.0
  %237 = vmatpush1.msra.mxu0 %v85
  %238 = vmatprep.subr.mxu0 0.0
  %239 = vmatpush1.msra.mxu0 %v84
  %240 = vmatprep.subr.mxu0 0.0
  %241 = vmatpush1.msra.mxu0 %v83
  %242 = vmatprep.subr.mxu0 0.0
  %243 = vmatpush1.msra.mxu0 %v82
  %244 = vmatprep.subr.mxu0 0.0
  %245 = vmatpush1.msra.mxu0 %v81
  %246 = vmatprep.subr.mxu0 0.0
  %247 = vmatpush2.msra.mxu0 %v112
  %248 = vmatprep.subr.mxu0 0.0
  %249 = vmatpush2.msra.mxu0 %v111
  %250 = vmatprep.subr.mxu0 0.0
  %251 = vmatpush2.msra.mxu0 %v110
  %252 = vmatprep.subr.mxu0 0.0
  %253 = vmatpush2.msra.mxu0 %v109
  %254 = vmatprep.subr.mxu0 0.0
  %255 = vmatpush2.msra.mxu0 %v108
  %256 = vmatprep.subr.mxu0 0.0
  %257 = vmatpush2.msra.mxu0 %v107
  %258 = vmatprep.subr.mxu0 0.0
  %259 = vmatpush2.msra.mxu0 %v106
  %260 = vmatprep.subr.mxu0 0.0
  %261 = vmatpush2.msra.mxu0 %v105
  %262 = vmatprep.subr.mxu0 0.0
  %263 = vmatpush2.msra.mxu0 %v104
  %264 = vmatprep.subr.mxu0 0.0
  %265 = vmatpush2.msra.mxu0 %v103
  %266 = vmatprep.subr.mxu0 0.0
  %267 = vmatpush2.msra.mxu0 %v102
  %268 = vmatprep.subr.mxu0 0.0
  %269 = vmatpush2.msra.mxu0 %v101
  %270 = vmatprep.subr.mxu0 0.0
  %271 = vmatpush2.msra.mxu0 %v100
  %272 = vmatprep.subr.mxu0 0.0
  %273 = vmatpush2.msra.mxu0 %v99
  %274 = vmatprep.subr.mxu0 0.0
  %275 = vmatpush2.msra.mxu0 %v98
  %276 = vmatprep.subr.mxu0 0.0
  %277 = vmatpush2.msra.mxu0 %v97
  %278 = vmatprep.mubr.f32.mxu0 %v32
  %279 = vmatmul.mubr.f32.gmra.mxu0 %v31
  %v280 = vpop.f32.mrf.mxu0
  %v281 = vadd.f32 %v196, %v280
  %v282 = vpop.f32.mrf.mxu0
  %283 = vmatprep.mubr.f32.mxu0 %v37
  %284 = vmatmul.mubr.f32.gmra.mxu0 %v36
  %v285 = vpop.f32.mrf.mxu0
  %v286 = vadd.f32 %v201, %v285
  %v287 = vpop.f32.mrf.mxu0
  %288 = vmatprep.mubr.f32.mxu0 %v42
  %289 = vmatmul.mubr.f32.gmra.mxu0 %v41
  %v290 = vpop.f32.mrf.mxu0
  %v291 = vadd.f32 %v206, %v290
  %v292 = vpop.f32.mrf.mxu0
  %293 = vmatprep.mubr.f32.mxu0 %v47
  %294 = vmatmul.mubr.f32.gmra.mxu0 %v46
  %v295 = vpop.f32.mrf.mxu0
  %v296 = vadd.f32 %v211, %v295
  %v297 = vpop.f32.mrf.mxu0
  %298 = vdwg.mxu0
  %299 = vmatprep.subr.mxu0 0.0
  %300 = vmatpush1.msra.mxu0 %v128
  %301 = vmatprep.subr.mxu0 0.0
  %302 = vmatpush1.msra.mxu0 %v127
  %303 = vmatprep.subr.mxu0 0.0
  %304 = vmatpush1.msra.mxu0 %v126
  %305 = vmatprep.subr.mxu0 0.0
  %306 = vmatpush1.msra.mxu0 %v125
  %307 = vmatprep.subr.mxu0 0.0
  %308 = vmatpush1.msra.mxu0 %v124
  %309 = vmatprep.subr.mxu0 0.0
  %310 = vmatpush1.msra.mxu0 %v123
  %311 = vmatprep.subr.mxu0 0.0
  %312 = vmatpush1.msra.mxu0 %v122
  %313 = vmatprep.subr.mxu0 0.0
  %314 = vmatpush1.msra.mxu0 %v121
  %315 = vmatprep.subr.mxu0 0.0
  %316 = vmatpush1.msra.mxu0 %v120
  %317 = vmatprep.subr.mxu0 0.0
  %318 = vmatpush1.msra.mxu0 %v119
  %319 = vmatprep.subr.mxu0 0.0
  %320 = vmatpush1.msra.mxu0 %v118
  %321 = vmatprep.subr.mxu0 0.0
  %322 = vmatpush1.msra.mxu0 %v117
  %323 = vmatprep.subr.mxu0 0.0
  %324 = vmatpush1.msra.mxu0 %v116
  %325 = vmatprep.subr.mxu0 0.0
  %326 = vmatpush1.msra.mxu0 %v115
  %327 = vmatprep.subr.mxu0 0.0
  %328 = vmatpush1.msra.mxu0 %v114
  %329 = vmatprep.subr.mxu0 0.0
  %330 = vmatpush1.msra.mxu0 %v113
  %331 = vmatprep.subr.mxu0 0.0
  %332 = vmatpush2.msra.mxu0 0.0
  %333 = vmatprep.subr.mxu0 0.0
  %334 = vmatpush2.msra.mxu0 0.0
  %335 = vmatprep.subr.mxu0 0.0
  %336 = vmatpush2.msra.mxu0 0.0
  %337 = vmatprep.subr.mxu0 0.0
  %338 = vmatpush2.msra.mxu0 0.0
  %339 = vmatprep.subr.mxu0 0.0
  %340 = vmatpush2.msra.mxu0 0.0
  %341 = vmatprep.subr.mxu0 0.0
  %342 = vmatpush2.msra.mxu0 0.0
  %343 = vmatprep.subr.mxu0 0.0
  %344 = vmatpush2.msra.mxu0 0.0
  %345 = vmatprep.subr.mxu0 0.0
  %346 = vmatpush2.msra.mxu0 0.0
  %347 = vmatprep.subr.mxu0 0.0
  %348 = vmatpush2.msra.mxu0 0.0
  %349 = vmatprep.subr.mxu0 0.0
  %350 = vmatpush2.msra.mxu0 0.0
  %351 = vmatprep.subr.mxu0 0.0
  %352 = vmatpush2.msra.mxu0 0.0
  %353 = vmatprep.subr.mxu0 0.0
  %354 = vmatpush2.msra.mxu0 0.0
  %355 = vmatprep.subr.mxu0 0.0
  %356 = vmatpush2.msra.mxu0 0.0
  %357 = vmatprep.subr.mxu0 0.0
  %358 = vmatpush2.msra.mxu0 0.0
  %359 = vmatprep.subr.mxu0 0.0
  %360 = vmatpush2.msra.mxu0 0.0
  %361 = vmatprep.subr.mxu0 0.0
  %362 = vmatpush2.msra.mxu0 0.0
  %363 = vmatprep.mubr.f32.mxu0 0.0
  %364 = vmatmul.mubr.f32.gmra.mxu0 %v33
  %v365 = vpop.f32.mrf.mxu0
  %v366 = vadd.f32 %v281, %v365
  %v367 = vpop.f32.mrf.mxu0
  %368 = vmatprep.mubr.f32.mxu0 0.0
  %369 = vmatmul.mubr.f32.gmra.mxu0 %v38
  %v370 = vpop.f32.mrf.mxu0
  %v371 = vadd.f32 %v286, %v370
  %v372 = vpop.f32.mrf.mxu0
  %373 = vmatprep.mubr.f32.mxu0 0.0
  %374 = vmatmul.mubr.f32.gmra.mxu0 %v43
  %v375 = vpop.f32.mrf.mxu0
  %v376 = vadd.f32 %v291, %v375
  %v377 = vpop.f32.mrf.mxu0
  %378 = vmatprep.mubr.f32.mxu0 0.0
  %379 = vmatmul.mubr.f32.gmra.mxu0 %v48
  %v380 = vpop.f32.mrf.mxu0
  %v381 = vadd.f32 %v296, %v380
  %v382 = vpop.f32.mrf.mxu0
  %383 = vdwg.mxu0
  %v384 = vadd.f32 %v25, %v366
  %v385 = vadd.f32 %v26, %v371
  %v386 = vadd.f32 %v27, %v376
  %v387 = vadd.f32 %v28, %v381
  %388 = vst [vmem:[#allocation2] sm:$0xff] %v384
  %389 = vst [vmem:[#allocation2 + $0x8] sm:$0xff] %v385
  %390 = vst [vmem:[#allocation2 + $0x10] sm:$0xff] %v386
  %391 = vst [vmem:[#allocation2 + $0x18] sm:$0xff] %v387
  // Predicated region
  $region22: #{_lambda_.18} parent=0 // pred_check
    %p392 = pneg %p17
  $region23: #{_lambda_.18} parent=0 // pred_check_branch
    %394 = sbr.rel (%p392) target = $region25
  $region24: #{_lambda_.18} parent=0 // pred_region
    %v395 = vld [vmem:[#allocation2] sm:$0xff]
    %v396 = vld [vmem:[#allocation2 + $0x8] sm:$0xff]
    %v397 = vld [vmem:[#allocation2 + $0x10] sm:$0xff]
    %v398 = vld [vmem:[#allocation2 + $0x18] sm:$0xff]
    %v399 = vld [vmem:[%s2] sm:$0x1]
    %v401 = vlaneseq
    %v402 = vshrl.u32 %v401, 7
    %v403 = vsub.s32 0, %v402
    %v404 = vrot.slane %v399, %v403
    %v406 = vmul.f32 %v395, %v404
    %v407 = vmul.f32 %v396, %v404
    %v408 = vmul.f32 %v397, %v404
    %v409 = vmul.f32 %v398, %v404
    %v410 = vld [vmem:[%s3] sm:$0x1]
    %v412 = vlaneseq
    %v413 = vshrl.u32 %v412, 7
    %v414 = vsub.s32 0, %v413
    %v415 = vrot.slane %v410, %v414
    %v417 = vadd.f32 %v406, %v415
    %v418 = vadd.f32 %v407, %v415
    %v419 = vadd.f32 %v408, %v415
    %v420 = vadd.f32 %v409, %v415
    %v421 = vmax.f32 %v417, 0.0
    %v422 = vmax.f32 %v418, 0.0
    %v423 = vmax.f32 %v419, 0.0
    %v424 = vmax.f32 %v420, 0.0
    %425 = vst [vmem:[%s4] sm:$0xff] %v421
    %426 = vst [vmem:[%s4 + $0x8] sm:$0xff] %v422
    %427 = vst [vmem:[%s4 + $0x10] sm:$0xff] %v423
    %428 = vst [vmem:[%s4 + $0x18] sm:$0xff] %v424
  $region25: #{_lambda_.18} parent=0 // pred_fallthru
    _
  // Predicated region
  $region26: #{_lambda_.18} parent=0 // pred_check
    _
  $region27: #{_lambda_.18} parent=0 // pred_check_branch
    %430 = sbr.rel (0) target = $region29
  $region28: #{_lambda_.18} parent=0 // pred_region
    _
  $region29: #{_lambda_.18} parent=0 // pred_fallthru
    _
  // Predicated region
  $region30: #{_lambda_.18} parent=0 // pred_check
    _
  $region31: #{_lambda_.18} parent=0 // pred_check_branch
    %432 = sbr.rel (0) target = $region33
  $region32: #{_lambda_.18} parent=0 // pred_region
    _
  $region33: #{_lambda_.18} parent=0 // pred_fallthru
    _

// kernel: _lambda_.19
$region0: #{_lambda_.19}
  #allocation0 [shape = 'u32[]', space=smem, size = 0x4, offset = 0x4, fixed_abs, tag = 'smem constant byte address 0x4 - core index']
  #allocation1 [shape = 'u32[144,128]{1,0:T(1,128)}', space=vmem, size = 0x12000, scoped, tag = 'internal scratch']
  #allocation2 [shape = 'f32[32,128]{1,0:T(8,128)}', space=vmem, size = 0x4000, scoped, tag = 'scratch operand']
  %s0 = inlined_call_operand.vmem [shape: f32[32,128], index: 0, kind: input, shape index: {}]
  %s1 = inlined_call_operand.vmem [shape: f32[128,128], index: 1, kind: input, shape index: {}]
  %s2 = inlined_call_operand.vmem [shape: f32[1,128], index: 2, kind: input, shape index: {}]
  %s3 = inlined_call_operand.vmem [shape: f32[1,128], index: 3, kind: input, shape index: {}]
  %s4 = inlined_call_operand.vmem [shape: f32[32,128], index: 4, kind: output, shape index: {}]
  %s5 = sld [smem:[#allocation0]]
  $region34: #{_lambda_.19} parent=0
    _
  %s7 = ssub.s32 1, %s5
  %s8 = scalar_select 0, %s7, %s5
  // Predicated region
  $region2: #{_lambda_.19} parent=0 // pred_check
    _
  $region3: #{_lambda_.19} parent=0 // pred_check_branch
    %10 = sbr.rel (0) target = $region5
  $region4: #{_lambda_.19} parent=0 // pred_region
    _
  $region5: #{_lambda_.19} parent=0 // pred_fallthru
    _
  // Predicated region
  $region6: #{_lambda_.19} parent=0 // pred_check
    _
  $region7: #{_lambda_.19} parent=0 // pred_check_branch
    %12 = sbr.rel (0) target = $region9
  $region8: #{_lambda_.19} parent=0 // pred_region
    _
  $region9: #{_lambda_.19} parent=0 // pred_fallthru
    _
  // Predicated region
  $region10: #{_lambda_.19} parent=0 // pred_check
    _
  $region11: #{_lambda_.19} parent=0 // pred_check_branch
    %14 = sbr.rel (0) target = $region13
  $region12: #{_lambda_.19} parent=0 // pred_region
    _
  $region13: #{_lambda_.19} parent=0 // pred_fallthru
    _
  // Predicated region
  $region14: #{_lambda_.19} parent=0 // pred_check
    _
  $region15: #{_lambda_.19} parent=0 // pred_check_branch
    %16 = sbr.rel (0) target = $region17
  $region16: #{_lambda_.19} parent=0 // pred_region
    _
  $region17: #{_lambda_.19} parent=0 // pred_fallthru
    _
  %p17 = scmp.eq.s32.totalorder 0, 0
  // Predicated region
  $region18: #{_lambda_.19} parent=0 // pred_check
    %p18 = pneg %p17
  $region19: #{_lambda_.19} parent=0 // pred_check_branch
    %20 = sbr.rel (%p18) target = $region21
  $region20: #{_lambda_.19} parent=0 // pred_region
    %21 = vst [vmem:[#allocation2] sm:$0xff] 0.0
    %22 = vst [vmem:[#allocation2 + $0x8] sm:$0xff] 0.0
    %23 = vst [vmem:[#allocation2 + $0x10] sm:$0xff] 0.0
    %24 = vst [vmem:[#allocation2 + $0x18] sm:$0xff] 0.0
  $region21: #{_lambda_.19} parent=0 // pred_fallthru
    _
  %v25 = vld [vmem:[#allocation2] sm:$0xff]
  %v26 = vld [vmem:[#allocation2 + $0x8] sm:$0xff]
  %v27 = vld [vmem:[#allocation2 + $0x10] sm:$0xff]
  %v28 = vld [vmem:[#allocation2 + $0x18] sm:$0xff]
  %v29 = vld [vmem:[%s0] sm:$0xff]
  %v30 = vld [vmem:[%s0 + $0x8] sm:$0xff]
  %v31 = vld [vmem:[%s0 + $0x10] sm:$0xff]
  %v32 = vld [vmem:[%s0 + $0x18] sm:$0xff]
  %v33 = vld [vmem:[%s1] sm:$0xff]
  %v34 = vld [vmem:[%s1 + $0x8] sm:$0xff]
  %v35 = vld [vmem:[%s1 + $0x10] sm:$0xff]
  %v36 = vld [vmem:[%s1 + $0x18] sm:$0xff]
  %v37 = vld [vmem:[%s1 + $0x20] sm:$0xff]
  %v38 = vld [vmem:[%s1 + $0x28] sm:$0xff]
  %v39 = vld [vmem:[%s1 + $0x30] sm:$0xff]
  %v40 = vld [vmem:[%s1 + $0x38] sm:$0xff]
  %v41 = vld [vmem:[%s1 + $0x40] sm:$0xff]
  %v42 = vld [vmem:[%s1 + $0x48] sm:$0xff]
  %v43 = vld [vmem:[%s1 + $0x50] sm:$0xff]
  %v44 = vld [vmem:[%s1 + $0x58] sm:$0xff]
  %v45 = vld [vmem:[%s1 + $0x60] sm:$0xff]
  %v46 = vld [vmem:[%s1 + $0x68] sm:$0xff]
  %v47 = vld [vmem:[%s1 + $0x70] sm:$0xff]
  %v48 = vld [vmem:[%s1 + $0x78] sm:$0xff]
  %49 = vmatprep.subr.mxu0 0.0
  %50 = vmatpush1.msra.mxu0 %v48
  %51 = vmatprep.subr.mxu0 0.0
  %52 = vmatpush1.msra.mxu0 %v47
  %53 = vmatprep.subr.mxu0 0.0
  %54 = vmatpush1.msra.mxu0 %v46
  %55 = vmatprep.subr.mxu0 0.0
  %56 = vmatpush1.msra.mxu0 %v45
  %57 = vmatprep.subr.mxu0 0.0
  %58 = vmatpush1.msra.mxu0 %v44
  %59 = vmatprep.subr.mxu0 0.0
  %60 = vmatpush1.msra.mxu0 %v43
  %61 = vmatprep.subr.mxu0 0.0
  %62 = vmatpush1.msra.mxu0 %v42
  %63 = vmatprep.subr.mxu0 0.0
  %64 = vmatpush1.msra.mxu0 %v41
  %65 = vmatprep.subr.mxu0 0.0
  %66 = vmatpush1.msra.mxu0 %v40
  %67 = vmatprep.subr.mxu0 0.0
  %68 = vmatpush1.msra.mxu0 %v39
  %69 = vmatprep.subr.mxu0 0.0
  %70 = vmatpush1.msra.mxu0 %v38
  %71 = vmatprep.subr.mxu0 0.0
  %72 = vmatpush1.msra.mxu0 %v37
  %73 = vmatprep.subr.mxu0 0.0
  %74 = vmatpush1.msra.mxu0 %v36
  %75 = vmatprep.subr.mxu0 0.0
  %76 = vmatpush1.msra.mxu0 %v35
  %77 = vmatprep.subr.mxu0 0.0
  %78 = vmatpush1.msra.mxu0 %v34
  %79 = vmatprep.subr.mxu0 0.0
  %80 = vmatpush1.msra.mxu0 %v33
  %81 = vmatprep.subr.mxu0 0.0
  %82 = vmatpush2.msra.mxu0 0.0
  %83 = vmatprep.subr.mxu0 0.0
  %84 = vmatpush2.msra.mxu0 0.0
  %85 = vmatprep.subr.mxu0 0.0
  %86 = vmatpush2.msra.mxu0 0.0
  %87 = vmatprep.subr.mxu0 0.0
  %88 = vmatpush2.msra.mxu0 0.0
  %89 = vmatprep.subr.mxu0 0.0
  %90 = vmatpush2.msra.mxu0 0.0
  %91 = vmatprep.subr.mxu0 0.0
  %92 = vmatpush2.msra.mxu0 0.0
  %93 = vmatprep.subr.mxu0 0.0
  %94 = vmatpush2.msra.mxu0 0.0
  %95 = vmatprep.subr.mxu0 0.0
  %96 = vmatpush2.msra.mxu0 0.0
  %97 = vmatprep.subr.mxu0 0.0
  %98 = vmatpush2.msra.mxu0 0.0
  %99 = vmatprep.subr.mxu0 0.0
  %100 = vmatpush2.msra.mxu0 0.0
  %101 = vmatprep.subr.mxu0 0.0
  %102 = vmatpush2.msra.mxu0 0.0
  %103 = vmatprep.subr.mxu0 0.0
  %104 = vmatpush2.msra.mxu0 0.0
  %105 = vmatprep.subr.mxu0 0.0
  %106 = vmatpush2.msra.mxu0 0.0
  %107 = vmatprep.subr.mxu0 0.0
  %108 = vmatpush2.msra.mxu0 0.0
  %109 = vmatprep.subr.mxu0 0.0
  %110 = vmatpush2.msra.mxu0 0.0
  %111 = vmatprep.subr.mxu0 0.0
  %112 = vmatpush2.msra.mxu0 0.0
  %113 = vmatprep.mubr.f32.mxu0 0.0
  %114 = vmatmul.mubr.f32.gmra.mxu0 %v29
  %v115 = vpop.f32.mrf.mxu0
  %v116 = vadd.f32 0.0, %v115
  %v117 = vpop.f32.mrf.mxu0
  %118 = vmatprep.mubr.f32.mxu0 0.0
  %119 = vmatmul.mubr.f32.gmra.mxu0 %v30
  %v120 = vpop.f32.mrf.mxu0
  %v121 = vadd.f32 0.0, %v120
  %v122 = vpop.f32.mrf.mxu0
  %123 = vmatprep.mubr.f32.mxu0 0.0
  %124 = vmatmul.mubr.f32.gmra.mxu0 %v31
  %v125 = vpop.f32.mrf.mxu0
  %v126 = vadd.f32 0.0, %v125
  %v127 = vpop.f32.mrf.mxu0
  %128 = vmatprep.mubr.f32.mxu0 0.0
  %129 = vmatmul.mubr.f32.gmra.mxu0 %v32
  %v130 = vpop.f32.mrf.mxu0
  %v131 = vadd.f32 0.0, %v130
  %v132 = vpop.f32.mrf.mxu0
  %133 = vdwg.mxu0
  %v134 = vadd.f32 %v25, %v116
  %v135 = vadd.f32 %v26, %v121
  %v136 = vadd.f32 %v27, %v126
  %v137 = vadd.f32 %v28, %v131
  %138 = vst [vmem:[#allocation2] sm:$0xff] %v134
  %139 = vst [vmem:[#allocation2 + $0x8] sm:$0xff] %v135
  %140 = vst [vmem:[#allocation2 + $0x10] sm:$0xff] %v136
  %141 = vst [vmem:[#allocation2 + $0x18] sm:$0xff] %v137
  // Predicated region
  $region22: #{_lambda_.19} parent=0 // pred_check
    %p142 = pneg %p17
  $region23: #{_lambda_.19} parent=0 // pred_check_branch
    %144 = sbr.rel (%p142) target = $region25
  $region24: #{_lambda_.19} parent=0 // pred_region
    %v145 = vld [vmem:[#allocation2] sm:$0xff]
    %v146 = vld [vmem:[#allocation2 + $0x8] sm:$0xff]
    %v147 = vld [vmem:[#allocation2 + $0x10] sm:$0xff]
    %v148 = vld [vmem:[#allocation2 + $0x18] sm:$0xff]
    %v149 = vld [vmem:[%s2] sm:$0x1]
    %v151 = vlaneseq
    %v152 = vshrl.u32 %v151, 7
    %v153 = vsub.s32 0, %v152
    %v154 = vrot.slane %v149, %v153
    %v156 = vmul.f32 %v145, %v154
    %v157 = vmul.f32 %v146, %v154
    %v158 = vmul.f32 %v147, %v154
    %v159 = vmul.f32 %v148, %v154
    %v160 = vld [vmem:[%s3] sm:$0x1]
    %v162 = vlaneseq
    %v163 = vshrl.u32 %v162, 7
    %v164 = vsub.s32 0, %v163
    %v165 = vrot.slane %v160, %v164
    %v167 = vadd.f32 %v156, %v165
    %v168 = vadd.f32 %v157, %v165
    %v169 = vadd.f32 %v158, %v165
    %v170 = vadd.f32 %v159, %v165
    %171 = vst [vmem:[%s4] sm:$0xff] %v167
    %172 = vst [vmem:[%s4 + $0x8] sm:$0xff] %v168
    %173 = vst [vmem:[%s4 + $0x10] sm:$0xff] %v169
    %174 = vst [vmem:[%s4 + $0x18] sm:$0xff] %v170
  $region25: #{_lambda_.19} parent=0 // pred_fallthru
    _
  // Predicated region
  $region26: #{_lambda_.19} parent=0 // pred_check
    _
  $region27: #{_lambda_.19} parent=0 // pred_check_branch
    %176 = sbr.rel (0) target = $region29
  $region28: #{_lambda_.19} parent=0 // pred_region
    _
  $region29: #{_lambda_.19} parent=0 // pred_fallthru
    _
  // Predicated region
  $region30: #{_lambda_.19} parent=0 // pred_check
    _
  $region31: #{_lambda_.19} parent=0 // pred_check_branch
    %178 = sbr.rel (0) target = $region33
  $region32: #{_lambda_.19} parent=0 // pred_region
    _
  $region33: #{_lambda_.19} parent=0 // pred_fallthru
    _

// kernel: _lambda_.20
$region0: #{_lambda_.20}
  #allocation0 [shape = 'u32[]', space=smem, size = 0x4, offset = 0x4, fixed_abs, tag = 'smem constant byte address 0x4 - core index']
  #allocation1 [shape = 'u32[144,128]{1,0:T(1,128)}', space=vmem, size = 0x12000, scoped, tag = 'internal scratch']
  #allocation2 [shape = 'f32[32,128]{1,0:T(8,128)}', space=vmem, size = 0x4000, scoped, tag = 'scratch operand']
  %s0 = inlined_call_operand.vmem [shape: f32[32,1152], index: 0, kind: input, shape index: {}]
  %s1 = inlined_call_operand.vmem [shape: f32[1152,128], index: 1, kind: input, shape index: {}]
  %s2 = inlined_call_operand.vmem [shape: f32[1,128], index: 2, kind: input, shape index: {}]
  %s3 = inlined_call_operand.vmem [shape: f32[1,128], index: 3, kind: input, shape index: {}]
  %s4 = inlined_call_operand.vmem [shape: f32[32,128], index: 4, kind: input, shape index: {}]
  %s5 = inlined_call_operand.vmem [shape: f32[32,128], index: 5, kind: output, shape index: {}]
  %s6 = sld [smem:[#allocation0]]
  $region38: #{_lambda_.20} parent=0
    _
  %s8 = ssub.s32 1, %s6
  %s9 = scalar_select 0, %s8, %s6
  // Predicated region
  $region2: #{_lambda_.20} parent=0 // pred_check
    _
  $region3: #{_lambda_.20} parent=0 // pred_check_branch
    %11 = sbr.rel (0) target = $region5
  $region4: #{_lambda_.20} parent=0 // pred_region
    _
  $region5: #{_lambda_.20} parent=0 // pred_fallthru
    _
  // Predicated region
  $region6: #{_lambda_.20} parent=0 // pred_check
    _
  $region7: #{_lambda_.20} parent=0 // pred_check_branch
    %13 = sbr.rel (0) target = $region9
  $region8: #{_lambda_.20} parent=0 // pred_region
    _
  $region9: #{_lambda_.20} parent=0 // pred_fallthru
    _
  // Predicated region
  $region10: #{_lambda_.20} parent=0 // pred_check
    _
  $region11: #{_lambda_.20} parent=0 // pred_check_branch
    %15 = sbr.rel (0) target = $region13
  $region12: #{_lambda_.20} parent=0 // pred_region
    _
  $region13: #{_lambda_.20} parent=0 // pred_fallthru
    _
  // Predicated region
  $region14: #{_lambda_.20} parent=0 // pred_check
    _
  $region15: #{_lambda_.20} parent=0 // pred_check_branch
    %17 = sbr.rel (0) target = $region17
  $region16: #{_lambda_.20} parent=0 // pred_region
    _
  $region17: #{_lambda_.20} parent=0 // pred_fallthru
    _
  // Predicated region
  $region18: #{_lambda_.20} parent=0 // pred_check
    _
  $region19: #{_lambda_.20} parent=0 // pred_check_branch
    %19 = sbr.rel (0) target = $region21
  $region20: #{_lambda_.20} parent=0 // pred_region
    _
  $region21: #{_lambda_.20} parent=0 // pred_fallthru
    _
  %p20 = scmp.eq.s32.totalorder 0, 0
  // Predicated region
  $region22: #{_lambda_.20} parent=0 // pred_check
    %p21 = pneg %p20
  $region23: #{_lambda_.20} parent=0 // pred_check_branch
    %23 = sbr.rel (%p21) target = $region25
  $region24: #{_lambda_.20} parent=0 // pred_region
    %24 = vst [vmem:[#allocation2] sm:$0xff] 0.0
    %25 = vst [vmem:[#allocation2 + $0x8] sm:$0xff] 0.0
    %26 = vst [vmem:[#allocation2 + $0x10] sm:$0xff] 0.0
    %27 = vst [vmem:[#allocation2 + $0x18] sm:$0xff] 0.0
  $region25: #{_lambda_.20} parent=0 // pred_fallthru
    _
  %v28 = vld [vmem:[#allocation2] sm:$0xff]
  %v29 = vld [vmem:[#allocation2 + $0x8] sm:$0xff]
  %v30 = vld [vmem:[#allocation2 + $0x10] sm:$0xff]
  %v31 = vld [vmem:[#allocation2 + $0x18] sm:$0xff]
  %v32 = vld [vmem:[%s0] sm:$0xff]
  %v33 = vld [vmem:[%s0 + $0x8] sm:$0xff]
  %v34 = vld [vmem:[%s0 + $0x10] sm:$0xff]
  %v35 = vld [vmem:[%s0 + $0x18] sm:$0xff]
  %v36 = vld [vmem:[%s0 + $0x20] sm:$0xff]
  %v37 = vld [vmem:[%s0 + $0x28] sm:$0xff]
  %v38 = vld [vmem:[%s0 + $0x30] sm:$0xff]
  %v39 = vld [vmem:[%s0 + $0x38] sm:$0xff]
  %v40 = vld [vmem:[%s0 + $0x40] sm:$0xff]
  %v41 = vld [vmem:[%s0 + $0x48] sm:$0xff]
  %v42 = vld [vmem:[%s0 + $0x50] sm:$0xff]
  %v43 = vld [vmem:[%s0 + $0x58] sm:$0xff]
  %v44 = vld [vmem:[%s0 + $0x60] sm:$0xff]
  %v45 = vld [vmem:[%s0 + $0x68] sm:$0xff]
  %v46 = vld [vmem:[%s0 + $0x70] sm:$0xff]
  %v47 = vld [vmem:[%s0 + $0x78] sm:$0xff]
  %v48 = vld [vmem:[%s0 + $0x80] sm:$0xff]
  %v49 = vld [vmem:[%s0 + $0x88] sm:$0xff]
  %v50 = vld [vmem:[%s0 + $0x90] sm:$0xff]
  %v51 = vld [vmem:[%s0 + $0x98] sm:$0xff]
  %v52 = vld [vmem:[%s0 + $0xa0] sm:$0xff]
  %v53 = vld [vmem:[%s0 + $0xa8] sm:$0xff]
  %v54 = vld [vmem:[%s0 + $0xb0] sm:$0xff]
  %v55 = vld [vmem:[%s0 + $0xb8] sm:$0xff]
  %v56 = vld [vmem:[%s0 + $0xc0] sm:$0xff]
  %v57 = vld [vmem:[%s0 + $0xc8] sm:$0xff]
  %v58 = vld [vmem:[%s0 + $0xd0] sm:$0xff]
  %v59 = vld [vmem:[%s0 + $0xd8] sm:$0xff]
  %v60 = vld [vmem:[%s0 + $0xe0] sm:$0xff]
  %v61 = vld [vmem:[%s0 + $0xe8] sm:$0xff]
  %v62 = vld [vmem:[%s0 + $0xf0] sm:$0xff]
  %v63 = vld [vmem:[%s0 + $0xf8] sm:$0xff]
  %v64 = vld [vmem:[%s0 + $0x100] sm:$0xff]
  %v65 = vld [vmem:[%s0 + $0x108] sm:$0xff]
  %v66 = vld [vmem:[%s0 + $0x110] sm:$0xff]
  %v67 = vld [vmem:[%s0 + $0x118] sm:$0xff]
  %v68 = vld [vmem:[%s1] sm:$0xff]
  %v69 = vld [vmem:[%s1 + $0x8] sm:$0xff]
  %v70 = vld [vmem:[%s1 + $0x10] sm:$0xff]
  %v71 = vld [vmem:[%s1 + $0x18] sm:$0xff]
  %v72 = vld [vmem:[%s1 + $0x20] sm:$0xff]
  %v73 = vld [vmem:[%s1 + $0x28] sm:$0xff]
  %v74 = vld [vmem:[%s1 + $0x30] sm:$0xff]
  %v75 = vld [vmem:[%s1 + $0x38] sm:$0xff]
  %v76 = vld [vmem:[%s1 + $0x40] sm:$0xff]
  %v77 = vld [vmem:[%s1 + $0x48] sm:$0xff]
  %v78 = vld [vmem:[%s1 + $0x50] sm:$0xff]
  %v79 = vld [vmem:[%s1 + $0x58] sm:$0xff]
  %v80 = vld [vmem:[%s1 + $0x60] sm:$0xff]
  %v81 = vld [vmem:[%s1 + $0x68] sm:$0xff]
  %v82 = vld [vmem:[%s1 + $0x70] sm:$0xff]
  %v83 = vld [vmem:[%s1 + $0x78] sm:$0xff]
  %v84 = vld [vmem:[%s1 + $0x80] sm:$0xff]
  %v85 = vld [vmem:[%s1 + $0x88] sm:$0xff]
  %v86 = vld [vmem:[%s1 + $0x90] sm:$0xff]
  %v87 = vld [vmem:[%s1 + $0x98] sm:$0xff]
  %v88 = vld [vmem:[%s1 + $0xa0] sm:$0xff]
  %v89 = vld [vmem:[%s1 + $0xa8] sm:$0xff]
  %v90 = vld [vmem:[%s1 + $0xb0] sm:$0xff]
  %v91 = vld [vmem:[%s1 + $0xb8] sm:$0xff]
  %v92 = vld [vmem:[%s1 + $0xc0] sm:$0xff]
  %v93 = vld [vmem:[%s1 + $0xc8] sm:$0xff]
  %v94 = vld [vmem:[%s1 + $0xd0] sm:$0xff]
  %v95 = vld [vmem:[%s1 + $0xd8] sm:$0xff]
  %v96 = vld [vmem:[%s1 + $0xe0] sm:$0xff]
  %v97 = vld [vmem:[%s1 + $0xe8] sm:$0xff]
  %v98 = vld [vmem:[%s1 + $0xf0] sm:$0xff]
  %v99 = vld [vmem:[%s1 + $0xf8] sm:$0xff]
  %v100 = vld [vmem:[%s1 + $0x100] sm:$0xff]
  %v101 = vld [vmem:[%s1 + $0x108] sm:$0xff]
  %v102 = vld [vmem:[%s1 + $0x110] sm:$0xff]
  %v103 = vld [vmem:[%s1 + $0x118] sm:$0xff]
  %v104 = vld [vmem:[%s1 + $0x120] sm:$0xff]
  %v105 = vld [vmem:[%s1 + $0x128] sm:$0xff]
  %v106 = vld [vmem:[%s1 + $0x130] sm:$0xff]
  %v107 = vld [vmem:[%s1 + $0x138] sm:$0xff]
  %v108 = vld [vmem:[%s1 + $0x140] sm:$0xff]
  %v109 = vld [vmem:[%s1 + $0x148] sm:$0xff]
  %v110 = vld [vmem:[%s1 + $0x150] sm:$0xff]
  %v111 = vld [vmem:[%s1 + $0x158] sm:$0xff]
  %v112 = vld [vmem:[%s1 + $0x160] sm:$0xff]
  %v113 = vld [vmem:[%s1 + $0x168] sm:$0xff]
  %v114 = vld [vmem:[%s1 + $0x170] sm:$0xff]
  %v115 = vld [vmem:[%s1 + $0x178] sm:$0xff]
  %v116 = vld [vmem:[%s1 + $0x180] sm:$0xff]
  %v117 = vld [vmem:[%s1 + $0x188] sm:$0xff]
  %v118 = vld [vmem:[%s1 + $0x190] sm:$0xff]
  %v119 = vld [vmem:[%s1 + $0x198] sm:$0xff]
  %v120 = vld [vmem:[%s1 + $0x1a0] sm:$0xff]
  %v121 = vld [vmem:[%s1 + $0x1a8] sm:$0xff]
  %v122 = vld [vmem:[%s1 + $0x1b0] sm:$0xff]
  %v123 = vld [vmem:[%s1 + $0x1b8] sm:$0xff]
  %v124 = vld [vmem:[%s1 + $0x1c0] sm:$0xff]
  %v125 = vld [vmem:[%s1 + $0x1c8] sm:$0xff]
  %v126 = vld [vmem:[%s1 + $0x1d0] sm:$0xff]
  %v127 = vld [vmem:[%s1 + $0x1d8] sm:$0xff]
  %v128 = vld [vmem:[%s1 + $0x1e0] sm:$0xff]
  %v129 = vld [vmem:[%s1 + $0x1e8] sm:$0xff]
  %v130 = vld [vmem:[%s1 + $0x1f0] sm:$0xff]
  %v131 = vld [vmem:[%s1 + $0x1f8] sm:$0xff]
  %v132 = vld [vmem:[%s1 + $0x200] sm:$0xff]
  %v133 = vld [vmem:[%s1 + $0x208] sm:$0xff]
  %v134 = vld [vmem:[%s1 + $0x210] sm:$0xff]
  %v135 = vld [vmem:[%s1 + $0x218] sm:$0xff]
  %v136 = vld [vmem:[%s1 + $0x220] sm:$0xff]
  %v137 = vld [vmem:[%s1 + $0x228] sm:$0xff]
  %v138 = vld [vmem:[%s1 + $0x230] sm:$0xff]
  %v139 = vld [vmem:[%s1 + $0x238] sm:$0xff]
  %v140 = vld [vmem:[%s1 + $0x240] sm:$0xff]
  %v141 = vld [vmem:[%s1 + $0x248] sm:$0xff]
  %v142 = vld [vmem:[%s1 + $0x250] sm:$0xff]
  %v143 = vld [vmem:[%s1 + $0x258] sm:$0xff]
  %v144 = vld [vmem:[%s1 + $0x260] sm:$0xff]
  %v145 = vld [vmem:[%s1 + $0x268] sm:$0xff]
  %v146 = vld [vmem:[%s1 + $0x270] sm:$0xff]
  %v147 = vld [vmem:[%s1 + $0x278] sm:$0xff]
  %v148 = vld [vmem:[%s1 + $0x280] sm:$0xff]
  %v149 = vld [vmem:[%s1 + $0x288] sm:$0xff]
  %v150 = vld [vmem:[%s1 + $0x290] sm:$0xff]
  %v151 = vld [vmem:[%s1 + $0x298] sm:$0xff]
  %v152 = vld [vmem:[%s1 + $0x2a0] sm:$0xff]
  %v153 = vld [vmem:[%s1 + $0x2a8] sm:$0xff]
  %v154 = vld [vmem:[%s1 + $0x2b0] sm:$0xff]
  %v155 = vld [vmem:[%s1 + $0x2b8] sm:$0xff]
  %v156 = vld [vmem:[%s1 + $0x2c0] sm:$0xff]
  %v157 = vld [vmem:[%s1 + $0x2c8] sm:$0xff]
  %v158 = vld [vmem:[%s1 + $0x2d0] sm:$0xff]
  %v159 = vld [vmem:[%s1 + $0x2d8] sm:$0xff]
  %v160 = vld [vmem:[%s1 + $0x2e0] sm:$0xff]
  %v161 = vld [vmem:[%s1 + $0x2e8] sm:$0xff]
  %v162 = vld [vmem:[%s1 + $0x2f0] sm:$0xff]
  %v163 = vld [vmem:[%s1 + $0x2f8] sm:$0xff]
  %v164 = vld [vmem:[%s1 + $0x300] sm:$0xff]
  %v165 = vld [vmem:[%s1 + $0x308] sm:$0xff]
  %v166 = vld [vmem:[%s1 + $0x310] sm:$0xff]
  %v167 = vld [vmem:[%s1 + $0x318] sm:$0xff]
  %v168 = vld [vmem:[%s1 + $0x320] sm:$0xff]
  %v169 = vld [vmem:[%s1 + $0x328] sm:$0xff]
  %v170 = vld [vmem:[%s1 + $0x330] sm:$0xff]
  %v171 = vld [vmem:[%s1 + $0x338] sm:$0xff]
  %v172 = vld [vmem:[%s1 + $0x340] sm:$0xff]
  %v173 = vld [vmem:[%s1 + $0x348] sm:$0xff]
  %v174 = vld [vmem:[%s1 + $0x350] sm:$0xff]
  %v175 = vld [vmem:[%s1 + $0x358] sm:$0xff]
  %v176 = vld [vmem:[%s1 + $0x360] sm:$0xff]
  %v177 = vld [vmem:[%s1 + $0x368] sm:$0xff]
  %v178 = vld [vmem:[%s1 + $0x370] sm:$0xff]
  %v179 = vld [vmem:[%s1 + $0x378] sm:$0xff]
  %v180 = vld [vmem:[%s1 + $0x380] sm:$0xff]
  %v181 = vld [vmem:[%s1 + $0x388] sm:$0xff]
  %v182 = vld [vmem:[%s1 + $0x390] sm:$0xff]
  %v183 = vld [vmem:[%s1 + $0x398] sm:$0xff]
  %v184 = vld [vmem:[%s1 + $0x3a0] sm:$0xff]
  %v185 = vld [vmem:[%s1 + $0x3a8] sm:$0xff]
  %v186 = vld [vmem:[%s1 + $0x3b0] sm:$0xff]
  %v187 = vld [vmem:[%s1 + $0x3b8] sm:$0xff]
  %v188 = vld [vmem:[%s1 + $0x3c0] sm:$0xff]
  %v189 = vld [vmem:[%s1 + $0x3c8] sm:$0xff]
  %v190 = vld [vmem:[%s1 + $0x3d0] sm:$0xff]
  %v191 = vld [vmem:[%s1 + $0x3d8] sm:$0xff]
  %v192 = vld [vmem:[%s1 + $0x3e0] sm:$0xff]
  %v193 = vld [vmem:[%s1 + $0x3e8] sm:$0xff]
  %v194 = vld [vmem:[%s1 + $0x3f0] sm:$0xff]
  %v195 = vld [vmem:[%s1 + $0x3f8] sm:$0xff]
  %v196 = vld [vmem:[%s1 + $0x400] sm:$0xff]
  %v197 = vld [vmem:[%s1 + $0x408] sm:$0xff]
  %v198 = vld [vmem:[%s1 + $0x410] sm:$0xff]
  %v199 = vld [vmem:[%s1 + $0x418] sm:$0xff]
  %v200 = vld [vmem:[%s1 + $0x420] sm:$0xff]
  %v201 = vld [vmem:[%s1 + $0x428] sm:$0xff]
  %v202 = vld [vmem:[%s1 + $0x430] sm:$0xff]
  %v203 = vld [vmem:[%s1 + $0x438] sm:$0xff]
  %v204 = vld [vmem:[%s1 + $0x440] sm:$0xff]
  %v205 = vld [vmem:[%s1 + $0x448] sm:$0xff]
  %v206 = vld [vmem:[%s1 + $0x450] sm:$0xff]
  %v207 = vld [vmem:[%s1 + $0x458] sm:$0xff]
  %v208 = vld [vmem:[%s1 + $0x460] sm:$0xff]
  %v209 = vld [vmem:[%s1 + $0x468] sm:$0xff]
  %v210 = vld [vmem:[%s1 + $0x470] sm:$0xff]
  %v211 = vld [vmem:[%s1 + $0x478] sm:$0xff]
  %212 = vmatprep.subr.mxu0 0.0
  %213 = vmatpush1.msra.mxu0 %v83
  %214 = vmatprep.subr.mxu0 0.0
  %215 = vmatpush1.msra.mxu0 %v82
  %216 = vmatprep.subr.mxu0 0.0
  %217 = vmatpush1.msra.mxu0 %v81
  %218 = vmatprep.subr.mxu0 0.0
  %219 = vmatpush1.msra.mxu0 %v80
  %220 = vmatprep.subr.mxu0 0.0
  %221 = vmatpush1.msra.mxu0 %v79
  %222 = vmatprep.subr.mxu0 0.0
  %223 = vmatpush1.msra.mxu0 %v78
  %224 = vmatprep.subr.mxu0 0.0
  %225 = vmatpush1.msra.mxu0 %v77
  %226 = vmatprep.subr.mxu0 0.0
  %227 = vmatpush1.msra.mxu0 %v76
  %228 = vmatprep.subr.mxu0 0.0
  %229 = vmatpush1.msra.mxu0 %v75
  %230 = vmatprep.subr.mxu0 0.0
  %231 = vmatpush1.msra.mxu0 %v74
  %232 = vmatprep.subr.mxu0 0.0
  %233 = vmatpush1.msra.mxu0 %v73
  %234 = vmatprep.subr.mxu0 0.0
  %235 = vmatpush1.msra.mxu0 %v72
  %236 = vmatprep.subr.mxu0 0.0
  %237 = vmatpush1.msra.mxu0 %v71
  %238 = vmatprep.subr.mxu0 0.0
  %239 = vmatpush1.msra.mxu0 %v70
  %240 = vmatprep.subr.mxu0 0.0
  %241 = vmatpush1.msra.mxu0 %v69
  %242 = vmatprep.subr.mxu0 0.0
  %243 = vmatpush1.msra.mxu0 %v68
  %244 = vmatprep.subr.mxu0 0.0
  %245 = vmatpush2.msra.mxu0 %v99
  %246 = vmatprep.subr.mxu0 0.0
  %247 = vmatpush2.msra.mxu0 %v98
  %248 = vmatprep.subr.mxu0 0.0
  %249 = vmatpush2.msra.mxu0 %v97
  %250 = vmatprep.subr.mxu0 0.0
  %251 = vmatpush2.msra.mxu0 %v96
  %252 = vmatprep.subr.mxu0 0.0
  %253 = vmatpush2.msra.mxu0 %v95
  %254 = vmatprep.subr.mxu0 0.0
  %255 = vmatpush2.msra.mxu0 %v94
  %256 = vmatprep.subr.mxu0 0.0
  %257 = vmatpush2.msra.mxu0 %v93
  %258 = vmatprep.subr.mxu0 0.0
  %259 = vmatpush2.msra.mxu0 %v92
  %260 = vmatprep.subr.mxu0 0.0
  %261 = vmatpush2.msra.mxu0 %v91
  %262 = vmatprep.subr.mxu0 0.0
  %263 = vmatpush2.msra.mxu0 %v90
  %264 = vmatprep.subr.mxu0 0.0
  %265 = vmatpush2.msra.mxu0 %v89
  %266 = vmatprep.subr.mxu0 0.0
  %267 = vmatpush2.msra.mxu0 %v88
  %268 = vmatprep.subr.mxu0 0.0
  %269 = vmatpush2.msra.mxu0 %v87
  %270 = vmatprep.subr.mxu0 0.0
  %271 = vmatpush2.msra.mxu0 %v86
  %272 = vmatprep.subr.mxu0 0.0
  %273 = vmatpush2.msra.mxu0 %v85
  %274 = vmatprep.subr.mxu0 0.0
  %275 = vmatpush2.msra.mxu0 %v84
  %276 = vmatprep.mubr.f32.mxu0 %v33
  %277 = vmatmul.mubr.f32.gmra.mxu0 %v32
  %v278 = vpop.f32.mrf.mxu0
  %v279 = vadd.f32 0.0, %v278
  %v280 = vpop.f32.mrf.mxu0
  %281 = vmatprep.mubr.f32.mxu0 %v42
  %282 = vmatmul.mubr.f32.gmra.mxu0 %v41
  %v283 = vpop.f32.mrf.mxu0
  %v284 = vadd.f32 0.0, %v283
  %v285 = vpop.f32.mrf.mxu0
  %286 = vmatprep.mubr.f32.mxu0 %v51
  %287 = vmatmul.mubr.f32.gmra.mxu0 %v50
  %v288 = vpop.f32.mrf.mxu0
  %v289 = vadd.f32 0.0, %v288
  %v290 = vpop.f32.mrf.mxu0
  %291 = vmatprep.mubr.f32.mxu0 %v60
  %292 = vmatmul.mubr.f32.gmra.mxu0 %v59
  %v293 = vpop.f32.mrf.mxu0
  %v294 = vadd.f32 0.0, %v293
  %v295 = vpop.f32.mrf.mxu0
  %296 = vdwg.mxu0
  %297 = vmatprep.subr.mxu0 0.0
  %298 = vmatpush1.msra.mxu0 %v115
  %299 = vmatprep.subr.mxu0 0.0
  %300 = vmatpush1.msra.mxu0 %v114
  %301 = vmatprep.subr.mxu0 0.0
  %302 = vmatpush1.msra.mxu0 %v113
  %303 = vmatprep.subr.mxu0 0.0
  %304 = vmatpush1.msra.mxu0 %v112
  %305 = vmatprep.subr.mxu0 0.0
  %306 = vmatpush1.msra.mxu0 %v111
  %307 = vmatprep.subr.mxu0 0.0
  %308 = vmatpush1.msra.mxu0 %v110
  %309 = vmatprep.subr.mxu0 0.0
  %310 = vmatpush1.msra.mxu0 %v109
  %311 = vmatprep.subr.mxu0 0.0
  %312 = vmatpush1.msra.mxu0 %v108
  %313 = vmatprep.subr.mxu0 0.0
  %314 = vmatpush1.msra.mxu0 %v107
  %315 = vmatprep.subr.mxu0 0.0
  %316 = vmatpush1.msra.mxu0 %v106
  %317 = vmatprep.subr.mxu0 0.0
  %318 = vmatpush1.msra.mxu0 %v105
  %319 = vmatprep.subr.mxu0 0.0
  %320 = vmatpush1.msra.mxu0 %v104
  %321 = vmatprep.subr.mxu0 0.0
  %322 = vmatpush1.msra.mxu0 %v103
  %323 = vmatprep.subr.mxu0 0.0
  %324 = vmatpush1.msra.mxu0 %v102
  %325 = vmatprep.subr.mxu0 0.0
  %326 = vmatpush1.msra.mxu0 %v101
  %327 = vmatprep.subr.mxu0 0.0
  %328 = vmatpush1.msra.mxu0 %v100
  %329 = vmatprep.subr.mxu0 0.0
  %330 = vmatpush2.msra.mxu0 %v131
  %331 = vmatprep.subr.mxu0 0.0
  %332 = vmatpush2.msra.mxu0 %v130
  %333 = vmatprep.subr.mxu0 0.0
  %334 = vmatpush2.msra.mxu0 %v129
  %335 = vmatprep.subr.mxu0 0.0
  %336 = vmatpush2.msra.mxu0 %v128
  %337 = vmatprep.subr.mxu0 0.0
  %338 = vmatpush2.msra.mxu0 %v127
  %339 = vmatprep.subr.mxu0 0.0
  %340 = vmatpush2.msra.mxu0 %v126
  %341 = vmatprep.subr.mxu0 0.0
  %342 = vmatpush2.msra.mxu0 %v125
  %343 = vmatprep.subr.mxu0 0.0
  %344 = vmatpush2.msra.mxu0 %v124
  %345 = vmatprep.subr.mxu0 0.0
  %346 = vmatpush2.msra.mxu0 %v123
  %347 = vmatprep.subr.mxu0 0.0
  %348 = vmatpush2.msra.mxu0 %v122
  %349 = vmatprep.subr.mxu0 0.0
  %350 = vmatpush2.msra.mxu0 %v121
  %351 = vmatprep.subr.mxu0 0.0
  %352 = vmatpush2.msra.mxu0 %v120
  %353 = vmatprep.subr.mxu0 0.0
  %354 = vmatpush2.msra.mxu0 %v119
  %355 = vmatprep.subr.mxu0 0.0
  %356 = vmatpush2.msra.mxu0 %v118
  %357 = vmatprep.subr.mxu0 0.0
  %358 = vmatpush2.msra.mxu0 %v117
  %359 = vmatprep.subr.mxu0 0.0
  %360 = vmatpush2.msra.mxu0 %v116
  %361 = vmatprep.mubr.f32.mxu0 %v35
  %362 = vmatmul.mubr.f32.gmra.mxu0 %v34
  %v363 = vpop.f32.mrf.mxu0
  %v364 = vadd.f32 %v279, %v363
  %v365 = vpop.f32.mrf.mxu0
  %366 = vmatprep.mubr.f32.mxu0 %v44
  %367 = vmatmul.mubr.f32.gmra.mxu0 %v43
  %v368 = vpop.f32.mrf.mxu0
  %v369 = vadd.f32 %v284, %v368
  %v370 = vpop.f32.mrf.mxu0
  %371 = vmatprep.mubr.f32.mxu0 %v53
  %372 = vmatmul.mubr.f32.gmra.mxu0 %v52
  %v373 = vpop.f32.mrf.mxu0
  %v374 = vadd.f32 %v289, %v373
  %v375 = vpop.f32.mrf.mxu0
  %376 = vmatprep.mubr.f32.mxu0 %v62
  %377 = vmatmul.mubr.f32.gmra.mxu0 %v61
  %v378 = vpop.f32.mrf.mxu0
  %v379 = vadd.f32 %v294, %v378
  %v380 = vpop.f32.mrf.mxu0
  %381 = vdwg.mxu0
  %382 = vmatprep.subr.mxu0 0.0
  %383 = vmatpush1.msra.mxu0 %v147
  %384 = vmatprep.subr.mxu0 0.0
  %385 = vmatpush1.msra.mxu0 %v146
  %386 = vmatprep.subr.mxu0 0.0
  %387 = vmatpush1.msra.mxu0 %v145
  %388 = vmatprep.subr.mxu0 0.0
  %389 = vmatpush1.msra.mxu0 %v144
  %390 = vmatprep.subr.mxu0 0.0
  %391 = vmatpush1.msra.mxu0 %v143
  %392 = vmatprep.subr.mxu0 0.0
  %393 = vmatpush1.msra.mxu0 %v142
  %394 = vmatprep.subr.mxu0 0.0
  %395 = vmatpush1.msra.mxu0 %v141
  %396 = vmatprep.subr.mxu0 0.0
  %397 = vmatpush1.msra.mxu0 %v140
  %398 = vmatprep.subr.mxu0 0.0
  %399 = vmatpush1.msra.mxu0 %v139
  %400 = vmatprep.subr.mxu0 0.0
  %401 = vmatpush1.msra.mxu0 %v138
  %402 = vmatprep.subr.mxu0 0.0
  %403 = vmatpush1.msra.mxu0 %v137
  %404 = vmatprep.subr.mxu0 0.0
  %405 = vmatpush1.msra.mxu0 %v136
  %406 = vmatprep.subr.mxu0 0.0
  %407 = vmatpush1.msra.mxu0 %v135
  %408 = vmatprep.subr.mxu0 0.0
  %409 = vmatpush1.msra.mxu0 %v134
  %410 = vmatprep.subr.mxu0 0.0
  %411 = vmatpush1.msra.mxu0 %v133
  %412 = vmatprep.subr.mxu0 0.0
  %413 = vmatpush1.msra.mxu0 %v132
  %414 = vmatprep.subr.mxu0 0.0
  %415 = vmatpush2.msra.mxu0 %v163
  %416 = vmatprep.subr.mxu0 0.0
  %417 = vmatpush2.msra.mxu0 %v162
  %418 = vmatprep.subr.mxu0 0.0
  %419 = vmatpush2.msra.mxu0 %v161
  %420 = vmatprep.subr.mxu0 0.0
  %421 = vmatpush2.msra.mxu0 %v160
  %422 = vmatprep.subr.mxu0 0.0
  %423 = vmatpush2.msra.mxu0 %v159
  %424 = vmatprep.subr.mxu0 0.0
  %425 = vmatpush2.msra.mxu0 %v158
  %426 = vmatprep.subr.mxu0 0.0
  %427 = vmatpush2.msra.mxu0 %v157
  %428 = vmatprep.subr.mxu0 0.0
  %429 = vmatpush2.msra.mxu0 %v156
  %430 = vmatprep.subr.mxu0 0.0
  %431 = vmatpush2.msra.mxu0 %v155
  %432 = vmatprep.subr.mxu0 0.0
  %433 = vmatpush2.msra.mxu0 %v154
  %434 = vmatprep.subr.mxu0 0.0
  %435 = vmatpush2.msra.mxu0 %v153
  %436 = vmatprep.subr.mxu0 0.0
  %437 = vmatpush2.msra.mxu0 %v152
  %438 = vmatprep.subr.mxu0 0.0
  %439 = vmatpush2.msra.mxu0 %v151
  %440 = vmatprep.subr.mxu0 0.0
  %441 = vmatpush2.msra.mxu0 %v150
  %442 = vmatprep.subr.mxu0 0.0
  %443 = vmatpush2.msra.mxu0 %v149
  %444 = vmatprep.subr.mxu0 0.0
  %445 = vmatpush2.msra.mxu0 %v148
  %446 = vmatprep.mubr.f32.mxu0 %v37
  %447 = vmatmul.mubr.f32.gmra.mxu0 %v36
  %v448 = vpop.f32.mrf.mxu0
  %v449 = vadd.f32 %v364, %v448
  %v450 = vpop.f32.mrf.mxu0
  %451 = vmatprep.mubr.f32.mxu0 %v46
  %452 = vmatmul.mubr.f32.gmra.mxu0 %v45
  %v453 = vpop.f32.mrf.mxu0
  %v454 = vadd.f32 %v369, %v453
  %v455 = vpop.f32.mrf.mxu0
  %456 = vmatprep.mubr.f32.mxu0 %v55
  %457 = vmatmul.mubr.f32.gmra.mxu0 %v54
  %v458 = vpop.f32.mrf.mxu0
  %v459 = vadd.f32 %v374, %v458
  %v460 = vpop.f32.mrf.mxu0
  %461 = vmatprep.mubr.f32.mxu0 %v64
  %462 = vmatmul.mubr.f32.gmra.mxu0 %v63
  %v463 = vpop.f32.mrf.mxu0
  %v464 = vadd.f32 %v379, %v463
  %v465 = vpop.f32.mrf.mxu0
  %466 = vdwg.mxu0
  %467 = vmatprep.subr.mxu0 0.0
  %468 = vmatpush1.msra.mxu0 %v179
  %469 = vmatprep.subr.mxu0 0.0
  %470 = vmatpush1.msra.mxu0 %v178
  %471 = vmatprep.subr.mxu0 0.0
  %472 = vmatpush1.msra.mxu0 %v177
  %473 = vmatprep.subr.mxu0 0.0
  %474 = vmatpush1.msra.mxu0 %v176
  %475 = vmatprep.subr.mxu0 0.0
  %476 = vmatpush1.msra.mxu0 %v175
  %477 = vmatprep.subr.mxu0 0.0
  %478 = vmatpush1.msra.mxu0 %v174
  %479 = vmatprep.subr.mxu0 0.0
  %480 = vmatpush1.msra.mxu0 %v173
  %481 = vmatprep.subr.mxu0 0.0
  %482 = vmatpush1.msra.mxu0 %v172
  %483 = vmatprep.subr.mxu0 0.0
  %484 = vmatpush1.msra.mxu0 %v171
  %485 = vmatprep.subr.mxu0 0.0
  %486 = vmatpush1.msra.mxu0 %v170
  %487 = vmatprep.subr.mxu0 0.0
  %488 = vmatpush1.msra.mxu0 %v169
  %489 = vmatprep.subr.mxu0 0.0
  %490 = vmatpush1.msra.mxu0 %v168
  %491 = vmatprep.subr.mxu0 0.0
  %492 = vmatpush1.msra.mxu0 %v167
  %493 = vmatprep.subr.mxu0 0.0
  %494 = vmatpush1.msra.mxu0 %v166
  %495 = vmatprep.subr.mxu0 0.0
  %496 = vmatpush1.msra.mxu0 %v165
  %497 = vmatprep.subr.mxu0 0.0
  %498 = vmatpush1.msra.mxu0 %v164
  %499 = vmatprep.subr.mxu0 0.0
  %500 = vmatpush2.msra.mxu0 %v195
  %501 = vmatprep.subr.mxu0 0.0
  %502 = vmatpush2.msra.mxu0 %v194
  %503 = vmatprep.subr.mxu0 0.0
  %504 = vmatpush2.msra.mxu0 %v193
  %505 = vmatprep.subr.mxu0 0.0
  %506 = vmatpush2.msra.mxu0 %v192
  %507 = vmatprep.subr.mxu0 0.0
  %508 = vmatpush2.msra.mxu0 %v191
  %509 = vmatprep.subr.mxu0 0.0
  %510 = vmatpush2.msra.mxu0 %v190
  %511 = vmatprep.subr.mxu0 0.0
  %512 = vmatpush2.msra.mxu0 %v189
  %513 = vmatprep.subr.mxu0 0.0
  %514 = vmatpush2.msra.mxu0 %v188
  %515 = vmatprep.subr.mxu0 0.0
  %516 = vmatpush2.msra.mxu0 %v187
  %517 = vmatprep.subr.mxu0 0.0
  %518 = vmatpush2.msra.mxu0 %v186
  %519 = vmatprep.subr.mxu0 0.0
  %520 = vmatpush2.msra.mxu0 %v185
  %521 = vmatprep.subr.mxu0 0.0
  %522 = vmatpush2.msra.mxu0 %v184
  %523 = vmatprep.subr.mxu0 0.0
  %524 = vmatpush2.msra.mxu0 %v183
  %525 = vmatprep.subr.mxu0 0.0
  %526 = vmatpush2.msra.mxu0 %v182
  %527 = vmatprep.subr.mxu0 0.0
  %528 = vmatpush2.msra.mxu0 %v181
  %529 = vmatprep.subr.mxu0 0.0
  %530 = vmatpush2.msra.mxu0 %v180
  %531 = vmatprep.mubr.f32.mxu0 %v39
  %532 = vmatmul.mubr.f32.gmra.mxu0 %v38
  %v533 = vpop.f32.mrf.mxu0
  %v534 = vadd.f32 %v449, %v533
  %v535 = vpop.f32.mrf.mxu0
  %536 = vmatprep.mubr.f32.mxu0 %v48
  %537 = vmatmul.mubr.f32.gmra.mxu0 %v47
  %v538 = vpop.f32.mrf.mxu0
  %v539 = vadd.f32 %v454, %v538
  %v540 = vpop.f32.mrf.mxu0
  %541 = vmatprep.mubr.f32.mxu0 %v57
  %542 = vmatmul.mubr.f32.gmra.mxu0 %v56
  %v543 = vpop.f32.mrf.mxu0
  %v544 = vadd.f32 %v459, %v543
  %v545 = vpop.f32.mrf.mxu0
  %546 = vmatprep.mubr.f32.mxu0 %v66
  %547 = vmatmul.mubr.f32.gmra.mxu0 %v65
  %v548 = vpop.f32.mrf.mxu0
  %v549 = vadd.f32 %v464, %v548
  %v550 = vpop.f32.mrf.mxu0
  %551 = vdwg.mxu0
  %552 = vmatprep.subr.mxu0 0.0
  %553 = vmatpush1.msra.mxu0 %v211
  %554 = vmatprep.subr.mxu0 0.0
  %555 = vmatpush1.msra.mxu0 %v210
  %556 = vmatprep.subr.mxu0 0.0
  %557 = vmatpush1.msra.mxu0 %v209
  %558 = vmatprep.subr.mxu0 0.0
  %559 = vmatpush1.msra.mxu0 %v208
  %560 = vmatprep.subr.mxu0 0.0
  %561 = vmatpush1.msra.mxu0 %v207
  %562 = vmatprep.subr.mxu0 0.0
  %563 = vmatpush1.msra.mxu0 %v206
  %564 = vmatprep.subr.mxu0 0.0
  %565 = vmatpush1.msra.mxu0 %v205
  %566 = vmatprep.subr.mxu0 0.0
  %567 = vmatpush1.msra.mxu0 %v204
  %568 = vmatprep.subr.mxu0 0.0
  %569 = vmatpush1.msra.mxu0 %v203
  %570 = vmatprep.subr.mxu0 0.0
  %571 = vmatpush1.msra.mxu0 %v202
  %572 = vmatprep.subr.mxu0 0.0
  %573 = vmatpush1.msra.mxu0 %v201
  %574 = vmatprep.subr.mxu0 0.0
  %575 = vmatpush1.msra.mxu0 %v200
  %576 = vmatprep.subr.mxu0 0.0
  %577 = vmatpush1.msra.mxu0 %v199
  %578 = vmatprep.subr.mxu0 0.0
  %579 = vmatpush1.msra.mxu0 %v198
  %580 = vmatprep.subr.mxu0 0.0
  %581 = vmatpush1.msra.mxu0 %v197
  %582 = vmatprep.subr.mxu0 0.0
  %583 = vmatpush1.msra.mxu0 %v196
  %584 = vmatprep.subr.mxu0 0.0
  %585 = vmatpush2.msra.mxu0 0.0
  %586 = vmatprep.subr.mxu0 0.0
  %587 = vmatpush2.msra.mxu0 0.0
  %588 = vmatprep.subr.mxu0 0.0
  %589 = vmatpush2.msra.mxu0 0.0
  %590 = vmatprep.subr.mxu0 0.0
  %591 = vmatpush2.msra.mxu0 0.0
  %592 = vmatprep.subr.mxu0 0.0
  %593 = vmatpush2.msra.mxu0 0.0
  %594 = vmatprep.subr.mxu0 0.0
  %595 = vmatpush2.msra.mxu0 0.0
  %596 = vmatprep.subr.mxu0 0.0
  %597 = vmatpush2.msra.mxu0 0.0
  %598 = vmatprep.subr.mxu0 0.0
  %599 = vmatpush2.msra.mxu0 0.0
  %600 = vmatprep.subr.mxu0 0.0
  %601 = vmatpush2.msra.mxu0 0.0
  %602 = vmatprep.subr.mxu0 0.0
  %603 = vmatpush2.msra.mxu0 0.0
  %604 = vmatprep.subr.mxu0 0.0
  %605 = vmatpush2.msra.mxu0 0.0
  %606 = vmatprep.subr.mxu0 0.0
  %607 = vmatpush2.msra.mxu0 0.0
  %608 = vmatprep.subr.mxu0 0.0
  %609 = vmatpush2.msra.mxu0 0.0
  %610 = vmatprep.subr.mxu0 0.0
  %611 = vmatpush2.msra.mxu0 0.0
  %612 = vmatprep.subr.mxu0 0.0
  %613 = vmatpush2.msra.mxu0 0.0
  %614 = vmatprep.subr.mxu0 0.0
  %615 = vmatpush2.msra.mxu0 0.0
  %616 = vmatprep.mubr.f32.mxu0 0.0
  %617 = vmatmul.mubr.f32.gmra.mxu0 %v40
  %v618 = vpop.f32.mrf.mxu0
  %v619 = vadd.f32 %v534, %v618
  %v620 = vpop.f32.mrf.mxu0
  %621 = vmatprep.mubr.f32.mxu0 0.0
  %622 = vmatmul.mubr.f32.gmra.mxu0 %v49
  %v623 = vpop.f32.mrf.mxu0
  %v624 = vadd.f32 %v539, %v623
  %v625 = vpop.f32.mrf.mxu0
  %626 = vmatprep.mubr.f32.mxu0 0.0
  %627 = vmatmul.mubr.f32.gmra.mxu0 %v58
  %v628 = vpop.f32.mrf.mxu0
  %v629 = vadd.f32 %v544, %v628
  %v630 = vpop.f32.mrf.mxu0
  %631 = vmatprep.mubr.f32.mxu0 0.0
  %632 = vmatmul.mubr.f32.gmra.mxu0 %v67
  %v633 = vpop.f32.mrf.mxu0
  %v634 = vadd.f32 %v549, %v633
  %v635 = vpop.f32.mrf.mxu0
  %636 = vdwg.mxu0
  %v637 = vadd.f32 %v28, %v619
  %v638 = vadd.f32 %v29, %v624
  %v639 = vadd.f32 %v30, %v629
  %v640 = vadd.f32 %v31, %v634
  %641 = vst [vmem:[#allocation2] sm:$0xff] %v637
  %642 = vst [vmem:[#allocation2 + $0x8] sm:$0xff] %v638
  %643 = vst [vmem:[#allocation2 + $0x10] sm:$0xff] %v639
  %644 = vst [vmem:[#allocation2 + $0x18] sm:$0xff] %v640
  // Predicated region
  $region26: #{_lambda_.20} parent=0 // pred_check
    %p645 = pneg %p20
  $region27: #{_lambda_.20} parent=0 // pred_check_branch
    %647 = sbr.rel (%p645) target = $region29
  $region28: #{_lambda_.20} parent=0 // pred_region
    %v648 = vld [vmem:[#allocation2] sm:$0xff]
    %v649 = vld [vmem:[#allocation2 + $0x8] sm:$0xff]
    %v650 = vld [vmem:[#allocation2 + $0x10] sm:$0xff]
    %v651 = vld [vmem:[#allocation2 + $0x18] sm:$0xff]
    %v652 = vld [vmem:[%s2] sm:$0x1]
    %v654 = vlaneseq
    %v655 = vshrl.u32 %v654, 7
    %v656 = vsub.s32 0, %v655
    %v657 = vrot.slane %v652, %v656
    %v659 = vmul.f32 %v648, %v657
    %v660 = vmul.f32 %v649, %v657
    %v661 = vmul.f32 %v650, %v657
    %v662 = vmul.f32 %v651, %v657
    %v663 = vld [vmem:[%s3] sm:$0x1]
    %v665 = vlaneseq
    %v666 = vshrl.u32 %v665, 7
    %v667 = vsub.s32 0, %v666
    %v668 = vrot.slane %v663, %v667
    %v670 = vadd.f32 %v659, %v668
    %v671 = vadd.f32 %v660, %v668
    %v672 = vadd.f32 %v661, %v668
    %v673 = vadd.f32 %v662, %v668
    %v674 = vld [vmem:[%s4] sm:$0xff]
    %v675 = vld [vmem:[%s4 + $0x8] sm:$0xff]
    %v676 = vld [vmem:[%s4 + $0x10] sm:$0xff]
    %v677 = vld [vmem:[%s4 + $0x18] sm:$0xff]
    %v678 = vadd.f32 %v670, %v674
    %v679 = vadd.f32 %v671, %v675
    %v680 = vadd.f32 %v672, %v676
    %v681 = vadd.f32 %v673, %v677
    %v682 = vmax.f32 %v678, 0.0
    %v683 = vmax.f32 %v679, 0.0
    %v684 = vmax.f32 %v680, 0.0
    %v685 = vmax.f32 %v681, 0.0
    %686 = vst [vmem:[%s5] sm:$0xff] %v682
    %687 = vst [vmem:[%s5 + $0x8] sm:$0xff] %v683
    %688 = vst [vmem:[%s5 + $0x10] sm:$0xff] %v684
    %689 = vst [vmem:[%s5 + $0x18] sm:$0xff] %v685
  $region29: #{_lambda_.20} parent=0 // pred_fallthru
    _
  // Predicated region
  $region30: #{_lambda_.20} parent=0 // pred_check
    _
  $region31: #{_lambda_.20} parent=0 // pred_check_branch
    %691 = sbr.rel (0) target = $region33
  $region32: #{_lambda_.20} parent=0 // pred_region
    _
  $region33: #{_lambda_.20} parent=0 // pred_fallthru
    _
  // Predicated region
  $region34: #{_lambda_.20} parent=0 // pred_check
    _
  $region35: #{_lambda_.20} parent=0 // pred_check_branch
    %693 = sbr.rel (0) target = $region37
  $region36: #{_lambda_.20} parent=0 // pred_region
    _
  $region37: #{_lambda_.20} parent=0 // pred_fallthru
    _

// kernel: _lambda_.21
$region0: #{_lambda_.21}
  #allocation0 [shape = 'u32[]', space=smem, size = 0x4, offset = 0x4, fixed_abs, tag = 'smem constant byte address 0x4 - core index']
  #allocation1 [shape = 'u32[144,128]{1,0:T(1,128)}', space=vmem, size = 0x12000, scoped, tag = 'internal scratch']
  #allocation2 [shape = 'f32[8,256]{1,0:T(8,128)}', space=vmem, size = 0x2000, scoped, tag = 'scratch operand']
  %s0 = inlined_call_operand.vmem [shape: f32[8,1152], index: 0, kind: input, shape index: {}]
  %s1 = inlined_call_operand.vmem [shape: f32[1152,256], index: 1, kind: input, shape index: {}]
  %s2 = inlined_call_operand.vmem [shape: f32[1,256], index: 2, kind: input, shape index: {}]
  %s3 = inlined_call_operand.vmem [shape: f32[1,256], index: 3, kind: input, shape index: {}]
  %s4 = inlined_call_operand.vmem [shape: f32[8,256], index: 4, kind: output, shape index: {}]
  %s5 = sld [smem:[#allocation0]]
  $region34: #{_lambda_.21} parent=0
    _
  %s7 = ssub.s32 1, %s5
  %s8 = scalar_select 0, %s7, %s5
  // Predicated region
  $region2: #{_lambda_.21} parent=0 // pred_check
    _
  $region3: #{_lambda_.21} parent=0 // pred_check_branch
    %10 = sbr.rel (0) target = $region5
  $region4: #{_lambda_.21} parent=0 // pred_region
    _
  $region5: #{_lambda_.21} parent=0 // pred_fallthru
    _
  // Predicated region
  $region6: #{_lambda_.21} parent=0 // pred_check
    _
  $region7: #{_lambda_.21} parent=0 // pred_check_branch
    %12 = sbr.rel (0) target = $region9
  $region8: #{_lambda_.21} parent=0 // pred_region
    _
  $region9: #{_lambda_.21} parent=0 // pred_fallthru
    _
  // Predicated region
  $region10: #{_lambda_.21} parent=0 // pred_check
    _
  $region11: #{_lambda_.21} parent=0 // pred_check_branch
    %14 = sbr.rel (0) target = $region13
  $region12: #{_lambda_.21} parent=0 // pred_region
    _
  $region13: #{_lambda_.21} parent=0 // pred_fallthru
    _
  // Predicated region
  $region14: #{_lambda_.21} parent=0 // pred_check
    _
  $region15: #{_lambda_.21} parent=0 // pred_check_branch
    %16 = sbr.rel (0) target = $region17
  $region16: #{_lambda_.21} parent=0 // pred_region
    _
  $region17: #{_lambda_.21} parent=0 // pred_fallthru
    _
  %p17 = scmp.eq.s32.totalorder 0, 0
  // Predicated region
  $region18: #{_lambda_.21} parent=0 // pred_check
    %p18 = pneg %p17
  $region19: #{_lambda_.21} parent=0 // pred_check_branch
    %20 = sbr.rel (%p18) target = $region21
  $region20: #{_lambda_.21} parent=0 // pred_region
    %21 = vst [vmem:[#allocation2] sm:$0xff] 0.0
    %22 = vst [vmem:[#allocation2 + $0x8] sm:$0xff] 0.0
  $region21: #{_lambda_.21} parent=0 // pred_fallthru
    _
  %v23 = vld [vmem:[#allocation2] sm:$0xff]
  %v24 = vld [vmem:[#allocation2 + $0x8] sm:$0xff]
  %v25 = vld [vmem:[%s0] sm:$0xff]
  %v26 = vld [vmem:[%s0 + $0x8] sm:$0xff]
  %v27 = vld [vmem:[%s0 + $0x10] sm:$0xff]
  %v28 = vld [vmem:[%s0 + $0x18] sm:$0xff]
  %v29 = vld [vmem:[%s0 + $0x20] sm:$0xff]
  %v30 = vld [vmem:[%s0 + $0x28] sm:$0xff]
  %v31 = vld [vmem:[%s0 + $0x30] sm:$0xff]
  %v32 = vld [vmem:[%s0 + $0x38] sm:$0xff]
  %v33 = vld [vmem:[%s0 + $0x40] sm:$0xff]
  %v34 = vld [vmem:[%s1] sm:$0xff]
  %v35 = vld [vmem:[%s1 + $0x8] sm:$0xff]
  %v36 = vld [vmem:[%s1 + $0x10] sm:$0xff]
  %v37 = vld [vmem:[%s1 + $0x18] sm:$0xff]
  %v38 = vld [vmem:[%s1 + $0x20] sm:$0xff]
  %v39 = vld [vmem:[%s1 + $0x28] sm:$0xff]
  %v40 = vld [vmem:[%s1 + $0x30] sm:$0xff]
  %v41 = vld [vmem:[%s1 + $0x38] sm:$0xff]
  %v42 = vld [vmem:[%s1 + $0x40] sm:$0xff]
  %v43 = vld [vmem:[%s1 + $0x48] sm:$0xff]
  %v44 = vld [vmem:[%s1 + $0x50] sm:$0xff]
  %v45 = vld [vmem:[%s1 + $0x58] sm:$0xff]
  %v46 = vld [vmem:[%s1 + $0x60] sm:$0xff]
  %v47 = vld [vmem:[%s1 + $0x68] sm:$0xff]
  %v48 = vld [vmem:[%s1 + $0x70] sm:$0xff]
  %v49 = vld [vmem:[%s1 + $0x78] sm:$0xff]
  %v50 = vld [vmem:[%s1 + $0x80] sm:$0xff]
  %v51 = vld [vmem:[%s1 + $0x88] sm:$0xff]
  %v52 = vld [vmem:[%s1 + $0x90] sm:$0xff]
  %v53 = vld [vmem:[%s1 + $0x98] sm:$0xff]
  %v54 = vld [vmem:[%s1 + $0xa0] sm:$0xff]
  %v55 = vld [vmem:[%s1 + $0xa8] sm:$0xff]
  %v56 = vld [vmem:[%s1 + $0xb0] sm:$0xff]
  %v57 = vld [vmem:[%s1 + $0xb8] sm:$0xff]
  %v58 = vld [vmem:[%s1 + $0xc0] sm:$0xff]
  %v59 = vld [vmem:[%s1 + $0xc8] sm:$0xff]
  %v60 = vld [vmem:[%s1 + $0xd0] sm:$0xff]
  %v61 = vld [vmem:[%s1 + $0xd8] sm:$0xff]
  %v62 = vld [vmem:[%s1 + $0xe0] sm:$0xff]
  %v63 = vld [vmem:[%s1 + $0xe8] sm:$0xff]
  %v64 = vld [vmem:[%s1 + $0xf0] sm:$0xff]
  %v65 = vld [vmem:[%s1 + $0xf8] sm:$0xff]
  %v66 = vld [vmem:[%s1 + $0x100] sm:$0xff]
  %v67 = vld [vmem:[%s1 + $0x108] sm:$0xff]
  %v68 = vld [vmem:[%s1 + $0x110] sm:$0xff]
  %v69 = vld [vmem:[%s1 + $0x118] sm:$0xff]
  %v70 = vld [vmem:[%s1 + $0x120] sm:$0xff]
  %v71 = vld [vmem:[%s1 + $0x128] sm:$0xff]
  %v72 = vld [vmem:[%s1 + $0x130] sm:$0xff]
  %v73 = vld [vmem:[%s1 + $0x138] sm:$0xff]
  %v74 = vld [vmem:[%s1 + $0x140] sm:$0xff]
  %v75 = vld [vmem:[%s1 + $0x148] sm:$0xff]
  %v76 = vld [vmem:[%s1 + $0x150] sm:$0xff]
  %v77 = vld [vmem:[%s1 + $0x158] sm:$0xff]
  %v78 = vld [vmem:[%s1 + $0x160] sm:$0xff]
  %v79 = vld [vmem:[%s1 + $0x168] sm:$0xff]
  %v80 = vld [vmem:[%s1 + $0x170] sm:$0xff]
  %v81 = vld [vmem:[%s1 + $0x178] sm:$0xff]
  %v82 = vld [vmem:[%s1 + $0x180] sm:$0xff]
  %v83 = vld [vmem:[%s1 + $0x188] sm:$0xff]
  %v84 = vld [vmem:[%s1 + $0x190] sm:$0xff]
  %v85 = vld [vmem:[%s1 + $0x198] sm:$0xff]
  %v86 = vld [vmem:[%s1 + $0x1a0] sm:$0xff]
  %v87 = vld [vmem:[%s1 + $0x1a8] sm:$0xff]
  %v88 = vld [vmem:[%s1 + $0x1b0] sm:$0xff]
  %v89 = vld [vmem:[%s1 + $0x1b8] sm:$0xff]
  %v90 = vld [vmem:[%s1 + $0x1c0] sm:$0xff]
  %v91 = vld [vmem:[%s1 + $0x1c8] sm:$0xff]
  %v92 = vld [vmem:[%s1 + $0x1d0] sm:$0xff]
  %v93 = vld [vmem:[%s1 + $0x1d8] sm:$0xff]
  %v94 = vld [vmem:[%s1 + $0x1e0] sm:$0xff]
  %v95 = vld [vmem:[%s1 + $0x1e8] sm:$0xff]
  %v96 = vld [vmem:[%s1 + $0x1f0] sm:$0xff]
  %v97 = vld [vmem:[%s1 + $0x1f8] sm:$0xff]
  %v98 = vld [vmem:[%s1 + $0x200] sm:$0xff]
  %v99 = vld [vmem:[%s1 + $0x208] sm:$0xff]
  %v100 = vld [vmem:[%s1 + $0x210] sm:$0xff]
  %v101 = vld [vmem:[%s1 + $0x218] sm:$0xff]
  %v102 = vld [vmem:[%s1 + $0x220] sm:$0xff]
  %v103 = vld [vmem:[%s1 + $0x228] sm:$0xff]
  %v104 = vld [vmem:[%s1 + $0x230] sm:$0xff]
  %v105 = vld [vmem:[%s1 + $0x238] sm:$0xff]
  %v106 = vld [vmem:[%s1 + $0x240] sm:$0xff]
  %v107 = vld [vmem:[%s1 + $0x248] sm:$0xff]
  %v108 = vld [vmem:[%s1 + $0x250] sm:$0xff]
  %v109 = vld [vmem:[%s1 + $0x258] sm:$0xff]
  %v110 = vld [vmem:[%s1 + $0x260] sm:$0xff]
  %v111 = vld [vmem:[%s1 + $0x268] sm:$0xff]
  %v112 = vld [vmem:[%s1 + $0x270] sm:$0xff]
  %v113 = vld [vmem:[%s1 + $0x278] sm:$0xff]
  %v114 = vld [vmem:[%s1 + $0x280] sm:$0xff]
  %v115 = vld [vmem:[%s1 + $0x288] sm:$0xff]
  %v116 = vld [vmem:[%s1 + $0x290] sm:$0xff]
  %v117 = vld [vmem:[%s1 + $0x298] sm:$0xff]
  %v118 = vld [vmem:[%s1 + $0x2a0] sm:$0xff]
  %v119 = vld [vmem:[%s1 + $0x2a8] sm:$0xff]
  %v120 = vld [vmem:[%s1 + $0x2b0] sm:$0xff]
  %v121 = vld [vmem:[%s1 + $0x2b8] sm:$0xff]
  %v122 = vld [vmem:[%s1 + $0x2c0] sm:$0xff]
  %v123 = vld [vmem:[%s1 + $0x2c8] sm:$0xff]
  %v124 = vld [vmem:[%s1 + $0x2d0] sm:$0xff]
  %v125 = vld [vmem:[%s1 + $0x2d8] sm:$0xff]
  %v126 = vld [vmem:[%s1 + $0x2e0] sm:$0xff]
  %v127 = vld [vmem:[%s1 + $0x2e8] sm:$0xff]
  %v128 = vld [vmem:[%s1 + $0x2f0] sm:$0xff]
  %v129 = vld [vmem:[%s1 + $0x2f8] sm:$0xff]
  %v130 = vld [vmem:[%s1 + $0x300] sm:$0xff]
  %v131 = vld [vmem:[%s1 + $0x308] sm:$0xff]
  %v132 = vld [vmem:[%s1 + $0x310] sm:$0xff]
  %v133 = vld [vmem:[%s1 + $0x318] sm:$0xff]
  %v134 = vld [vmem:[%s1 + $0x320] sm:$0xff]
  %v135 = vld [vmem:[%s1 + $0x328] sm:$0xff]
  %v136 = vld [vmem:[%s1 + $0x330] sm:$0xff]
  %v137 = vld [vmem:[%s1 + $0x338] sm:$0xff]
  %v138 = vld [vmem:[%s1 + $0x340] sm:$0xff]
  %v139 = vld [vmem:[%s1 + $0x348] sm:$0xff]
  %v140 = vld [vmem:[%s1 + $0x350] sm:$0xff]
  %v141 = vld [vmem:[%s1 + $0x358] sm:$0xff]
  %v142 = vld [vmem:[%s1 + $0x360] sm:$0xff]
  %v143 = vld [vmem:[%s1 + $0x368] sm:$0xff]
  %v144 = vld [vmem:[%s1 + $0x370] sm:$0xff]
  %v145 = vld [vmem:[%s1 + $0x378] sm:$0xff]
  %v146 = vld [vmem:[%s1 + $0x380] sm:$0xff]
  %v147 = vld [vmem:[%s1 + $0x388] sm:$0xff]
  %v148 = vld [vmem:[%s1 + $0x390] sm:$0xff]
  %v149 = vld [vmem:[%s1 + $0x398] sm:$0xff]
  %v150 = vld [vmem:[%s1 + $0x3a0] sm:$0xff]
  %v151 = vld [vmem:[%s1 + $0x3a8] sm:$0xff]
  %v152 = vld [vmem:[%s1 + $0x3b0] sm:$0xff]
  %v153 = vld [vmem:[%s1 + $0x3b8] sm:$0xff]
  %v154 = vld [vmem:[%s1 + $0x3c0] sm:$0xff]
  %v155 = vld [vmem:[%s1 + $0x3c8] sm:$0xff]
  %v156 = vld [vmem:[%s1 + $0x3d0] sm:$0xff]
  %v157 = vld [vmem:[%s1 + $0x3d8] sm:$0xff]
  %v158 = vld [vmem:[%s1 + $0x3e0] sm:$0xff]
  %v159 = vld [vmem:[%s1 + $0x3e8] sm:$0xff]
  %v160 = vld [vmem:[%s1 + $0x3f0] sm:$0xff]
  %v161 = vld [vmem:[%s1 + $0x3f8] sm:$0xff]
  %v162 = vld [vmem:[%s1 + $0x400] sm:$0xff]
  %v163 = vld [vmem:[%s1 + $0x408] sm:$0xff]
  %v164 = vld [vmem:[%s1 + $0x410] sm:$0xff]
  %v165 = vld [vmem:[%s1 + $0x418] sm:$0xff]
  %v166 = vld [vmem:[%s1 + $0x420] sm:$0xff]
  %v167 = vld [vmem:[%s1 + $0x428] sm:$0xff]
  %v168 = vld [vmem:[%s1 + $0x430] sm:$0xff]
  %v169 = vld [vmem:[%s1 + $0x438] sm:$0xff]
  %v170 = vld [vmem:[%s1 + $0x440] sm:$0xff]
  %v171 = vld [vmem:[%s1 + $0x448] sm:$0xff]
  %v172 = vld [vmem:[%s1 + $0x450] sm:$0xff]
  %v173 = vld [vmem:[%s1 + $0x458] sm:$0xff]
  %v174 = vld [vmem:[%s1 + $0x460] sm:$0xff]
  %v175 = vld [vmem:[%s1 + $0x468] sm:$0xff]
  %v176 = vld [vmem:[%s1 + $0x470] sm:$0xff]
  %v177 = vld [vmem:[%s1 + $0x478] sm:$0xff]
  %v178 = vld [vmem:[%s1 + $0x480] sm:$0xff]
  %v179 = vld [vmem:[%s1 + $0x488] sm:$0xff]
  %v180 = vld [vmem:[%s1 + $0x490] sm:$0xff]
  %v181 = vld [vmem:[%s1 + $0x498] sm:$0xff]
  %v182 = vld [vmem:[%s1 + $0x4a0] sm:$0xff]
  %v183 = vld [vmem:[%s1 + $0x4a8] sm:$0xff]
  %v184 = vld [vmem:[%s1 + $0x4b0] sm:$0xff]
  %v185 = vld [vmem:[%s1 + $0x4b8] sm:$0xff]
  %v186 = vld [vmem:[%s1 + $0x4c0] sm:$0xff]
  %v187 = vld [vmem:[%s1 + $0x4c8] sm:$0xff]
  %v188 = vld [vmem:[%s1 + $0x4d0] sm:$0xff]
  %v189 = vld [vmem:[%s1 + $0x4d8] sm:$0xff]
  %v190 = vld [vmem:[%s1 + $0x4e0] sm:$0xff]
  %v191 = vld [vmem:[%s1 + $0x4e8] sm:$0xff]
  %v192 = vld [vmem:[%s1 + $0x4f0] sm:$0xff]
  %v193 = vld [vmem:[%s1 + $0x4f8] sm:$0xff]
  %v194 = vld [vmem:[%s1 + $0x500] sm:$0xff]
  %v195 = vld [vmem:[%s1 + $0x508] sm:$0xff]
  %v196 = vld [vmem:[%s1 + $0x510] sm:$0xff]
  %v197 = vld [vmem:[%s1 + $0x518] sm:$0xff]
  %v198 = vld [vmem:[%s1 + $0x520] sm:$0xff]
  %v199 = vld [vmem:[%s1 + $0x528] sm:$0xff]
  %v200 = vld [vmem:[%s1 + $0x530] sm:$0xff]
  %v201 = vld [vmem:[%s1 + $0x538] sm:$0xff]
  %v202 = vld [vmem:[%s1 + $0x540] sm:$0xff]
  %v203 = vld [vmem:[%s1 + $0x548] sm:$0xff]
  %v204 = vld [vmem:[%s1 + $0x550] sm:$0xff]
  %v205 = vld [vmem:[%s1 + $0x558] sm:$0xff]
  %v206 = vld [vmem:[%s1 + $0x560] sm:$0xff]
  %v207 = vld [vmem:[%s1 + $0x568] sm:$0xff]
  %v208 = vld [vmem:[%s1 + $0x570] sm:$0xff]
  %v209 = vld [vmem:[%s1 + $0x578] sm:$0xff]
  %v210 = vld [vmem:[%s1 + $0x580] sm:$0xff]
  %v211 = vld [vmem:[%s1 + $0x588] sm:$0xff]
  %v212 = vld [vmem:[%s1 + $0x590] sm:$0xff]
  %v213 = vld [vmem:[%s1 + $0x598] sm:$0xff]
  %v214 = vld [vmem:[%s1 + $0x5a0] sm:$0xff]
  %v215 = vld [vmem:[%s1 + $0x5a8] sm:$0xff]
  %v216 = vld [vmem:[%s1 + $0x5b0] sm:$0xff]
  %v217 = vld [vmem:[%s1 + $0x5b8] sm:$0xff]
  %v218 = vld [vmem:[%s1 + $0x5c0] sm:$0xff]
  %v219 = vld [vmem:[%s1 + $0x5c8] sm:$0xff]
  %v220 = vld [vmem:[%s1 + $0x5d0] sm:$0xff]
  %v221 = vld [vmem:[%s1 + $0x5d8] sm:$0xff]
  %v222 = vld [vmem:[%s1 + $0x5e0] sm:$0xff]
  %v223 = vld [vmem:[%s1 + $0x5e8] sm:$0xff]
  %v224 = vld [vmem:[%s1 + $0x5f0] sm:$0xff]
  %v225 = vld [vmem:[%s1 + $0x5f8] sm:$0xff]
  %v226 = vld [vmem:[%s1 + $0x600] sm:$0xff]
  %v227 = vld [vmem:[%s1 + $0x608] sm:$0xff]
  %v228 = vld [vmem:[%s1 + $0x610] sm:$0xff]
  %v229 = vld [vmem:[%s1 + $0x618] sm:$0xff]
  %v230 = vld [vmem:[%s1 + $0x620] sm:$0xff]
  %v231 = vld [vmem:[%s1 + $0x628] sm:$0xff]
  %v232 = vld [vmem:[%s1 + $0x630] sm:$0xff]
  %v233 = vld [vmem:[%s1 + $0x638] sm:$0xff]
  %v234 = vld [vmem:[%s1 + $0x640] sm:$0xff]
  %v235 = vld [vmem:[%s1 + $0x648] sm:$0xff]
  %v236 = vld [vmem:[%s1 + $0x650] sm:$0xff]
  %v237 = vld [vmem:[%s1 + $0x658] sm:$0xff]
  %v238 = vld [vmem:[%s1 + $0x660] sm:$0xff]
  %v239 = vld [vmem:[%s1 + $0x668] sm:$0xff]
  %v240 = vld [vmem:[%s1 + $0x670] sm:$0xff]
  %v241 = vld [vmem:[%s1 + $0x678] sm:$0xff]
  %v242 = vld [vmem:[%s1 + $0x680] sm:$0xff]
  %v243 = vld [vmem:[%s1 + $0x688] sm:$0xff]
  %v244 = vld [vmem:[%s1 + $0x690] sm:$0xff]
  %v245 = vld [vmem:[%s1 + $0x698] sm:$0xff]
  %v246 = vld [vmem:[%s1 + $0x6a0] sm:$0xff]
  %v247 = vld [vmem:[%s1 + $0x6a8] sm:$0xff]
  %v248 = vld [vmem:[%s1 + $0x6b0] sm:$0xff]
  %v249 = vld [vmem:[%s1 + $0x6b8] sm:$0xff]
  %v250 = vld [vmem:[%s1 + $0x6c0] sm:$0xff]
  %v251 = vld [vmem:[%s1 + $0x6c8] sm:$0xff]
  %v252 = vld [vmem:[%s1 + $0x6d0] sm:$0xff]
  %v253 = vld [vmem:[%s1 + $0x6d8] sm:$0xff]
  %v254 = vld [vmem:[%s1 + $0x6e0] sm:$0xff]
  %v255 = vld [vmem:[%s1 + $0x6e8] sm:$0xff]
  %v256 = vld [vmem:[%s1 + $0x6f0] sm:$0xff]
  %v257 = vld [vmem:[%s1 + $0x6f8] sm:$0xff]
  %v258 = vld [vmem:[%s1 + $0x700] sm:$0xff]
  %v259 = vld [vmem:[%s1 + $0x708] sm:$0xff]
  %v260 = vld [vmem:[%s1 + $0x710] sm:$0xff]
  %v261 = vld [vmem:[%s1 + $0x718] sm:$0xff]
  %v262 = vld [vmem:[%s1 + $0x720] sm:$0xff]
  %v263 = vld [vmem:[%s1 + $0x728] sm:$0xff]
  %v264 = vld [vmem:[%s1 + $0x730] sm:$0xff]
  %v265 = vld [vmem:[%s1 + $0x738] sm:$0xff]
  %v266 = vld [vmem:[%s1 + $0x740] sm:$0xff]
  %v267 = vld [vmem:[%s1 + $0x748] sm:$0xff]
  %v268 = vld [vmem:[%s1 + $0x750] sm:$0xff]
  %v269 = vld [vmem:[%s1 + $0x758] sm:$0xff]
  %v270 = vld [vmem:[%s1 + $0x760] sm:$0xff]
  %v271 = vld [vmem:[%s1 + $0x768] sm:$0xff]
  %v272 = vld [vmem:[%s1 + $0x770] sm:$0xff]
  %v273 = vld [vmem:[%s1 + $0x778] sm:$0xff]
  %v274 = vld [vmem:[%s1 + $0x780] sm:$0xff]
  %v275 = vld [vmem:[%s1 + $0x788] sm:$0xff]
  %v276 = vld [vmem:[%s1 + $0x790] sm:$0xff]
  %v277 = vld [vmem:[%s1 + $0x798] sm:$0xff]
  %v278 = vld [vmem:[%s1 + $0x7a0] sm:$0xff]
  %v279 = vld [vmem:[%s1 + $0x7a8] sm:$0xff]
  %v280 = vld [vmem:[%s1 + $0x7b0] sm:$0xff]
  %v281 = vld [vmem:[%s1 + $0x7b8] sm:$0xff]
  %v282 = vld [vmem:[%s1 + $0x7c0] sm:$0xff]
  %v283 = vld [vmem:[%s1 + $0x7c8] sm:$0xff]
  %v284 = vld [vmem:[%s1 + $0x7d0] sm:$0xff]
  %v285 = vld [vmem:[%s1 + $0x7d8] sm:$0xff]
  %v286 = vld [vmem:[%s1 + $0x7e0] sm:$0xff]
  %v287 = vld [vmem:[%s1 + $0x7e8] sm:$0xff]
  %v288 = vld [vmem:[%s1 + $0x7f0] sm:$0xff]
  %v289 = vld [vmem:[%s1 + $0x7f8] sm:$0xff]
  %v290 = vld [vmem:[%s1 + $0x800] sm:$0xff]
  %v291 = vld [vmem:[%s1 + $0x808] sm:$0xff]
  %v292 = vld [vmem:[%s1 + $0x810] sm:$0xff]
  %v293 = vld [vmem:[%s1 + $0x818] sm:$0xff]
  %v294 = vld [vmem:[%s1 + $0x820] sm:$0xff]
  %v295 = vld [vmem:[%s1 + $0x828] sm:$0xff]
  %v296 = vld [vmem:[%s1 + $0x830] sm:$0xff]
  %v297 = vld [vmem:[%s1 + $0x838] sm:$0xff]
  %v298 = vld [vmem:[%s1 + $0x840] sm:$0xff]
  %v299 = vld [vmem:[%s1 + $0x848] sm:$0xff]
  %v300 = vld [vmem:[%s1 + $0x850] sm:$0xff]
  %v301 = vld [vmem:[%s1 + $0x858] sm:$0xff]
  %v302 = vld [vmem:[%s1 + $0x860] sm:$0xff]
  %v303 = vld [vmem:[%s1 + $0x868] sm:$0xff]
  %v304 = vld [vmem:[%s1 + $0x870] sm:$0xff]
  %v305 = vld [vmem:[%s1 + $0x878] sm:$0xff]
  %v306 = vld [vmem:[%s1 + $0x880] sm:$0xff]
  %v307 = vld [vmem:[%s1 + $0x888] sm:$0xff]
  %v308 = vld [vmem:[%s1 + $0x890] sm:$0xff]
  %v309 = vld [vmem:[%s1 + $0x898] sm:$0xff]
  %v310 = vld [vmem:[%s1 + $0x8a0] sm:$0xff]
  %v311 = vld [vmem:[%s1 + $0x8a8] sm:$0xff]
  %v312 = vld [vmem:[%s1 + $0x8b0] sm:$0xff]
  %v313 = vld [vmem:[%s1 + $0x8b8] sm:$0xff]
  %v314 = vld [vmem:[%s1 + $0x8c0] sm:$0xff]
  %v315 = vld [vmem:[%s1 + $0x8c8] sm:$0xff]
  %v316 = vld [vmem:[%s1 + $0x8d0] sm:$0xff]
  %v317 = vld [vmem:[%s1 + $0x8d8] sm:$0xff]
  %v318 = vld [vmem:[%s1 + $0x8e0] sm:$0xff]
  %v319 = vld [vmem:[%s1 + $0x8e8] sm:$0xff]
  %v320 = vld [vmem:[%s1 + $0x8f0] sm:$0xff]
  %v321 = vld [vmem:[%s1 + $0x8f8] sm:$0xff]
  %322 = vmatprep.subr.mxu0 %v65
  %323 = vmatpush1.msra.mxu0 %v64
  %324 = vmatprep.subr.mxu0 %v63
  %325 = vmatpush1.msra.mxu0 %v62
  %326 = vmatprep.subr.mxu0 %v61
  %327 = vmatpush1.msra.mxu0 %v60
  %328 = vmatprep.subr.mxu0 %v59
  %329 = vmatpush1.msra.mxu0 %v58
  %330 = vmatprep.subr.mxu0 %v57
  %331 = vmatpush1.msra.mxu0 %v56
  %332 = vmatprep.subr.mxu0 %v55
  %333 = vmatpush1.msra.mxu0 %v54
  %334 = vmatprep.subr.mxu0 %v53
  %335 = vmatpush1.msra.mxu0 %v52
  %336 = vmatprep.subr.mxu0 %v51
  %337 = vmatpush1.msra.mxu0 %v50
  %338 = vmatprep.subr.mxu0 %v49
  %339 = vmatpush1.msra.mxu0 %v48
  %340 = vmatprep.subr.mxu0 %v47
  %341 = vmatpush1.msra.mxu0 %v46
  %342 = vmatprep.subr.mxu0 %v45
  %343 = vmatpush1.msra.mxu0 %v44
  %344 = vmatprep.subr.mxu0 %v43
  %345 = vmatpush1.msra.mxu0 %v42
  %346 = vmatprep.subr.mxu0 %v41
  %347 = vmatpush1.msra.mxu0 %v40
  %348 = vmatprep.subr.mxu0 %v39
  %349 = vmatpush1.msra.mxu0 %v38
  %350 = vmatprep.subr.mxu0 %v37
  %351 = vmatpush1.msra.mxu0 %v36
  %352 = vmatprep.subr.mxu0 %v35
  %353 = vmatpush1.msra.mxu0 %v34
  %354 = vmatprep.subr.mxu0 %v97
  %355 = vmatpush2.msra.mxu0 %v96
  %356 = vmatprep.subr.mxu0 %v95
  %357 = vmatpush2.msra.mxu0 %v94
  %358 = vmatprep.subr.mxu0 %v93
  %359 = vmatpush2.msra.mxu0 %v92
  %360 = vmatprep.subr.mxu0 %v91
  %361 = vmatpush2.msra.mxu0 %v90
  %362 = vmatprep.subr.mxu0 %v89
  %363 = vmatpush2.msra.mxu0 %v88
  %364 = vmatprep.subr.mxu0 %v87
  %365 = vmatpush2.msra.mxu0 %v86
  %366 = vmatprep.subr.mxu0 %v85
  %367 = vmatpush2.msra.mxu0 %v84
  %368 = vmatprep.subr.mxu0 %v83
  %369 = vmatpush2.msra.mxu0 %v82
  %370 = vmatprep.subr.mxu0 %v81
  %371 = vmatpush2.msra.mxu0 %v80
  %372 = vmatprep.subr.mxu0 %v79
  %373 = vmatpush2.msra.mxu0 %v78
  %374 = vmatprep.subr.mxu0 %v77
  %375 = vmatpush2.msra.mxu0 %v76
  %376 = vmatprep.subr.mxu0 %v75
  %377 = vmatpush2.msra.mxu0 %v74
  %378 = vmatprep.subr.mxu0 %v73
  %379 = vmatpush2.msra.mxu0 %v72
  %380 = vmatprep.subr.mxu0 %v71
  %381 = vmatpush2.msra.mxu0 %v70
  %382 = vmatprep.subr.mxu0 %v69
  %383 = vmatpush2.msra.mxu0 %v68
  %384 = vmatprep.subr.mxu0 %v67
  %385 = vmatpush2.msra.mxu0 %v66
  %386 = vmatprep.mubr.f32.mxu0 %v26
  %387 = vmatmul.mubr.f32.gmra.mxu0 %v25
  %v388 = vpop.f32.mrf.mxu0
  %v389 = vadd.f32 0.0, %v388
  %v390 = vpop.f32.mrf.mxu0
  %v391 = vadd.f32 0.0, %v390
  %392 = vdwg.mxu0
  %393 = vmatprep.subr.mxu0 %v129
  %394 = vmatpush1.msra.mxu0 %v128
  %395 = vmatprep.subr.mxu0 %v127
  %396 = vmatpush1.msra.mxu0 %v126
  %397 = vmatprep.subr.mxu0 %v125
  %398 = vmatpush1.msra.mxu0 %v124
  %399 = vmatprep.subr.mxu0 %v123
  %400 = vmatpush1.msra.mxu0 %v122
  %401 = vmatprep.subr.mxu0 %v121
  %402 = vmatpush1.msra.mxu0 %v120
  %403 = vmatprep.subr.mxu0 %v119
  %404 = vmatpush1.msra.mxu0 %v118
  %405 = vmatprep.subr.mxu0 %v117
  %406 = vmatpush1.msra.mxu0 %v116
  %407 = vmatprep.subr.mxu0 %v115
  %408 = vmatpush1.msra.mxu0 %v114
  %409 = vmatprep.subr.mxu0 %v113
  %410 = vmatpush1.msra.mxu0 %v112
  %411 = vmatprep.subr.mxu0 %v111
  %412 = vmatpush1.msra.mxu0 %v110
  %413 = vmatprep.subr.mxu0 %v109
  %414 = vmatpush1.msra.mxu0 %v108
  %415 = vmatprep.subr.mxu0 %v107
  %416 = vmatpush1.msra.mxu0 %v106
  %417 = vmatprep.subr.mxu0 %v105
  %418 = vmatpush1.msra.mxu0 %v104
  %419 = vmatprep.subr.mxu0 %v103
  %420 = vmatpush1.msra.mxu0 %v102
  %421 = vmatprep.subr.mxu0 %v101
  %422 = vmatpush1.msra.mxu0 %v100
  %423 = vmatprep.subr.mxu0 %v99
  %424 = vmatpush1.msra.mxu0 %v98
  %425 = vmatprep.subr.mxu0 %v161
  %426 = vmatpush2.msra.mxu0 %v160
  %427 = vmatprep.subr.mxu0 %v159
  %428 = vmatpush2.msra.mxu0 %v158
  %429 = vmatprep.subr.mxu0 %v157
  %430 = vmatpush2.msra.mxu0 %v156
  %431 = vmatprep.subr.mxu0 %v155
  %432 = vmatpush2.msra.mxu0 %v154
  %433 = vmatprep.subr.mxu0 %v153
  %434 = vmatpush2.msra.mxu0 %v152
  %435 = vmatprep.subr.mxu0 %v151
  %436 = vmatpush2.msra.mxu0 %v150
  %437 = vmatprep.subr.mxu0 %v149
  %438 = vmatpush2.msra.mxu0 %v148
  %439 = vmatprep.subr.mxu0 %v147
  %440 = vmatpush2.msra.mxu0 %v146
  %441 = vmatprep.subr.mxu0 %v145
  %442 = vmatpush2.msra.mxu0 %v144
  %443 = vmatprep.subr.mxu0 %v143
  %444 = vmatpush2.msra.mxu0 %v142
  %445 = vmatprep.subr.mxu0 %v141
  %446 = vmatpush2.msra.mxu0 %v140
  %447 = vmatprep.subr.mxu0 %v139
  %448 = vmatpush2.msra.mxu0 %v138
  %449 = vmatprep.subr.mxu0 %v137
  %450 = vmatpush2.msra.mxu0 %v136
  %451 = vmatprep.subr.mxu0 %v135
  %452 = vmatpush2.msra.mxu0 %v134
  %453 = vmatprep.subr.mxu0 %v133
  %454 = vmatpush2.msra.mxu0 %v132
  %455 = vmatprep.subr.mxu0 %v131
  %456 = vmatpush2.msra.mxu0 %v130
  %457 = vmatprep.mubr.f32.mxu0 %v28
  %458 = vmatmul.mubr.f32.gmra.mxu0 %v27
  %v459 = vpop.f32.mrf.mxu0
  %v460 = vadd.f32 %v389, %v459
  %v461 = vpop.f32.mrf.mxu0
  %v462 = vadd.f32 %v391, %v461
  %463 = vdwg.mxu0
  %464 = vmatprep.subr.mxu0 %v193
  %465 = vmatpush1.msra.mxu0 %v192
  %466 = vmatprep.subr.mxu0 %v191
  %467 = vmatpush1.msra.mxu0 %v190
  %468 = vmatprep.subr.mxu0 %v189
  %469 = vmatpush1.msra.mxu0 %v188
  %470 = vmatprep.subr.mxu0 %v187
  %471 = vmatpush1.msra.mxu0 %v186
  %472 = vmatprep.subr.mxu0 %v185
  %473 = vmatpush1.msra.mxu0 %v184
  %474 = vmatprep.subr.mxu0 %v183
  %475 = vmatpush1.msra.mxu0 %v182
  %476 = vmatprep.subr.mxu0 %v181
  %477 = vmatpush1.msra.mxu0 %v180
  %478 = vmatprep.subr.mxu0 %v179
  %479 = vmatpush1.msra.mxu0 %v178
  %480 = vmatprep.subr.mxu0 %v177
  %481 = vmatpush1.msra.mxu0 %v176
  %482 = vmatprep.subr.mxu0 %v175
  %483 = vmatpush1.msra.mxu0 %v174
  %484 = vmatprep.subr.mxu0 %v173
  %485 = vmatpush1.msra.mxu0 %v172
  %486 = vmatprep.subr.mxu0 %v171
  %487 = vmatpush1.msra.mxu0 %v170
  %488 = vmatprep.subr.mxu0 %v169
  %489 = vmatpush1.msra.mxu0 %v168
  %490 = vmatprep.subr.mxu0 %v167
  %491 = vmatpush1.msra.mxu0 %v166
  %492 = vmatprep.subr.mxu0 %v165
  %493 = vmatpush1.msra.mxu0 %v164
  %494 = vmatprep.subr.mxu0 %v163
  %495 = vmatpush1.msra.mxu0 %v162
  %496 = vmatprep.subr.mxu0 %v225
  %497 = vmatpush2.msra.mxu0 %v224
  %498 = vmatprep.subr.mxu0 %v223
  %499 = vmatpush2.msra.mxu0 %v222
  %500 = vmatprep.subr.mxu0 %v221
  %501 = vmatpush2.msra.mxu0 %v220
  %502 = vmatprep.subr.mxu0 %v219
  %503 = vmatpush2.msra.mxu0 %v218
  %504 = vmatprep.subr.mxu0 %v217
  %505 = vmatpush2.msra.mxu0 %v216
  %506 = vmatprep.subr.mxu0 %v215
  %507 = vmatpush2.msra.mxu0 %v214
  %508 = vmatprep.subr.mxu0 %v213
  %509 = vmatpush2.msra.mxu0 %v212
  %510 = vmatprep.subr.mxu0 %v211
  %511 = vmatpush2.msra.mxu0 %v210
  %512 = vmatprep.subr.mxu0 %v209
  %513 = vmatpush2.msra.mxu0 %v208
  %514 = vmatprep.subr.mxu0 %v207
  %515 = vmatpush2.msra.mxu0 %v206
  %516 = vmatprep.subr.mxu0 %v205
  %517 = vmatpush2.msra.mxu0 %v204
  %518 = vmatprep.subr.mxu0 %v203
  %519 = vmatpush2.msra.mxu0 %v202
  %520 = vmatprep.subr.mxu0 %v201
  %521 = vmatpush2.msra.mxu0 %v200
  %522 = vmatprep.subr.mxu0 %v199
  %523 = vmatpush2.msra.mxu0 %v198
  %524 = vmatprep.subr.mxu0 %v197
  %525 = vmatpush2.msra.mxu0 %v196
  %526 = vmatprep.subr.mxu0 %v195
  %527 = vmatpush2.msra.mxu0 %v194
  %528 = vmatprep.mubr.f32.mxu0 %v30
  %529 = vmatmul.mubr.f32.gmra.mxu0 %v29
  %v530 = vpop.f32.mrf.mxu0
  %v531 = vadd.f32 %v460, %v530
  %v532 = vpop.f32.mrf.mxu0
  %v533 = vadd.f32 %v462, %v532
  %534 = vdwg.mxu0
  %535 = vmatprep.subr.mxu0 %v257
  %536 = vmatpush1.msra.mxu0 %v256
  %537 = vmatprep.subr.mxu0 %v255
  %538 = vmatpush1.msra.mxu0 %v254
  %539 = vmatprep.subr.mxu0 %v253
  %540 = vmatpush1.msra.mxu0 %v252
  %541 = vmatprep.subr.mxu0 %v251
  %542 = vmatpush1.msra.mxu0 %v250
  %543 = vmatprep.subr.mxu0 %v249
  %544 = vmatpush1.msra.mxu0 %v248
  %545 = vmatprep.subr.mxu0 %v247
  %546 = vmatpush1.msra.mxu0 %v246
  %547 = vmatprep.subr.mxu0 %v245
  %548 = vmatpush1.msra.mxu0 %v244
  %549 = vmatprep.subr.mxu0 %v243
  %550 = vmatpush1.msra.mxu0 %v242
  %551 = vmatprep.subr.mxu0 %v241
  %552 = vmatpush1.msra.mxu0 %v240
  %553 = vmatprep.subr.mxu0 %v239
  %554 = vmatpush1.msra.mxu0 %v238
  %555 = vmatprep.subr.mxu0 %v237
  %556 = vmatpush1.msra.mxu0 %v236
  %557 = vmatprep.subr.mxu0 %v235
  %558 = vmatpush1.msra.mxu0 %v234
  %559 = vmatprep.subr.mxu0 %v233
  %560 = vmatpush1.msra.mxu0 %v232
  %561 = vmatprep.subr.mxu0 %v231
  %562 = vmatpush1.msra.mxu0 %v230
  %563 = vmatprep.subr.mxu0 %v229
  %564 = vmatpush1.msra.mxu0 %v228
  %565 = vmatprep.subr.mxu0 %v227
  %566 = vmatpush1.msra.mxu0 %v226
  %567 = vmatprep.subr.mxu0 %v289
  %568 = vmatpush2.msra.mxu0 %v288
  %569 = vmatprep.subr.mxu0 %v287
  %570 = vmatpush2.msra.mxu0 %v286
  %571 = vmatprep.subr.mxu0 %v285
  %572 = vmatpush2.msra.mxu0 %v284
  %573 = vmatprep.subr.mxu0 %v283
  %574 = vmatpush2.msra.mxu0 %v282
  %575 = vmatprep.subr.mxu0 %v281
  %576 = vmatpush2.msra.mxu0 %v280
  %577 = vmatprep.subr.mxu0 %v279
  %578 = vmatpush2.msra.mxu0 %v278
  %579 = vmatprep.subr.mxu0 %v277
  %580 = vmatpush2.msra.mxu0 %v276
  %581 = vmatprep.subr.mxu0 %v275
  %582 = vmatpush2.msra.mxu0 %v274
  %583 = vmatprep.subr.mxu0 %v273
  %584 = vmatpush2.msra.mxu0 %v272
  %585 = vmatprep.subr.mxu0 %v271
  %586 = vmatpush2.msra.mxu0 %v270
  %587 = vmatprep.subr.mxu0 %v269
  %588 = vmatpush2.msra.mxu0 %v268
  %589 = vmatprep.subr.mxu0 %v267
  %590 = vmatpush2.msra.mxu0 %v266
  %591 = vmatprep.subr.mxu0 %v265
  %592 = vmatpush2.msra.mxu0 %v264
  %593 = vmatprep.subr.mxu0 %v263
  %594 = vmatpush2.msra.mxu0 %v262
  %595 = vmatprep.subr.mxu0 %v261
  %596 = vmatpush2.msra.mxu0 %v260
  %597 = vmatprep.subr.mxu0 %v259
  %598 = vmatpush2.msra.mxu0 %v258
  %599 = vmatprep.mubr.f32.mxu0 %v32
  %600 = vmatmul.mubr.f32.gmra.mxu0 %v31
  %v601 = vpop.f32.mrf.mxu0
  %v602 = vadd.f32 %v531, %v601
  %v603 = vpop.f32.mrf.mxu0
  %v604 = vadd.f32 %v533, %v603
  %605 = vdwg.mxu0
  %606 = vmatprep.subr.mxu0 %v321
  %607 = vmatpush1.msra.mxu0 %v320
  %608 = vmatprep.subr.mxu0 %v319
  %609 = vmatpush1.msra.mxu0 %v318
  %610 = vmatprep.subr.mxu0 %v317
  %611 = vmatpush1.msra.mxu0 %v316
  %612 = vmatprep.subr.mxu0 %v315
  %613 = vmatpush1.msra.mxu0 %v314
  %614 = vmatprep.subr.mxu0 %v313
  %615 = vmatpush1.msra.mxu0 %v312
  %616 = vmatprep.subr.mxu0 %v311
  %617 = vmatpush1.msra.mxu0 %v310
  %618 = vmatprep.subr.mxu0 %v309
  %619 = vmatpush1.msra.mxu0 %v308
  %620 = vmatprep.subr.mxu0 %v307
  %621 = vmatpush1.msra.mxu0 %v306
  %622 = vmatprep.subr.mxu0 %v305
  %623 = vmatpush1.msra.mxu0 %v304
  %624 = vmatprep.subr.mxu0 %v303
  %625 = vmatpush1.msra.mxu0 %v302
  %626 = vmatprep.subr.mxu0 %v301
  %627 = vmatpush1.msra.mxu0 %v300
  %628 = vmatprep.subr.mxu0 %v299
  %629 = vmatpush1.msra.mxu0 %v298
  %630 = vmatprep.subr.mxu0 %v297
  %631 = vmatpush1.msra.mxu0 %v296
  %632 = vmatprep.subr.mxu0 %v295
  %633 = vmatpush1.msra.mxu0 %v294
  %634 = vmatprep.subr.mxu0 %v293
  %635 = vmatpush1.msra.mxu0 %v292
  %636 = vmatprep.subr.mxu0 %v291
  %637 = vmatpush1.msra.mxu0 %v290
  %638 = vmatprep.subr.mxu0 0.0
  %639 = vmatpush2.msra.mxu0 0.0
  %640 = vmatprep.subr.mxu0 0.0
  %641 = vmatpush2.msra.mxu0 0.0
  %642 = vmatprep.subr.mxu0 0.0
  %643 = vmatpush2.msra.mxu0 0.0
  %644 = vmatprep.subr.mxu0 0.0
  %645 = vmatpush2.msra.mxu0 0.0
  %646 = vmatprep.subr.mxu0 0.0
  %647 = vmatpush2.msra.mxu0 0.0
  %648 = vmatprep.subr.mxu0 0.0
  %649 = vmatpush2.msra.mxu0 0.0
  %650 = vmatprep.subr.mxu0 0.0
  %651 = vmatpush2.msra.mxu0 0.0
  %652 = vmatprep.subr.mxu0 0.0
  %653 = vmatpush2.msra.mxu0 0.0
  %654 = vmatprep.subr.mxu0 0.0
  %655 = vmatpush2.msra.mxu0 0.0
  %656 = vmatprep.subr.mxu0 0.0
  %657 = vmatpush2.msra.mxu0 0.0
  %658 = vmatprep.subr.mxu0 0.0
  %659 = vmatpush2.msra.mxu0 0.0
  %660 = vmatprep.subr.mxu0 0.0
  %661 = vmatpush2.msra.mxu0 0.0
  %662 = vmatprep.subr.mxu0 0.0
  %663 = vmatpush2.msra.mxu0 0.0
  %664 = vmatprep.subr.mxu0 0.0
  %665 = vmatpush2.msra.mxu0 0.0
  %666 = vmatprep.subr.mxu0 0.0
  %667 = vmatpush2.msra.mxu0 0.0
  %668 = vmatprep.subr.mxu0 0.0
  %669 = vmatpush2.msra.mxu0 0.0
  %670 = vmatprep.mubr.f32.mxu0 0.0
  %671 = vmatmul.mubr.f32.gmra.mxu0 %v33
  %v672 = vpop.f32.mrf.mxu0
  %v673 = vadd.f32 %v602, %v672
  %v674 = vpop.f32.mrf.mxu0
  %v675 = vadd.f32 %v604, %v674
  %676 = vdwg.mxu0
  %v677 = vadd.f32 %v23, %v673
  %v678 = vadd.f32 %v24, %v675
  %679 = vst [vmem:[#allocation2] sm:$0xff] %v677
  %680 = vst [vmem:[#allocation2 + $0x8] sm:$0xff] %v678
  // Predicated region
  $region22: #{_lambda_.21} parent=0 // pred_check
    %p681 = pneg %p17
  $region23: #{_lambda_.21} parent=0 // pred_check_branch
    %683 = sbr.rel (%p681) target = $region25
  $region24: #{_lambda_.21} parent=0 // pred_region
    %v684 = vld [vmem:[#allocation2] sm:$0xff]
    %v685 = vld [vmem:[#allocation2 + $0x8] sm:$0xff]
    %v686 = vld [vmem:[%s2] sm:$0x3]
    %v688 = vlaneseq
    %v689 = vshrl.u32 %v688, 7
    %v690 = vsub.s32 0, %v689
    %v691 = vrot.slane %v686, %v690
    %v692 = vlaneseq
    %v693 = vshrl.u32 %v692, 7
    %v694 = vsub.s32 1, %v693
    %v695 = vrot.slane %v686, %v694
    %v698 = vmul.f32 %v684, %v691
    %v699 = vmul.f32 %v685, %v695
    %v700 = vld [vmem:[%s3] sm:$0x3]
    %v702 = vlaneseq
    %v703 = vshrl.u32 %v702, 7
    %v704 = vsub.s32 0, %v703
    %v705 = vrot.slane %v700, %v704
    %v706 = vlaneseq
    %v707 = vshrl.u32 %v706, 7
    %v708 = vsub.s32 1, %v707
    %v709 = vrot.slane %v700, %v708
    %v712 = vadd.f32 %v698, %v705
    %v713 = vadd.f32 %v699, %v709
    %v714 = vmax.f32 %v712, 0.0
    %v715 = vmax.f32 %v713, 0.0
    %716 = vst [vmem:[%s4] sm:$0xff] %v714
    %717 = vst [vmem:[%s4 + $0x8] sm:$0xff] %v715
  $region25: #{_lambda_.21} parent=0 // pred_fallthru
    _
  // Predicated region
  $region26: #{_lambda_.21} parent=0 // pred_check
    _
  $region27: #{_lambda_.21} parent=0 // pred_check_branch
    %719 = sbr.rel (0) target = $region29
  $region28: #{_lambda_.21} parent=0 // pred_region
    _
  $region29: #{_lambda_.21} parent=0 // pred_fallthru
    _
  // Predicated region
  $region30: #{_lambda_.21} parent=0 // pred_check
    _
  $region31: #{_lambda_.21} parent=0 // pred_check_branch
    %721 = sbr.rel (0) target = $region33
  $region32: #{_lambda_.21} parent=0 // pred_region
    _
  $region33: #{_lambda_.21} parent=0 // pred_fallthru
    _

// kernel: _lambda_.22
$region0: #{_lambda_.22}
  #allocation0 [shape = 'u32[]', space=smem, size = 0x4, offset = 0x4, fixed_abs, tag = 'smem constant byte address 0x4 - core index']
  #allocation1 [shape = 'u32[144,128]{1,0:T(1,128)}', space=vmem, size = 0x12000, scoped, tag = 'internal scratch']
  #allocation2 [shape = 'f32[8,256]{1,0:T(8,128)}', space=vmem, size = 0x2000, scoped, tag = 'scratch operand']
  %s0 = inlined_call_operand.vmem [shape: f32[8,128], index: 0, kind: input, shape index: {}]
  %s1 = inlined_call_operand.vmem [shape: f32[128,256], index: 1, kind: input, shape index: {}]
  %s2 = inlined_call_operand.vmem [shape: f32[1,256], index: 2, kind: input, shape index: {}]
  %s3 = inlined_call_operand.vmem [shape: f32[1,256], index: 3, kind: input, shape index: {}]
  %s4 = inlined_call_operand.vmem [shape: f32[8,256], index: 4, kind: output, shape index: {}]
  %s5 = sld [smem:[#allocation0]]
  $region34: #{_lambda_.22} parent=0
    _
  %s7 = ssub.s32 1, %s5
  %s8 = scalar_select 0, %s7, %s5
  // Predicated region
  $region2: #{_lambda_.22} parent=0 // pred_check
    _
  $region3: #{_lambda_.22} parent=0 // pred_check_branch
    %10 = sbr.rel (0) target = $region5
  $region4: #{_lambda_.22} parent=0 // pred_region
    _
  $region5: #{_lambda_.22} parent=0 // pred_fallthru
    _
  // Predicated region
  $region6: #{_lambda_.22} parent=0 // pred_check
    _
  $region7: #{_lambda_.22} parent=0 // pred_check_branch
    %12 = sbr.rel (0) target = $region9
  $region8: #{_lambda_.22} parent=0 // pred_region
    _
  $region9: #{_lambda_.22} parent=0 // pred_fallthru
    _
  // Predicated region
  $region10: #{_lambda_.22} parent=0 // pred_check
    _
  $region11: #{_lambda_.22} parent=0 // pred_check_branch
    %14 = sbr.rel (0) target = $region13
  $region12: #{_lambda_.22} parent=0 // pred_region
    _
  $region13: #{_lambda_.22} parent=0 // pred_fallthru
    _
  // Predicated region
  $region14: #{_lambda_.22} parent=0 // pred_check
    _
  $region15: #{_lambda_.22} parent=0 // pred_check_branch
    %16 = sbr.rel (0) target = $region17
  $region16: #{_lambda_.22} parent=0 // pred_region
    _
  $region17: #{_lambda_.22} parent=0 // pred_fallthru
    _
  %p17 = scmp.eq.s32.totalorder 0, 0
  // Predicated region
  $region18: #{_lambda_.22} parent=0 // pred_check
    %p18 = pneg %p17
  $region19: #{_lambda_.22} parent=0 // pred_check_branch
    %20 = sbr.rel (%p18) target = $region21
  $region20: #{_lambda_.22} parent=0 // pred_region
    %21 = vst [vmem:[#allocation2] sm:$0xff] 0.0
    %22 = vst [vmem:[#allocation2 + $0x8] sm:$0xff] 0.0
  $region21: #{_lambda_.22} parent=0 // pred_fallthru
    _
  %v23 = vld [vmem:[#allocation2] sm:$0xff]
  %v24 = vld [vmem:[#allocation2 + $0x8] sm:$0xff]
  %v25 = vld [vmem:[%s0] sm:$0xff]
  %v26 = vld [vmem:[%s1] sm:$0xff]
  %v27 = vld [vmem:[%s1 + $0x8] sm:$0xff]
  %v28 = vld [vmem:[%s1 + $0x10] sm:$0xff]
  %v29 = vld [vmem:[%s1 + $0x18] sm:$0xff]
  %v30 = vld [vmem:[%s1 + $0x20] sm:$0xff]
  %v31 = vld [vmem:[%s1 + $0x28] sm:$0xff]
  %v32 = vld [vmem:[%s1 + $0x30] sm:$0xff]
  %v33 = vld [vmem:[%s1 + $0x38] sm:$0xff]
  %v34 = vld [vmem:[%s1 + $0x40] sm:$0xff]
  %v35 = vld [vmem:[%s1 + $0x48] sm:$0xff]
  %v36 = vld [vmem:[%s1 + $0x50] sm:$0xff]
  %v37 = vld [vmem:[%s1 + $0x58] sm:$0xff]
  %v38 = vld [vmem:[%s1 + $0x60] sm:$0xff]
  %v39 = vld [vmem:[%s1 + $0x68] sm:$0xff]
  %v40 = vld [vmem:[%s1 + $0x70] sm:$0xff]
  %v41 = vld [vmem:[%s1 + $0x78] sm:$0xff]
  %v42 = vld [vmem:[%s1 + $0x80] sm:$0xff]
  %v43 = vld [vmem:[%s1 + $0x88] sm:$0xff]
  %v44 = vld [vmem:[%s1 + $0x90] sm:$0xff]
  %v45 = vld [vmem:[%s1 + $0x98] sm:$0xff]
  %v46 = vld [vmem:[%s1 + $0xa0] sm:$0xff]
  %v47 = vld [vmem:[%s1 + $0xa8] sm:$0xff]
  %v48 = vld [vmem:[%s1 + $0xb0] sm:$0xff]
  %v49 = vld [vmem:[%s1 + $0xb8] sm:$0xff]
  %v50 = vld [vmem:[%s1 + $0xc0] sm:$0xff]
  %v51 = vld [vmem:[%s1 + $0xc8] sm:$0xff]
  %v52 = vld [vmem:[%s1 + $0xd0] sm:$0xff]
  %v53 = vld [vmem:[%s1 + $0xd8] sm:$0xff]
  %v54 = vld [vmem:[%s1 + $0xe0] sm:$0xff]
  %v55 = vld [vmem:[%s1 + $0xe8] sm:$0xff]
  %v56 = vld [vmem:[%s1 + $0xf0] sm:$0xff]
  %v57 = vld [vmem:[%s1 + $0xf8] sm:$0xff]
  %58 = vmatprep.subr.mxu0 %v57
  %59 = vmatpush1.msra.mxu0 %v56
  %60 = vmatprep.subr.mxu0 %v55
  %61 = vmatpush1.msra.mxu0 %v54
  %62 = vmatprep.subr.mxu0 %v53
  %63 = vmatpush1.msra.mxu0 %v52
  %64 = vmatprep.subr.mxu0 %v51
  %65 = vmatpush1.msra.mxu0 %v50
  %66 = vmatprep.subr.mxu0 %v49
  %67 = vmatpush1.msra.mxu0 %v48
  %68 = vmatprep.subr.mxu0 %v47
  %69 = vmatpush1.msra.mxu0 %v46
  %70 = vmatprep.subr.mxu0 %v45
  %71 = vmatpush1.msra.mxu0 %v44
  %72 = vmatprep.subr.mxu0 %v43
  %73 = vmatpush1.msra.mxu0 %v42
  %74 = vmatprep.subr.mxu0 %v41
  %75 = vmatpush1.msra.mxu0 %v40
  %76 = vmatprep.subr.mxu0 %v39
  %77 = vmatpush1.msra.mxu0 %v38
  %78 = vmatprep.subr.mxu0 %v37
  %79 = vmatpush1.msra.mxu0 %v36
  %80 = vmatprep.subr.mxu0 %v35
  %81 = vmatpush1.msra.mxu0 %v34
  %82 = vmatprep.subr.mxu0 %v33
  %83 = vmatpush1.msra.mxu0 %v32
  %84 = vmatprep.subr.mxu0 %v31
  %85 = vmatpush1.msra.mxu0 %v30
  %86 = vmatprep.subr.mxu0 %v29
  %87 = vmatpush1.msra.mxu0 %v28
  %88 = vmatprep.subr.mxu0 %v27
  %89 = vmatpush1.msra.mxu0 %v26
  %90 = vmatprep.subr.mxu0 0.0
  %91 = vmatpush2.msra.mxu0 0.0
  %92 = vmatprep.subr.mxu0 0.0
  %93 = vmatpush2.msra.mxu0 0.0
  %94 = vmatprep.subr.mxu0 0.0
  %95 = vmatpush2.msra.mxu0 0.0
  %96 = vmatprep.subr.mxu0 0.0
  %97 = vmatpush2.msra.mxu0 0.0
  %98 = vmatprep.subr.mxu0 0.0
  %99 = vmatpush2.msra.mxu0 0.0
  %100 = vmatprep.subr.mxu0 0.0
  %101 = vmatpush2.msra.mxu0 0.0
  %102 = vmatprep.subr.mxu0 0.0
  %103 = vmatpush2.msra.mxu0 0.0
  %104 = vmatprep.subr.mxu0 0.0
  %105 = vmatpush2.msra.mxu0 0.0
  %106 = vmatprep.subr.mxu0 0.0
  %107 = vmatpush2.msra.mxu0 0.0
  %108 = vmatprep.subr.mxu0 0.0
  %109 = vmatpush2.msra.mxu0 0.0
  %110 = vmatprep.subr.mxu0 0.0
  %111 = vmatpush2.msra.mxu0 0.0
  %112 = vmatprep.subr.mxu0 0.0
  %113 = vmatpush2.msra.mxu0 0.0
  %114 = vmatprep.subr.mxu0 0.0
  %115 = vmatpush2.msra.mxu0 0.0
  %116 = vmatprep.subr.mxu0 0.0
  %117 = vmatpush2.msra.mxu0 0.0
  %118 = vmatprep.subr.mxu0 0.0
  %119 = vmatpush2.msra.mxu0 0.0
  %120 = vmatprep.subr.mxu0 0.0
  %121 = vmatpush2.msra.mxu0 0.0
  %122 = vmatprep.mubr.f32.mxu0 0.0
  %123 = vmatmul.mubr.f32.gmra.mxu0 %v25
  %v124 = vpop.f32.mrf.mxu0
  %v125 = vadd.f32 0.0, %v124
  %v126 = vpop.f32.mrf.mxu0
  %v127 = vadd.f32 0.0, %v126
  %128 = vdwg.mxu0
  %v129 = vadd.f32 %v23, %v125
  %v130 = vadd.f32 %v24, %v127
  %131 = vst [vmem:[#allocation2] sm:$0xff] %v129
  %132 = vst [vmem:[#allocation2 + $0x8] sm:$0xff] %v130
  // Predicated region
  $region22: #{_lambda_.22} parent=0 // pred_check
    %p133 = pneg %p17
  $region23: #{_lambda_.22} parent=0 // pred_check_branch
    %135 = sbr.rel (%p133) target = $region25
  $region24: #{_lambda_.22} parent=0 // pred_region
    %v136 = vld [vmem:[#allocation2] sm:$0xff]
    %v137 = vld [vmem:[#allocation2 + $0x8] sm:$0xff]
    %v138 = vld [vmem:[%s2] sm:$0x3]
    %v140 = vlaneseq
    %v141 = vshrl.u32 %v140, 7
    %v142 = vsub.s32 0, %v141
    %v143 = vrot.slane %v138, %v142
    %v144 = vlaneseq
    %v145 = vshrl.u32 %v144, 7
    %v146 = vsub.s32 1, %v145
    %v147 = vrot.slane %v138, %v146
    %v150 = vmul.f32 %v136, %v143
    %v151 = vmul.f32 %v137, %v147
    %v152 = vld [vmem:[%s3] sm:$0x3]
    %v154 = vlaneseq
    %v155 = vshrl.u32 %v154, 7
    %v156 = vsub.s32 0, %v155
    %v157 = vrot.slane %v152, %v156
    %v158 = vlaneseq
    %v159 = vshrl.u32 %v158, 7
    %v160 = vsub.s32 1, %v159
    %v161 = vrot.slane %v152, %v160
    %v164 = vadd.f32 %v150, %v157
    %v165 = vadd.f32 %v151, %v161
    %166 = vst [vmem:[%s4] sm:$0xff] %v164
    %167 = vst [vmem:[%s4 + $0x8] sm:$0xff] %v165
  $region25: #{_lambda_.22} parent=0 // pred_fallthru
    _
  // Predicated region
  $region26: #{_lambda_.22} parent=0 // pred_check
    _
  $region27: #{_lambda_.22} parent=0 // pred_check_branch
    %169 = sbr.rel (0) target = $region29
  $region28: #{_lambda_.22} parent=0 // pred_region
    _
  $region29: #{_lambda_.22} parent=0 // pred_fallthru
    _
  // Predicated region
  $region30: #{_lambda_.22} parent=0 // pred_check
    _
  $region31: #{_lambda_.22} parent=0 // pred_check_branch
    %171 = sbr.rel (0) target = $region33
  $region32: #{_lambda_.22} parent=0 // pred_region
    _
  $region33: #{_lambda_.22} parent=0 // pred_fallthru
    _

// kernel: _lambda_.23
$region0: #{_lambda_.23}
  #allocation0 [shape = 'u32[]', space=smem, size = 0x4, offset = 0x4, fixed_abs, tag = 'smem constant byte address 0x4 - core index']
  #allocation1 [shape = 'u32[144,128]{1,0:T(1,128)}', space=vmem, size = 0x12000, scoped, tag = 'internal scratch']
  #allocation2 [shape = 'f32[8,256]{1,0:T(8,128)}', space=vmem, size = 0x2000, scoped, tag = 'scratch operand']
  %s0 = inlined_call_operand.vmem [shape: f32[8,2560], index: 0, kind: input, shape index: {}]
  %s1 = inlined_call_operand.vmem [shape: f32[2560,256], index: 1, kind: input, shape index: {}]
  %s2 = inlined_call_operand.vmem [shape: f32[1,256], index: 2, kind: input, shape index: {}]
  %s3 = inlined_call_operand.vmem [shape: f32[1,256], index: 3, kind: input, shape index: {}]
  %s4 = inlined_call_operand.vmem [shape: f32[8,256], index: 4, kind: input, shape index: {}]
  %s5 = inlined_call_operand.vmem [shape: f32[8,256], index: 5, kind: output, shape index: {}]
  %s6 = sld [smem:[#allocation0]]
  $region61: #{_lambda_.23} parent=0
    _
  %s8 = ssub.s32 1, %s6
  %s9 = scalar_select 0, %s8, %s6
  loop: start=0, step=1, limit=7
  $region2: #{_lambda_.23} parent=0 // loop_pre_header
    _
  $region3: #{_lambda_.23} parent=0 // loop_header
    %s11 = sphi 0, %s15
    %p12 = scmp.ge.s32.totalorder %s11, 7
    %s18 = sphi 0, %s37
    %s19 = sphi 0, %s33
    %s20 = sphi 0, %s29
    %s21 = sphi 0, %s18
    %s22 = sphi 0, %s19
    %s23 = sphi 0, %s20
    %s24 = sphi 0, %s21
    %s25 = sphi 0, %s22
    %s26 = sphi 0, %s23
    %s42 = sphi 0, %s44
    %s45 = sphi 0, %s42
    %s46 = sphi 0, %s45
    %s62 = sphi 0, %s46
    %s70 = sphi 0, %s72
    %s73 = sphi 0, %s70
    %s74 = sphi 0, %s73
    %s90 = sphi 0, %s74
    %s96 = sphi 0, %s98
    %s99 = sphi 0, %s96
    %s100 = sphi 0, %s99
    %s116 = sphi 0, %s100
    %s122 = sphi 0, %s124
    %s125 = sphi 0, %s122
    %s126 = sphi 0, %s125
    %s142 = sphi 0, %s126
    %s150 = sphi 0, %s152
    %s153 = sphi 0, %s150
    %s154 = sphi 0, %s153
    %s170 = sphi 0, %s154
    %s178 = sphi 0, %s180
    %s181 = sphi 0, %s178
    %s182 = sphi 0, %s181
    %s198 = sphi 0, %s182
  $region4: #{_lambda_.23} parent=0 // loop_header_branch
    %14 = sbr.rel (%p12) target = $region8
  $region5: #{_lambda_.23} parent=0 // loop_body
    %s16 = ssub.s32 %s11, 1
    %s17 = ssub.s32 %s11, 2
    %s27 = sadd.s32 1, %s20
    %p28 = scmp.ge.s32.totalorder %s27, 5
    %s29 = scalar_select %p28, 0, %s27
    %s30 = sadd.s32 1, %s19
    %s31 = scalar_select %p28, %s30, %s19
    %p32 = scmp.ge.s32.totalorder %s31, 1
    %s33 = scalar_select %p32, 0, %s31
    %s34 = sadd.s32 1, %s18
    %s35 = scalar_select %p32, %s34, %s18
    %p36 = scmp.ge.s32.totalorder %s35, 1
    %s37 = scalar_select %p36, 0, %s35
    %s38 = ssub.s32 %s18, %s37
    %s39 = ssub.s32 %s20, %s29
    %s40 = sor.u32 %s38, %s39
    %p41 = scmp.eq.s32.totalorder %s40, 0
    %s43 = sadd.s32 %s42, 1
    %s44 = scalar_select %p41, %s42, %s43
    %p47 = pneg %p41
    %p48 = scmp.eq.s32.totalorder %s11, 4
    %p49 = por %p47, %p48
    %p50 = scmp.ne.s32.totalorder %s42, %s45
    %p51 = scmp.eq.s32.totalorder %s11, 0
    %p52 = por %p50, %p51
    %p53 = scmp.ne.s32.totalorder %s42, %s45
    %p54 = scmp.eq.s32.totalorder %s16, 4
    %p55 = por %p53, %p54
    %p56 = scmp.ne.s32.totalorder %s45, %s46
    %p57 = scmp.eq.s32.totalorder %s16, 0
    %p58 = por %p56, %p57
    %p59 = scmp.ne.s32.totalorder %s45, %s46
    %p60 = scmp.eq.s32.totalorder %s17, 4
    %p61 = por %p59, %p60
    %p63 = scmp.ne.s32.totalorder %s46, %s62
    %p64 = scmp.eq.s32.totalorder %s17, 0
    %p65 = por %p63, %p64
    %s66 = ssub.s32 %s20, %s29
    %s67 = ssub.s32 %s19, %s33
    %s68 = sor.u32 %s66, %s67
    %p69 = scmp.eq.s32.totalorder %s68, 0
    %s71 = sadd.s32 %s70, 1
    %s72 = scalar_select %p69, %s70, %s71
    %p75 = pneg %p69
    %p76 = scmp.eq.s32.totalorder %s11, 4
    %p77 = por %p75, %p76
    %p78 = scmp.ne.s32.totalorder %s70, %s73
    %p79 = scmp.eq.s32.totalorder %s11, 0
    %p80 = por %p78, %p79
    %p81 = scmp.ne.s32.totalorder %s70, %s73
    %p82 = scmp.eq.s32.totalorder %s16, 4
    %p83 = por %p81, %p82
    %p84 = scmp.ne.s32.totalorder %s73, %s74
    %p85 = scmp.eq.s32.totalorder %s16, 0
    %p86 = por %p84, %p85
    %p87 = scmp.ne.s32.totalorder %s73, %s74
    %p88 = scmp.eq.s32.totalorder %s17, 4
    %p89 = por %p87, %p88
    %p91 = scmp.ne.s32.totalorder %s74, %s90
    %p92 = scmp.eq.s32.totalorder %s17, 0
    %p93 = por %p91, %p92
    %s94 = ssub.s32 %s19, %s33
    %p95 = scmp.eq.s32.totalorder %s94, 0
    %s97 = sadd.s32 %s96, 1
    %s98 = scalar_select %p95, %s96, %s97
    %p101 = pneg %p95
    %p102 = scmp.eq.s32.totalorder %s11, 4
    %p103 = por %p101, %p102
    %p104 = scmp.ne.s32.totalorder %s96, %s99
    %p105 = scmp.eq.s32.totalorder %s11, 0
    %p106 = por %p104, %p105
    %p107 = scmp.ne.s32.totalorder %s96, %s99
    %p108 = scmp.eq.s32.totalorder %s16, 4
    %p109 = por %p107, %p108
    %p110 = scmp.ne.s32.totalorder %s99, %s100
    %p111 = scmp.eq.s32.totalorder %s16, 0
    %p112 = por %p110, %p111
    %p113 = scmp.ne.s32.totalorder %s99, %s100
    %p114 = scmp.eq.s32.totalorder %s17, 4
    %p115 = por %p113, %p114
    %p117 = scmp.ne.s32.totalorder %s100, %s116
    %p118 = scmp.eq.s32.totalorder %s17, 0
    %p119 = por %p117, %p118
    %s120 = ssub.s32 %s19, %s33
    %p121 = scmp.eq.s32.totalorder %s120, 0
    %s123 = sadd.s32 %s122, 1
    %s124 = scalar_select %p121, %s122, %s123
    %p127 = pneg %p121
    %p128 = scmp.eq.s32.totalorder %s11, 4
    %p129 = por %p127, %p128
    %p130 = scmp.ne.s32.totalorder %s122, %s125
    %p131 = scmp.eq.s32.totalorder %s11, 0
    %p132 = por %p130, %p131
    %p133 = scmp.ne.s32.totalorder %s122, %s125
    %p134 = scmp.eq.s32.totalorder %s16, 4
    %p135 = por %p133, %p134
    %p136 = scmp.ne.s32.totalorder %s125, %s126
    %p137 = scmp.eq.s32.totalorder %s16, 0
    %p138 = por %p136, %p137
    %p139 = scmp.ne.s32.totalorder %s125, %s126
    %p140 = scmp.eq.s32.totalorder %s17, 4
    %p141 = por %p139, %p140
    %p143 = scmp.ne.s32.totalorder %s126, %s142
    %p144 = scmp.eq.s32.totalorder %s17, 0
    %p145 = por %p143, %p144
    %s146 = ssub.s32 %s18, %s37
    %s147 = ssub.s32 %s19, %s33
    %s148 = sor.u32 %s146, %s147
    %p149 = scmp.eq.s32.totalorder %s148, 0
    %s151 = sadd.s32 %s150, 1
    %s152 = scalar_select %p149, %s150, %s151
    %p155 = pneg %p149
    %p156 = scmp.eq.s32.totalorder %s11, 4
    %p157 = por %p155, %p156
    %p158 = scmp.ne.s32.totalorder %s150, %s153
    %p159 = scmp.eq.s32.totalorder %s11, 0
    %p160 = por %p158, %p159
    %p161 = scmp.ne.s32.totalorder %s150, %s153
    %p162 = scmp.eq.s32.totalorder %s16, 4
    %p163 = por %p161, %p162
    %p164 = scmp.ne.s32.totalorder %s153, %s154
    %p165 = scmp.eq.s32.totalorder %s16, 0
    %p166 = por %p164, %p165
    %p167 = scmp.ne.s32.totalorder %s153, %s154
    %p168 = scmp.eq.s32.totalorder %s17, 4
    %p169 = por %p167, %p168
    %p171 = scmp.ne.s32.totalorder %s154, %s170
    %p172 = scmp.eq.s32.totalorder %s17, 0
    %p173 = por %p171, %p172
    %s174 = ssub.s32 %s18, %s37
    %s175 = ssub.s32 %s19, %s33
    %s176 = sor.u32 %s174, %s175
    %p177 = scmp.eq.s32.totalorder %s176, 0
    %s179 = sadd.s32 %s178, 1
    %s180 = scalar_select %p177, %s178, %s179
    %p183 = pneg %p177
    %p184 = scmp.eq.s32.totalorder %s11, 4
    %p185 = por %p183, %p184
    %p186 = scmp.ne.s32.totalorder %s178, %s181
    %p187 = scmp.eq.s32.totalorder %s11, 0
    %p188 = por %p186, %p187
    %p189 = scmp.ne.s32.totalorder %s178, %s181
    %p190 = scmp.eq.s32.totalorder %s16, 4
    %p191 = por %p189, %p190
    %p192 = scmp.ne.s32.totalorder %s181, %s182
    %p193 = scmp.eq.s32.totalorder %s16, 0
    %p194 = por %p192, %p193
    %p195 = scmp.ne.s32.totalorder %s181, %s182
    %p196 = scmp.eq.s32.totalorder %s17, 4
    %p197 = por %p195, %p196
    %p199 = scmp.ne.s32.totalorder %s182, %s198
    %p200 = scmp.eq.s32.totalorder %s17, 0
    %p201 = por %p199, %p200
    %p202 = scmp.le.s32.totalorder 1, %s11
    %p203 = scmp.lt.s32.totalorder %s11, 6
    %p204 = pnand %p202, %p203
    %p205 = pneg %p204
    // Predicated region
    $region9: #{_lambda_.23} parent=5 // pred_check
      _
    $region10: #{_lambda_.23} parent=5 // pred_check_branch
      %207 = sbr.rel (%p204) target = $region12
    $region11: #{_lambda_.23} parent=5 // pred_region
      %s208 = ssub.s32 %s11, 1
      // Predicated region
      $region13: #{_lambda_.23} parent=11 // pred_check
        %p209 = pneg %p112
      $region14: #{_lambda_.23} parent=11 // pred_check_branch
        %211 = sbr.rel (%p209) target = $region16
      $region15: #{_lambda_.23} parent=11 // pred_region
        %s212 = smul.u32 2, %s22
        %p213 = scmp.lt.s32.totalorder %s212, 1
        %s214 = scalar_select %p213, %s212, 1
        %s215 = scalar_lea.vmem %s2, %s214
        %s216 = smul.u32 2, %s22
      $region16: #{_lambda_.23} parent=11 // pred_fallthru
        _
      // Predicated region
      $region17: #{_lambda_.23} parent=11 // pred_check
        %p217 = pneg %p138
      $region18: #{_lambda_.23} parent=11 // pred_check_branch
        %219 = sbr.rel (%p217) target = $region20
      $region19: #{_lambda_.23} parent=11 // pred_region
        %s220 = smul.u32 2, %s22
        %p221 = scmp.lt.s32.totalorder %s220, 1
        %s222 = scalar_select %p221, %s220, 1
        %s223 = scalar_lea.vmem %s3, %s222
        %s224 = smul.u32 2, %s22
      $region20: #{_lambda_.23} parent=11 // pred_fallthru
        _
      // Predicated region
      $region21: #{_lambda_.23} parent=11 // pred_check
        %p225 = pneg %p166
      $region22: #{_lambda_.23} parent=11 // pred_check_branch
        %227 = sbr.rel (%p225) target = $region24
      $region23: #{_lambda_.23} parent=11 // pred_region
        %s228 = smul.u32 2, %s22
        %p229 = scmp.lt.s32.totalorder %s21, 0
        %s230 = scalar_select %p229, %s21, 0
        %p231 = scmp.lt.s32.totalorder %s228, 1
        %s232 = scalar_select %p231, %s228, 1
        %s233 = smul.addr %s230, 2
        %s234 = sadd.s32 %s232, %s233
        %s235 = smul.addr %s234, 8
        %s236 = scalar_lea.vmem %s4, %s235
        %s237 = smul.u32 2, %s22
      $region24: #{_lambda_.23} parent=11 // pred_fallthru
        _
    $region12: #{_lambda_.23} parent=5 // pred_fallthru
      _
    %p238 = scmp.lt.s32.totalorder %s11, 5
    // Predicated region
    $region25: #{_lambda_.23} parent=5 // pred_check
      %p239 = pneg %p238
    $region26: #{_lambda_.23} parent=5 // pred_check_branch
      %241 = sbr.rel (%p239) target = $region28
    $region27: #{_lambda_.23} parent=5 // pred_region
      // Predicated region
      $region29: #{_lambda_.23} parent=27 // pred_check
        %p242 = pneg %p52
      $region30: #{_lambda_.23} parent=27 // pred_check_branch
        %244 = sbr.rel (%p242) target = $region32
      $region31: #{_lambda_.23} parent=27 // pred_region
        %s245 = smul.u32 4, %s20
        %p246 = scmp.lt.s32.totalorder %s18, 0
        %s247 = scalar_select %p246, %s18, 0
        %p248 = scmp.lt.s32.totalorder %s245, 19
        %s249 = scalar_select %p248, %s245, 19
        %s250 = smul.addr %s247, 20
        %s251 = sadd.s32 %s249, %s250
        %s252 = smul.addr %s251, 8
        %s253 = scalar_lea.vmem %s0, %s252
        %s254 = smul.u32 4, %s20
      $region32: #{_lambda_.23} parent=27 // pred_fallthru
        _
      // Predicated region
      $region33: #{_lambda_.23} parent=27 // pred_check
        %p255 = pneg %p80
      $region34: #{_lambda_.23} parent=27 // pred_check_branch
        %257 = sbr.rel (%p255) target = $region36
      $region35: #{_lambda_.23} parent=27 // pred_region
        %s258 = smul.u32 64, %s20
        %s259 = smul.u32 2, %s19
        %p260 = scmp.lt.s32.totalorder %s258, 319
        %s261 = scalar_select %p260, %s258, 319
        %p262 = scmp.lt.s32.totalorder %s259, 1
        %s263 = scalar_select %p262, %s259, 1
        %s264 = smul.addr %s261, 2
        %s265 = sadd.s32 %s263, %s264
        %s266 = smul.addr %s265, 8
        %s267 = scalar_lea.vmem %s1, %s266
        %s268 = smul.u32 64, %s20
        %s269 = smul.u32 2, %s19
      $region36: #{_lambda_.23} parent=27 // pred_fallthru
        _
    $region28: #{_lambda_.23} parent=5 // pred_fallthru
      _
    %p270 = scmp.le.s32.totalorder 1, %s11
    %p271 = scmp.lt.s32.totalorder %s11, 6
    %p272 = pnand %p270, %p271
    %p273 = pneg %p272
    // Predicated region
    $region37: #{_lambda_.23} parent=5 // pred_check
      _
    $region38: #{_lambda_.23} parent=5 // pred_check_branch
      %275 = sbr.rel (%p272) target = $region40
    $region39: #{_lambda_.23} parent=5 // pred_region
      %s276 = ssub.s32 %s11, 1
      %s277 = smul.u32 4, %s23
      %p278 = scmp.lt.s32.totalorder %s21, 0
      %s279 = scalar_select %p278, %s21, 0
      %p280 = scmp.lt.s32.totalorder %s277, 19
      %s281 = scalar_select %p280, %s277, 19
      %s282 = smul.addr %s279, 20
      %s283 = sadd.s32 %s281, %s282
      %s284 = smul.addr %s283, 8
      %s285 = scalar_lea.vmem %s0, %s284
      %p286 = pneg %p58
      %p287 = pneg %p55
      %s288 = smul.u32 64, %s23
      %s289 = smul.u32 2, %s22
      %p290 = scmp.lt.s32.totalorder %s288, 319
      %s291 = scalar_select %p290, %s288, 319
      %p292 = scmp.lt.s32.totalorder %s289, 1
      %s293 = scalar_select %p292, %s289, 1
      %s294 = smul.addr %s291, 2
      %s295 = sadd.s32 %s293, %s294
      %s296 = smul.addr %s295, 8
      %s297 = scalar_lea.vmem %s1, %s296
      %p298 = pneg %p86
      %p299 = pneg %p83
      %s300 = smul.u32 2, %s22
      %p301 = scmp.lt.s32.totalorder %s300, 1
      %s302 = scalar_select %p301, %s300, 1
      %s303 = scalar_lea.vmem %s2, %s302
      %p304 = pneg %p112
      %p305 = pneg %p109
      %s306 = smul.u32 2, %s22
      %p307 = scmp.lt.s32.totalorder %s306, 1
      %s308 = scalar_select %p307, %s306, 1
      %s309 = scalar_lea.vmem %s3, %s308
      %p310 = pneg %p138
      %p311 = pneg %p135
      %s312 = smul.u32 2, %s22
      %p313 = scmp.lt.s32.totalorder %s21, 0
      %s314 = scalar_select %p313, %s21, 0
      %p315 = scmp.lt.s32.totalorder %s312, 1
      %s316 = scalar_select %p315, %s312, 1
      %s317 = smul.addr %s314, 2
      %s318 = sadd.s32 %s316, %s317
      %s319 = smul.addr %s318, 8
      %s320 = scalar_lea.vmem %s4, %s319
      %p321 = pneg %p166
      %p322 = pneg %p163
      %p323 = pneg %p194
      %p324 = pneg %p191
      %s325 = smul.u32 2, %s22
      %p326 = scmp.lt.s32.totalorder %s21, 0
      %s327 = scalar_select %p326, %s21, 0
      %p328 = scmp.lt.s32.totalorder %s325, 1
      %s329 = scalar_select %p328, %s325, 1
      %s330 = smul.addr %s327, 2
      %s331 = sadd.s32 %s329, %s330
      %s332 = smul.addr %s331, 8
      %s333 = scalar_lea.vmem %s5, %s332
      %s334 = smul.u32 4, %s23
      %p335 = scmp.lt.s32.totalorder %s21, 0
      %s336 = scalar_select %p335, %s21, 0
      %p337 = scmp.lt.s32.totalorder %s334, 19
      %s338 = scalar_select %p337, %s334, 19
      %s339 = smul.addr %s336, 20
      %s340 = sadd.s32 %s338, %s339
      %s341 = smul.addr %s340, 8
      %s342 = scalar_lea.vmem %s0, %s341
      %s343 = smul.u32 4, %s23
      %s344 = smul.u32 64, %s23
      %s345 = smul.u32 2, %s22
      %p346 = scmp.lt.s32.totalorder %s344, 319
      %s347 = scalar_select %p346, %s344, 319
      %p348 = scmp.lt.s32.totalorder %s345, 1
      %s349 = scalar_select %p348, %s345, 1
      %s350 = smul.addr %s347, 2
      %s351 = sadd.s32 %s349, %s350
      %s352 = smul.addr %s351, 8
      %s353 = scalar_lea.vmem %s1, %s352
      %s354 = smul.u32 64, %s23
      %s355 = smul.u32 2, %s22
      %s356 = smul.u32 2, %s22
      %p357 = scmp.lt.s32.totalorder %s356, 1
      %s358 = scalar_select %p357, %s356, 1
      %s359 = scalar_lea.vmem %s2, %s358
      %s360 = smul.u32 2, %s22
      %s361 = smul.u32 2, %s22
      %p362 = scmp.lt.s32.totalorder %s361, 1
      %s363 = scalar_select %p362, %s361, 1
      %s364 = scalar_lea.vmem %s3, %s363
      %s365 = smul.u32 2, %s22
      %s366 = smul.u32 2, %s22
      %p367 = scmp.lt.s32.totalorder %s21, 0
      %s368 = scalar_select %p367, %s21, 0
      %p369 = scmp.lt.s32.totalorder %s366, 1
      %s370 = scalar_select %p369, %s366, 1
      %s371 = smul.addr %s368, 2
      %s372 = sadd.s32 %s370, %s371
      %s373 = smul.addr %s372, 8
      %s374 = scalar_lea.vmem %s4, %s373
      %s375 = smul.u32 2, %s22
      %s376 = smul.u32 2, %s22
      %p377 = scmp.lt.s32.totalorder %s21, 0
      %s378 = scalar_select %p377, %s21, 0
      %p379 = scmp.lt.s32.totalorder %s376, 1
      %s380 = scalar_select %p379, %s376, 1
      %s381 = smul.addr %s378, 2
      %s382 = sadd.s32 %s380, %s381
      %s383 = smul.addr %s382, 8
      %s384 = scalar_lea.vmem %s5, %s383
      %s385 = smul.u32 2, %s22
      %p386 = scmp.eq.s32.totalorder %s23, 0
      // Predicated region
      $region41: #{_lambda_.23} parent=39 // pred_check
        %p387 = pneg %p386
      $region42: #{_lambda_.23} parent=39 // pred_check_branch
        %389 = sbr.rel (%p387) target = $region44
      $region43: #{_lambda_.23} parent=39 // pred_region
        %390 = vst [vmem:[#allocation2] sm:$0xff] 0.0
        %391 = vst [vmem:[#allocation2 + $0x8] sm:$0xff] 0.0
      $region44: #{_lambda_.23} parent=39 // pred_fallthru
        _
      %v392 = vld [vmem:[#allocation2] sm:$0xff]
      %v393 = vld [vmem:[#allocation2 + $0x8] sm:$0xff]
      %v394 = vld [vmem:[%s342] sm:$0xff]
      %v395 = vld [vmem:[%s342 + $0x8] sm:$0xff]
      %v396 = vld [vmem:[%s342 + $0x10] sm:$0xff]
      %v397 = vld [vmem:[%s342 + $0x18] sm:$0xff]
      %v398 = vld [vmem:[%s353] sm:$0xff]
      %v399 = vld [vmem:[%s353 + $0x8] sm:$0xff]
      %v400 = vld [vmem:[%s353 + $0x10] sm:$0xff]
      %v401 = vld [vmem:[%s353 + $0x18] sm:$0xff]
      %v402 = vld [vmem:[%s353 + $0x20] sm:$0xff]
      %v403 = vld [vmem:[%s353 + $0x28] sm:$0xff]
      %v404 = vld [vmem:[%s353 + $0x30] sm:$0xff]
      %v405 = vld [vmem:[%s353 + $0x38] sm:$0xff]
      %v406 = vld [vmem:[%s353 + $0x40] sm:$0xff]
      %v407 = vld [vmem:[%s353 + $0x48] sm:$0xff]
      %v408 = vld [vmem:[%s353 + $0x50] sm:$0xff]
      %v409 = vld [vmem:[%s353 + $0x58] sm:$0xff]
      %v410 = vld [vmem:[%s353 + $0x60] sm:$0xff]
      %v411 = vld [vmem:[%s353 + $0x68] sm:$0xff]
      %v412 = vld [vmem:[%s353 + $0x70] sm:$0xff]
      %v413 = vld [vmem:[%s353 + $0x78] sm:$0xff]
      %v414 = vld [vmem:[%s353 + $0x80] sm:$0xff]
      %v415 = vld [vmem:[%s353 + $0x88] sm:$0xff]
      %v416 = vld [vmem:[%s353 + $0x90] sm:$0xff]
      %v417 = vld [vmem:[%s353 + $0x98] sm:$0xff]
      %v418 = vld [vmem:[%s353 + $0xa0] sm:$0xff]
      %v419 = vld [vmem:[%s353 + $0xa8] sm:$0xff]
      %v420 = vld [vmem:[%s353 + $0xb0] sm:$0xff]
      %v421 = vld [vmem:[%s353 + $0xb8] sm:$0xff]
      %v422 = vld [vmem:[%s353 + $0xc0] sm:$0xff]
      %v423 = vld [vmem:[%s353 + $0xc8] sm:$0xff]
      %v424 = vld [vmem:[%s353 + $0xd0] sm:$0xff]
      %v425 = vld [vmem:[%s353 + $0xd8] sm:$0xff]
      %v426 = vld [vmem:[%s353 + $0xe0] sm:$0xff]
      %v427 = vld [vmem:[%s353 + $0xe8] sm:$0xff]
      %v428 = vld [vmem:[%s353 + $0xf0] sm:$0xff]
      %v429 = vld [vmem:[%s353 + $0xf8] sm:$0xff]
      %v430 = vld [vmem:[%s353 + $0x100] sm:$0xff]
      %v431 = vld [vmem:[%s353 + $0x108] sm:$0xff]
      %v432 = vld [vmem:[%s353 + $0x110] sm:$0xff]
      %v433 = vld [vmem:[%s353 + $0x118] sm:$0xff]
      %v434 = vld [vmem:[%s353 + $0x120] sm:$0xff]
      %v435 = vld [vmem:[%s353 + $0x128] sm:$0xff]
      %v436 = vld [vmem:[%s353 + $0x130] sm:$0xff]
      %v437 = vld [vmem:[%s353 + $0x138] sm:$0xff]
      %v438 = vld [vmem:[%s353 + $0x140] sm:$0xff]
      %v439 = vld [vmem:[%s353 + $0x148] sm:$0xff]
      %v440 = vld [vmem:[%s353 + $0x150] sm:$0xff]
      %v441 = vld [vmem:[%s353 + $0x158] sm:$0xff]
      %v442 = vld [vmem:[%s353 + $0x160] sm:$0xff]
      %v443 = vld [vmem:[%s353 + $0x168] sm:$0xff]
      %v444 = vld [vmem:[%s353 + $0x170] sm:$0xff]
      %v445 = vld [vmem:[%s353 + $0x178] sm:$0xff]
      %v446 = vld [vmem:[%s353 + $0x180] sm:$0xff]
      %v447 = vld [vmem:[%s353 + $0x188] sm:$0xff]
      %v448 = vld [vmem:[%s353 + $0x190] sm:$0xff]
      %v449 = vld [vmem:[%s353 + $0x198] sm:$0xff]
      %v450 = vld [vmem:[%s353 + $0x1a0] sm:$0xff]
      %v451 = vld [vmem:[%s353 + $0x1a8] sm:$0xff]
      %v452 = vld [vmem:[%s353 + $0x1b0] sm:$0xff]
      %v453 = vld [vmem:[%s353 + $0x1b8] sm:$0xff]
      %v454 = vld [vmem:[%s353 + $0x1c0] sm:$0xff]
      %v455 = vld [vmem:[%s353 + $0x1c8] sm:$0xff]
      %v456 = vld [vmem:[%s353 + $0x1d0] sm:$0xff]
      %v457 = vld [vmem:[%s353 + $0x1d8] sm:$0xff]
      %v458 = vld [vmem:[%s353 + $0x1e0] sm:$0xff]
      %v459 = vld [vmem:[%s353 + $0x1e8] sm:$0xff]
      %v460 = vld [vmem:[%s353 + $0x1f0] sm:$0xff]
      %v461 = vld [vmem:[%s353 + $0x1f8] sm:$0xff]
      %v462 = vld [vmem:[%s353 + $0x200] sm:$0xff]
      %v463 = vld [vmem:[%s353 + $0x208] sm:$0xff]
      %v464 = vld [vmem:[%s353 + $0x210] sm:$0xff]
      %v465 = vld [vmem:[%s353 + $0x218] sm:$0xff]
      %v466 = vld [vmem:[%s353 + $0x220] sm:$0xff]
      %v467 = vld [vmem:[%s353 + $0x228] sm:$0xff]
      %v468 = vld [vmem:[%s353 + $0x230] sm:$0xff]
      %v469 = vld [vmem:[%s353 + $0x238] sm:$0xff]
      %v470 = vld [vmem:[%s353 + $0x240] sm:$0xff]
      %v471 = vld [vmem:[%s353 + $0x248] sm:$0xff]
      %v472 = vld [vmem:[%s353 + $0x250] sm:$0xff]
      %v473 = vld [vmem:[%s353 + $0x258] sm:$0xff]
      %v474 = vld [vmem:[%s353 + $0x260] sm:$0xff]
      %v475 = vld [vmem:[%s353 + $0x268] sm:$0xff]
      %v476 = vld [vmem:[%s353 + $0x270] sm:$0xff]
      %v477 = vld [vmem:[%s353 + $0x278] sm:$0xff]
      %v478 = vld [vmem:[%s353 + $0x280] sm:$0xff]
      %v479 = vld [vmem:[%s353 + $0x288] sm:$0xff]
      %v480 = vld [vmem:[%s353 + $0x290] sm:$0xff]
      %v481 = vld [vmem:[%s353 + $0x298] sm:$0xff]
      %v482 = vld [vmem:[%s353 + $0x2a0] sm:$0xff]
      %v483 = vld [vmem:[%s353 + $0x2a8] sm:$0xff]
      %v484 = vld [vmem:[%s353 + $0x2b0] sm:$0xff]
      %v485 = vld [vmem:[%s353 + $0x2b8] sm:$0xff]
      %v486 = vld [vmem:[%s353 + $0x2c0] sm:$0xff]
      %v487 = vld [vmem:[%s353 + $0x2c8] sm:$0xff]
      %v488 = vld [vmem:[%s353 + $0x2d0] sm:$0xff]
      %v489 = vld [vmem:[%s353 + $0x2d8] sm:$0xff]
      %v490 = vld [vmem:[%s353 + $0x2e0] sm:$0xff]
      %v491 = vld [vmem:[%s353 + $0x2e8] sm:$0xff]
      %v492 = vld [vmem:[%s353 + $0x2f0] sm:$0xff]
      %v493 = vld [vmem:[%s353 + $0x2f8] sm:$0xff]
      %v494 = vld [vmem:[%s353 + $0x300] sm:$0xff]
      %v495 = vld [vmem:[%s353 + $0x308] sm:$0xff]
      %v496 = vld [vmem:[%s353 + $0x310] sm:$0xff]
      %v497 = vld [vmem:[%s353 + $0x318] sm:$0xff]
      %v498 = vld [vmem:[%s353 + $0x320] sm:$0xff]
      %v499 = vld [vmem:[%s353 + $0x328] sm:$0xff]
      %v500 = vld [vmem:[%s353 + $0x330] sm:$0xff]
      %v501 = vld [vmem:[%s353 + $0x338] sm:$0xff]
      %v502 = vld [vmem:[%s353 + $0x340] sm:$0xff]
      %v503 = vld [vmem:[%s353 + $0x348] sm:$0xff]
      %v504 = vld [vmem:[%s353 + $0x350] sm:$0xff]
      %v505 = vld [vmem:[%s353 + $0x358] sm:$0xff]
      %v506 = vld [vmem:[%s353 + $0x360] sm:$0xff]
      %v507 = vld [vmem:[%s353 + $0x368] sm:$0xff]
      %v508 = vld [vmem:[%s353 + $0x370] sm:$0xff]
      %v509 = vld [vmem:[%s353 + $0x378] sm:$0xff]
      %v510 = vld [vmem:[%s353 + $0x380] sm:$0xff]
      %v511 = vld [vmem:[%s353 + $0x388] sm:$0xff]
      %v512 = vld [vmem:[%s353 + $0x390] sm:$0xff]
      %v513 = vld [vmem:[%s353 + $0x398] sm:$0xff]
      %v514 = vld [vmem:[%s353 + $0x3a0] sm:$0xff]
      %v515 = vld [vmem:[%s353 + $0x3a8] sm:$0xff]
      %v516 = vld [vmem:[%s353 + $0x3b0] sm:$0xff]
      %v517 = vld [vmem:[%s353 + $0x3b8] sm:$0xff]
      %v518 = vld [vmem:[%s353 + $0x3c0] sm:$0xff]
      %v519 = vld [vmem:[%s353 + $0x3c8] sm:$0xff]
      %v520 = vld [vmem:[%s353 + $0x3d0] sm:$0xff]
      %v521 = vld [vmem:[%s353 + $0x3d8] sm:$0xff]
      %v522 = vld [vmem:[%s353 + $0x3e0] sm:$0xff]
      %v523 = vld [vmem:[%s353 + $0x3e8] sm:$0xff]
      %v524 = vld [vmem:[%s353 + $0x3f0] sm:$0xff]
      %v525 = vld [vmem:[%s353 + $0x3f8] sm:$0xff]
      %526 = vmatprep.subr.mxu0 %v429
      %527 = vmatpush1.msra.mxu0 %v428
      %528 = vmatprep.subr.mxu0 %v427
      %529 = vmatpush1.msra.mxu0 %v426
      %530 = vmatprep.subr.mxu0 %v425
      %531 = vmatpush1.msra.mxu0 %v424
      %532 = vmatprep.subr.mxu0 %v423
      %533 = vmatpush1.msra.mxu0 %v422
      %534 = vmatprep.subr.mxu0 %v421
      %535 = vmatpush1.msra.mxu0 %v420
      %536 = vmatprep.subr.mxu0 %v419
      %537 = vmatpush1.msra.mxu0 %v418
      %538 = vmatprep.subr.mxu0 %v417
      %539 = vmatpush1.msra.mxu0 %v416
      %540 = vmatprep.subr.mxu0 %v415
      %541 = vmatpush1.msra.mxu0 %v414
      %542 = vmatprep.subr.mxu0 %v413
      %543 = vmatpush1.msra.mxu0 %v412
      %544 = vmatprep.subr.mxu0 %v411
      %545 = vmatpush1.msra.mxu0 %v410
      %546 = vmatprep.subr.mxu0 %v409
      %547 = vmatpush1.msra.mxu0 %v408
      %548 = vmatprep.subr.mxu0 %v407
      %549 = vmatpush1.msra.mxu0 %v406
      %550 = vmatprep.subr.mxu0 %v405
      %551 = vmatpush1.msra.mxu0 %v404
      %552 = vmatprep.subr.mxu0 %v403
      %553 = vmatpush1.msra.mxu0 %v402
      %554 = vmatprep.subr.mxu0 %v401
      %555 = vmatpush1.msra.mxu0 %v400
      %556 = vmatprep.subr.mxu0 %v399
      %557 = vmatpush1.msra.mxu0 %v398
      %558 = vmatprep.subr.mxu0 %v461
      %559 = vmatpush2.msra.mxu0 %v460
      %560 = vmatprep.subr.mxu0 %v459
      %561 = vmatpush2.msra.mxu0 %v458
      %562 = vmatprep.subr.mxu0 %v457
      %563 = vmatpush2.msra.mxu0 %v456
      %564 = vmatprep.subr.mxu0 %v455
      %565 = vmatpush2.msra.mxu0 %v454
      %566 = vmatprep.subr.mxu0 %v453
      %567 = vmatpush2.msra.mxu0 %v452
      %568 = vmatprep.subr.mxu0 %v451
      %569 = vmatpush2.msra.mxu0 %v450
      %570 = vmatprep.subr.mxu0 %v449
      %571 = vmatpush2.msra.mxu0 %v448
      %572 = vmatprep.subr.mxu0 %v447
      %573 = vmatpush2.msra.mxu0 %v446
      %574 = vmatprep.subr.mxu0 %v445
      %575 = vmatpush2.msra.mxu0 %v444
      %576 = vmatprep.subr.mxu0 %v443
      %577 = vmatpush2.msra.mxu0 %v442
      %578 = vmatprep.subr.mxu0 %v441
      %579 = vmatpush2.msra.mxu0 %v440
      %580 = vmatprep.subr.mxu0 %v439
      %581 = vmatpush2.msra.mxu0 %v438
      %582 = vmatprep.subr.mxu0 %v437
      %583 = vmatpush2.msra.mxu0 %v436
      %584 = vmatprep.subr.mxu0 %v435
      %585 = vmatpush2.msra.mxu0 %v434
      %586 = vmatprep.subr.mxu0 %v433
      %587 = vmatpush2.msra.mxu0 %v432
      %588 = vmatprep.subr.mxu0 %v431
      %589 = vmatpush2.msra.mxu0 %v430
      %590 = vmatprep.mubr.f32.mxu0 %v395
      %591 = vmatmul.mubr.f32.gmra.mxu0 %v394
      %v592 = vpop.f32.mrf.mxu0
      %v593 = vadd.f32 0.0, %v592
      %v594 = vpop.f32.mrf.mxu0
      %v595 = vadd.f32 0.0, %v594
      %596 = vdwg.mxu0
      %597 = vmatprep.subr.mxu0 %v493
      %598 = vmatpush1.msra.mxu0 %v492
      %599 = vmatprep.subr.mxu0 %v491
      %600 = vmatpush1.msra.mxu0 %v490
      %601 = vmatprep.subr.mxu0 %v489
      %602 = vmatpush1.msra.mxu0 %v488
      %603 = vmatprep.subr.mxu0 %v487
      %604 = vmatpush1.msra.mxu0 %v486
      %605 = vmatprep.subr.mxu0 %v485
      %606 = vmatpush1.msra.mxu0 %v484
      %607 = vmatprep.subr.mxu0 %v483
      %608 = vmatpush1.msra.mxu0 %v482
      %609 = vmatprep.subr.mxu0 %v481
      %610 = vmatpush1.msra.mxu0 %v480
      %611 = vmatprep.subr.mxu0 %v479
      %612 = vmatpush1.msra.mxu0 %v478
      %613 = vmatprep.subr.mxu0 %v477
      %614 = vmatpush1.msra.mxu0 %v476
      %615 = vmatprep.subr.mxu0 %v475
      %616 = vmatpush1.msra.mxu0 %v474
      %617 = vmatprep.subr.mxu0 %v473
      %618 = vmatpush1.msra.mxu0 %v472
      %619 = vmatprep.subr.mxu0 %v471
      %620 = vmatpush1.msra.mxu0 %v470
      %621 = vmatprep.subr.mxu0 %v469
      %622 = vmatpush1.msra.mxu0 %v468
      %623 = vmatprep.subr.mxu0 %v467
      %624 = vmatpush1.msra.mxu0 %v466
      %625 = vmatprep.subr.mxu0 %v465
      %626 = vmatpush1.msra.mxu0 %v464
      %627 = vmatprep.subr.mxu0 %v463
      %628 = vmatpush1.msra.mxu0 %v462
      %629 = vmatprep.subr.mxu0 %v525
      %630 = vmatpush2.msra.mxu0 %v524
      %631 = vmatprep.subr.mxu0 %v523
      %632 = vmatpush2.msra.mxu0 %v522
      %633 = vmatprep.subr.mxu0 %v521
      %634 = vmatpush2.msra.mxu0 %v520
      %635 = vmatprep.subr.mxu0 %v519
      %636 = vmatpush2.msra.mxu0 %v518
      %637 = vmatprep.subr.mxu0 %v517
      %638 = vmatpush2.msra.mxu0 %v516
      %639 = vmatprep.subr.mxu0 %v515
      %640 = vmatpush2.msra.mxu0 %v514
      %641 = vmatprep.subr.mxu0 %v513
      %642 = vmatpush2.msra.mxu0 %v512
      %643 = vmatprep.subr.mxu0 %v511
      %644 = vmatpush2.msra.mxu0 %v510
      %645 = vmatprep.subr.mxu0 %v509
      %646 = vmatpush2.msra.mxu0 %v508
      %647 = vmatprep.subr.mxu0 %v507
      %648 = vmatpush2.msra.mxu0 %v506
      %649 = vmatprep.subr.mxu0 %v505
      %650 = vmatpush2.msra.mxu0 %v504
      %651 = vmatprep.subr.mxu0 %v503
      %652 = vmatpush2.msra.mxu0 %v502
      %653 = vmatprep.subr.mxu0 %v501
      %654 = vmatpush2.msra.mxu0 %v500
      %655 = vmatprep.subr.mxu0 %v499
      %656 = vmatpush2.msra.mxu0 %v498
      %657 = vmatprep.subr.mxu0 %v497
      %658 = vmatpush2.msra.mxu0 %v496
      %659 = vmatprep.subr.mxu0 %v495
      %660 = vmatpush2.msra.mxu0 %v494
      %661 = vmatprep.mubr.f32.mxu0 %v397
      %662 = vmatmul.mubr.f32.gmra.mxu0 %v396
      %v663 = vpop.f32.mrf.mxu0
      %v664 = vadd.f32 %v593, %v663
      %v665 = vpop.f32.mrf.mxu0
      %v666 = vadd.f32 %v595, %v665
      %667 = vdwg.mxu0
      %v668 = vadd.f32 %v392, %v664
      %v669 = vadd.f32 %v393, %v666
      %670 = vst [vmem:[#allocation2] sm:$0xff] %v668
      %671 = vst [vmem:[#allocation2 + $0x8] sm:$0xff] %v669
      %p672 = scmp.eq.s32.totalorder %s23, 4
      // Predicated region
      $region45: #{_lambda_.23} parent=39 // pred_check
        %p673 = pneg %p672
      $region46: #{_lambda_.23} parent=39 // pred_check_branch
        %675 = sbr.rel (%p673) target = $region48
      $region47: #{_lambda_.23} parent=39 // pred_region
        %v676 = vld [vmem:[#allocation2] sm:$0xff]
        %v677 = vld [vmem:[#allocation2 + $0x8] sm:$0xff]
        %v678 = vld [vmem:[%s359] sm:$0x3]
        %v680 = vlaneseq
        %v681 = vshrl.u32 %v680, 7
        %v682 = vsub.s32 0, %v681
        %v683 = vrot.slane %v678, %v682
        %v684 = vlaneseq
        %v685 = vshrl.u32 %v684, 7
        %v686 = vsub.s32 1, %v685
        %v687 = vrot.slane %v678, %v686
        %v690 = vmul.f32 %v676, %v683
        %v691 = vmul.f32 %v677, %v687
        %v692 = vld [vmem:[%s364] sm:$0x3]
        %v694 = vlaneseq
        %v695 = vshrl.u32 %v694, 7
        %v696 = vsub.s32 0, %v695
        %v697 = vrot.slane %v692, %v696
        %v698 = vlaneseq
        %v699 = vshrl.u32 %v698, 7
        %v700 = vsub.s32 1, %v699
        %v701 = vrot.slane %v692, %v700
        %v704 = vadd.f32 %v690, %v697
        %v705 = vadd.f32 %v691, %v701
        %v706 = vld [vmem:[%s374] sm:$0xff]
        %v707 = vld [vmem:[%s374 + $0x8] sm:$0xff]
        %v708 = vadd.f32 %v704, %v706
        %v709 = vadd.f32 %v705, %v707
        %v710 = vmax.f32 %v708, 0.0
        %v711 = vmax.f32 %v709, 0.0
        %712 = vst [vmem:[%s384] sm:$0xff] %v710
        %713 = vst [vmem:[%s384 + $0x8] sm:$0xff] %v711
      $region48: #{_lambda_.23} parent=39 // pred_fallthru
        _
      %s714 = smul.u32 2, %s22
      %p715 = scmp.lt.s32.totalorder %s21, 0
      %s716 = scalar_select %p715, %s21, 0
      %p717 = scmp.lt.s32.totalorder %s714, 1
      %s718 = scalar_select %p717, %s714, 1
      %s719 = smul.addr %s716, 2
      %s720 = sadd.s32 %s718, %s719
      %s721 = smul.addr %s720, 8
      %s722 = scalar_lea.vmem %s5, %s721
      // Predicated region
      $region49: #{_lambda_.23} parent=39 // pred_check
        %p723 = pneg %p191
      $region50: #{_lambda_.23} parent=39 // pred_check_branch
        %725 = sbr.rel (%p723) target = $region52
      $region51: #{_lambda_.23} parent=39 // pred_region
        %s726 = smul.u32 2, %s22
      $region52: #{_lambda_.23} parent=39 // pred_fallthru
        _
      // Predicated region
      $region53: #{_lambda_.23} parent=39 // pred_check
        %p727 = pneg %p191
      $region54: #{_lambda_.23} parent=39 // pred_check_branch
        %729 = sbr.rel (%p727) target = $region56
      $region55: #{_lambda_.23} parent=39 // pred_region
        %s730 = smul.u32 2, %s22
        %p731 = scmp.lt.s32.totalorder %s21, 0
        %s732 = scalar_select %p731, %s21, 0
        %p733 = scmp.lt.s32.totalorder %s730, 1
        %s734 = scalar_select %p733, %s730, 1
        %s735 = smul.addr %s732, 2
        %s736 = sadd.s32 %s734, %s735
        %s737 = smul.addr %s736, 8
        %s738 = scalar_lea.vmem %s5, %s737
      $region56: #{_lambda_.23} parent=39 // pred_fallthru
        _
    $region40: #{_lambda_.23} parent=5 // pred_fallthru
      _
    %p739 = scmp.le.s32.totalorder 2, %s11
    // Predicated region
    $region57: #{_lambda_.23} parent=5 // pred_check
      %p740 = pneg %p739
    $region58: #{_lambda_.23} parent=5 // pred_check_branch
      %742 = sbr.rel (%p740) target = $region60
    $region59: #{_lambda_.23} parent=5 // pred_region
      %s743 = ssub.s32 %s11, 2
    $region60: #{_lambda_.23} parent=5 // pred_fallthru
      _
  $region6: #{_lambda_.23} parent=0 // loop_footer
    %s15 = sadd.s32 1, %s11
  $region7: #{_lambda_.23} parent=0 // loop_footer_branch
    %10 = sbr.rel target = $region3
  $region8: #{_lambda_.23} parent=0 // loop_exit
    _

// kernel: _lambda_.24
$region0: #{_lambda_.24}
  #allocation0 [shape = 'u32[]', space=smem, size = 0x4, offset = 0x4, fixed_abs, tag = 'smem constant byte address 0x4 - core index']
  #allocation1 [shape = 'u32[144,128]{1,0:T(1,128)}', space=vmem, size = 0x12000, scoped, tag = 'internal scratch']
  #allocation2 [shape = 'f32[8,256]{1,0:T(8,128)}', space=vmem, size = 0x2000, scoped, tag = 'scratch operand']
  %s0 = inlined_call_operand.vmem [shape: f32[8,2560], index: 0, kind: input, shape index: {}]
  %s1 = inlined_call_operand.vmem [shape: f32[2560,512], index: 1, kind: input, shape index: {}]
  %s2 = inlined_call_operand.vmem [shape: f32[1,512], index: 2, kind: input, shape index: {}]
  %s3 = inlined_call_operand.vmem [shape: f32[1,512], index: 3, kind: input, shape index: {}]
  %s4 = inlined_call_operand.vmem [shape: f32[8,512], index: 4, kind: output, shape index: {}]
  %s5 = sld [smem:[#allocation0]]
  $region80: #{_lambda_.24} parent=0
    _
  %s7 = ssub.s32 1, %s5
  %s8 = scalar_select 0, %s7, %s5
  $region1: #{_lambda_.24} parent=0
    #allocation3 [shape = 'u8[1048576]{0}', space=vmem, size = 0x100000, scoped, tag = 'input window, operand 1']
    loop: start=0, step=1, limit=12
    $region2: #{_lambda_.24} parent=1 // loop_pre_header
      _
    $region3: #{_lambda_.24} parent=1 // loop_header
      %s10 = sphi 0, %s14
      %p11 = scmp.ge.s32.totalorder %s10, 12
      %s17 = sphi 0, %s36
      %s18 = sphi 0, %s32
      %s19 = sphi 0, %s28
      %s20 = sphi 0, %s17
      %s21 = sphi 0, %s18
      %s22 = sphi 0, %s19
      %s23 = sphi 0, %s20
      %s24 = sphi 0, %s21
      %s25 = sphi 0, %s22
      %s41 = sphi 0, %s43
      %s44 = sphi 0, %s41
      %s45 = sphi 0, %s44
      %s61 = sphi 0, %s45
      %s69 = sphi 0, %s71
      %s72 = sphi 0, %s69
      %s73 = sphi 0, %s72
      %s89 = sphi 0, %s73
      %s95 = sphi 0, %s97
      %s98 = sphi 0, %s95
      %s99 = sphi 0, %s98
      %s115 = sphi 0, %s99
      %s121 = sphi 0, %s123
      %s124 = sphi 0, %s121
      %s125 = sphi 0, %s124
      %s141 = sphi 0, %s125
      %s149 = sphi 0, %s151
      %s152 = sphi 0, %s149
      %s153 = sphi 0, %s152
      %s169 = sphi 0, %s153
    $region4: #{_lambda_.24} parent=1 // loop_header_branch
      %13 = sbr.rel (%p11) target = $region8
    $region5: #{_lambda_.24} parent=1 // loop_body
      %s15 = ssub.s32 %s10, 1
      %s16 = ssub.s32 %s10, 2
      %s26 = sadd.s32 1, %s19
      %p27 = scmp.ge.s32.totalorder %s26, 5
      %s28 = scalar_select %p27, 0, %s26
      %s29 = sadd.s32 1, %s18
      %s30 = scalar_select %p27, %s29, %s18
      %p31 = scmp.ge.s32.totalorder %s30, 2
      %s32 = scalar_select %p31, 0, %s30
      %s33 = sadd.s32 1, %s17
      %s34 = scalar_select %p31, %s33, %s17
      %p35 = scmp.ge.s32.totalorder %s34, 1
      %s36 = scalar_select %p35, 0, %s34
      %s37 = ssub.s32 %s17, %s36
      %s38 = ssub.s32 %s19, %s28
      %s39 = sor.u32 %s37, %s38
      %p40 = scmp.eq.s32.totalorder %s39, 0
      %s42 = sadd.s32 %s41, 1
      %s43 = scalar_select %p40, %s41, %s42
      %p46 = pneg %p40
      %p47 = scmp.eq.s32.totalorder %s10, 9
      %p48 = por %p46, %p47
      %p49 = scmp.ne.s32.totalorder %s41, %s44
      %p50 = scmp.eq.s32.totalorder %s10, 0
      %p51 = por %p49, %p50
      %p52 = scmp.ne.s32.totalorder %s41, %s44
      %p53 = scmp.eq.s32.totalorder %s15, 9
      %p54 = por %p52, %p53
      %p55 = scmp.ne.s32.totalorder %s44, %s45
      %p56 = scmp.eq.s32.totalorder %s15, 0
      %p57 = por %p55, %p56
      %p58 = scmp.ne.s32.totalorder %s44, %s45
      %p59 = scmp.eq.s32.totalorder %s16, 9
      %p60 = por %p58, %p59
      %p62 = scmp.ne.s32.totalorder %s45, %s61
      %p63 = scmp.eq.s32.totalorder %s16, 0
      %p64 = por %p62, %p63
      %s65 = ssub.s32 %s19, %s28
      %s66 = ssub.s32 %s18, %s32
      %s67 = sor.u32 %s65, %s66
      %p68 = scmp.eq.s32.totalorder %s67, 0
      %s70 = sadd.s32 %s69, 1
      %s71 = scalar_select %p68, %s69, %s70
      %p74 = pneg %p68
      %p75 = scmp.eq.s32.totalorder %s10, 9
      %p76 = por %p74, %p75
      %p77 = scmp.ne.s32.totalorder %s69, %s72
      %p78 = scmp.eq.s32.totalorder %s10, 0
      %p79 = por %p77, %p78
      %p80 = scmp.ne.s32.totalorder %s69, %s72
      %p81 = scmp.eq.s32.totalorder %s15, 9
      %p82 = por %p80, %p81
      %p83 = scmp.ne.s32.totalorder %s72, %s73
      %p84 = scmp.eq.s32.totalorder %s15, 0
      %p85 = por %p83, %p84
      %p86 = scmp.ne.s32.totalorder %s72, %s73
      %p87 = scmp.eq.s32.totalorder %s16, 9
      %p88 = por %p86, %p87
      %p90 = scmp.ne.s32.totalorder %s73, %s89
      %p91 = scmp.eq.s32.totalorder %s16, 0
      %p92 = por %p90, %p91
      %s93 = ssub.s32 %s18, %s32
      %p94 = scmp.eq.s32.totalorder %s93, 0
      %s96 = sadd.s32 %s95, 1
      %s97 = scalar_select %p94, %s95, %s96
      %p100 = pneg %p94
      %p101 = scmp.eq.s32.totalorder %s10, 9
      %p102 = por %p100, %p101
      %p103 = scmp.ne.s32.totalorder %s95, %s98
      %p104 = scmp.eq.s32.totalorder %s10, 0
      %p105 = por %p103, %p104
      %p106 = scmp.ne.s32.totalorder %s95, %s98
      %p107 = scmp.eq.s32.totalorder %s15, 9
      %p108 = por %p106, %p107
      %p109 = scmp.ne.s32.totalorder %s98, %s99
      %p110 = scmp.eq.s32.totalorder %s15, 0
      %p111 = por %p109, %p110
      %p112 = scmp.ne.s32.totalorder %s98, %s99
      %p113 = scmp.eq.s32.totalorder %s16, 9
      %p114 = por %p112, %p113
      %p116 = scmp.ne.s32.totalorder %s99, %s115
      %p117 = scmp.eq.s32.totalorder %s16, 0
      %p118 = por %p116, %p117
      %s119 = ssub.s32 %s18, %s32
      %p120 = scmp.eq.s32.totalorder %s119, 0
      %s122 = sadd.s32 %s121, 1
      %s123 = scalar_select %p120, %s121, %s122
      %p126 = pneg %p120
      %p127 = scmp.eq.s32.totalorder %s10, 9
      %p128 = por %p126, %p127
      %p129 = scmp.ne.s32.totalorder %s121, %s124
      %p130 = scmp.eq.s32.totalorder %s10, 0
      %p131 = por %p129, %p130
      %p132 = scmp.ne.s32.totalorder %s121, %s124
      %p133 = scmp.eq.s32.totalorder %s15, 9
      %p134 = por %p132, %p133
      %p135 = scmp.ne.s32.totalorder %s124, %s125
      %p136 = scmp.eq.s32.totalorder %s15, 0
      %p137 = por %p135, %p136
      %p138 = scmp.ne.s32.totalorder %s124, %s125
      %p139 = scmp.eq.s32.totalorder %s16, 9
      %p140 = por %p138, %p139
      %p142 = scmp.ne.s32.totalorder %s125, %s141
      %p143 = scmp.eq.s32.totalorder %s16, 0
      %p144 = por %p142, %p143
      %s145 = ssub.s32 %s17, %s36
      %s146 = ssub.s32 %s18, %s32
      %s147 = sor.u32 %s145, %s146
      %p148 = scmp.eq.s32.totalorder %s147, 0
      %s150 = sadd.s32 %s149, 1
      %s151 = scalar_select %p148, %s149, %s150
      %p154 = pneg %p148
      %p155 = scmp.eq.s32.totalorder %s10, 9
      %p156 = por %p154, %p155
      %p157 = scmp.ne.s32.totalorder %s149, %s152
      %p158 = scmp.eq.s32.totalorder %s10, 0
      %p159 = por %p157, %p158
      %p160 = scmp.ne.s32.totalorder %s149, %s152
      %p161 = scmp.eq.s32.totalorder %s15, 9
      %p162 = por %p160, %p161
      %p163 = scmp.ne.s32.totalorder %s152, %s153
      %p164 = scmp.eq.s32.totalorder %s15, 0
      %p165 = por %p163, %p164
      %p166 = scmp.ne.s32.totalorder %s152, %s153
      %p167 = scmp.eq.s32.totalorder %s16, 9
      %p168 = por %p166, %p167
      %p170 = scmp.ne.s32.totalorder %s153, %s169
      %p171 = scmp.eq.s32.totalorder %s16, 0
      %p172 = por %p170, %p171
      %p173 = scmp.le.s32.totalorder 1, %s10
      %p174 = scmp.lt.s32.totalorder %s10, 11
      %p175 = pnand %p173, %p174
      %p176 = pneg %p175
      // Predicated region
      $region9: #{_lambda_.24} parent=5 // pred_check
        _
      $region10: #{_lambda_.24} parent=5 // pred_check_branch
        %178 = sbr.rel (%p175) target = $region12
      $region11: #{_lambda_.24} parent=5 // pred_region
        %s179 = ssub.s32 %s10, 1
      $region12: #{_lambda_.24} parent=5 // pred_fallthru
        _
      %p180 = scmp.lt.s32.totalorder %s10, 10
      // Predicated region
      $region13: #{_lambda_.24} parent=5 // pred_check
        %p181 = pneg %p180
      $region14: #{_lambda_.24} parent=5 // pred_check_branch
        %183 = sbr.rel (%p181) target = $region16
      $region15: #{_lambda_.24} parent=5 // pred_region
        // Predicated region
        $region17: #{_lambda_.24} parent=15 // pred_check
          %p184 = pneg %p51
        $region18: #{_lambda_.24} parent=15 // pred_check_branch
          %186 = sbr.rel (%p184) target = $region20
        $region19: #{_lambda_.24} parent=15 // pred_region
          %s187 = smul.u32 4, %s19
          %p188 = scmp.lt.s32.totalorder %s17, 0
          %s189 = scalar_select %p188, %s17, 0
          %p190 = scmp.lt.s32.totalorder %s187, 19
          %s191 = scalar_select %p190, %s187, 19
          %s192 = smul.addr %s189, 20
          %s193 = sadd.s32 %s191, %s192
          %s194 = smul.addr %s193, 8
          %s195 = scalar_lea.vmem %s0, %s194
          %s196 = smul.u32 4, %s19
        $region20: #{_lambda_.24} parent=15 // pred_fallthru
          _
        // Predicated region
        $region21: #{_lambda_.24} parent=15 // pred_check
          %p197 = pneg %p79
        $region22: #{_lambda_.24} parent=15 // pred_check_branch
          %199 = sbr.rel (%p197) target = $region24
        $region23: #{_lambda_.24} parent=15 // pred_region
          %s200 = sand.u32 %s69, 1
          %s201 = sand.u32 %s69, 1
          %s202 = smul.addr %s201, 1024
          %s203 = scalar_lea.vmem [#allocation3], %s202
          %s204 = smul.u32 64, %s19
          %s205 = smul.u32 2, %s18
          %s206 = smul.addr %s204, 4
          %s207 = sadd.s32 %s205, %s206
          %s208 = smul.addr %s207, 8
          %s209 = scalar_lea.vmem %s1, %s208
          // Predicated region
          $region25: #{_lambda_.24} parent=23 // pred_check
            _
          $region26: #{_lambda_.24} parent=23 // pred_check_branch
            %211 = sbr.rel (0) target = $region28
          $region27: #{_lambda_.24} parent=23 // pred_region
            // Predicated region
            $region29: #{_lambda_.24} parent=27 // pred_check
              _
            $region30: #{_lambda_.24} parent=27 // pred_check_branch
              %213 = sbr.rel (0) target = $region32
            $region31: #{_lambda_.24} parent=27 // pred_region
              loop: start=0, step=1, limit=1
              $region33: #{_lambda_.24} parent=31 // loop_pre_header
                _
              $region34: #{_lambda_.24} parent=31 // loop_header
                %s215 = sphi 0, %s219
                %p216 = scmp.ge.s32.totalorder %s215, 1
                %s220 = sphi %s209, %s209
                %s221 = sphi %s203, %s203
              $region35: #{_lambda_.24} parent=31 // loop_header_branch
                %218 = sbr.rel (%p216) target = $region39
              $region36: #{_lambda_.24} parent=31 // loop_body
                %v222 = vld [vmem:[%s220] sm:$0xff]
                %223 = vst [vmem:[%s221] sm:$0xff] %v222
                %v224 = vld [vmem:[%s220 + $0x8] sm:$0xff]
                %225 = vst [vmem:[%s221 + $0x8] sm:$0xff] %v224
                %v226 = vld [vmem:[%s220 + $0x20] sm:$0xff]
                %227 = vst [vmem:[%s221 + $0x10] sm:$0xff] %v226
                %v228 = vld [vmem:[%s220 + $0x28] sm:$0xff]
                %229 = vst [vmem:[%s221 + $0x18] sm:$0xff] %v228
                %v230 = vld [vmem:[%s220 + $0x40] sm:$0xff]
                %231 = vst [vmem:[%s221 + $0x20] sm:$0xff] %v230
                %v232 = vld [vmem:[%s220 + $0x48] sm:$0xff]
                %233 = vst [vmem:[%s221 + $0x28] sm:$0xff] %v232
                %v234 = vld [vmem:[%s220 + $0x60] sm:$0xff]
                %235 = vst [vmem:[%s221 + $0x30] sm:$0xff] %v234
                %v236 = vld [vmem:[%s220 + $0x68] sm:$0xff]
                %237 = vst [vmem:[%s221 + $0x38] sm:$0xff] %v236
                %v238 = vld [vmem:[%s220 + $0x80] sm:$0xff]
                %239 = vst [vmem:[%s221 + $0x40] sm:$0xff] %v238
                %v240 = vld [vmem:[%s220 + $0x88] sm:$0xff]
                %241 = vst [vmem:[%s221 + $0x48] sm:$0xff] %v240
                %v242 = vld [vmem:[%s220 + $0xa0] sm:$0xff]
                %243 = vst [vmem:[%s221 + $0x50] sm:$0xff] %v242
                %v244 = vld [vmem:[%s220 + $0xa8] sm:$0xff]
                %245 = vst [vmem:[%s221 + $0x58] sm:$0xff] %v244
                %v246 = vld [vmem:[%s220 + $0xc0] sm:$0xff]
                %247 = vst [vmem:[%s221 + $0x60] sm:$0xff] %v246
                %v248 = vld [vmem:[%s220 + $0xc8] sm:$0xff]
                %249 = vst [vmem:[%s221 + $0x68] sm:$0xff] %v248
                %v250 = vld [vmem:[%s220 + $0xe0] sm:$0xff]
                %251 = vst [vmem:[%s221 + $0x70] sm:$0xff] %v250
                %v252 = vld [vmem:[%s220 + $0xe8] sm:$0xff]
                %253 = vst [vmem:[%s221 + $0x78] sm:$0xff] %v252
                %v254 = vld [vmem:[%s220 + $0x100] sm:$0xff]
                %255 = vst [vmem:[%s221 + $0x80] sm:$0xff] %v254
                %v256 = vld [vmem:[%s220 + $0x108] sm:$0xff]
                %257 = vst [vmem:[%s221 + $0x88] sm:$0xff] %v256
                %v258 = vld [vmem:[%s220 + $0x120] sm:$0xff]
                %259 = vst [vmem:[%s221 + $0x90] sm:$0xff] %v258
                %v260 = vld [vmem:[%s220 + $0x128] sm:$0xff]
                %261 = vst [vmem:[%s221 + $0x98] sm:$0xff] %v260
                %v262 = vld [vmem:[%s220 + $0x140] sm:$0xff]
                %263 = vst [vmem:[%s221 + $0xa0] sm:$0xff] %v262
                %v264 = vld [vmem:[%s220 + $0x148] sm:$0xff]
                %265 = vst [vmem:[%s221 + $0xa8] sm:$0xff] %v264
                %v266 = vld [vmem:[%s220 + $0x160] sm:$0xff]
                %267 = vst [vmem:[%s221 + $0xb0] sm:$0xff] %v266
                %v268 = vld [vmem:[%s220 + $0x168] sm:$0xff]
                %269 = vst [vmem:[%s221 + $0xb8] sm:$0xff] %v268
                %v270 = vld [vmem:[%s220 + $0x180] sm:$0xff]
                %271 = vst [vmem:[%s221 + $0xc0] sm:$0xff] %v270
                %v272 = vld [vmem:[%s220 + $0x188] sm:$0xff]
                %273 = vst [vmem:[%s221 + $0xc8] sm:$0xff] %v272
                %v274 = vld [vmem:[%s220 + $0x1a0] sm:$0xff]
                %275 = vst [vmem:[%s221 + $0xd0] sm:$0xff] %v274
                %v276 = vld [vmem:[%s220 + $0x1a8] sm:$0xff]
                %277 = vst [vmem:[%s221 + $0xd8] sm:$0xff] %v276
                %v278 = vld [vmem:[%s220 + $0x1c0] sm:$0xff]
                %279 = vst [vmem:[%s221 + $0xe0] sm:$0xff] %v278
                %v280 = vld [vmem:[%s220 + $0x1c8] sm:$0xff]
                %281 = vst [vmem:[%s221 + $0xe8] sm:$0xff] %v280
                %v282 = vld [vmem:[%s220 + $0x1e0] sm:$0xff]
                %283 = vst [vmem:[%s221 + $0xf0] sm:$0xff] %v282
                %v284 = vld [vmem:[%s220 + $0x1e8] sm:$0xff]
                %285 = vst [vmem:[%s221 + $0xf8] sm:$0xff] %v284
                %v286 = vld [vmem:[%s220 + $0x200] sm:$0xff]
                %287 = vst [vmem:[%s221 + $0x100] sm:$0xff] %v286
                %v288 = vld [vmem:[%s220 + $0x208] sm:$0xff]
                %289 = vst [vmem:[%s221 + $0x108] sm:$0xff] %v288
                %v290 = vld [vmem:[%s220 + $0x220] sm:$0xff]
                %291 = vst [vmem:[%s221 + $0x110] sm:$0xff] %v290
                %v292 = vld [vmem:[%s220 + $0x228] sm:$0xff]
                %293 = vst [vmem:[%s221 + $0x118] sm:$0xff] %v292
                %v294 = vld [vmem:[%s220 + $0x240] sm:$0xff]
                %295 = vst [vmem:[%s221 + $0x120] sm:$0xff] %v294
                %v296 = vld [vmem:[%s220 + $0x248] sm:$0xff]
                %297 = vst [vmem:[%s221 + $0x128] sm:$0xff] %v296
                %v298 = vld [vmem:[%s220 + $0x260] sm:$0xff]
                %299 = vst [vmem:[%s221 + $0x130] sm:$0xff] %v298
                %v300 = vld [vmem:[%s220 + $0x268] sm:$0xff]
                %301 = vst [vmem:[%s221 + $0x138] sm:$0xff] %v300
                %v302 = vld [vmem:[%s220 + $0x280] sm:$0xff]
                %303 = vst [vmem:[%s221 + $0x140] sm:$0xff] %v302
                %v304 = vld [vmem:[%s220 + $0x288] sm:$0xff]
                %305 = vst [vmem:[%s221 + $0x148] sm:$0xff] %v304
                %v306 = vld [vmem:[%s220 + $0x2a0] sm:$0xff]
                %307 = vst [vmem:[%s221 + $0x150] sm:$0xff] %v306
                %v308 = vld [vmem:[%s220 + $0x2a8] sm:$0xff]
                %309 = vst [vmem:[%s221 + $0x158] sm:$0xff] %v308
                %v310 = vld [vmem:[%s220 + $0x2c0] sm:$0xff]
                %311 = vst [vmem:[%s221 + $0x160] sm:$0xff] %v310
                %v312 = vld [vmem:[%s220 + $0x2c8] sm:$0xff]
                %313 = vst [vmem:[%s221 + $0x168] sm:$0xff] %v312
                %v314 = vld [vmem:[%s220 + $0x2e0] sm:$0xff]
                %315 = vst [vmem:[%s221 + $0x170] sm:$0xff] %v314
                %v316 = vld [vmem:[%s220 + $0x2e8] sm:$0xff]
                %317 = vst [vmem:[%s221 + $0x178] sm:$0xff] %v316
                %v318 = vld [vmem:[%s220 + $0x300] sm:$0xff]
                %319 = vst [vmem:[%s221 + $0x180] sm:$0xff] %v318
                %v320 = vld [vmem:[%s220 + $0x308] sm:$0xff]
                %321 = vst [vmem:[%s221 + $0x188] sm:$0xff] %v320
                %v322 = vld [vmem:[%s220 + $0x320] sm:$0xff]
                %323 = vst [vmem:[%s221 + $0x190] sm:$0xff] %v322
                %v324 = vld [vmem:[%s220 + $0x328] sm:$0xff]
                %325 = vst [vmem:[%s221 + $0x198] sm:$0xff] %v324
                %v326 = vld [vmem:[%s220 + $0x340] sm:$0xff]
                %327 = vst [vmem:[%s221 + $0x1a0] sm:$0xff] %v326
                %v328 = vld [vmem:[%s220 + $0x348] sm:$0xff]
                %329 = vst [vmem:[%s221 + $0x1a8] sm:$0xff] %v328
                %v330 = vld [vmem:[%s220 + $0x360] sm:$0xff]
                %331 = vst [vmem:[%s221 + $0x1b0] sm:$0xff] %v330
                %v332 = vld [vmem:[%s220 + $0x368] sm:$0xff]
                %333 = vst [vmem:[%s221 + $0x1b8] sm:$0xff] %v332
                %v334 = vld [vmem:[%s220 + $0x380] sm:$0xff]
                %335 = vst [vmem:[%s221 + $0x1c0] sm:$0xff] %v334
                %v336 = vld [vmem:[%s220 + $0x388] sm:$0xff]
                %337 = vst [vmem:[%s221 + $0x1c8] sm:$0xff] %v336
                %v338 = vld [vmem:[%s220 + $0x3a0] sm:$0xff]
                %339 = vst [vmem:[%s221 + $0x1d0] sm:$0xff] %v338
                %v340 = vld [vmem:[%s220 + $0x3a8] sm:$0xff]
                %341 = vst [vmem:[%s221 + $0x1d8] sm:$0xff] %v340
                %v342 = vld [vmem:[%s220 + $0x3c0] sm:$0xff]
                %343 = vst [vmem:[%s221 + $0x1e0] sm:$0xff] %v342
                %v344 = vld [vmem:[%s220 + $0x3c8] sm:$0xff]
                %345 = vst [vmem:[%s221 + $0x1e8] sm:$0xff] %v344
                %v346 = vld [vmem:[%s220 + $0x3e0] sm:$0xff]
                %347 = vst [vmem:[%s221 + $0x1f0] sm:$0xff] %v346
                %v348 = vld [vmem:[%s220 + $0x3e8] sm:$0xff]
                %349 = vst [vmem:[%s221 + $0x1f8] sm:$0xff] %v348
                %v350 = vld [vmem:[%s220 + $0x400] sm:$0xff]
                %351 = vst [vmem:[%s221 + $0x200] sm:$0xff] %v350
                %v352 = vld [vmem:[%s220 + $0x408] sm:$0xff]
                %353 = vst [vmem:[%s221 + $0x208] sm:$0xff] %v352
                %v354 = vld [vmem:[%s220 + $0x420] sm:$0xff]
                %355 = vst [vmem:[%s221 + $0x210] sm:$0xff] %v354
                %v356 = vld [vmem:[%s220 + $0x428] sm:$0xff]
                %357 = vst [vmem:[%s221 + $0x218] sm:$0xff] %v356
                %v358 = vld [vmem:[%s220 + $0x440] sm:$0xff]
                %359 = vst [vmem:[%s221 + $0x220] sm:$0xff] %v358
                %v360 = vld [vmem:[%s220 + $0x448] sm:$0xff]
                %361 = vst [vmem:[%s221 + $0x228] sm:$0xff] %v360
                %v362 = vld [vmem:[%s220 + $0x460] sm:$0xff]
                %363 = vst [vmem:[%s221 + $0x230] sm:$0xff] %v362
                %v364 = vld [vmem:[%s220 + $0x468] sm:$0xff]
                %365 = vst [vmem:[%s221 + $0x238] sm:$0xff] %v364
                %v366 = vld [vmem:[%s220 + $0x480] sm:$0xff]
                %367 = vst [vmem:[%s221 + $0x240] sm:$0xff] %v366
                %v368 = vld [vmem:[%s220 + $0x488] sm:$0xff]
                %369 = vst [vmem:[%s221 + $0x248] sm:$0xff] %v368
                %v370 = vld [vmem:[%s220 + $0x4a0] sm:$0xff]
                %371 = vst [vmem:[%s221 + $0x250] sm:$0xff] %v370
                %v372 = vld [vmem:[%s220 + $0x4a8] sm:$0xff]
                %373 = vst [vmem:[%s221 + $0x258] sm:$0xff] %v372
                %v374 = vld [vmem:[%s220 + $0x4c0] sm:$0xff]
                %375 = vst [vmem:[%s221 + $0x260] sm:$0xff] %v374
                %v376 = vld [vmem:[%s220 + $0x4c8] sm:$0xff]
                %377 = vst [vmem:[%s221 + $0x268] sm:$0xff] %v376
                %v378 = vld [vmem:[%s220 + $0x4e0] sm:$0xff]
                %379 = vst [vmem:[%s221 + $0x270] sm:$0xff] %v378
                %v380 = vld [vmem:[%s220 + $0x4e8] sm:$0xff]
                %381 = vst [vmem:[%s221 + $0x278] sm:$0xff] %v380
                %v382 = vld [vmem:[%s220 + $0x500] sm:$0xff]
                %383 = vst [vmem:[%s221 + $0x280] sm:$0xff] %v382
                %v384 = vld [vmem:[%s220 + $0x508] sm:$0xff]
                %385 = vst [vmem:[%s221 + $0x288] sm:$0xff] %v384
                %v386 = vld [vmem:[%s220 + $0x520] sm:$0xff]
                %387 = vst [vmem:[%s221 + $0x290] sm:$0xff] %v386
                %v388 = vld [vmem:[%s220 + $0x528] sm:$0xff]
                %389 = vst [vmem:[%s221 + $0x298] sm:$0xff] %v388
                %v390 = vld [vmem:[%s220 + $0x540] sm:$0xff]
                %391 = vst [vmem:[%s221 + $0x2a0] sm:$0xff] %v390
                %v392 = vld [vmem:[%s220 + $0x548] sm:$0xff]
                %393 = vst [vmem:[%s221 + $0x2a8] sm:$0xff] %v392
                %v394 = vld [vmem:[%s220 + $0x560] sm:$0xff]
                %395 = vst [vmem:[%s221 + $0x2b0] sm:$0xff] %v394
                %v396 = vld [vmem:[%s220 + $0x568] sm:$0xff]
                %397 = vst [vmem:[%s221 + $0x2b8] sm:$0xff] %v396
                %v398 = vld [vmem:[%s220 + $0x580] sm:$0xff]
                %399 = vst [vmem:[%s221 + $0x2c0] sm:$0xff] %v398
                %v400 = vld [vmem:[%s220 + $0x588] sm:$0xff]
                %401 = vst [vmem:[%s221 + $0x2c8] sm:$0xff] %v400
                %v402 = vld [vmem:[%s220 + $0x5a0] sm:$0xff]
                %403 = vst [vmem:[%s221 + $0x2d0] sm:$0xff] %v402
                %v404 = vld [vmem:[%s220 + $0x5a8] sm:$0xff]
                %405 = vst [vmem:[%s221 + $0x2d8] sm:$0xff] %v404
                %v406 = vld [vmem:[%s220 + $0x5c0] sm:$0xff]
                %407 = vst [vmem:[%s221 + $0x2e0] sm:$0xff] %v406
                %v408 = vld [vmem:[%s220 + $0x5c8] sm:$0xff]
                %409 = vst [vmem:[%s221 + $0x2e8] sm:$0xff] %v408
                %v410 = vld [vmem:[%s220 + $0x5e0] sm:$0xff]
                %411 = vst [vmem:[%s221 + $0x2f0] sm:$0xff] %v410
                %v412 = vld [vmem:[%s220 + $0x5e8] sm:$0xff]
                %413 = vst [vmem:[%s221 + $0x2f8] sm:$0xff] %v412
                %v414 = vld [vmem:[%s220 + $0x600] sm:$0xff]
                %415 = vst [vmem:[%s221 + $0x300] sm:$0xff] %v414
                %v416 = vld [vmem:[%s220 + $0x608] sm:$0xff]
                %417 = vst [vmem:[%s221 + $0x308] sm:$0xff] %v416
                %v418 = vld [vmem:[%s220 + $0x620] sm:$0xff]
                %419 = vst [vmem:[%s221 + $0x310] sm:$0xff] %v418
                %v420 = vld [vmem:[%s220 + $0x628] sm:$0xff]
                %421 = vst [vmem:[%s221 + $0x318] sm:$0xff] %v420
                %v422 = vld [vmem:[%s220 + $0x640] sm:$0xff]
                %423 = vst [vmem:[%s221 + $0x320] sm:$0xff] %v422
                %v424 = vld [vmem:[%s220 + $0x648] sm:$0xff]
                %425 = vst [vmem:[%s221 + $0x328] sm:$0xff] %v424
                %v426 = vld [vmem:[%s220 + $0x660] sm:$0xff]
                %427 = vst [vmem:[%s221 + $0x330] sm:$0xff] %v426
                %v428 = vld [vmem:[%s220 + $0x668] sm:$0xff]
                %429 = vst [vmem:[%s221 + $0x338] sm:$0xff] %v428
                %v430 = vld [vmem:[%s220 + $0x680] sm:$0xff]
                %431 = vst [vmem:[%s221 + $0x340] sm:$0xff] %v430
                %v432 = vld [vmem:[%s220 + $0x688] sm:$0xff]
                %433 = vst [vmem:[%s221 + $0x348] sm:$0xff] %v432
                %v434 = vld [vmem:[%s220 + $0x6a0] sm:$0xff]
                %435 = vst [vmem:[%s221 + $0x350] sm:$0xff] %v434
                %v436 = vld [vmem:[%s220 + $0x6a8] sm:$0xff]
                %437 = vst [vmem:[%s221 + $0x358] sm:$0xff] %v436
                %v438 = vld [vmem:[%s220 + $0x6c0] sm:$0xff]
                %439 = vst [vmem:[%s221 + $0x360] sm:$0xff] %v438
                %v440 = vld [vmem:[%s220 + $0x6c8] sm:$0xff]
                %441 = vst [vmem:[%s221 + $0x368] sm:$0xff] %v440
                %v442 = vld [vmem:[%s220 + $0x6e0] sm:$0xff]
                %443 = vst [vmem:[%s221 + $0x370] sm:$0xff] %v442
                %v444 = vld [vmem:[%s220 + $0x6e8] sm:$0xff]
                %445 = vst [vmem:[%s221 + $0x378] sm:$0xff] %v444
                %v446 = vld [vmem:[%s220 + $0x700] sm:$0xff]
                %447 = vst [vmem:[%s221 + $0x380] sm:$0xff] %v446
                %v448 = vld [vmem:[%s220 + $0x708] sm:$0xff]
                %449 = vst [vmem:[%s221 + $0x388] sm:$0xff] %v448
                %v450 = vld [vmem:[%s220 + $0x720] sm:$0xff]
                %451 = vst [vmem:[%s221 + $0x390] sm:$0xff] %v450
                %v452 = vld [vmem:[%s220 + $0x728] sm:$0xff]
                %453 = vst [vmem:[%s221 + $0x398] sm:$0xff] %v452
                %v454 = vld [vmem:[%s220 + $0x740] sm:$0xff]
                %455 = vst [vmem:[%s221 + $0x3a0] sm:$0xff] %v454
                %v456 = vld [vmem:[%s220 + $0x748] sm:$0xff]
                %457 = vst [vmem:[%s221 + $0x3a8] sm:$0xff] %v456
                %v458 = vld [vmem:[%s220 + $0x760] sm:$0xff]
                %459 = vst [vmem:[%s221 + $0x3b0] sm:$0xff] %v458
                %v460 = vld [vmem:[%s220 + $0x768] sm:$0xff]
                %461 = vst [vmem:[%s221 + $0x3b8] sm:$0xff] %v460
                %v462 = vld [vmem:[%s220 + $0x780] sm:$0xff]
                %463 = vst [vmem:[%s221 + $0x3c0] sm:$0xff] %v462
                %v464 = vld [vmem:[%s220 + $0x788] sm:$0xff]
                %465 = vst [vmem:[%s221 + $0x3c8] sm:$0xff] %v464
                %v466 = vld [vmem:[%s220 + $0x7a0] sm:$0xff]
                %467 = vst [vmem:[%s221 + $0x3d0] sm:$0xff] %v466
                %v468 = vld [vmem:[%s220 + $0x7a8] sm:$0xff]
                %469 = vst [vmem:[%s221 + $0x3d8] sm:$0xff] %v468
                %v470 = vld [vmem:[%s220 + $0x7c0] sm:$0xff]
                %471 = vst [vmem:[%s221 + $0x3e0] sm:$0xff] %v470
                %v472 = vld [vmem:[%s220 + $0x7c8] sm:$0xff]
                %473 = vst [vmem:[%s221 + $0x3e8] sm:$0xff] %v472
                %v474 = vld [vmem:[%s220 + $0x7e0] sm:$0xff]
                %475 = vst [vmem:[%s221 + $0x3f0] sm:$0xff] %v474
                %v476 = vld [vmem:[%s220 + $0x7e8] sm:$0xff]
                %477 = vst [vmem:[%s221 + $0x3f8] sm:$0xff] %v476
              $region37: #{_lambda_.24} parent=31 // loop_footer
                %s219 = sadd.s32 1, %s215
              $region38: #{_lambda_.24} parent=31 // loop_footer_branch
                %214 = sbr.rel target = $region34
              $region39: #{_lambda_.24} parent=31 // loop_exit
                _
            $region32: #{_lambda_.24} parent=27 // pred_fallthru
              _
            // Predicated region
            $region40: #{_lambda_.24} parent=27 // pred_check
              _
            $region41: #{_lambda_.24} parent=27 // pred_check_branch
              %479 = sbr.rel target = $region43
            $region42: #{_lambda_.24} parent=27 // pred_region
              _
            $region43: #{_lambda_.24} parent=27 // pred_fallthru
              _
          $region28: #{_lambda_.24} parent=23 // pred_fallthru
            _
          %480 = vnop
        $region24: #{_lambda_.24} parent=15 // pred_fallthru
          _
        // Predicated region
        $region44: #{_lambda_.24} parent=15 // pred_check
          %p481 = pneg %p105
        $region45: #{_lambda_.24} parent=15 // pred_check_branch
          %483 = sbr.rel (%p481) target = $region47
        $region46: #{_lambda_.24} parent=15 // pred_region
          %s484 = smul.u32 2, %s18
          %p485 = scmp.lt.s32.totalorder %s484, 3
          %s486 = scalar_select %p485, %s484, 3
          %s487 = scalar_lea.vmem %s2, %s486
          %s488 = smul.u32 2, %s18
        $region47: #{_lambda_.24} parent=15 // pred_fallthru
          _
        // Predicated region
        $region48: #{_lambda_.24} parent=15 // pred_check
          %p489 = pneg %p131
        $region49: #{_lambda_.24} parent=15 // pred_check_branch
          %491 = sbr.rel (%p489) target = $region51
        $region50: #{_lambda_.24} parent=15 // pred_region
          %s492 = smul.u32 2, %s18
          %p493 = scmp.lt.s32.totalorder %s492, 3
          %s494 = scalar_select %p493, %s492, 3
          %s495 = scalar_lea.vmem %s3, %s494
          %s496 = smul.u32 2, %s18
        $region51: #{_lambda_.24} parent=15 // pred_fallthru
          _
      $region16: #{_lambda_.24} parent=5 // pred_fallthru
        _
      %p497 = scmp.le.s32.totalorder 1, %s10
      %p498 = scmp.lt.s32.totalorder %s10, 11
      %p499 = pnand %p497, %p498
      %p500 = pneg %p499
      // Predicated region
      $region52: #{_lambda_.24} parent=5 // pred_check
        _
      $region53: #{_lambda_.24} parent=5 // pred_check_branch
        %502 = sbr.rel (%p499) target = $region55
      $region54: #{_lambda_.24} parent=5 // pred_region
        %s503 = ssub.s32 %s10, 1
        %s504 = sand.u32 %s72, 1
        %s505 = sand.u32 %s72, 1
        %s506 = smul.addr %s505, 1024
        %s507 = scalar_lea.vmem [#allocation3], %s506
        // Predicated region
        $region56: #{_lambda_.24} parent=54 // pred_check
          %p508 = pneg %p85
        $region57: #{_lambda_.24} parent=54 // pred_check_branch
          %510 = sbr.rel (%p508) target = $region59
        $region58: #{_lambda_.24} parent=54 // pred_region
          _
        $region59: #{_lambda_.24} parent=54 // pred_fallthru
          _
        %s511 = smul.u32 4, %s22
        %p512 = scmp.lt.s32.totalorder %s20, 0
        %s513 = scalar_select %p512, %s20, 0
        %p514 = scmp.lt.s32.totalorder %s511, 19
        %s515 = scalar_select %p514, %s511, 19
        %s516 = smul.addr %s513, 20
        %s517 = sadd.s32 %s515, %s516
        %s518 = smul.addr %s517, 8
        %s519 = scalar_lea.vmem %s0, %s518
        %p520 = pneg %p57
        %p521 = pneg %p54
        %s522 = sand.u32 %s72, 1
        %s523 = sand.u32 %s72, 1
        %s524 = smul.addr %s523, 1024
        %s525 = scalar_lea.vmem [#allocation3], %s524
        %p526 = pneg %p85
        %p527 = pneg %p82
        %s528 = smul.u32 2, %s21
        %p529 = scmp.lt.s32.totalorder %s528, 3
        %s530 = scalar_select %p529, %s528, 3
        %s531 = scalar_lea.vmem %s2, %s530
        %p532 = pneg %p111
        %p533 = pneg %p108
        %s534 = smul.u32 2, %s21
        %p535 = scmp.lt.s32.totalorder %s534, 3
        %s536 = scalar_select %p535, %s534, 3
        %s537 = scalar_lea.vmem %s3, %s536
        %p538 = pneg %p137
        %p539 = pneg %p134
        %p540 = pneg %p165
        %p541 = pneg %p162
        %s542 = smul.u32 2, %s21
        %p543 = scmp.lt.s32.totalorder %s20, 0
        %s544 = scalar_select %p543, %s20, 0
        %p545 = scmp.lt.s32.totalorder %s542, 3
        %s546 = scalar_select %p545, %s542, 3
        %s547 = smul.addr %s544, 4
        %s548 = sadd.s32 %s546, %s547
        %s549 = smul.addr %s548, 8
        %s550 = scalar_lea.vmem %s4, %s549
        %s551 = smul.u32 4, %s22
        %p552 = scmp.lt.s32.totalorder %s20, 0
        %s553 = scalar_select %p552, %s20, 0
        %p554 = scmp.lt.s32.totalorder %s551, 19
        %s555 = scalar_select %p554, %s551, 19
        %s556 = smul.addr %s553, 20
        %s557 = sadd.s32 %s555, %s556
        %s558 = smul.addr %s557, 8
        %s559 = scalar_lea.vmem %s0, %s558
        %s560 = smul.u32 4, %s22
        %s561 = smul.u32 64, %s22
        %s562 = smul.u32 2, %s21
        %s563 = smul.u32 2, %s21
        %p564 = scmp.lt.s32.totalorder %s563, 3
        %s565 = scalar_select %p564, %s563, 3
        %s566 = scalar_lea.vmem %s2, %s565
        %s567 = smul.u32 2, %s21
        %s568 = smul.u32 2, %s21
        %p569 = scmp.lt.s32.totalorder %s568, 3
        %s570 = scalar_select %p569, %s568, 3
        %s571 = scalar_lea.vmem %s3, %s570
        %s572 = smul.u32 2, %s21
        %s573 = smul.u32 2, %s21
        %p574 = scmp.lt.s32.totalorder %s20, 0
        %s575 = scalar_select %p574, %s20, 0
        %p576 = scmp.lt.s32.totalorder %s573, 3
        %s577 = scalar_select %p576, %s573, 3
        %s578 = smul.addr %s575, 4
        %s579 = sadd.s32 %s577, %s578
        %s580 = smul.addr %s579, 8
        %s581 = scalar_lea.vmem %s4, %s580
        %s582 = smul.u32 2, %s21
        %p583 = scmp.eq.s32.totalorder %s22, 0
        // Predicated region
        $region60: #{_lambda_.24} parent=54 // pred_check
          %p584 = pneg %p583
        $region61: #{_lambda_.24} parent=54 // pred_check_branch
          %586 = sbr.rel (%p584) target = $region63
        $region62: #{_lambda_.24} parent=54 // pred_region
          %587 = vst [vmem:[#allocation2] sm:$0xff] 0.0
          %588 = vst [vmem:[#allocation2 + $0x8] sm:$0xff] 0.0
        $region63: #{_lambda_.24} parent=54 // pred_fallthru
          _
        %v589 = vld [vmem:[#allocation2] sm:$0xff]
        %v590 = vld [vmem:[#allocation2 + $0x8] sm:$0xff]
        %v591 = vld [vmem:[%s559] sm:$0xff]
        %v592 = vld [vmem:[%s559 + $0x8] sm:$0xff]
        %v593 = vld [vmem:[%s559 + $0x10] sm:$0xff]
        %v594 = vld [vmem:[%s559 + $0x18] sm:$0xff]
        %v595 = vld [vmem:[%s507] sm:$0xff]
        %v596 = vld [vmem:[%s507 + $0x8] sm:$0xff]
        %v597 = vld [vmem:[%s507 + $0x10] sm:$0xff]
        %v598 = vld [vmem:[%s507 + $0x18] sm:$0xff]
        %v599 = vld [vmem:[%s507 + $0x20] sm:$0xff]
        %v600 = vld [vmem:[%s507 + $0x28] sm:$0xff]
        %v601 = vld [vmem:[%s507 + $0x30] sm:$0xff]
        %v602 = vld [vmem:[%s507 + $0x38] sm:$0xff]
        %v603 = vld [vmem:[%s507 + $0x40] sm:$0xff]
        %v604 = vld [vmem:[%s507 + $0x48] sm:$0xff]
        %v605 = vld [vmem:[%s507 + $0x50] sm:$0xff]
        %v606 = vld [vmem:[%s507 + $0x58] sm:$0xff]
        %v607 = vld [vmem:[%s507 + $0x60] sm:$0xff]
        %v608 = vld [vmem:[%s507 + $0x68] sm:$0xff]
        %v609 = vld [vmem:[%s507 + $0x70] sm:$0xff]
        %v610 = vld [vmem:[%s507 + $0x78] sm:$0xff]
        %v611 = vld [vmem:[%s507 + $0x80] sm:$0xff]
        %v612 = vld [vmem:[%s507 + $0x88] sm:$0xff]
        %v613 = vld [vmem:[%s507 + $0x90] sm:$0xff]
        %v614 = vld [vmem:[%s507 + $0x98] sm:$0xff]
        %v615 = vld [vmem:[%s507 + $0xa0] sm:$0xff]
        %v616 = vld [vmem:[%s507 + $0xa8] sm:$0xff]
        %v617 = vld [vmem:[%s507 + $0xb0] sm:$0xff]
        %v618 = vld [vmem:[%s507 + $0xb8] sm:$0xff]
        %v619 = vld [vmem:[%s507 + $0xc0] sm:$0xff]
        %v620 = vld [vmem:[%s507 + $0xc8] sm:$0xff]
        %v621 = vld [vmem:[%s507 + $0xd0] sm:$0xff]
        %v622 = vld [vmem:[%s507 + $0xd8] sm:$0xff]
        %v623 = vld [vmem:[%s507 + $0xe0] sm:$0xff]
        %v624 = vld [vmem:[%s507 + $0xe8] sm:$0xff]
        %v625 = vld [vmem:[%s507 + $0xf0] sm:$0xff]
        %v626 = vld [vmem:[%s507 + $0xf8] sm:$0xff]
        %v627 = vld [vmem:[%s507 + $0x100] sm:$0xff]
        %v628 = vld [vmem:[%s507 + $0x108] sm:$0xff]
        %v629 = vld [vmem:[%s507 + $0x110] sm:$0xff]
        %v630 = vld [vmem:[%s507 + $0x118] sm:$0xff]
        %v631 = vld [vmem:[%s507 + $0x120] sm:$0xff]
        %v632 = vld [vmem:[%s507 + $0x128] sm:$0xff]
        %v633 = vld [vmem:[%s507 + $0x130] sm:$0xff]
        %v634 = vld [vmem:[%s507 + $0x138] sm:$0xff]
        %v635 = vld [vmem:[%s507 + $0x140] sm:$0xff]
        %v636 = vld [vmem:[%s507 + $0x148] sm:$0xff]
        %v637 = vld [vmem:[%s507 + $0x150] sm:$0xff]
        %v638 = vld [vmem:[%s507 + $0x158] sm:$0xff]
        %v639 = vld [vmem:[%s507 + $0x160] sm:$0xff]
        %v640 = vld [vmem:[%s507 + $0x168] sm:$0xff]
        %v641 = vld [vmem:[%s507 + $0x170] sm:$0xff]
        %v642 = vld [vmem:[%s507 + $0x178] sm:$0xff]
        %v643 = vld [vmem:[%s507 + $0x180] sm:$0xff]
        %v644 = vld [vmem:[%s507 + $0x188] sm:$0xff]
        %v645 = vld [vmem:[%s507 + $0x190] sm:$0xff]
        %v646 = vld [vmem:[%s507 + $0x198] sm:$0xff]
        %v647 = vld [vmem:[%s507 + $0x1a0] sm:$0xff]
        %v648 = vld [vmem:[%s507 + $0x1a8] sm:$0xff]
        %v649 = vld [vmem:[%s507 + $0x1b0] sm:$0xff]
        %v650 = vld [vmem:[%s507 + $0x1b8] sm:$0xff]
        %v651 = vld [vmem:[%s507 + $0x1c0] sm:$0xff]
        %v652 = vld [vmem:[%s507 + $0x1c8] sm:$0xff]
        %v653 = vld [vmem:[%s507 + $0x1d0] sm:$0xff]
        %v654 = vld [vmem:[%s507 + $0x1d8] sm:$0xff]
        %v655 = vld [vmem:[%s507 + $0x1e0] sm:$0xff]
        %v656 = vld [vmem:[%s507 + $0x1e8] sm:$0xff]
        %v657 = vld [vmem:[%s507 + $0x1f0] sm:$0xff]
        %v658 = vld [vmem:[%s507 + $0x1f8] sm:$0xff]
        %v659 = vld [vmem:[%s507 + $0x200] sm:$0xff]
        %v660 = vld [vmem:[%s507 + $0x208] sm:$0xff]
        %v661 = vld [vmem:[%s507 + $0x210] sm:$0xff]
        %v662 = vld [vmem:[%s507 + $0x218] sm:$0xff]
        %v663 = vld [vmem:[%s507 + $0x220] sm:$0xff]
        %v664 = vld [vmem:[%s507 + $0x228] sm:$0xff]
        %v665 = vld [vmem:[%s507 + $0x230] sm:$0xff]
        %v666 = vld [vmem:[%s507 + $0x238] sm:$0xff]
        %v667 = vld [vmem:[%s507 + $0x240] sm:$0xff]
        %v668 = vld [vmem:[%s507 + $0x248] sm:$0xff]
        %v669 = vld [vmem:[%s507 + $0x250] sm:$0xff]
        %v670 = vld [vmem:[%s507 + $0x258] sm:$0xff]
        %v671 = vld [vmem:[%s507 + $0x260] sm:$0xff]
        %v672 = vld [vmem:[%s507 + $0x268] sm:$0xff]
        %v673 = vld [vmem:[%s507 + $0x270] sm:$0xff]
        %v674 = vld [vmem:[%s507 + $0x278] sm:$0xff]
        %v675 = vld [vmem:[%s507 + $0x280] sm:$0xff]
        %v676 = vld [vmem:[%s507 + $0x288] sm:$0xff]
        %v677 = vld [vmem:[%s507 + $0x290] sm:$0xff]
        %v678 = vld [vmem:[%s507 + $0x298] sm:$0xff]
        %v679 = vld [vmem:[%s507 + $0x2a0] sm:$0xff]
        %v680 = vld [vmem:[%s507 + $0x2a8] sm:$0xff]
        %v681 = vld [vmem:[%s507 + $0x2b0] sm:$0xff]
        %v682 = vld [vmem:[%s507 + $0x2b8] sm:$0xff]
        %v683 = vld [vmem:[%s507 + $0x2c0] sm:$0xff]
        %v684 = vld [vmem:[%s507 + $0x2c8] sm:$0xff]
        %v685 = vld [vmem:[%s507 + $0x2d0] sm:$0xff]
        %v686 = vld [vmem:[%s507 + $0x2d8] sm:$0xff]
        %v687 = vld [vmem:[%s507 + $0x2e0] sm:$0xff]
        %v688 = vld [vmem:[%s507 + $0x2e8] sm:$0xff]
        %v689 = vld [vmem:[%s507 + $0x2f0] sm:$0xff]
        %v690 = vld [vmem:[%s507 + $0x2f8] sm:$0xff]
        %v691 = vld [vmem:[%s507 + $0x300] sm:$0xff]
        %v692 = vld [vmem:[%s507 + $0x308] sm:$0xff]
        %v693 = vld [vmem:[%s507 + $0x310] sm:$0xff]
        %v694 = vld [vmem:[%s507 + $0x318] sm:$0xff]
        %v695 = vld [vmem:[%s507 + $0x320] sm:$0xff]
        %v696 = vld [vmem:[%s507 + $0x328] sm:$0xff]
        %v697 = vld [vmem:[%s507 + $0x330] sm:$0xff]
        %v698 = vld [vmem:[%s507 + $0x338] sm:$0xff]
        %v699 = vld [vmem:[%s507 + $0x340] sm:$0xff]
        %v700 = vld [vmem:[%s507 + $0x348] sm:$0xff]
        %v701 = vld [vmem:[%s507 + $0x350] sm:$0xff]
        %v702 = vld [vmem:[%s507 + $0x358] sm:$0xff]
        %v703 = vld [vmem:[%s507 + $0x360] sm:$0xff]
        %v704 = vld [vmem:[%s507 + $0x368] sm:$0xff]
        %v705 = vld [vmem:[%s507 + $0x370] sm:$0xff]
        %v706 = vld [vmem:[%s507 + $0x378] sm:$0xff]
        %v707 = vld [vmem:[%s507 + $0x380] sm:$0xff]
        %v708 = vld [vmem:[%s507 + $0x388] sm:$0xff]
        %v709 = vld [vmem:[%s507 + $0x390] sm:$0xff]
        %v710 = vld [vmem:[%s507 + $0x398] sm:$0xff]
        %v711 = vld [vmem:[%s507 + $0x3a0] sm:$0xff]
        %v712 = vld [vmem:[%s507 + $0x3a8] sm:$0xff]
        %v713 = vld [vmem:[%s507 + $0x3b0] sm:$0xff]
        %v714 = vld [vmem:[%s507 + $0x3b8] sm:$0xff]
        %v715 = vld [vmem:[%s507 + $0x3c0] sm:$0xff]
        %v716 = vld [vmem:[%s507 + $0x3c8] sm:$0xff]
        %v717 = vld [vmem:[%s507 + $0x3d0] sm:$0xff]
        %v718 = vld [vmem:[%s507 + $0x3d8] sm:$0xff]
        %v719 = vld [vmem:[%s507 + $0x3e0] sm:$0xff]
        %v720 = vld [vmem:[%s507 + $0x3e8] sm:$0xff]
        %v721 = vld [vmem:[%s507 + $0x3f0] sm:$0xff]
        %v722 = vld [vmem:[%s507 + $0x3f8] sm:$0xff]
        %723 = vmatprep.subr.mxu0 %v626
        %724 = vmatpush1.msra.mxu0 %v625
        %725 = vmatprep.subr.mxu0 %v624
        %726 = vmatpush1.msra.mxu0 %v623
        %727 = vmatprep.subr.mxu0 %v622
        %728 = vmatpush1.msra.mxu0 %v621
        %729 = vmatprep.subr.mxu0 %v620
        %730 = vmatpush1.msra.mxu0 %v619
        %731 = vmatprep.subr.mxu0 %v618
        %732 = vmatpush1.msra.mxu0 %v617
        %733 = vmatprep.subr.mxu0 %v616
        %734 = vmatpush1.msra.mxu0 %v615
        %735 = vmatprep.subr.mxu0 %v614
        %736 = vmatpush1.msra.mxu0 %v613
        %737 = vmatprep.subr.mxu0 %v612
        %738 = vmatpush1.msra.mxu0 %v611
        %739 = vmatprep.subr.mxu0 %v610
        %740 = vmatpush1.msra.mxu0 %v609
        %741 = vmatprep.subr.mxu0 %v608
        %742 = vmatpush1.msra.mxu0 %v607
        %743 = vmatprep.subr.mxu0 %v606
        %744 = vmatpush1.msra.mxu0 %v605
        %745 = vmatprep.subr.mxu0 %v604
        %746 = vmatpush1.msra.mxu0 %v603
        %747 = vmatprep.subr.mxu0 %v602
        %748 = vmatpush1.msra.mxu0 %v601
        %749 = vmatprep.subr.mxu0 %v600
        %750 = vmatpush1.msra.mxu0 %v599
        %751 = vmatprep.subr.mxu0 %v598
        %752 = vmatpush1.msra.mxu0 %v597
        %753 = vmatprep.subr.mxu0 %v596
        %754 = vmatpush1.msra.mxu0 %v595
        %755 = vmatprep.subr.mxu0 %v658
        %756 = vmatpush2.msra.mxu0 %v657
        %757 = vmatprep.subr.mxu0 %v656
        %758 = vmatpush2.msra.mxu0 %v655
        %759 = vmatprep.subr.mxu0 %v654
        %760 = vmatpush2.msra.mxu0 %v653
        %761 = vmatprep.subr.mxu0 %v652
        %762 = vmatpush2.msra.mxu0 %v651
        %763 = vmatprep.subr.mxu0 %v650
        %764 = vmatpush2.msra.mxu0 %v649
        %765 = vmatprep.subr.mxu0 %v648
        %766 = vmatpush2.msra.mxu0 %v647
        %767 = vmatprep.subr.mxu0 %v646
        %768 = vmatpush2.msra.mxu0 %v645
        %769 = vmatprep.subr.mxu0 %v644
        %770 = vmatpush2.msra.mxu0 %v643
        %771 = vmatprep.subr.mxu0 %v642
        %772 = vmatpush2.msra.mxu0 %v641
        %773 = vmatprep.subr.mxu0 %v640
        %774 = vmatpush2.msra.mxu0 %v639
        %775 = vmatprep.subr.mxu0 %v638
        %776 = vmatpush2.msra.mxu0 %v637
        %777 = vmatprep.subr.mxu0 %v636
        %778 = vmatpush2.msra.mxu0 %v635
        %779 = vmatprep.subr.mxu0 %v634
        %780 = vmatpush2.msra.mxu0 %v633
        %781 = vmatprep.subr.mxu0 %v632
        %782 = vmatpush2.msra.mxu0 %v631
        %783 = vmatprep.subr.mxu0 %v630
        %784 = vmatpush2.msra.mxu0 %v629
        %785 = vmatprep.subr.mxu0 %v628
        %786 = vmatpush2.msra.mxu0 %v627
        %787 = vmatprep.mubr.f32.mxu0 %v592
        %788 = vmatmul.mubr.f32.gmra.mxu0 %v591
        %v789 = vpop.f32.mrf.mxu0
        %v790 = vadd.f32 0.0, %v789
        %v791 = vpop.f32.mrf.mxu0
        %v792 = vadd.f32 0.0, %v791
        %793 = vdwg.mxu0
        %794 = vmatprep.subr.mxu0 %v690
        %795 = vmatpush1.msra.mxu0 %v689
        %796 = vmatprep.subr.mxu0 %v688
        %797 = vmatpush1.msra.mxu0 %v687
        %798 = vmatprep.subr.mxu0 %v686
        %799 = vmatpush1.msra.mxu0 %v685
        %800 = vmatprep.subr.mxu0 %v684
        %801 = vmatpush1.msra.mxu0 %v683
        %802 = vmatprep.subr.mxu0 %v682
        %803 = vmatpush1.msra.mxu0 %v681
        %804 = vmatprep.subr.mxu0 %v680
        %805 = vmatpush1.msra.mxu0 %v679
        %806 = vmatprep.subr.mxu0 %v678
        %807 = vmatpush1.msra.mxu0 %v677
        %808 = vmatprep.subr.mxu0 %v676
        %809 = vmatpush1.msra.mxu0 %v675
        %810 = vmatprep.subr.mxu0 %v674
        %811 = vmatpush1.msra.mxu0 %v673
        %812 = vmatprep.subr.mxu0 %v672
        %813 = vmatpush1.msra.mxu0 %v671
        %814 = vmatprep.subr.mxu0 %v670
        %815 = vmatpush1.msra.mxu0 %v669
        %816 = vmatprep.subr.mxu0 %v668
        %817 = vmatpush1.msra.mxu0 %v667
        %818 = vmatprep.subr.mxu0 %v666
        %819 = vmatpush1.msra.mxu0 %v665
        %820 = vmatprep.subr.mxu0 %v664
        %821 = vmatpush1.msra.mxu0 %v663
        %822 = vmatprep.subr.mxu0 %v662
        %823 = vmatpush1.msra.mxu0 %v661
        %824 = vmatprep.subr.mxu0 %v660
        %825 = vmatpush1.msra.mxu0 %v659
        %826 = vmatprep.subr.mxu0 %v722
        %827 = vmatpush2.msra.mxu0 %v721
        %828 = vmatprep.subr.mxu0 %v720
        %829 = vmatpush2.msra.mxu0 %v719
        %830 = vmatprep.subr.mxu0 %v718
        %831 = vmatpush2.msra.mxu0 %v717
        %832 = vmatprep.subr.mxu0 %v716
        %833 = vmatpush2.msra.mxu0 %v715
        %834 = vmatprep.subr.mxu0 %v714
        %835 = vmatpush2.msra.mxu0 %v713
        %836 = vmatprep.subr.mxu0 %v712
        %837 = vmatpush2.msra.mxu0 %v711
        %838 = vmatprep.subr.mxu0 %v710
        %839 = vmatpush2.msra.mxu0 %v709
        %840 = vmatprep.subr.mxu0 %v708
        %841 = vmatpush2.msra.mxu0 %v707
        %842 = vmatprep.subr.mxu0 %v706
        %843 = vmatpush2.msra.mxu0 %v705
        %844 = vmatprep.subr.mxu0 %v704
        %845 = vmatpush2.msra.mxu0 %v703
        %846 = vmatprep.subr.mxu0 %v702
        %847 = vmatpush2.msra.mxu0 %v701
        %848 = vmatprep.subr.mxu0 %v700
        %849 = vmatpush2.msra.mxu0 %v699
        %850 = vmatprep.subr.mxu0 %v698
        %851 = vmatpush2.msra.mxu0 %v697
        %852 = vmatprep.subr.mxu0 %v696
        %853 = vmatpush2.msra.mxu0 %v695
        %854 = vmatprep.subr.mxu0 %v694
        %855 = vmatpush2.msra.mxu0 %v693
        %856 = vmatprep.subr.mxu0 %v692
        %857 = vmatpush2.msra.mxu0 %v691
        %858 = vmatprep.mubr.f32.mxu0 %v594
        %859 = vmatmul.mubr.f32.gmra.mxu0 %v593
        %v860 = vpop.f32.mrf.mxu0
        %v861 = vadd.f32 %v790, %v860
        %v862 = vpop.f32.mrf.mxu0
        %v863 = vadd.f32 %v792, %v862
        %864 = vdwg.mxu0
        %v865 = vadd.f32 %v589, %v861
        %v866 = vadd.f32 %v590, %v863
        %867 = vst [vmem:[#allocation2] sm:$0xff] %v865
        %868 = vst [vmem:[#allocation2 + $0x8] sm:$0xff] %v866
        %p869 = scmp.eq.s32.totalorder %s22, 4
        // Predicated region
        $region64: #{_lambda_.24} parent=54 // pred_check
          %p870 = pneg %p869
        $region65: #{_lambda_.24} parent=54 // pred_check_branch
          %872 = sbr.rel (%p870) target = $region67
        $region66: #{_lambda_.24} parent=54 // pred_region
          %v873 = vld [vmem:[#allocation2] sm:$0xff]
          %v874 = vld [vmem:[#allocation2 + $0x8] sm:$0xff]
          %v875 = vld [vmem:[%s566] sm:$0x3]
          %v877 = vlaneseq
          %v878 = vshrl.u32 %v877, 7
          %v879 = vsub.s32 0, %v878
          %v880 = vrot.slane %v875, %v879
          %v881 = vlaneseq
          %v882 = vshrl.u32 %v881, 7
          %v883 = vsub.s32 1, %v882
          %v884 = vrot.slane %v875, %v883
          %v887 = vmul.f32 %v873, %v880
          %v888 = vmul.f32 %v874, %v884
          %v889 = vld [vmem:[%s571] sm:$0x3]
          %v891 = vlaneseq
          %v892 = vshrl.u32 %v891, 7
          %v893 = vsub.s32 0, %v892
          %v894 = vrot.slane %v889, %v893
          %v895 = vlaneseq
          %v896 = vshrl.u32 %v895, 7
          %v897 = vsub.s32 1, %v896
          %v898 = vrot.slane %v889, %v897
          %v901 = vadd.f32 %v887, %v894
          %v902 = vadd.f32 %v888, %v898
          %v903 = vmax.f32 %v901, 0.0
          %v904 = vmax.f32 %v902, 0.0
          %905 = vst [vmem:[%s581] sm:$0xff] %v903
          %906 = vst [vmem:[%s581 + $0x8] sm:$0xff] %v904
        $region67: #{_lambda_.24} parent=54 // pred_fallthru
          _
        %s907 = smul.u32 2, %s21
        %p908 = scmp.lt.s32.totalorder %s20, 0
        %s909 = scalar_select %p908, %s20, 0
        %p910 = scmp.lt.s32.totalorder %s907, 3
        %s911 = scalar_select %p910, %s907, 3
        %s912 = smul.addr %s909, 4
        %s913 = sadd.s32 %s911, %s912
        %s914 = smul.addr %s913, 8
        %s915 = scalar_lea.vmem %s4, %s914
        // Predicated region
        $region68: #{_lambda_.24} parent=54 // pred_check
          %p916 = pneg %p162
        $region69: #{_lambda_.24} parent=54 // pred_check_branch
          %918 = sbr.rel (%p916) target = $region71
        $region70: #{_lambda_.24} parent=54 // pred_region
          %s919 = smul.u32 2, %s21
        $region71: #{_lambda_.24} parent=54 // pred_fallthru
          _
      $region55: #{_lambda_.24} parent=5 // pred_fallthru
        _
      %p920 = scmp.le.s32.totalorder 2, %s10
      // Predicated region
      $region72: #{_lambda_.24} parent=5 // pred_check
        %p921 = pneg %p920
      $region73: #{_lambda_.24} parent=5 // pred_check_branch
        %923 = sbr.rel (%p921) target = $region75
      $region74: #{_lambda_.24} parent=5 // pred_region
        %s924 = ssub.s32 %s10, 2
        // Predicated region
        $region76: #{_lambda_.24} parent=74 // pred_check
          %p925 = pneg %p168
        $region77: #{_lambda_.24} parent=74 // pred_check_branch
          %927 = sbr.rel (%p925) target = $region79
        $region78: #{_lambda_.24} parent=74 // pred_region
          %s928 = smul.u32 2, %s24
          %p929 = scmp.lt.s32.totalorder %s23, 0
          %s930 = scalar_select %p929, %s23, 0
          %p931 = scmp.lt.s32.totalorder %s928, 3
          %s932 = scalar_select %p931, %s928, 3
          %s933 = smul.addr %s930, 4
          %s934 = sadd.s32 %s932, %s933
          %s935 = smul.addr %s934, 8
          %s936 = scalar_lea.vmem %s4, %s935
        $region79: #{_lambda_.24} parent=74 // pred_fallthru
          _
      $region75: #{_lambda_.24} parent=5 // pred_fallthru
        _
    $region6: #{_lambda_.24} parent=1 // loop_footer
      %s14 = sadd.s32 1, %s10
    $region7: #{_lambda_.24} parent=1 // loop_footer_branch
      %9 = sbr.rel target = $region3
    $region8: #{_lambda_.24} parent=1 // loop_exit
      _

// kernel: _lambda_.25
$region0: #{_lambda_.25}
  #allocation0 [shape = 'u32[]', space=smem, size = 0x4, offset = 0x4, fixed_abs, tag = 'smem constant byte address 0x4 - core index']
  #allocation1 [shape = 'u32[144,128]{1,0:T(1,128)}', space=vmem, size = 0x12000, scoped, tag = 'internal scratch']
  #allocation2 [shape = 'f32[8,256]{1,0:T(8,128)}', space=vmem, size = 0x2000, scoped, tag = 'scratch operand']
  %s0 = inlined_call_operand.vmem [shape: f32[8,256], index: 0, kind: input, shape index: {}]
  %s1 = inlined_call_operand.vmem [shape: f32[256,512], index: 1, kind: input, shape index: {}]
  %s2 = inlined_call_operand.vmem [shape: f32[1,512], index: 2, kind: input, shape index: {}]
  %s3 = inlined_call_operand.vmem [shape: f32[1,512], index: 3, kind: input, shape index: {}]
  %s4 = inlined_call_operand.vmem [shape: f32[8,512], index: 4, kind: output, shape index: {}]
  %s5 = sld [smem:[#allocation0]]
  $region80: #{_lambda_.25} parent=0
    _
  %s7 = ssub.s32 1, %s5
  %s8 = scalar_select 0, %s7, %s5
  $region1: #{_lambda_.25} parent=0
    #allocation3 [shape = 'u8[524288]{0}', space=vmem, size = 0x80000, scoped, tag = 'input window, operand 1']
    loop: start=0, step=1, limit=4
    $region2: #{_lambda_.25} parent=1 // loop_pre_header
      _
    $region3: #{_lambda_.25} parent=1 // loop_header
      %s10 = sphi 0, %s14
      %p11 = scmp.ge.s32.totalorder %s10, 4
      %s17 = sphi 0, %s36
      %s18 = sphi 0, %s32
      %s19 = sphi 0, %s28
      %s20 = sphi 0, %s17
      %s21 = sphi 0, %s18
      %s22 = sphi 0, %s19
      %s23 = sphi 0, %s20
      %s24 = sphi 0, %s21
      %s25 = sphi 0, %s22
      %s41 = sphi 0, %s43
      %s44 = sphi 0, %s41
      %s45 = sphi 0, %s44
      %s61 = sphi 0, %s45
      %s69 = sphi 0, %s71
      %s72 = sphi 0, %s69
      %s73 = sphi 0, %s72
      %s89 = sphi 0, %s73
      %s95 = sphi 0, %s97
      %s98 = sphi 0, %s95
      %s99 = sphi 0, %s98
      %s115 = sphi 0, %s99
      %s121 = sphi 0, %s123
      %s124 = sphi 0, %s121
      %s125 = sphi 0, %s124
      %s141 = sphi 0, %s125
      %s149 = sphi 0, %s151
      %s152 = sphi 0, %s149
      %s153 = sphi 0, %s152
      %s169 = sphi 0, %s153
    $region4: #{_lambda_.25} parent=1 // loop_header_branch
      %13 = sbr.rel (%p11) target = $region8
    $region5: #{_lambda_.25} parent=1 // loop_body
      %s15 = ssub.s32 %s10, 1
      %s16 = ssub.s32 %s10, 2
      %s26 = sadd.s32 1, %s19
      %p27 = scmp.ge.s32.totalorder %s26, 1
      %s28 = scalar_select %p27, 0, %s26
      %s29 = sadd.s32 1, %s18
      %s30 = scalar_select %p27, %s29, %s18
      %p31 = scmp.ge.s32.totalorder %s30, 2
      %s32 = scalar_select %p31, 0, %s30
      %s33 = sadd.s32 1, %s17
      %s34 = scalar_select %p31, %s33, %s17
      %p35 = scmp.ge.s32.totalorder %s34, 1
      %s36 = scalar_select %p35, 0, %s34
      %s37 = ssub.s32 %s17, %s36
      %s38 = ssub.s32 %s19, %s28
      %s39 = sor.u32 %s37, %s38
      %p40 = scmp.eq.s32.totalorder %s39, 0
      %s42 = sadd.s32 %s41, 1
      %s43 = scalar_select %p40, %s41, %s42
      %p46 = pneg %p40
      %p47 = scmp.eq.s32.totalorder %s10, 1
      %p48 = por %p46, %p47
      %p49 = scmp.ne.s32.totalorder %s41, %s44
      %p50 = scmp.eq.s32.totalorder %s10, 0
      %p51 = por %p49, %p50
      %p52 = scmp.ne.s32.totalorder %s41, %s44
      %p53 = scmp.eq.s32.totalorder %s15, 1
      %p54 = por %p52, %p53
      %p55 = scmp.ne.s32.totalorder %s44, %s45
      %p56 = scmp.eq.s32.totalorder %s15, 0
      %p57 = por %p55, %p56
      %p58 = scmp.ne.s32.totalorder %s44, %s45
      %p59 = scmp.eq.s32.totalorder %s16, 1
      %p60 = por %p58, %p59
      %p62 = scmp.ne.s32.totalorder %s45, %s61
      %p63 = scmp.eq.s32.totalorder %s16, 0
      %p64 = por %p62, %p63
      %s65 = ssub.s32 %s19, %s28
      %s66 = ssub.s32 %s18, %s32
      %s67 = sor.u32 %s65, %s66
      %p68 = scmp.eq.s32.totalorder %s67, 0
      %s70 = sadd.s32 %s69, 1
      %s71 = scalar_select %p68, %s69, %s70
      %p74 = pneg %p68
      %p75 = scmp.eq.s32.totalorder %s10, 1
      %p76 = por %p74, %p75
      %p77 = scmp.ne.s32.totalorder %s69, %s72
      %p78 = scmp.eq.s32.totalorder %s10, 0
      %p79 = por %p77, %p78
      %p80 = scmp.ne.s32.totalorder %s69, %s72
      %p81 = scmp.eq.s32.totalorder %s15, 1
      %p82 = por %p80, %p81
      %p83 = scmp.ne.s32.totalorder %s72, %s73
      %p84 = scmp.eq.s32.totalorder %s15, 0
      %p85 = por %p83, %p84
      %p86 = scmp.ne.s32.totalorder %s72, %s73
      %p87 = scmp.eq.s32.totalorder %s16, 1
      %p88 = por %p86, %p87
      %p90 = scmp.ne.s32.totalorder %s73, %s89
      %p91 = scmp.eq.s32.totalorder %s16, 0
      %p92 = por %p90, %p91
      %s93 = ssub.s32 %s18, %s32
      %p94 = scmp.eq.s32.totalorder %s93, 0
      %s96 = sadd.s32 %s95, 1
      %s97 = scalar_select %p94, %s95, %s96
      %p100 = pneg %p94
      %p101 = scmp.eq.s32.totalorder %s10, 1
      %p102 = por %p100, %p101
      %p103 = scmp.ne.s32.totalorder %s95, %s98
      %p104 = scmp.eq.s32.totalorder %s10, 0
      %p105 = por %p103, %p104
      %p106 = scmp.ne.s32.totalorder %s95, %s98
      %p107 = scmp.eq.s32.totalorder %s15, 1
      %p108 = por %p106, %p107
      %p109 = scmp.ne.s32.totalorder %s98, %s99
      %p110 = scmp.eq.s32.totalorder %s15, 0
      %p111 = por %p109, %p110
      %p112 = scmp.ne.s32.totalorder %s98, %s99
      %p113 = scmp.eq.s32.totalorder %s16, 1
      %p114 = por %p112, %p113
      %p116 = scmp.ne.s32.totalorder %s99, %s115
      %p117 = scmp.eq.s32.totalorder %s16, 0
      %p118 = por %p116, %p117
      %s119 = ssub.s32 %s18, %s32
      %p120 = scmp.eq.s32.totalorder %s119, 0
      %s122 = sadd.s32 %s121, 1
      %s123 = scalar_select %p120, %s121, %s122
      %p126 = pneg %p120
      %p127 = scmp.eq.s32.totalorder %s10, 1
      %p128 = por %p126, %p127
      %p129 = scmp.ne.s32.totalorder %s121, %s124
      %p130 = scmp.eq.s32.totalorder %s10, 0
      %p131 = por %p129, %p130
      %p132 = scmp.ne.s32.totalorder %s121, %s124
      %p133 = scmp.eq.s32.totalorder %s15, 1
      %p134 = por %p132, %p133
      %p135 = scmp.ne.s32.totalorder %s124, %s125
      %p136 = scmp.eq.s32.totalorder %s15, 0
      %p137 = por %p135, %p136
      %p138 = scmp.ne.s32.totalorder %s124, %s125
      %p139 = scmp.eq.s32.totalorder %s16, 1
      %p140 = por %p138, %p139
      %p142 = scmp.ne.s32.totalorder %s125, %s141
      %p143 = scmp.eq.s32.totalorder %s16, 0
      %p144 = por %p142, %p143
      %s145 = ssub.s32 %s17, %s36
      %s146 = ssub.s32 %s18, %s32
      %s147 = sor.u32 %s145, %s146
      %p148 = scmp.eq.s32.totalorder %s147, 0
      %s150 = sadd.s32 %s149, 1
      %s151 = scalar_select %p148, %s149, %s150
      %p154 = pneg %p148
      %p155 = scmp.eq.s32.totalorder %s10, 1
      %p156 = por %p154, %p155
      %p157 = scmp.ne.s32.totalorder %s149, %s152
      %p158 = scmp.eq.s32.totalorder %s10, 0
      %p159 = por %p157, %p158
      %p160 = scmp.ne.s32.totalorder %s149, %s152
      %p161 = scmp.eq.s32.totalorder %s15, 1
      %p162 = por %p160, %p161
      %p163 = scmp.ne.s32.totalorder %s152, %s153
      %p164 = scmp.eq.s32.totalorder %s15, 0
      %p165 = por %p163, %p164
      %p166 = scmp.ne.s32.totalorder %s152, %s153
      %p167 = scmp.eq.s32.totalorder %s16, 1
      %p168 = por %p166, %p167
      %p170 = scmp.ne.s32.totalorder %s153, %s169
      %p171 = scmp.eq.s32.totalorder %s16, 0
      %p172 = por %p170, %p171
      %p173 = scmp.le.s32.totalorder 1, %s10
      %p174 = scmp.lt.s32.totalorder %s10, 3
      %p175 = pnand %p173, %p174
      %p176 = pneg %p175
      // Predicated region
      $region9: #{_lambda_.25} parent=5 // pred_check
        _
      $region10: #{_lambda_.25} parent=5 // pred_check_branch
        %178 = sbr.rel (%p175) target = $region12
      $region11: #{_lambda_.25} parent=5 // pred_region
        %s179 = ssub.s32 %s10, 1
        // Predicated region
        $region13: #{_lambda_.25} parent=11 // pred_check
          %p180 = pneg %p57
        $region14: #{_lambda_.25} parent=11 // pred_check_branch
          %182 = sbr.rel (%p180) target = $region16
        $region15: #{_lambda_.25} parent=11 // pred_region
          %s183 = smul.u32 2, %s22
          %p184 = scmp.lt.s32.totalorder %s20, 0
          %s185 = scalar_select %p184, %s20, 0
          %p186 = scmp.lt.s32.totalorder %s183, 1
          %s187 = scalar_select %p186, %s183, 1
          %s188 = smul.addr %s185, 2
          %s189 = sadd.s32 %s187, %s188
          %s190 = smul.addr %s189, 8
          %s191 = scalar_lea.vmem %s0, %s190
          %s192 = smul.u32 2, %s22
        $region16: #{_lambda_.25} parent=11 // pred_fallthru
          _
      $region12: #{_lambda_.25} parent=5 // pred_fallthru
        _
      %p193 = scmp.lt.s32.totalorder %s10, 2
      // Predicated region
      $region17: #{_lambda_.25} parent=5 // pred_check
        %p194 = pneg %p193
      $region18: #{_lambda_.25} parent=5 // pred_check_branch
        %196 = sbr.rel (%p194) target = $region20
      $region19: #{_lambda_.25} parent=5 // pred_region
        // Predicated region
        $region21: #{_lambda_.25} parent=19 // pred_check
          %p197 = pneg %p79
        $region22: #{_lambda_.25} parent=19 // pred_check_branch
          %199 = sbr.rel (%p197) target = $region24
        $region23: #{_lambda_.25} parent=19 // pred_region
          %s200 = sand.u32 %s69, 1
          %s201 = sand.u32 %s69, 1
          %s202 = smul.addr %s201, 512
          %s203 = scalar_lea.vmem [#allocation3], %s202
          %s204 = smul.u32 32, %s19
          %s205 = smul.u32 2, %s18
          %s206 = smul.addr %s204, 4
          %s207 = sadd.s32 %s205, %s206
          %s208 = smul.addr %s207, 8
          %s209 = scalar_lea.vmem %s1, %s208
          // Predicated region
          $region25: #{_lambda_.25} parent=23 // pred_check
            _
          $region26: #{_lambda_.25} parent=23 // pred_check_branch
            %211 = sbr.rel (0) target = $region28
          $region27: #{_lambda_.25} parent=23 // pred_region
            // Predicated region
            $region29: #{_lambda_.25} parent=27 // pred_check
              _
            $region30: #{_lambda_.25} parent=27 // pred_check_branch
              %213 = sbr.rel (0) target = $region32
            $region31: #{_lambda_.25} parent=27 // pred_region
              loop: start=0, step=1, limit=1
              $region33: #{_lambda_.25} parent=31 // loop_pre_header
                _
              $region34: #{_lambda_.25} parent=31 // loop_header
                %s215 = sphi 0, %s219
                %p216 = scmp.ge.s32.totalorder %s215, 1
                %s220 = sphi %s209, %s209
                %s221 = sphi %s203, %s203
              $region35: #{_lambda_.25} parent=31 // loop_header_branch
                %218 = sbr.rel (%p216) target = $region39
              $region36: #{_lambda_.25} parent=31 // loop_body
                %v222 = vld [vmem:[%s220] sm:$0xff]
                %223 = vst [vmem:[%s221] sm:$0xff] %v222
                %v224 = vld [vmem:[%s220 + $0x8] sm:$0xff]
                %225 = vst [vmem:[%s221 + $0x8] sm:$0xff] %v224
                %v226 = vld [vmem:[%s220 + $0x20] sm:$0xff]
                %227 = vst [vmem:[%s221 + $0x10] sm:$0xff] %v226
                %v228 = vld [vmem:[%s220 + $0x28] sm:$0xff]
                %229 = vst [vmem:[%s221 + $0x18] sm:$0xff] %v228
                %v230 = vld [vmem:[%s220 + $0x40] sm:$0xff]
                %231 = vst [vmem:[%s221 + $0x20] sm:$0xff] %v230
                %v232 = vld [vmem:[%s220 + $0x48] sm:$0xff]
                %233 = vst [vmem:[%s221 + $0x28] sm:$0xff] %v232
                %v234 = vld [vmem:[%s220 + $0x60] sm:$0xff]
                %235 = vst [vmem:[%s221 + $0x30] sm:$0xff] %v234
                %v236 = vld [vmem:[%s220 + $0x68] sm:$0xff]
                %237 = vst [vmem:[%s221 + $0x38] sm:$0xff] %v236
                %v238 = vld [vmem:[%s220 + $0x80] sm:$0xff]
                %239 = vst [vmem:[%s221 + $0x40] sm:$0xff] %v238
                %v240 = vld [vmem:[%s220 + $0x88] sm:$0xff]
                %241 = vst [vmem:[%s221 + $0x48] sm:$0xff] %v240
                %v242 = vld [vmem:[%s220 + $0xa0] sm:$0xff]
                %243 = vst [vmem:[%s221 + $0x50] sm:$0xff] %v242
                %v244 = vld [vmem:[%s220 + $0xa8] sm:$0xff]
                %245 = vst [vmem:[%s221 + $0x58] sm:$0xff] %v244
                %v246 = vld [vmem:[%s220 + $0xc0] sm:$0xff]
                %247 = vst [vmem:[%s221 + $0x60] sm:$0xff] %v246
                %v248 = vld [vmem:[%s220 + $0xc8] sm:$0xff]
                %249 = vst [vmem:[%s221 + $0x68] sm:$0xff] %v248
                %v250 = vld [vmem:[%s220 + $0xe0] sm:$0xff]
                %251 = vst [vmem:[%s221 + $0x70] sm:$0xff] %v250
                %v252 = vld [vmem:[%s220 + $0xe8] sm:$0xff]
                %253 = vst [vmem:[%s221 + $0x78] sm:$0xff] %v252
                %v254 = vld [vmem:[%s220 + $0x100] sm:$0xff]
                %255 = vst [vmem:[%s221 + $0x80] sm:$0xff] %v254
                %v256 = vld [vmem:[%s220 + $0x108] sm:$0xff]
                %257 = vst [vmem:[%s221 + $0x88] sm:$0xff] %v256
                %v258 = vld [vmem:[%s220 + $0x120] sm:$0xff]
                %259 = vst [vmem:[%s221 + $0x90] sm:$0xff] %v258
                %v260 = vld [vmem:[%s220 + $0x128] sm:$0xff]
                %261 = vst [vmem:[%s221 + $0x98] sm:$0xff] %v260
                %v262 = vld [vmem:[%s220 + $0x140] sm:$0xff]
                %263 = vst [vmem:[%s221 + $0xa0] sm:$0xff] %v262
                %v264 = vld [vmem:[%s220 + $0x148] sm:$0xff]
                %265 = vst [vmem:[%s221 + $0xa8] sm:$0xff] %v264
                %v266 = vld [vmem:[%s220 + $0x160] sm:$0xff]
                %267 = vst [vmem:[%s221 + $0xb0] sm:$0xff] %v266
                %v268 = vld [vmem:[%s220 + $0x168] sm:$0xff]
                %269 = vst [vmem:[%s221 + $0xb8] sm:$0xff] %v268
                %v270 = vld [vmem:[%s220 + $0x180] sm:$0xff]
                %271 = vst [vmem:[%s221 + $0xc0] sm:$0xff] %v270
                %v272 = vld [vmem:[%s220 + $0x188] sm:$0xff]
                %273 = vst [vmem:[%s221 + $0xc8] sm:$0xff] %v272
                %v274 = vld [vmem:[%s220 + $0x1a0] sm:$0xff]
                %275 = vst [vmem:[%s221 + $0xd0] sm:$0xff] %v274
                %v276 = vld [vmem:[%s220 + $0x1a8] sm:$0xff]
                %277 = vst [vmem:[%s221 + $0xd8] sm:$0xff] %v276
                %v278 = vld [vmem:[%s220 + $0x1c0] sm:$0xff]
                %279 = vst [vmem:[%s221 + $0xe0] sm:$0xff] %v278
                %v280 = vld [vmem:[%s220 + $0x1c8] sm:$0xff]
                %281 = vst [vmem:[%s221 + $0xe8] sm:$0xff] %v280
                %v282 = vld [vmem:[%s220 + $0x1e0] sm:$0xff]
                %283 = vst [vmem:[%s221 + $0xf0] sm:$0xff] %v282
                %v284 = vld [vmem:[%s220 + $0x1e8] sm:$0xff]
                %285 = vst [vmem:[%s221 + $0xf8] sm:$0xff] %v284
                %v286 = vld [vmem:[%s220 + $0x200] sm:$0xff]
                %287 = vst [vmem:[%s221 + $0x100] sm:$0xff] %v286
                %v288 = vld [vmem:[%s220 + $0x208] sm:$0xff]
                %289 = vst [vmem:[%s221 + $0x108] sm:$0xff] %v288
                %v290 = vld [vmem:[%s220 + $0x220] sm:$0xff]
                %291 = vst [vmem:[%s221 + $0x110] sm:$0xff] %v290
                %v292 = vld [vmem:[%s220 + $0x228] sm:$0xff]
                %293 = vst [vmem:[%s221 + $0x118] sm:$0xff] %v292
                %v294 = vld [vmem:[%s220 + $0x240] sm:$0xff]
                %295 = vst [vmem:[%s221 + $0x120] sm:$0xff] %v294
                %v296 = vld [vmem:[%s220 + $0x248] sm:$0xff]
                %297 = vst [vmem:[%s221 + $0x128] sm:$0xff] %v296
                %v298 = vld [vmem:[%s220 + $0x260] sm:$0xff]
                %299 = vst [vmem:[%s221 + $0x130] sm:$0xff] %v298
                %v300 = vld [vmem:[%s220 + $0x268] sm:$0xff]
                %301 = vst [vmem:[%s221 + $0x138] sm:$0xff] %v300
                %v302 = vld [vmem:[%s220 + $0x280] sm:$0xff]
                %303 = vst [vmem:[%s221 + $0x140] sm:$0xff] %v302
                %v304 = vld [vmem:[%s220 + $0x288] sm:$0xff]
                %305 = vst [vmem:[%s221 + $0x148] sm:$0xff] %v304
                %v306 = vld [vmem:[%s220 + $0x2a0] sm:$0xff]
                %307 = vst [vmem:[%s221 + $0x150] sm:$0xff] %v306
                %v308 = vld [vmem:[%s220 + $0x2a8] sm:$0xff]
                %309 = vst [vmem:[%s221 + $0x158] sm:$0xff] %v308
                %v310 = vld [vmem:[%s220 + $0x2c0] sm:$0xff]
                %311 = vst [vmem:[%s221 + $0x160] sm:$0xff] %v310
                %v312 = vld [vmem:[%s220 + $0x2c8] sm:$0xff]
                %313 = vst [vmem:[%s221 + $0x168] sm:$0xff] %v312
                %v314 = vld [vmem:[%s220 + $0x2e0] sm:$0xff]
                %315 = vst [vmem:[%s221 + $0x170] sm:$0xff] %v314
                %v316 = vld [vmem:[%s220 + $0x2e8] sm:$0xff]
                %317 = vst [vmem:[%s221 + $0x178] sm:$0xff] %v316
                %v318 = vld [vmem:[%s220 + $0x300] sm:$0xff]
                %319 = vst [vmem:[%s221 + $0x180] sm:$0xff] %v318
                %v320 = vld [vmem:[%s220 + $0x308] sm:$0xff]
                %321 = vst [vmem:[%s221 + $0x188] sm:$0xff] %v320
                %v322 = vld [vmem:[%s220 + $0x320] sm:$0xff]
                %323 = vst [vmem:[%s221 + $0x190] sm:$0xff] %v322
                %v324 = vld [vmem:[%s220 + $0x328] sm:$0xff]
                %325 = vst [vmem:[%s221 + $0x198] sm:$0xff] %v324
                %v326 = vld [vmem:[%s220 + $0x340] sm:$0xff]
                %327 = vst [vmem:[%s221 + $0x1a0] sm:$0xff] %v326
                %v328 = vld [vmem:[%s220 + $0x348] sm:$0xff]
                %329 = vst [vmem:[%s221 + $0x1a8] sm:$0xff] %v328
                %v330 = vld [vmem:[%s220 + $0x360] sm:$0xff]
                %331 = vst [vmem:[%s221 + $0x1b0] sm:$0xff] %v330
                %v332 = vld [vmem:[%s220 + $0x368] sm:$0xff]
                %333 = vst [vmem:[%s221 + $0x1b8] sm:$0xff] %v332
                %v334 = vld [vmem:[%s220 + $0x380] sm:$0xff]
                %335 = vst [vmem:[%s221 + $0x1c0] sm:$0xff] %v334
                %v336 = vld [vmem:[%s220 + $0x388] sm:$0xff]
                %337 = vst [vmem:[%s221 + $0x1c8] sm:$0xff] %v336
                %v338 = vld [vmem:[%s220 + $0x3a0] sm:$0xff]
                %339 = vst [vmem:[%s221 + $0x1d0] sm:$0xff] %v338
                %v340 = vld [vmem:[%s220 + $0x3a8] sm:$0xff]
                %341 = vst [vmem:[%s221 + $0x1d8] sm:$0xff] %v340
                %v342 = vld [vmem:[%s220 + $0x3c0] sm:$0xff]
                %343 = vst [vmem:[%s221 + $0x1e0] sm:$0xff] %v342
                %v344 = vld [vmem:[%s220 + $0x3c8] sm:$0xff]
                %345 = vst [vmem:[%s221 + $0x1e8] sm:$0xff] %v344
                %v346 = vld [vmem:[%s220 + $0x3e0] sm:$0xff]
                %347 = vst [vmem:[%s221 + $0x1f0] sm:$0xff] %v346
                %v348 = vld [vmem:[%s220 + $0x3e8] sm:$0xff]
                %349 = vst [vmem:[%s221 + $0x1f8] sm:$0xff] %v348
              $region37: #{_lambda_.25} parent=31 // loop_footer
                %s219 = sadd.s32 1, %s215
              $region38: #{_lambda_.25} parent=31 // loop_footer_branch
                %214 = sbr.rel target = $region34
              $region39: #{_lambda_.25} parent=31 // loop_exit
                _
            $region32: #{_lambda_.25} parent=27 // pred_fallthru
              _
            // Predicated region
            $region40: #{_lambda_.25} parent=27 // pred_check
              _
            $region41: #{_lambda_.25} parent=27 // pred_check_branch
              %351 = sbr.rel target = $region43
            $region42: #{_lambda_.25} parent=27 // pred_region
              _
            $region43: #{_lambda_.25} parent=27 // pred_fallthru
              _
          $region28: #{_lambda_.25} parent=23 // pred_fallthru
            _
          %352 = vnop
        $region24: #{_lambda_.25} parent=19 // pred_fallthru
          _
        // Predicated region
        $region44: #{_lambda_.25} parent=19 // pred_check
          %p353 = pneg %p105
        $region45: #{_lambda_.25} parent=19 // pred_check_branch
          %355 = sbr.rel (%p353) target = $region47
        $region46: #{_lambda_.25} parent=19 // pred_region
          %s356 = smul.u32 2, %s18
          %p357 = scmp.lt.s32.totalorder %s356, 3
          %s358 = scalar_select %p357, %s356, 3
          %s359 = scalar_lea.vmem %s2, %s358
          %s360 = smul.u32 2, %s18
        $region47: #{_lambda_.25} parent=19 // pred_fallthru
          _
        // Predicated region
        $region48: #{_lambda_.25} parent=19 // pred_check
          %p361 = pneg %p131
        $region49: #{_lambda_.25} parent=19 // pred_check_branch
          %363 = sbr.rel (%p361) target = $region51
        $region50: #{_lambda_.25} parent=19 // pred_region
          %s364 = smul.u32 2, %s18
          %p365 = scmp.lt.s32.totalorder %s364, 3
          %s366 = scalar_select %p365, %s364, 3
          %s367 = scalar_lea.vmem %s3, %s366
          %s368 = smul.u32 2, %s18
        $region51: #{_lambda_.25} parent=19 // pred_fallthru
          _
      $region20: #{_lambda_.25} parent=5 // pred_fallthru
        _
      %p369 = scmp.le.s32.totalorder 1, %s10
      %p370 = scmp.lt.s32.totalorder %s10, 3
      %p371 = pnand %p369, %p370
      %p372 = pneg %p371
      // Predicated region
      $region52: #{_lambda_.25} parent=5 // pred_check
        _
      $region53: #{_lambda_.25} parent=5 // pred_check_branch
        %374 = sbr.rel (%p371) target = $region55
      $region54: #{_lambda_.25} parent=5 // pred_region
        %s375 = ssub.s32 %s10, 1
        %s376 = sand.u32 %s72, 1
        %s377 = sand.u32 %s72, 1
        %s378 = smul.addr %s377, 512
        %s379 = scalar_lea.vmem [#allocation3], %s378
        // Predicated region
        $region56: #{_lambda_.25} parent=54 // pred_check
          %p380 = pneg %p85
        $region57: #{_lambda_.25} parent=54 // pred_check_branch
          %382 = sbr.rel (%p380) target = $region59
        $region58: #{_lambda_.25} parent=54 // pred_region
          _
        $region59: #{_lambda_.25} parent=54 // pred_fallthru
          _
        %s383 = smul.u32 2, %s22
        %p384 = scmp.lt.s32.totalorder %s20, 0
        %s385 = scalar_select %p384, %s20, 0
        %p386 = scmp.lt.s32.totalorder %s383, 1
        %s387 = scalar_select %p386, %s383, 1
        %s388 = smul.addr %s385, 2
        %s389 = sadd.s32 %s387, %s388
        %s390 = smul.addr %s389, 8
        %s391 = scalar_lea.vmem %s0, %s390
        %p392 = pneg %p57
        %p393 = pneg %p54
        %s394 = sand.u32 %s72, 1
        %s395 = sand.u32 %s72, 1
        %s396 = smul.addr %s395, 512
        %s397 = scalar_lea.vmem [#allocation3], %s396
        %p398 = pneg %p85
        %p399 = pneg %p82
        %s400 = smul.u32 2, %s21
        %p401 = scmp.lt.s32.totalorder %s400, 3
        %s402 = scalar_select %p401, %s400, 3
        %s403 = scalar_lea.vmem %s2, %s402
        %p404 = pneg %p111
        %p405 = pneg %p108
        %s406 = smul.u32 2, %s21
        %p407 = scmp.lt.s32.totalorder %s406, 3
        %s408 = scalar_select %p407, %s406, 3
        %s409 = scalar_lea.vmem %s3, %s408
        %p410 = pneg %p137
        %p411 = pneg %p134
        %p412 = pneg %p165
        %p413 = pneg %p162
        %s414 = smul.u32 2, %s21
        %p415 = scmp.lt.s32.totalorder %s20, 0
        %s416 = scalar_select %p415, %s20, 0
        %p417 = scmp.lt.s32.totalorder %s414, 3
        %s418 = scalar_select %p417, %s414, 3
        %s419 = smul.addr %s416, 4
        %s420 = sadd.s32 %s418, %s419
        %s421 = smul.addr %s420, 8
        %s422 = scalar_lea.vmem %s4, %s421
        %s423 = smul.u32 2, %s22
        %p424 = scmp.lt.s32.totalorder %s20, 0
        %s425 = scalar_select %p424, %s20, 0
        %p426 = scmp.lt.s32.totalorder %s423, 1
        %s427 = scalar_select %p426, %s423, 1
        %s428 = smul.addr %s425, 2
        %s429 = sadd.s32 %s427, %s428
        %s430 = smul.addr %s429, 8
        %s431 = scalar_lea.vmem %s0, %s430
        %s432 = smul.u32 2, %s22
        %s433 = smul.u32 32, %s22
        %s434 = smul.u32 2, %s21
        %s435 = smul.u32 2, %s21
        %p436 = scmp.lt.s32.totalorder %s435, 3
        %s437 = scalar_select %p436, %s435, 3
        %s438 = scalar_lea.vmem %s2, %s437
        %s439 = smul.u32 2, %s21
        %s440 = smul.u32 2, %s21
        %p441 = scmp.lt.s32.totalorder %s440, 3
        %s442 = scalar_select %p441, %s440, 3
        %s443 = scalar_lea.vmem %s3, %s442
        %s444 = smul.u32 2, %s21
        %s445 = smul.u32 2, %s21
        %p446 = scmp.lt.s32.totalorder %s20, 0
        %s447 = scalar_select %p446, %s20, 0
        %p448 = scmp.lt.s32.totalorder %s445, 3
        %s449 = scalar_select %p448, %s445, 3
        %s450 = smul.addr %s447, 4
        %s451 = sadd.s32 %s449, %s450
        %s452 = smul.addr %s451, 8
        %s453 = scalar_lea.vmem %s4, %s452
        %s454 = smul.u32 2, %s21
        %p455 = scmp.eq.s32.totalorder %s22, 0
        // Predicated region
        $region60: #{_lambda_.25} parent=54 // pred_check
          %p456 = pneg %p455
        $region61: #{_lambda_.25} parent=54 // pred_check_branch
          %458 = sbr.rel (%p456) target = $region63
        $region62: #{_lambda_.25} parent=54 // pred_region
          %459 = vst [vmem:[#allocation2] sm:$0xff] 0.0
          %460 = vst [vmem:[#allocation2 + $0x8] sm:$0xff] 0.0
        $region63: #{_lambda_.25} parent=54 // pred_fallthru
          _
        %v461 = vld [vmem:[#allocation2] sm:$0xff]
        %v462 = vld [vmem:[#allocation2 + $0x8] sm:$0xff]
        %v463 = vld [vmem:[%s431] sm:$0xff]
        %v464 = vld [vmem:[%s431 + $0x8] sm:$0xff]
        %v465 = vld [vmem:[%s379] sm:$0xff]
        %v466 = vld [vmem:[%s379 + $0x8] sm:$0xff]
        %v467 = vld [vmem:[%s379 + $0x10] sm:$0xff]
        %v468 = vld [vmem:[%s379 + $0x18] sm:$0xff]
        %v469 = vld [vmem:[%s379 + $0x20] sm:$0xff]
        %v470 = vld [vmem:[%s379 + $0x28] sm:$0xff]
        %v471 = vld [vmem:[%s379 + $0x30] sm:$0xff]
        %v472 = vld [vmem:[%s379 + $0x38] sm:$0xff]
        %v473 = vld [vmem:[%s379 + $0x40] sm:$0xff]
        %v474 = vld [vmem:[%s379 + $0x48] sm:$0xff]
        %v475 = vld [vmem:[%s379 + $0x50] sm:$0xff]
        %v476 = vld [vmem:[%s379 + $0x58] sm:$0xff]
        %v477 = vld [vmem:[%s379 + $0x60] sm:$0xff]
        %v478 = vld [vmem:[%s379 + $0x68] sm:$0xff]
        %v479 = vld [vmem:[%s379 + $0x70] sm:$0xff]
        %v480 = vld [vmem:[%s379 + $0x78] sm:$0xff]
        %v481 = vld [vmem:[%s379 + $0x80] sm:$0xff]
        %v482 = vld [vmem:[%s379 + $0x88] sm:$0xff]
        %v483 = vld [vmem:[%s379 + $0x90] sm:$0xff]
        %v484 = vld [vmem:[%s379 + $0x98] sm:$0xff]
        %v485 = vld [vmem:[%s379 + $0xa0] sm:$0xff]
        %v486 = vld [vmem:[%s379 + $0xa8] sm:$0xff]
        %v487 = vld [vmem:[%s379 + $0xb0] sm:$0xff]
        %v488 = vld [vmem:[%s379 + $0xb8] sm:$0xff]
        %v489 = vld [vmem:[%s379 + $0xc0] sm:$0xff]
        %v490 = vld [vmem:[%s379 + $0xc8] sm:$0xff]
        %v491 = vld [vmem:[%s379 + $0xd0] sm:$0xff]
        %v492 = vld [vmem:[%s379 + $0xd8] sm:$0xff]
        %v493 = vld [vmem:[%s379 + $0xe0] sm:$0xff]
        %v494 = vld [vmem:[%s379 + $0xe8] sm:$0xff]
        %v495 = vld [vmem:[%s379 + $0xf0] sm:$0xff]
        %v496 = vld [vmem:[%s379 + $0xf8] sm:$0xff]
        %v497 = vld [vmem:[%s379 + $0x100] sm:$0xff]
        %v498 = vld [vmem:[%s379 + $0x108] sm:$0xff]
        %v499 = vld [vmem:[%s379 + $0x110] sm:$0xff]
        %v500 = vld [vmem:[%s379 + $0x118] sm:$0xff]
        %v501 = vld [vmem:[%s379 + $0x120] sm:$0xff]
        %v502 = vld [vmem:[%s379 + $0x128] sm:$0xff]
        %v503 = vld [vmem:[%s379 + $0x130] sm:$0xff]
        %v504 = vld [vmem:[%s379 + $0x138] sm:$0xff]
        %v505 = vld [vmem:[%s379 + $0x140] sm:$0xff]
        %v506 = vld [vmem:[%s379 + $0x148] sm:$0xff]
        %v507 = vld [vmem:[%s379 + $0x150] sm:$0xff]
        %v508 = vld [vmem:[%s379 + $0x158] sm:$0xff]
        %v509 = vld [vmem:[%s379 + $0x160] sm:$0xff]
        %v510 = vld [vmem:[%s379 + $0x168] sm:$0xff]
        %v511 = vld [vmem:[%s379 + $0x170] sm:$0xff]
        %v512 = vld [vmem:[%s379 + $0x178] sm:$0xff]
        %v513 = vld [vmem:[%s379 + $0x180] sm:$0xff]
        %v514 = vld [vmem:[%s379 + $0x188] sm:$0xff]
        %v515 = vld [vmem:[%s379 + $0x190] sm:$0xff]
        %v516 = vld [vmem:[%s379 + $0x198] sm:$0xff]
        %v517 = vld [vmem:[%s379 + $0x1a0] sm:$0xff]
        %v518 = vld [vmem:[%s379 + $0x1a8] sm:$0xff]
        %v519 = vld [vmem:[%s379 + $0x1b0] sm:$0xff]
        %v520 = vld [vmem:[%s379 + $0x1b8] sm:$0xff]
        %v521 = vld [vmem:[%s379 + $0x1c0] sm:$0xff]
        %v522 = vld [vmem:[%s379 + $0x1c8] sm:$0xff]
        %v523 = vld [vmem:[%s379 + $0x1d0] sm:$0xff]
        %v524 = vld [vmem:[%s379 + $0x1d8] sm:$0xff]
        %v525 = vld [vmem:[%s379 + $0x1e0] sm:$0xff]
        %v526 = vld [vmem:[%s379 + $0x1e8] sm:$0xff]
        %v527 = vld [vmem:[%s379 + $0x1f0] sm:$0xff]
        %v528 = vld [vmem:[%s379 + $0x1f8] sm:$0xff]
        %529 = vmatprep.subr.mxu0 %v496
        %530 = vmatpush1.msra.mxu0 %v495
        %531 = vmatprep.subr.mxu0 %v494
        %532 = vmatpush1.msra.mxu0 %v493
        %533 = vmatprep.subr.mxu0 %v492
        %534 = vmatpush1.msra.mxu0 %v491
        %535 = vmatprep.subr.mxu0 %v490
        %536 = vmatpush1.msra.mxu0 %v489
        %537 = vmatprep.subr.mxu0 %v488
        %538 = vmatpush1.msra.mxu0 %v487
        %539 = vmatprep.subr.mxu0 %v486
        %540 = vmatpush1.msra.mxu0 %v485
        %541 = vmatprep.subr.mxu0 %v484
        %542 = vmatpush1.msra.mxu0 %v483
        %543 = vmatprep.subr.mxu0 %v482
        %544 = vmatpush1.msra.mxu0 %v481
        %545 = vmatprep.subr.mxu0 %v480
        %546 = vmatpush1.msra.mxu0 %v479
        %547 = vmatprep.subr.mxu0 %v478
        %548 = vmatpush1.msra.mxu0 %v477
        %549 = vmatprep.subr.mxu0 %v476
        %550 = vmatpush1.msra.mxu0 %v475
        %551 = vmatprep.subr.mxu0 %v474
        %552 = vmatpush1.msra.mxu0 %v473
        %553 = vmatprep.subr.mxu0 %v472
        %554 = vmatpush1.msra.mxu0 %v471
        %555 = vmatprep.subr.mxu0 %v470
        %556 = vmatpush1.msra.mxu0 %v469
        %557 = vmatprep.subr.mxu0 %v468
        %558 = vmatpush1.msra.mxu0 %v467
        %559 = vmatprep.subr.mxu0 %v466
        %560 = vmatpush1.msra.mxu0 %v465
        %561 = vmatprep.subr.mxu0 %v528
        %562 = vmatpush2.msra.mxu0 %v527
        %563 = vmatprep.subr.mxu0 %v526
        %564 = vmatpush2.msra.mxu0 %v525
        %565 = vmatprep.subr.mxu0 %v524
        %566 = vmatpush2.msra.mxu0 %v523
        %567 = vmatprep.subr.mxu0 %v522
        %568 = vmatpush2.msra.mxu0 %v521
        %569 = vmatprep.subr.mxu0 %v520
        %570 = vmatpush2.msra.mxu0 %v519
        %571 = vmatprep.subr.mxu0 %v518
        %572 = vmatpush2.msra.mxu0 %v517
        %573 = vmatprep.subr.mxu0 %v516
        %574 = vmatpush2.msra.mxu0 %v515
        %575 = vmatprep.subr.mxu0 %v514
        %576 = vmatpush2.msra.mxu0 %v513
        %577 = vmatprep.subr.mxu0 %v512
        %578 = vmatpush2.msra.mxu0 %v511
        %579 = vmatprep.subr.mxu0 %v510
        %580 = vmatpush2.msra.mxu0 %v509
        %581 = vmatprep.subr.mxu0 %v508
        %582 = vmatpush2.msra.mxu0 %v507
        %583 = vmatprep.subr.mxu0 %v506
        %584 = vmatpush2.msra.mxu0 %v505
        %585 = vmatprep.subr.mxu0 %v504
        %586 = vmatpush2.msra.mxu0 %v503
        %587 = vmatprep.subr.mxu0 %v502
        %588 = vmatpush2.msra.mxu0 %v501
        %589 = vmatprep.subr.mxu0 %v500
        %590 = vmatpush2.msra.mxu0 %v499
        %591 = vmatprep.subr.mxu0 %v498
        %592 = vmatpush2.msra.mxu0 %v497
        %593 = vmatprep.mubr.f32.mxu0 %v464
        %594 = vmatmul.mubr.f32.gmra.mxu0 %v463
        %v595 = vpop.f32.mrf.mxu0
        %v596 = vadd.f32 0.0, %v595
        %v597 = vpop.f32.mrf.mxu0
        %v598 = vadd.f32 0.0, %v597
        %599 = vdwg.mxu0
        %v600 = vadd.f32 %v461, %v596
        %v601 = vadd.f32 %v462, %v598
        %602 = vst [vmem:[#allocation2] sm:$0xff] %v600
        %603 = vst [vmem:[#allocation2 + $0x8] sm:$0xff] %v601
        // Predicated region
        $region64: #{_lambda_.25} parent=54 // pred_check
          %p604 = pneg %p455
        $region65: #{_lambda_.25} parent=54 // pred_check_branch
          %606 = sbr.rel (%p604) target = $region67
        $region66: #{_lambda_.25} parent=54 // pred_region
          %v607 = vld [vmem:[#allocation2] sm:$0xff]
          %v608 = vld [vmem:[#allocation2 + $0x8] sm:$0xff]
          %v609 = vld [vmem:[%s438] sm:$0x3]
          %v611 = vlaneseq
          %v612 = vshrl.u32 %v611, 7
          %v613 = vsub.s32 0, %v612
          %v614 = vrot.slane %v609, %v613
          %v615 = vlaneseq
          %v616 = vshrl.u32 %v615, 7
          %v617 = vsub.s32 1, %v616
          %v618 = vrot.slane %v609, %v617
          %v621 = vmul.f32 %v607, %v614
          %v622 = vmul.f32 %v608, %v618
          %v623 = vld [vmem:[%s443] sm:$0x3]
          %v625 = vlaneseq
          %v626 = vshrl.u32 %v625, 7
          %v627 = vsub.s32 0, %v626
          %v628 = vrot.slane %v623, %v627
          %v629 = vlaneseq
          %v630 = vshrl.u32 %v629, 7
          %v631 = vsub.s32 1, %v630
          %v632 = vrot.slane %v623, %v631
          %v635 = vadd.f32 %v621, %v628
          %v636 = vadd.f32 %v622, %v632
          %637 = vst [vmem:[%s453] sm:$0xff] %v635
          %638 = vst [vmem:[%s453 + $0x8] sm:$0xff] %v636
        $region67: #{_lambda_.25} parent=54 // pred_fallthru
          _
        %s639 = smul.u32 2, %s21
        %p640 = scmp.lt.s32.totalorder %s20, 0
        %s641 = scalar_select %p640, %s20, 0
        %p642 = scmp.lt.s32.totalorder %s639, 3
        %s643 = scalar_select %p642, %s639, 3
        %s644 = smul.addr %s641, 4
        %s645 = sadd.s32 %s643, %s644
        %s646 = smul.addr %s645, 8
        %s647 = scalar_lea.vmem %s4, %s646
        // Predicated region
        $region68: #{_lambda_.25} parent=54 // pred_check
          %p648 = pneg %p162
        $region69: #{_lambda_.25} parent=54 // pred_check_branch
          %650 = sbr.rel (%p648) target = $region71
        $region70: #{_lambda_.25} parent=54 // pred_region
          %s651 = smul.u32 2, %s21
        $region71: #{_lambda_.25} parent=54 // pred_fallthru
          _
      $region55: #{_lambda_.25} parent=5 // pred_fallthru
        _
      %p652 = scmp.le.s32.totalorder 2, %s10
      // Predicated region
      $region72: #{_lambda_.25} parent=5 // pred_check
        %p653 = pneg %p652
      $region73: #{_lambda_.25} parent=5 // pred_check_branch
        %655 = sbr.rel (%p653) target = $region75
      $region74: #{_lambda_.25} parent=5 // pred_region
        %s656 = ssub.s32 %s10, 2
        // Predicated region
        $region76: #{_lambda_.25} parent=74 // pred_check
          %p657 = pneg %p168
        $region77: #{_lambda_.25} parent=74 // pred_check_branch
          %659 = sbr.rel (%p657) target = $region79
        $region78: #{_lambda_.25} parent=74 // pred_region
          %s660 = smul.u32 2, %s24
          %p661 = scmp.lt.s32.totalorder %s23, 0
          %s662 = scalar_select %p661, %s23, 0
          %p663 = scmp.lt.s32.totalorder %s660, 3
          %s664 = scalar_select %p663, %s660, 3
          %s665 = smul.addr %s662, 4
          %s666 = sadd.s32 %s664, %s665
          %s667 = smul.addr %s666, 8
          %s668 = scalar_lea.vmem %s4, %s667
        $region79: #{_lambda_.25} parent=74 // pred_fallthru
          _
      $region75: #{_lambda_.25} parent=5 // pred_fallthru
        _
    $region6: #{_lambda_.25} parent=1 // loop_footer
      %s14 = sadd.s32 1, %s10
    $region7: #{_lambda_.25} parent=1 // loop_footer_branch
      %9 = sbr.rel target = $region3
    $region8: #{_lambda_.25} parent=1 // loop_exit
      _

// kernel: _lambda_.26
$region0: #{_lambda_.26}
  #allocation0 [shape = 'u32[]', space=smem, size = 0x4, offset = 0x4, fixed_abs, tag = 'smem constant byte address 0x4 - core index']
  #allocation1 [shape = 'u32[144,128]{1,0:T(1,128)}', space=vmem, size = 0x12000, scoped, tag = 'internal scratch']
  #allocation2 [shape = 'f32[8,256]{1,0:T(8,128)}', space=vmem, size = 0x2000, scoped, tag = 'scratch operand']
  %s0 = inlined_call_operand.vmem [shape: f32[8,4608], index: 0, kind: input, shape index: {}]
  %s1 = inlined_call_operand.vmem [shape: f32[4608,512], index: 1, kind: input, shape index: {}]
  %s2 = inlined_call_operand.vmem [shape: f32[1,512], index: 2, kind: input, shape index: {}]
  %s3 = inlined_call_operand.vmem [shape: f32[1,512], index: 3, kind: input, shape index: {}]
  %s4 = inlined_call_operand.vmem [shape: f32[8,512], index: 4, kind: input, shape index: {}]
  %s5 = inlined_call_operand.vmem [shape: f32[8,512], index: 5, kind: output, shape index: {}]
  %s6 = sld [smem:[#allocation0]]
  $region84: #{_lambda_.26} parent=0
    _
  %s8 = ssub.s32 1, %s6
  %s9 = scalar_select 0, %s8, %s6
  $region1: #{_lambda_.26} parent=0
    #allocation3 [shape = 'u8[1048576]{0}', space=vmem, size = 0x100000, scoped, tag = 'input window, operand 1']
    loop: start=0, step=1, limit=20
    $region2: #{_lambda_.26} parent=1 // loop_pre_header
      _
    $region3: #{_lambda_.26} parent=1 // loop_header
      %s11 = sphi 0, %s15
      %p12 = scmp.ge.s32.totalorder %s11, 20
      %s18 = sphi 0, %s37
      %s19 = sphi 0, %s33
      %s20 = sphi 0, %s29
      %s21 = sphi 0, %s18
      %s22 = sphi 0, %s19
      %s23 = sphi 0, %s20
      %s24 = sphi 0, %s21
      %s25 = sphi 0, %s22
      %s26 = sphi 0, %s23
      %s42 = sphi 0, %s44
      %s45 = sphi 0, %s42
      %s46 = sphi 0, %s45
      %s62 = sphi 0, %s46
      %s70 = sphi 0, %s72
      %s73 = sphi 0, %s70
      %s74 = sphi 0, %s73
      %s90 = sphi 0, %s74
      %s96 = sphi 0, %s98
      %s99 = sphi 0, %s96
      %s100 = sphi 0, %s99
      %s116 = sphi 0, %s100
      %s122 = sphi 0, %s124
      %s125 = sphi 0, %s122
      %s126 = sphi 0, %s125
      %s142 = sphi 0, %s126
      %s150 = sphi 0, %s152
      %s153 = sphi 0, %s150
      %s154 = sphi 0, %s153
      %s170 = sphi 0, %s154
      %s178 = sphi 0, %s180
      %s181 = sphi 0, %s178
      %s182 = sphi 0, %s181
      %s198 = sphi 0, %s182
    $region4: #{_lambda_.26} parent=1 // loop_header_branch
      %14 = sbr.rel (%p12) target = $region8
    $region5: #{_lambda_.26} parent=1 // loop_body
      %s16 = ssub.s32 %s11, 1
      %s17 = ssub.s32 %s11, 2
      %s27 = sadd.s32 1, %s20
      %p28 = scmp.ge.s32.totalorder %s27, 9
      %s29 = scalar_select %p28, 0, %s27
      %s30 = sadd.s32 1, %s19
      %s31 = scalar_select %p28, %s30, %s19
      %p32 = scmp.ge.s32.totalorder %s31, 2
      %s33 = scalar_select %p32, 0, %s31
      %s34 = sadd.s32 1, %s18
      %s35 = scalar_select %p32, %s34, %s18
      %p36 = scmp.ge.s32.totalorder %s35, 1
      %s37 = scalar_select %p36, 0, %s35
      %s38 = ssub.s32 %s18, %s37
      %s39 = ssub.s32 %s20, %s29
      %s40 = sor.u32 %s38, %s39
      %p41 = scmp.eq.s32.totalorder %s40, 0
      %s43 = sadd.s32 %s42, 1
      %s44 = scalar_select %p41, %s42, %s43
      %p47 = pneg %p41
      %p48 = scmp.eq.s32.totalorder %s11, 17
      %p49 = por %p47, %p48
      %p50 = scmp.ne.s32.totalorder %s42, %s45
      %p51 = scmp.eq.s32.totalorder %s11, 0
      %p52 = por %p50, %p51
      %p53 = scmp.ne.s32.totalorder %s42, %s45
      %p54 = scmp.eq.s32.totalorder %s16, 17
      %p55 = por %p53, %p54
      %p56 = scmp.ne.s32.totalorder %s45, %s46
      %p57 = scmp.eq.s32.totalorder %s16, 0
      %p58 = por %p56, %p57
      %p59 = scmp.ne.s32.totalorder %s45, %s46
      %p60 = scmp.eq.s32.totalorder %s17, 17
      %p61 = por %p59, %p60
      %p63 = scmp.ne.s32.totalorder %s46, %s62
      %p64 = scmp.eq.s32.totalorder %s17, 0
      %p65 = por %p63, %p64
      %s66 = ssub.s32 %s20, %s29
      %s67 = ssub.s32 %s19, %s33
      %s68 = sor.u32 %s66, %s67
      %p69 = scmp.eq.s32.totalorder %s68, 0
      %s71 = sadd.s32 %s70, 1
      %s72 = scalar_select %p69, %s70, %s71
      %p75 = pneg %p69
      %p76 = scmp.eq.s32.totalorder %s11, 17
      %p77 = por %p75, %p76
      %p78 = scmp.ne.s32.totalorder %s70, %s73
      %p79 = scmp.eq.s32.totalorder %s11, 0
      %p80 = por %p78, %p79
      %p81 = scmp.ne.s32.totalorder %s70, %s73
      %p82 = scmp.eq.s32.totalorder %s16, 17
      %p83 = por %p81, %p82
      %p84 = scmp.ne.s32.totalorder %s73, %s74
      %p85 = scmp.eq.s32.totalorder %s16, 0
      %p86 = por %p84, %p85
      %p87 = scmp.ne.s32.totalorder %s73, %s74
      %p88 = scmp.eq.s32.totalorder %s17, 17
      %p89 = por %p87, %p88
      %p91 = scmp.ne.s32.totalorder %s74, %s90
      %p92 = scmp.eq.s32.totalorder %s17, 0
      %p93 = por %p91, %p92
      %s94 = ssub.s32 %s19, %s33
      %p95 = scmp.eq.s32.totalorder %s94, 0
      %s97 = sadd.s32 %s96, 1
      %s98 = scalar_select %p95, %s96, %s97
      %p101 = pneg %p95
      %p102 = scmp.eq.s32.totalorder %s11, 17
      %p103 = por %p101, %p102
      %p104 = scmp.ne.s32.totalorder %s96, %s99
      %p105 = scmp.eq.s32.totalorder %s11, 0
      %p106 = por %p104, %p105
      %p107 = scmp.ne.s32.totalorder %s96, %s99
      %p108 = scmp.eq.s32.totalorder %s16, 17
      %p109 = por %p107, %p108
      %p110 = scmp.ne.s32.totalorder %s99, %s100
      %p111 = scmp.eq.s32.totalorder %s16, 0
      %p112 = por %p110, %p111
      %p113 = scmp.ne.s32.totalorder %s99, %s100
      %p114 = scmp.eq.s32.totalorder %s17, 17
      %p115 = por %p113, %p114
      %p117 = scmp.ne.s32.totalorder %s100, %s116
      %p118 = scmp.eq.s32.totalorder %s17, 0
      %p119 = por %p117, %p118
      %s120 = ssub.s32 %s19, %s33
      %p121 = scmp.eq.s32.totalorder %s120, 0
      %s123 = sadd.s32 %s122, 1
      %s124 = scalar_select %p121, %s122, %s123
      %p127 = pneg %p121
      %p128 = scmp.eq.s32.totalorder %s11, 17
      %p129 = por %p127, %p128
      %p130 = scmp.ne.s32.totalorder %s122, %s125
      %p131 = scmp.eq.s32.totalorder %s11, 0
      %p132 = por %p130, %p131
      %p133 = scmp.ne.s32.totalorder %s122, %s125
      %p134 = scmp.eq.s32.totalorder %s16, 17
      %p135 = por %p133, %p134
      %p136 = scmp.ne.s32.totalorder %s125, %s126
      %p137 = scmp.eq.s32.totalorder %s16, 0
      %p138 = por %p136, %p137
      %p139 = scmp.ne.s32.totalorder %s125, %s126
      %p140 = scmp.eq.s32.totalorder %s17, 17
      %p141 = por %p139, %p140
      %p143 = scmp.ne.s32.totalorder %s126, %s142
      %p144 = scmp.eq.s32.totalorder %s17, 0
      %p145 = por %p143, %p144
      %s146 = ssub.s32 %s18, %s37
      %s147 = ssub.s32 %s19, %s33
      %s148 = sor.u32 %s146, %s147
      %p149 = scmp.eq.s32.totalorder %s148, 0
      %s151 = sadd.s32 %s150, 1
      %s152 = scalar_select %p149, %s150, %s151
      %p155 = pneg %p149
      %p156 = scmp.eq.s32.totalorder %s11, 17
      %p157 = por %p155, %p156
      %p158 = scmp.ne.s32.totalorder %s150, %s153
      %p159 = scmp.eq.s32.totalorder %s11, 0
      %p160 = por %p158, %p159
      %p161 = scmp.ne.s32.totalorder %s150, %s153
      %p162 = scmp.eq.s32.totalorder %s16, 17
      %p163 = por %p161, %p162
      %p164 = scmp.ne.s32.totalorder %s153, %s154
      %p165 = scmp.eq.s32.totalorder %s16, 0
      %p166 = por %p164, %p165
      %p167 = scmp.ne.s32.totalorder %s153, %s154
      %p168 = scmp.eq.s32.totalorder %s17, 17
      %p169 = por %p167, %p168
      %p171 = scmp.ne.s32.totalorder %s154, %s170
      %p172 = scmp.eq.s32.totalorder %s17, 0
      %p173 = por %p171, %p172
      %s174 = ssub.s32 %s18, %s37
      %s175 = ssub.s32 %s19, %s33
      %s176 = sor.u32 %s174, %s175
      %p177 = scmp.eq.s32.totalorder %s176, 0
      %s179 = sadd.s32 %s178, 1
      %s180 = scalar_select %p177, %s178, %s179
      %p183 = pneg %p177
      %p184 = scmp.eq.s32.totalorder %s11, 17
      %p185 = por %p183, %p184
      %p186 = scmp.ne.s32.totalorder %s178, %s181
      %p187 = scmp.eq.s32.totalorder %s11, 0
      %p188 = por %p186, %p187
      %p189 = scmp.ne.s32.totalorder %s178, %s181
      %p190 = scmp.eq.s32.totalorder %s16, 17
      %p191 = por %p189, %p190
      %p192 = scmp.ne.s32.totalorder %s181, %s182
      %p193 = scmp.eq.s32.totalorder %s16, 0
      %p194 = por %p192, %p193
      %p195 = scmp.ne.s32.totalorder %s181, %s182
      %p196 = scmp.eq.s32.totalorder %s17, 17
      %p197 = por %p195, %p196
      %p199 = scmp.ne.s32.totalorder %s182, %s198
      %p200 = scmp.eq.s32.totalorder %s17, 0
      %p201 = por %p199, %p200
      %p202 = scmp.le.s32.totalorder 1, %s11
      %p203 = scmp.lt.s32.totalorder %s11, 19
      %p204 = pnand %p202, %p203
      %p205 = pneg %p204
      // Predicated region
      $region9: #{_lambda_.26} parent=5 // pred_check
        _
      $region10: #{_lambda_.26} parent=5 // pred_check_branch
        %207 = sbr.rel (%p204) target = $region12
      $region11: #{_lambda_.26} parent=5 // pred_region
        %s208 = ssub.s32 %s11, 1
      $region12: #{_lambda_.26} parent=5 // pred_fallthru
        _
      %p209 = scmp.lt.s32.totalorder %s11, 18
      // Predicated region
      $region13: #{_lambda_.26} parent=5 // pred_check
        %p210 = pneg %p209
      $region14: #{_lambda_.26} parent=5 // pred_check_branch
        %212 = sbr.rel (%p210) target = $region16
      $region15: #{_lambda_.26} parent=5 // pred_region
        // Predicated region
        $region17: #{_lambda_.26} parent=15 // pred_check
          %p213 = pneg %p52
        $region18: #{_lambda_.26} parent=15 // pred_check_branch
          %215 = sbr.rel (%p213) target = $region20
        $region19: #{_lambda_.26} parent=15 // pred_region
          %s216 = smul.u32 4, %s20
          %p217 = scmp.lt.s32.totalorder %s18, 0
          %s218 = scalar_select %p217, %s18, 0
          %p219 = scmp.lt.s32.totalorder %s216, 35
          %s220 = scalar_select %p219, %s216, 35
          %s221 = smul.addr %s218, 36
          %s222 = sadd.s32 %s220, %s221
          %s223 = smul.addr %s222, 8
          %s224 = scalar_lea.vmem %s0, %s223
          %s225 = smul.u32 4, %s20
        $region20: #{_lambda_.26} parent=15 // pred_fallthru
          _
        // Predicated region
        $region21: #{_lambda_.26} parent=15 // pred_check
          %p226 = pneg %p80
        $region22: #{_lambda_.26} parent=15 // pred_check_branch
          %228 = sbr.rel (%p226) target = $region24
        $region23: #{_lambda_.26} parent=15 // pred_region
          %s229 = sand.u32 %s70, 1
          %s230 = sand.u32 %s70, 1
          %s231 = smul.addr %s230, 1024
          %s232 = scalar_lea.vmem [#allocation3], %s231
          %s233 = smul.u32 64, %s20
          %s234 = smul.u32 2, %s19
          %s235 = smul.addr %s233, 4
          %s236 = sadd.s32 %s234, %s235
          %s237 = smul.addr %s236, 8
          %s238 = scalar_lea.vmem %s1, %s237
          // Predicated region
          $region25: #{_lambda_.26} parent=23 // pred_check
            _
          $region26: #{_lambda_.26} parent=23 // pred_check_branch
            %240 = sbr.rel (0) target = $region28
          $region27: #{_lambda_.26} parent=23 // pred_region
            // Predicated region
            $region29: #{_lambda_.26} parent=27 // pred_check
              _
            $region30: #{_lambda_.26} parent=27 // pred_check_branch
              %242 = sbr.rel (0) target = $region32
            $region31: #{_lambda_.26} parent=27 // pred_region
              loop: start=0, step=1, limit=1
              $region33: #{_lambda_.26} parent=31 // loop_pre_header
                _
              $region34: #{_lambda_.26} parent=31 // loop_header
                %s244 = sphi 0, %s248
                %p245 = scmp.ge.s32.totalorder %s244, 1
                %s249 = sphi %s238, %s238
                %s250 = sphi %s232, %s232
              $region35: #{_lambda_.26} parent=31 // loop_header_branch
                %247 = sbr.rel (%p245) target = $region39
              $region36: #{_lambda_.26} parent=31 // loop_body
                %v251 = vld [vmem:[%s249] sm:$0xff]
                %252 = vst [vmem:[%s250] sm:$0xff] %v251
                %v253 = vld [vmem:[%s249 + $0x8] sm:$0xff]
                %254 = vst [vmem:[%s250 + $0x8] sm:$0xff] %v253
                %v255 = vld [vmem:[%s249 + $0x20] sm:$0xff]
                %256 = vst [vmem:[%s250 + $0x10] sm:$0xff] %v255
                %v257 = vld [vmem:[%s249 + $0x28] sm:$0xff]
                %258 = vst [vmem:[%s250 + $0x18] sm:$0xff] %v257
                %v259 = vld [vmem:[%s249 + $0x40] sm:$0xff]
                %260 = vst [vmem:[%s250 + $0x20] sm:$0xff] %v259
                %v261 = vld [vmem:[%s249 + $0x48] sm:$0xff]
                %262 = vst [vmem:[%s250 + $0x28] sm:$0xff] %v261
                %v263 = vld [vmem:[%s249 + $0x60] sm:$0xff]
                %264 = vst [vmem:[%s250 + $0x30] sm:$0xff] %v263
                %v265 = vld [vmem:[%s249 + $0x68] sm:$0xff]
                %266 = vst [vmem:[%s250 + $0x38] sm:$0xff] %v265
                %v267 = vld [vmem:[%s249 + $0x80] sm:$0xff]
                %268 = vst [vmem:[%s250 + $0x40] sm:$0xff] %v267
                %v269 = vld [vmem:[%s249 + $0x88] sm:$0xff]
                %270 = vst [vmem:[%s250 + $0x48] sm:$0xff] %v269
                %v271 = vld [vmem:[%s249 + $0xa0] sm:$0xff]
                %272 = vst [vmem:[%s250 + $0x50] sm:$0xff] %v271
                %v273 = vld [vmem:[%s249 + $0xa8] sm:$0xff]
                %274 = vst [vmem:[%s250 + $0x58] sm:$0xff] %v273
                %v275 = vld [vmem:[%s249 + $0xc0] sm:$0xff]
                %276 = vst [vmem:[%s250 + $0x60] sm:$0xff] %v275
                %v277 = vld [vmem:[%s249 + $0xc8] sm:$0xff]
                %278 = vst [vmem:[%s250 + $0x68] sm:$0xff] %v277
                %v279 = vld [vmem:[%s249 + $0xe0] sm:$0xff]
                %280 = vst [vmem:[%s250 + $0x70] sm:$0xff] %v279
                %v281 = vld [vmem:[%s249 + $0xe8] sm:$0xff]
                %282 = vst [vmem:[%s250 + $0x78] sm:$0xff] %v281
                %v283 = vld [vmem:[%s249 + $0x100] sm:$0xff]
                %284 = vst [vmem:[%s250 + $0x80] sm:$0xff] %v283
                %v285 = vld [vmem:[%s249 + $0x108] sm:$0xff]
                %286 = vst [vmem:[%s250 + $0x88] sm:$0xff] %v285
                %v287 = vld [vmem:[%s249 + $0x120] sm:$0xff]
                %288 = vst [vmem:[%s250 + $0x90] sm:$0xff] %v287
                %v289 = vld [vmem:[%s249 + $0x128] sm:$0xff]
                %290 = vst [vmem:[%s250 + $0x98] sm:$0xff] %v289
                %v291 = vld [vmem:[%s249 + $0x140] sm:$0xff]
                %292 = vst [vmem:[%s250 + $0xa0] sm:$0xff] %v291
                %v293 = vld [vmem:[%s249 + $0x148] sm:$0xff]
                %294 = vst [vmem:[%s250 + $0xa8] sm:$0xff] %v293
                %v295 = vld [vmem:[%s249 + $0x160] sm:$0xff]
                %296 = vst [vmem:[%s250 + $0xb0] sm:$0xff] %v295
                %v297 = vld [vmem:[%s249 + $0x168] sm:$0xff]
                %298 = vst [vmem:[%s250 + $0xb8] sm:$0xff] %v297
                %v299 = vld [vmem:[%s249 + $0x180] sm:$0xff]
                %300 = vst [vmem:[%s250 + $0xc0] sm:$0xff] %v299
                %v301 = vld [vmem:[%s249 + $0x188] sm:$0xff]
                %302 = vst [vmem:[%s250 + $0xc8] sm:$0xff] %v301
                %v303 = vld [vmem:[%s249 + $0x1a0] sm:$0xff]
                %304 = vst [vmem:[%s250 + $0xd0] sm:$0xff] %v303
                %v305 = vld [vmem:[%s249 + $0x1a8] sm:$0xff]
                %306 = vst [vmem:[%s250 + $0xd8] sm:$0xff] %v305
                %v307 = vld [vmem:[%s249 + $0x1c0] sm:$0xff]
                %308 = vst [vmem:[%s250 + $0xe0] sm:$0xff] %v307
                %v309 = vld [vmem:[%s249 + $0x1c8] sm:$0xff]
                %310 = vst [vmem:[%s250 + $0xe8] sm:$0xff] %v309
                %v311 = vld [vmem:[%s249 + $0x1e0] sm:$0xff]
                %312 = vst [vmem:[%s250 + $0xf0] sm:$0xff] %v311
                %v313 = vld [vmem:[%s249 + $0x1e8] sm:$0xff]
                %314 = vst [vmem:[%s250 + $0xf8] sm:$0xff] %v313
                %v315 = vld [vmem:[%s249 + $0x200] sm:$0xff]
                %316 = vst [vmem:[%s250 + $0x100] sm:$0xff] %v315
                %v317 = vld [vmem:[%s249 + $0x208] sm:$0xff]
                %318 = vst [vmem:[%s250 + $0x108] sm:$0xff] %v317
                %v319 = vld [vmem:[%s249 + $0x220] sm:$0xff]
                %320 = vst [vmem:[%s250 + $0x110] sm:$0xff] %v319
                %v321 = vld [vmem:[%s249 + $0x228] sm:$0xff]
                %322 = vst [vmem:[%s250 + $0x118] sm:$0xff] %v321
                %v323 = vld [vmem:[%s249 + $0x240] sm:$0xff]
                %324 = vst [vmem:[%s250 + $0x120] sm:$0xff] %v323
                %v325 = vld [vmem:[%s249 + $0x248] sm:$0xff]
                %326 = vst [vmem:[%s250 + $0x128] sm:$0xff] %v325
                %v327 = vld [vmem:[%s249 + $0x260] sm:$0xff]
                %328 = vst [vmem:[%s250 + $0x130] sm:$0xff] %v327
                %v329 = vld [vmem:[%s249 + $0x268] sm:$0xff]
                %330 = vst [vmem:[%s250 + $0x138] sm:$0xff] %v329
                %v331 = vld [vmem:[%s249 + $0x280] sm:$0xff]
                %332 = vst [vmem:[%s250 + $0x140] sm:$0xff] %v331
                %v333 = vld [vmem:[%s249 + $0x288] sm:$0xff]
                %334 = vst [vmem:[%s250 + $0x148] sm:$0xff] %v333
                %v335 = vld [vmem:[%s249 + $0x2a0] sm:$0xff]
                %336 = vst [vmem:[%s250 + $0x150] sm:$0xff] %v335
                %v337 = vld [vmem:[%s249 + $0x2a8] sm:$0xff]
                %338 = vst [vmem:[%s250 + $0x158] sm:$0xff] %v337
                %v339 = vld [vmem:[%s249 + $0x2c0] sm:$0xff]
                %340 = vst [vmem:[%s250 + $0x160] sm:$0xff] %v339
                %v341 = vld [vmem:[%s249 + $0x2c8] sm:$0xff]
                %342 = vst [vmem:[%s250 + $0x168] sm:$0xff] %v341
                %v343 = vld [vmem:[%s249 + $0x2e0] sm:$0xff]
                %344 = vst [vmem:[%s250 + $0x170] sm:$0xff] %v343
                %v345 = vld [vmem:[%s249 + $0x2e8] sm:$0xff]
                %346 = vst [vmem:[%s250 + $0x178] sm:$0xff] %v345
                %v347 = vld [vmem:[%s249 + $0x300] sm:$0xff]
                %348 = vst [vmem:[%s250 + $0x180] sm:$0xff] %v347
                %v349 = vld [vmem:[%s249 + $0x308] sm:$0xff]
                %350 = vst [vmem:[%s250 + $0x188] sm:$0xff] %v349
                %v351 = vld [vmem:[%s249 + $0x320] sm:$0xff]
                %352 = vst [vmem:[%s250 + $0x190] sm:$0xff] %v351
                %v353 = vld [vmem:[%s249 + $0x328] sm:$0xff]
                %354 = vst [vmem:[%s250 + $0x198] sm:$0xff] %v353
                %v355 = vld [vmem:[%s249 + $0x340] sm:$0xff]
                %356 = vst [vmem:[%s250 + $0x1a0] sm:$0xff] %v355
                %v357 = vld [vmem:[%s249 + $0x348] sm:$0xff]
                %358 = vst [vmem:[%s250 + $0x1a8] sm:$0xff] %v357
                %v359 = vld [vmem:[%s249 + $0x360] sm:$0xff]
                %360 = vst [vmem:[%s250 + $0x1b0] sm:$0xff] %v359
                %v361 = vld [vmem:[%s249 + $0x368] sm:$0xff]
                %362 = vst [vmem:[%s250 + $0x1b8] sm:$0xff] %v361
                %v363 = vld [vmem:[%s249 + $0x380] sm:$0xff]
                %364 = vst [vmem:[%s250 + $0x1c0] sm:$0xff] %v363
                %v365 = vld [vmem:[%s249 + $0x388] sm:$0xff]
                %366 = vst [vmem:[%s250 + $0x1c8] sm:$0xff] %v365
                %v367 = vld [vmem:[%s249 + $0x3a0] sm:$0xff]
                %368 = vst [vmem:[%s250 + $0x1d0] sm:$0xff] %v367
                %v369 = vld [vmem:[%s249 + $0x3a8] sm:$0xff]
                %370 = vst [vmem:[%s250 + $0x1d8] sm:$0xff] %v369
                %v371 = vld [vmem:[%s249 + $0x3c0] sm:$0xff]
                %372 = vst [vmem:[%s250 + $0x1e0] sm:$0xff] %v371
                %v373 = vld [vmem:[%s249 + $0x3c8] sm:$0xff]
                %374 = vst [vmem:[%s250 + $0x1e8] sm:$0xff] %v373
                %v375 = vld [vmem:[%s249 + $0x3e0] sm:$0xff]
                %376 = vst [vmem:[%s250 + $0x1f0] sm:$0xff] %v375
                %v377 = vld [vmem:[%s249 + $0x3e8] sm:$0xff]
                %378 = vst [vmem:[%s250 + $0x1f8] sm:$0xff] %v377
                %v379 = vld [vmem:[%s249 + $0x400] sm:$0xff]
                %380 = vst [vmem:[%s250 + $0x200] sm:$0xff] %v379
                %v381 = vld [vmem:[%s249 + $0x408] sm:$0xff]
                %382 = vst [vmem:[%s250 + $0x208] sm:$0xff] %v381
                %v383 = vld [vmem:[%s249 + $0x420] sm:$0xff]
                %384 = vst [vmem:[%s250 + $0x210] sm:$0xff] %v383
                %v385 = vld [vmem:[%s249 + $0x428] sm:$0xff]
                %386 = vst [vmem:[%s250 + $0x218] sm:$0xff] %v385
                %v387 = vld [vmem:[%s249 + $0x440] sm:$0xff]
                %388 = vst [vmem:[%s250 + $0x220] sm:$0xff] %v387
                %v389 = vld [vmem:[%s249 + $0x448] sm:$0xff]
                %390 = vst [vmem:[%s250 + $0x228] sm:$0xff] %v389
                %v391 = vld [vmem:[%s249 + $0x460] sm:$0xff]
                %392 = vst [vmem:[%s250 + $0x230] sm:$0xff] %v391
                %v393 = vld [vmem:[%s249 + $0x468] sm:$0xff]
                %394 = vst [vmem:[%s250 + $0x238] sm:$0xff] %v393
                %v395 = vld [vmem:[%s249 + $0x480] sm:$0xff]
                %396 = vst [vmem:[%s250 + $0x240] sm:$0xff] %v395
                %v397 = vld [vmem:[%s249 + $0x488] sm:$0xff]
                %398 = vst [vmem:[%s250 + $0x248] sm:$0xff] %v397
                %v399 = vld [vmem:[%s249 + $0x4a0] sm:$0xff]
                %400 = vst [vmem:[%s250 + $0x250] sm:$0xff] %v399
                %v401 = vld [vmem:[%s249 + $0x4a8] sm:$0xff]
                %402 = vst [vmem:[%s250 + $0x258] sm:$0xff] %v401
                %v403 = vld [vmem:[%s249 + $0x4c0] sm:$0xff]
                %404 = vst [vmem:[%s250 + $0x260] sm:$0xff] %v403
                %v405 = vld [vmem:[%s249 + $0x4c8] sm:$0xff]
                %406 = vst [vmem:[%s250 + $0x268] sm:$0xff] %v405
                %v407 = vld [vmem:[%s249 + $0x4e0] sm:$0xff]
                %408 = vst [vmem:[%s250 + $0x270] sm:$0xff] %v407
                %v409 = vld [vmem:[%s249 + $0x4e8] sm:$0xff]
                %410 = vst [vmem:[%s250 + $0x278] sm:$0xff] %v409
                %v411 = vld [vmem:[%s249 + $0x500] sm:$0xff]
                %412 = vst [vmem:[%s250 + $0x280] sm:$0xff] %v411
                %v413 = vld [vmem:[%s249 + $0x508] sm:$0xff]
                %414 = vst [vmem:[%s250 + $0x288] sm:$0xff] %v413
                %v415 = vld [vmem:[%s249 + $0x520] sm:$0xff]
                %416 = vst [vmem:[%s250 + $0x290] sm:$0xff] %v415
                %v417 = vld [vmem:[%s249 + $0x528] sm:$0xff]
                %418 = vst [vmem:[%s250 + $0x298] sm:$0xff] %v417
                %v419 = vld [vmem:[%s249 + $0x540] sm:$0xff]
                %420 = vst [vmem:[%s250 + $0x2a0] sm:$0xff] %v419
                %v421 = vld [vmem:[%s249 + $0x548] sm:$0xff]
                %422 = vst [vmem:[%s250 + $0x2a8] sm:$0xff] %v421
                %v423 = vld [vmem:[%s249 + $0x560] sm:$0xff]
                %424 = vst [vmem:[%s250 + $0x2b0] sm:$0xff] %v423
                %v425 = vld [vmem:[%s249 + $0x568] sm:$0xff]
                %426 = vst [vmem:[%s250 + $0x2b8] sm:$0xff] %v425
                %v427 = vld [vmem:[%s249 + $0x580] sm:$0xff]
                %428 = vst [vmem:[%s250 + $0x2c0] sm:$0xff] %v427
                %v429 = vld [vmem:[%s249 + $0x588] sm:$0xff]
                %430 = vst [vmem:[%s250 + $0x2c8] sm:$0xff] %v429
                %v431 = vld [vmem:[%s249 + $0x5a0] sm:$0xff]
                %432 = vst [vmem:[%s250 + $0x2d0] sm:$0xff] %v431
                %v433 = vld [vmem:[%s249 + $0x5a8] sm:$0xff]
                %434 = vst [vmem:[%s250 + $0x2d8] sm:$0xff] %v433
                %v435 = vld [vmem:[%s249 + $0x5c0] sm:$0xff]
                %436 = vst [vmem:[%s250 + $0x2e0] sm:$0xff] %v435
                %v437 = vld [vmem:[%s249 + $0x5c8] sm:$0xff]
                %438 = vst [vmem:[%s250 + $0x2e8] sm:$0xff] %v437
                %v439 = vld [vmem:[%s249 + $0x5e0] sm:$0xff]
                %440 = vst [vmem:[%s250 + $0x2f0] sm:$0xff] %v439
                %v441 = vld [vmem:[%s249 + $0x5e8] sm:$0xff]
                %442 = vst [vmem:[%s250 + $0x2f8] sm:$0xff] %v441
                %v443 = vld [vmem:[%s249 + $0x600] sm:$0xff]
                %444 = vst [vmem:[%s250 + $0x300] sm:$0xff] %v443
                %v445 = vld [vmem:[%s249 + $0x608] sm:$0xff]
                %446 = vst [vmem:[%s250 + $0x308] sm:$0xff] %v445
                %v447 = vld [vmem:[%s249 + $0x620] sm:$0xff]
                %448 = vst [vmem:[%s250 + $0x310] sm:$0xff] %v447
                %v449 = vld [vmem:[%s249 + $0x628] sm:$0xff]
                %450 = vst [vmem:[%s250 + $0x318] sm:$0xff] %v449
                %v451 = vld [vmem:[%s249 + $0x640] sm:$0xff]
                %452 = vst [vmem:[%s250 + $0x320] sm:$0xff] %v451
                %v453 = vld [vmem:[%s249 + $0x648] sm:$0xff]
                %454 = vst [vmem:[%s250 + $0x328] sm:$0xff] %v453
                %v455 = vld [vmem:[%s249 + $0x660] sm:$0xff]
                %456 = vst [vmem:[%s250 + $0x330] sm:$0xff] %v455
                %v457 = vld [vmem:[%s249 + $0x668] sm:$0xff]
                %458 = vst [vmem:[%s250 + $0x338] sm:$0xff] %v457
                %v459 = vld [vmem:[%s249 + $0x680] sm:$0xff]
                %460 = vst [vmem:[%s250 + $0x340] sm:$0xff] %v459
                %v461 = vld [vmem:[%s249 + $0x688] sm:$0xff]
                %462 = vst [vmem:[%s250 + $0x348] sm:$0xff] %v461
                %v463 = vld [vmem:[%s249 + $0x6a0] sm:$0xff]
                %464 = vst [vmem:[%s250 + $0x350] sm:$0xff] %v463
                %v465 = vld [vmem:[%s249 + $0x6a8] sm:$0xff]
                %466 = vst [vmem:[%s250 + $0x358] sm:$0xff] %v465
                %v467 = vld [vmem:[%s249 + $0x6c0] sm:$0xff]
                %468 = vst [vmem:[%s250 + $0x360] sm:$0xff] %v467
                %v469 = vld [vmem:[%s249 + $0x6c8] sm:$0xff]
                %470 = vst [vmem:[%s250 + $0x368] sm:$0xff] %v469
                %v471 = vld [vmem:[%s249 + $0x6e0] sm:$0xff]
                %472 = vst [vmem:[%s250 + $0x370] sm:$0xff] %v471
                %v473 = vld [vmem:[%s249 + $0x6e8] sm:$0xff]
                %474 = vst [vmem:[%s250 + $0x378] sm:$0xff] %v473
                %v475 = vld [vmem:[%s249 + $0x700] sm:$0xff]
                %476 = vst [vmem:[%s250 + $0x380] sm:$0xff] %v475
                %v477 = vld [vmem:[%s249 + $0x708] sm:$0xff]
                %478 = vst [vmem:[%s250 + $0x388] sm:$0xff] %v477
                %v479 = vld [vmem:[%s249 + $0x720] sm:$0xff]
                %480 = vst [vmem:[%s250 + $0x390] sm:$0xff] %v479
                %v481 = vld [vmem:[%s249 + $0x728] sm:$0xff]
                %482 = vst [vmem:[%s250 + $0x398] sm:$0xff] %v481
                %v483 = vld [vmem:[%s249 + $0x740] sm:$0xff]
                %484 = vst [vmem:[%s250 + $0x3a0] sm:$0xff] %v483
                %v485 = vld [vmem:[%s249 + $0x748] sm:$0xff]
                %486 = vst [vmem:[%s250 + $0x3a8] sm:$0xff] %v485
                %v487 = vld [vmem:[%s249 + $0x760] sm:$0xff]
                %488 = vst [vmem:[%s250 + $0x3b0] sm:$0xff] %v487
                %v489 = vld [vmem:[%s249 + $0x768] sm:$0xff]
                %490 = vst [vmem:[%s250 + $0x3b8] sm:$0xff] %v489
                %v491 = vld [vmem:[%s249 + $0x780] sm:$0xff]
                %492 = vst [vmem:[%s250 + $0x3c0] sm:$0xff] %v491
                %v493 = vld [vmem:[%s249 + $0x788] sm:$0xff]
                %494 = vst [vmem:[%s250 + $0x3c8] sm:$0xff] %v493
                %v495 = vld [vmem:[%s249 + $0x7a0] sm:$0xff]
                %496 = vst [vmem:[%s250 + $0x3d0] sm:$0xff] %v495
                %v497 = vld [vmem:[%s249 + $0x7a8] sm:$0xff]
                %498 = vst [vmem:[%s250 + $0x3d8] sm:$0xff] %v497
                %v499 = vld [vmem:[%s249 + $0x7c0] sm:$0xff]
                %500 = vst [vmem:[%s250 + $0x3e0] sm:$0xff] %v499
                %v501 = vld [vmem:[%s249 + $0x7c8] sm:$0xff]
                %502 = vst [vmem:[%s250 + $0x3e8] sm:$0xff] %v501
                %v503 = vld [vmem:[%s249 + $0x7e0] sm:$0xff]
                %504 = vst [vmem:[%s250 + $0x3f0] sm:$0xff] %v503
                %v505 = vld [vmem:[%s249 + $0x7e8] sm:$0xff]
                %506 = vst [vmem:[%s250 + $0x3f8] sm:$0xff] %v505
              $region37: #{_lambda_.26} parent=31 // loop_footer
                %s248 = sadd.s32 1, %s244
              $region38: #{_lambda_.26} parent=31 // loop_footer_branch
                %243 = sbr.rel target = $region34
              $region39: #{_lambda_.26} parent=31 // loop_exit
                _
            $region32: #{_lambda_.26} parent=27 // pred_fallthru
              _
            // Predicated region
            $region40: #{_lambda_.26} parent=27 // pred_check
              _
            $region41: #{_lambda_.26} parent=27 // pred_check_branch
              %508 = sbr.rel target = $region43
            $region42: #{_lambda_.26} parent=27 // pred_region
              _
            $region43: #{_lambda_.26} parent=27 // pred_fallthru
              _
          $region28: #{_lambda_.26} parent=23 // pred_fallthru
            _
          %509 = vnop
        $region24: #{_lambda_.26} parent=15 // pred_fallthru
          _
        // Predicated region
        $region44: #{_lambda_.26} parent=15 // pred_check
          %p510 = pneg %p106
        $region45: #{_lambda_.26} parent=15 // pred_check_branch
          %512 = sbr.rel (%p510) target = $region47
        $region46: #{_lambda_.26} parent=15 // pred_region
          %s513 = smul.u32 2, %s19
          %p514 = scmp.lt.s32.totalorder %s513, 3
          %s515 = scalar_select %p514, %s513, 3
          %s516 = scalar_lea.vmem %s2, %s515
          %s517 = smul.u32 2, %s19
        $region47: #{_lambda_.26} parent=15 // pred_fallthru
          _
        // Predicated region
        $region48: #{_lambda_.26} parent=15 // pred_check
          %p518 = pneg %p132
        $region49: #{_lambda_.26} parent=15 // pred_check_branch
          %520 = sbr.rel (%p518) target = $region51
        $region50: #{_lambda_.26} parent=15 // pred_region
          %s521 = smul.u32 2, %s19
          %p522 = scmp.lt.s32.totalorder %s521, 3
          %s523 = scalar_select %p522, %s521, 3
          %s524 = scalar_lea.vmem %s3, %s523
          %s525 = smul.u32 2, %s19
        $region51: #{_lambda_.26} parent=15 // pred_fallthru
          _
        // Predicated region
        $region52: #{_lambda_.26} parent=15 // pred_check
          %p526 = pneg %p160
        $region53: #{_lambda_.26} parent=15 // pred_check_branch
          %528 = sbr.rel (%p526) target = $region55
        $region54: #{_lambda_.26} parent=15 // pred_region
          %s529 = smul.u32 2, %s19
          %p530 = scmp.lt.s32.totalorder %s18, 0
          %s531 = scalar_select %p530, %s18, 0
          %p532 = scmp.lt.s32.totalorder %s529, 3
          %s533 = scalar_select %p532, %s529, 3
          %s534 = smul.addr %s531, 4
          %s535 = sadd.s32 %s533, %s534
          %s536 = smul.addr %s535, 8
          %s537 = scalar_lea.vmem %s4, %s536
          %s538 = smul.u32 2, %s19
        $region55: #{_lambda_.26} parent=15 // pred_fallthru
          _
      $region16: #{_lambda_.26} parent=5 // pred_fallthru
        _
      %p539 = scmp.le.s32.totalorder 1, %s11
      %p540 = scmp.lt.s32.totalorder %s11, 19
      %p541 = pnand %p539, %p540
      %p542 = pneg %p541
      // Predicated region
      $region56: #{_lambda_.26} parent=5 // pred_check
        _
      $region57: #{_lambda_.26} parent=5 // pred_check_branch
        %544 = sbr.rel (%p541) target = $region59
      $region58: #{_lambda_.26} parent=5 // pred_region
        %s545 = ssub.s32 %s11, 1
        %s546 = sand.u32 %s73, 1
        %s547 = sand.u32 %s73, 1
        %s548 = smul.addr %s547, 1024
        %s549 = scalar_lea.vmem [#allocation3], %s548
        // Predicated region
        $region60: #{_lambda_.26} parent=58 // pred_check
          %p550 = pneg %p86
        $region61: #{_lambda_.26} parent=58 // pred_check_branch
          %552 = sbr.rel (%p550) target = $region63
        $region62: #{_lambda_.26} parent=58 // pred_region
          _
        $region63: #{_lambda_.26} parent=58 // pred_fallthru
          _
        %s553 = smul.u32 4, %s23
        %p554 = scmp.lt.s32.totalorder %s21, 0
        %s555 = scalar_select %p554, %s21, 0
        %p556 = scmp.lt.s32.totalorder %s553, 35
        %s557 = scalar_select %p556, %s553, 35
        %s558 = smul.addr %s555, 36
        %s559 = sadd.s32 %s557, %s558
        %s560 = smul.addr %s559, 8
        %s561 = scalar_lea.vmem %s0, %s560
        %p562 = pneg %p58
        %p563 = pneg %p55
        %s564 = sand.u32 %s73, 1
        %s565 = sand.u32 %s73, 1
        %s566 = smul.addr %s565, 1024
        %s567 = scalar_lea.vmem [#allocation3], %s566
        %p568 = pneg %p86
        %p569 = pneg %p83
        %s570 = smul.u32 2, %s22
        %p571 = scmp.lt.s32.totalorder %s570, 3
        %s572 = scalar_select %p571, %s570, 3
        %s573 = scalar_lea.vmem %s2, %s572
        %p574 = pneg %p112
        %p575 = pneg %p109
        %s576 = smul.u32 2, %s22
        %p577 = scmp.lt.s32.totalorder %s576, 3
        %s578 = scalar_select %p577, %s576, 3
        %s579 = scalar_lea.vmem %s3, %s578
        %p580 = pneg %p138
        %p581 = pneg %p135
        %s582 = smul.u32 2, %s22
        %p583 = scmp.lt.s32.totalorder %s21, 0
        %s584 = scalar_select %p583, %s21, 0
        %p585 = scmp.lt.s32.totalorder %s582, 3
        %s586 = scalar_select %p585, %s582, 3
        %s587 = smul.addr %s584, 4
        %s588 = sadd.s32 %s586, %s587
        %s589 = smul.addr %s588, 8
        %s590 = scalar_lea.vmem %s4, %s589
        %p591 = pneg %p166
        %p592 = pneg %p163
        %p593 = pneg %p194
        %p594 = pneg %p191
        %s595 = smul.u32 2, %s22
        %p596 = scmp.lt.s32.totalorder %s21, 0
        %s597 = scalar_select %p596, %s21, 0
        %p598 = scmp.lt.s32.totalorder %s595, 3
        %s599 = scalar_select %p598, %s595, 3
        %s600 = smul.addr %s597, 4
        %s601 = sadd.s32 %s599, %s600
        %s602 = smul.addr %s601, 8
        %s603 = scalar_lea.vmem %s5, %s602
        %s604 = smul.u32 4, %s23
        %p605 = scmp.lt.s32.totalorder %s21, 0
        %s606 = scalar_select %p605, %s21, 0
        %p607 = scmp.lt.s32.totalorder %s604, 35
        %s608 = scalar_select %p607, %s604, 35
        %s609 = smul.addr %s606, 36
        %s610 = sadd.s32 %s608, %s609
        %s611 = smul.addr %s610, 8
        %s612 = scalar_lea.vmem %s0, %s611
        %s613 = smul.u32 4, %s23
        %s614 = smul.u32 64, %s23
        %s615 = smul.u32 2, %s22
        %s616 = smul.u32 2, %s22
        %p617 = scmp.lt.s32.totalorder %s616, 3
        %s618 = scalar_select %p617, %s616, 3
        %s619 = scalar_lea.vmem %s2, %s618
        %s620 = smul.u32 2, %s22
        %s621 = smul.u32 2, %s22
        %p622 = scmp.lt.s32.totalorder %s621, 3
        %s623 = scalar_select %p622, %s621, 3
        %s624 = scalar_lea.vmem %s3, %s623
        %s625 = smul.u32 2, %s22
        %s626 = smul.u32 2, %s22
        %p627 = scmp.lt.s32.totalorder %s21, 0
        %s628 = scalar_select %p627, %s21, 0
        %p629 = scmp.lt.s32.totalorder %s626, 3
        %s630 = scalar_select %p629, %s626, 3
        %s631 = smul.addr %s628, 4
        %s632 = sadd.s32 %s630, %s631
        %s633 = smul.addr %s632, 8
        %s634 = scalar_lea.vmem %s4, %s633
        %s635 = smul.u32 2, %s22
        %s636 = smul.u32 2, %s22
        %p637 = scmp.lt.s32.totalorder %s21, 0
        %s638 = scalar_select %p637, %s21, 0
        %p639 = scmp.lt.s32.totalorder %s636, 3
        %s640 = scalar_select %p639, %s636, 3
        %s641 = smul.addr %s638, 4
        %s642 = sadd.s32 %s640, %s641
        %s643 = smul.addr %s642, 8
        %s644 = scalar_lea.vmem %s5, %s643
        %s645 = smul.u32 2, %s22
        %p646 = scmp.eq.s32.totalorder %s23, 0
        // Predicated region
        $region64: #{_lambda_.26} parent=58 // pred_check
          %p647 = pneg %p646
        $region65: #{_lambda_.26} parent=58 // pred_check_branch
          %649 = sbr.rel (%p647) target = $region67
        $region66: #{_lambda_.26} parent=58 // pred_region
          %650 = vst [vmem:[#allocation2] sm:$0xff] 0.0
          %651 = vst [vmem:[#allocation2 + $0x8] sm:$0xff] 0.0
        $region67: #{_lambda_.26} parent=58 // pred_fallthru
          _
        %v652 = vld [vmem:[#allocation2] sm:$0xff]
        %v653 = vld [vmem:[#allocation2 + $0x8] sm:$0xff]
        %v654 = vld [vmem:[%s612] sm:$0xff]
        %v655 = vld [vmem:[%s612 + $0x8] sm:$0xff]
        %v656 = vld [vmem:[%s612 + $0x10] sm:$0xff]
        %v657 = vld [vmem:[%s612 + $0x18] sm:$0xff]
        %v658 = vld [vmem:[%s549] sm:$0xff]
        %v659 = vld [vmem:[%s549 + $0x8] sm:$0xff]
        %v660 = vld [vmem:[%s549 + $0x10] sm:$0xff]
        %v661 = vld [vmem:[%s549 + $0x18] sm:$0xff]
        %v662 = vld [vmem:[%s549 + $0x20] sm:$0xff]
        %v663 = vld [vmem:[%s549 + $0x28] sm:$0xff]
        %v664 = vld [vmem:[%s549 + $0x30] sm:$0xff]
        %v665 = vld [vmem:[%s549 + $0x38] sm:$0xff]
        %v666 = vld [vmem:[%s549 + $0x40] sm:$0xff]
        %v667 = vld [vmem:[%s549 + $0x48] sm:$0xff]
        %v668 = vld [vmem:[%s549 + $0x50] sm:$0xff]
        %v669 = vld [vmem:[%s549 + $0x58] sm:$0xff]
        %v670 = vld [vmem:[%s549 + $0x60] sm:$0xff]
        %v671 = vld [vmem:[%s549 + $0x68] sm:$0xff]
        %v672 = vld [vmem:[%s549 + $0x70] sm:$0xff]
        %v673 = vld [vmem:[%s549 + $0x78] sm:$0xff]
        %v674 = vld [vmem:[%s549 + $0x80] sm:$0xff]
        %v675 = vld [vmem:[%s549 + $0x88] sm:$0xff]
        %v676 = vld [vmem:[%s549 + $0x90] sm:$0xff]
        %v677 = vld [vmem:[%s549 + $0x98] sm:$0xff]
        %v678 = vld [vmem:[%s549 + $0xa0] sm:$0xff]
        %v679 = vld [vmem:[%s549 + $0xa8] sm:$0xff]
        %v680 = vld [vmem:[%s549 + $0xb0] sm:$0xff]
        %v681 = vld [vmem:[%s549 + $0xb8] sm:$0xff]
        %v682 = vld [vmem:[%s549 + $0xc0] sm:$0xff]
        %v683 = vld [vmem:[%s549 + $0xc8] sm:$0xff]
        %v684 = vld [vmem:[%s549 + $0xd0] sm:$0xff]
        %v685 = vld [vmem:[%s549 + $0xd8] sm:$0xff]
        %v686 = vld [vmem:[%s549 + $0xe0] sm:$0xff]
        %v687 = vld [vmem:[%s549 + $0xe8] sm:$0xff]
        %v688 = vld [vmem:[%s549 + $0xf0] sm:$0xff]
        %v689 = vld [vmem:[%s549 + $0xf8] sm:$0xff]
        %v690 = vld [vmem:[%s549 + $0x100] sm:$0xff]
        %v691 = vld [vmem:[%s549 + $0x108] sm:$0xff]
        %v692 = vld [vmem:[%s549 + $0x110] sm:$0xff]
        %v693 = vld [vmem:[%s549 + $0x118] sm:$0xff]
        %v694 = vld [vmem:[%s549 + $0x120] sm:$0xff]
        %v695 = vld [vmem:[%s549 + $0x128] sm:$0xff]
        %v696 = vld [vmem:[%s549 + $0x130] sm:$0xff]
        %v697 = vld [vmem:[%s549 + $0x138] sm:$0xff]
        %v698 = vld [vmem:[%s549 + $0x140] sm:$0xff]
        %v699 = vld [vmem:[%s549 + $0x148] sm:$0xff]
        %v700 = vld [vmem:[%s549 + $0x150] sm:$0xff]
        %v701 = vld [vmem:[%s549 + $0x158] sm:$0xff]
        %v702 = vld [vmem:[%s549 + $0x160] sm:$0xff]
        %v703 = vld [vmem:[%s549 + $0x168] sm:$0xff]
        %v704 = vld [vmem:[%s549 + $0x170] sm:$0xff]
        %v705 = vld [vmem:[%s549 + $0x178] sm:$0xff]
        %v706 = vld [vmem:[%s549 + $0x180] sm:$0xff]
        %v707 = vld [vmem:[%s549 + $0x188] sm:$0xff]
        %v708 = vld [vmem:[%s549 + $0x190] sm:$0xff]
        %v709 = vld [vmem:[%s549 + $0x198] sm:$0xff]
        %v710 = vld [vmem:[%s549 + $0x1a0] sm:$0xff]
        %v711 = vld [vmem:[%s549 + $0x1a8] sm:$0xff]
        %v712 = vld [vmem:[%s549 + $0x1b0] sm:$0xff]
        %v713 = vld [vmem:[%s549 + $0x1b8] sm:$0xff]
        %v714 = vld [vmem:[%s549 + $0x1c0] sm:$0xff]
        %v715 = vld [vmem:[%s549 + $0x1c8] sm:$0xff]
        %v716 = vld [vmem:[%s549 + $0x1d0] sm:$0xff]
        %v717 = vld [vmem:[%s549 + $0x1d8] sm:$0xff]
        %v718 = vld [vmem:[%s549 + $0x1e0] sm:$0xff]
        %v719 = vld [vmem:[%s549 + $0x1e8] sm:$0xff]
        %v720 = vld [vmem:[%s549 + $0x1f0] sm:$0xff]
        %v721 = vld [vmem:[%s549 + $0x1f8] sm:$0xff]
        %v722 = vld [vmem:[%s549 + $0x200] sm:$0xff]
        %v723 = vld [vmem:[%s549 + $0x208] sm:$0xff]
        %v724 = vld [vmem:[%s549 + $0x210] sm:$0xff]
        %v725 = vld [vmem:[%s549 + $0x218] sm:$0xff]
        %v726 = vld [vmem:[%s549 + $0x220] sm:$0xff]
        %v727 = vld [vmem:[%s549 + $0x228] sm:$0xff]
        %v728 = vld [vmem:[%s549 + $0x230] sm:$0xff]
        %v729 = vld [vmem:[%s549 + $0x238] sm:$0xff]
        %v730 = vld [vmem:[%s549 + $0x240] sm:$0xff]
        %v731 = vld [vmem:[%s549 + $0x248] sm:$0xff]
        %v732 = vld [vmem:[%s549 + $0x250] sm:$0xff]
        %v733 = vld [vmem:[%s549 + $0x258] sm:$0xff]
        %v734 = vld [vmem:[%s549 + $0x260] sm:$0xff]
        %v735 = vld [vmem:[%s549 + $0x268] sm:$0xff]
        %v736 = vld [vmem:[%s549 + $0x270] sm:$0xff]
        %v737 = vld [vmem:[%s549 + $0x278] sm:$0xff]
        %v738 = vld [vmem:[%s549 + $0x280] sm:$0xff]
        %v739 = vld [vmem:[%s549 + $0x288] sm:$0xff]
        %v740 = vld [vmem:[%s549 + $0x290] sm:$0xff]
        %v741 = vld [vmem:[%s549 + $0x298] sm:$0xff]
        %v742 = vld [vmem:[%s549 + $0x2a0] sm:$0xff]
        %v743 = vld [vmem:[%s549 + $0x2a8] sm:$0xff]
        %v744 = vld [vmem:[%s549 + $0x2b0] sm:$0xff]
        %v745 = vld [vmem:[%s549 + $0x2b8] sm:$0xff]
        %v746 = vld [vmem:[%s549 + $0x2c0] sm:$0xff]
        %v747 = vld [vmem:[%s549 + $0x2c8] sm:$0xff]
        %v748 = vld [vmem:[%s549 + $0x2d0] sm:$0xff]
        %v749 = vld [vmem:[%s549 + $0x2d8] sm:$0xff]
        %v750 = vld [vmem:[%s549 + $0x2e0] sm:$0xff]
        %v751 = vld [vmem:[%s549 + $0x2e8] sm:$0xff]
        %v752 = vld [vmem:[%s549 + $0x2f0] sm:$0xff]
        %v753 = vld [vmem:[%s549 + $0x2f8] sm:$0xff]
        %v754 = vld [vmem:[%s549 + $0x300] sm:$0xff]
        %v755 = vld [vmem:[%s549 + $0x308] sm:$0xff]
        %v756 = vld [vmem:[%s549 + $0x310] sm:$0xff]
        %v757 = vld [vmem:[%s549 + $0x318] sm:$0xff]
        %v758 = vld [vmem:[%s549 + $0x320] sm:$0xff]
        %v759 = vld [vmem:[%s549 + $0x328] sm:$0xff]
        %v760 = vld [vmem:[%s549 + $0x330] sm:$0xff]
        %v761 = vld [vmem:[%s549 + $0x338] sm:$0xff]
        %v762 = vld [vmem:[%s549 + $0x340] sm:$0xff]
        %v763 = vld [vmem:[%s549 + $0x348] sm:$0xff]
        %v764 = vld [vmem:[%s549 + $0x350] sm:$0xff]
        %v765 = vld [vmem:[%s549 + $0x358] sm:$0xff]
        %v766 = vld [vmem:[%s549 + $0x360] sm:$0xff]
        %v767 = vld [vmem:[%s549 + $0x368] sm:$0xff]
        %v768 = vld [vmem:[%s549 + $0x370] sm:$0xff]
        %v769 = vld [vmem:[%s549 + $0x378] sm:$0xff]
        %v770 = vld [vmem:[%s549 + $0x380] sm:$0xff]
        %v771 = vld [vmem:[%s549 + $0x388] sm:$0xff]
        %v772 = vld [vmem:[%s549 + $0x390] sm:$0xff]
        %v773 = vld [vmem:[%s549 + $0x398] sm:$0xff]
        %v774 = vld [vmem:[%s549 + $0x3a0] sm:$0xff]
        %v775 = vld [vmem:[%s549 + $0x3a8] sm:$0xff]
        %v776 = vld [vmem:[%s549 + $0x3b0] sm:$0xff]
        %v777 = vld [vmem:[%s549 + $0x3b8] sm:$0xff]
        %v778 = vld [vmem:[%s549 + $0x3c0] sm:$0xff]
        %v779 = vld [vmem:[%s549 + $0x3c8] sm:$0xff]
        %v780 = vld [vmem:[%s549 + $0x3d0] sm:$0xff]
        %v781 = vld [vmem:[%s549 + $0x3d8] sm:$0xff]
        %v782 = vld [vmem:[%s549 + $0x3e0] sm:$0xff]
        %v783 = vld [vmem:[%s549 + $0x3e8] sm:$0xff]
        %v784 = vld [vmem:[%s549 + $0x3f0] sm:$0xff]
        %v785 = vld [vmem:[%s549 + $0x3f8] sm:$0xff]
        %786 = vmatprep.subr.mxu0 %v689
        %787 = vmatpush1.msra.mxu0 %v688
        %788 = vmatprep.subr.mxu0 %v687
        %789 = vmatpush1.msra.mxu0 %v686
        %790 = vmatprep.subr.mxu0 %v685
        %791 = vmatpush1.msra.mxu0 %v684
        %792 = vmatprep.subr.mxu0 %v683
        %793 = vmatpush1.msra.mxu0 %v682
        %794 = vmatprep.subr.mxu0 %v681
        %795 = vmatpush1.msra.mxu0 %v680
        %796 = vmatprep.subr.mxu0 %v679
        %797 = vmatpush1.msra.mxu0 %v678
        %798 = vmatprep.subr.mxu0 %v677
        %799 = vmatpush1.msra.mxu0 %v676
        %800 = vmatprep.subr.mxu0 %v675
        %801 = vmatpush1.msra.mxu0 %v674
        %802 = vmatprep.subr.mxu0 %v673
        %803 = vmatpush1.msra.mxu0 %v672
        %804 = vmatprep.subr.mxu0 %v671
        %805 = vmatpush1.msra.mxu0 %v670
        %806 = vmatprep.subr.mxu0 %v669
        %807 = vmatpush1.msra.mxu0 %v668
        %808 = vmatprep.subr.mxu0 %v667
        %809 = vmatpush1.msra.mxu0 %v666
        %810 = vmatprep.subr.mxu0 %v665
        %811 = vmatpush1.msra.mxu0 %v664
        %812 = vmatprep.subr.mxu0 %v663
        %813 = vmatpush1.msra.mxu0 %v662
        %814 = vmatprep.subr.mxu0 %v661
        %815 = vmatpush1.msra.mxu0 %v660
        %816 = vmatprep.subr.mxu0 %v659
        %817 = vmatpush1.msra.mxu0 %v658
        %818 = vmatprep.subr.mxu0 %v721
        %819 = vmatpush2.msra.mxu0 %v720
        %820 = vmatprep.subr.mxu0 %v719
        %821 = vmatpush2.msra.mxu0 %v718
        %822 = vmatprep.subr.mxu0 %v717
        %823 = vmatpush2.msra.mxu0 %v716
        %824 = vmatprep.subr.mxu0 %v715
        %825 = vmatpush2.msra.mxu0 %v714
        %826 = vmatprep.subr.mxu0 %v713
        %827 = vmatpush2.msra.mxu0 %v712
        %828 = vmatprep.subr.mxu0 %v711
        %829 = vmatpush2.msra.mxu0 %v710
        %830 = vmatprep.subr.mxu0 %v709
        %831 = vmatpush2.msra.mxu0 %v708
        %832 = vmatprep.subr.mxu0 %v707
        %833 = vmatpush2.msra.mxu0 %v706
        %834 = vmatprep.subr.mxu0 %v705
        %835 = vmatpush2.msra.mxu0 %v704
        %836 = vmatprep.subr.mxu0 %v703
        %837 = vmatpush2.msra.mxu0 %v702
        %838 = vmatprep.subr.mxu0 %v701
        %839 = vmatpush2.msra.mxu0 %v700
        %840 = vmatprep.subr.mxu0 %v699
        %841 = vmatpush2.msra.mxu0 %v698
        %842 = vmatprep.subr.mxu0 %v697
        %843 = vmatpush2.msra.mxu0 %v696
        %844 = vmatprep.subr.mxu0 %v695
        %845 = vmatpush2.msra.mxu0 %v694
        %846 = vmatprep.subr.mxu0 %v693
        %847 = vmatpush2.msra.mxu0 %v692
        %848 = vmatprep.subr.mxu0 %v691
        %849 = vmatpush2.msra.mxu0 %v690
        %850 = vmatprep.mubr.f32.mxu0 %v655
        %851 = vmatmul.mubr.f32.gmra.mxu0 %v654
        %v852 = vpop.f32.mrf.mxu0
        %v853 = vadd.f32 0.0, %v852
        %v854 = vpop.f32.mrf.mxu0
        %v855 = vadd.f32 0.0, %v854
        %856 = vdwg.mxu0
        %857 = vmatprep.subr.mxu0 %v753
        %858 = vmatpush1.msra.mxu0 %v752
        %859 = vmatprep.subr.mxu0 %v751
        %860 = vmatpush1.msra.mxu0 %v750
        %861 = vmatprep.subr.mxu0 %v749
        %862 = vmatpush1.msra.mxu0 %v748
        %863 = vmatprep.subr.mxu0 %v747
        %864 = vmatpush1.msra.mxu0 %v746
        %865 = vmatprep.subr.mxu0 %v745
        %866 = vmatpush1.msra.mxu0 %v744
        %867 = vmatprep.subr.mxu0 %v743
        %868 = vmatpush1.msra.mxu0 %v742
        %869 = vmatprep.subr.mxu0 %v741
        %870 = vmatpush1.msra.mxu0 %v740
        %871 = vmatprep.subr.mxu0 %v739
        %872 = vmatpush1.msra.mxu0 %v738
        %873 = vmatprep.subr.mxu0 %v737
        %874 = vmatpush1.msra.mxu0 %v736
        %875 = vmatprep.subr.mxu0 %v735
        %876 = vmatpush1.msra.mxu0 %v734
        %877 = vmatprep.subr.mxu0 %v733
        %878 = vmatpush1.msra.mxu0 %v732
        %879 = vmatprep.subr.mxu0 %v731
        %880 = vmatpush1.msra.mxu0 %v730
        %881 = vmatprep.subr.mxu0 %v729
        %882 = vmatpush1.msra.mxu0 %v728
        %883 = vmatprep.subr.mxu0 %v727
        %884 = vmatpush1.msra.mxu0 %v726
        %885 = vmatprep.subr.mxu0 %v725
        %886 = vmatpush1.msra.mxu0 %v724
        %887 = vmatprep.subr.mxu0 %v723
        %888 = vmatpush1.msra.mxu0 %v722
        %889 = vmatprep.subr.mxu0 %v785
        %890 = vmatpush2.msra.mxu0 %v784
        %891 = vmatprep.subr.mxu0 %v783
        %892 = vmatpush2.msra.mxu0 %v782
        %893 = vmatprep.subr.mxu0 %v781
        %894 = vmatpush2.msra.mxu0 %v780
        %895 = vmatprep.subr.mxu0 %v779
        %896 = vmatpush2.msra.mxu0 %v778
        %897 = vmatprep.subr.mxu0 %v777
        %898 = vmatpush2.msra.mxu0 %v776
        %899 = vmatprep.subr.mxu0 %v775
        %900 = vmatpush2.msra.mxu0 %v774
        %901 = vmatprep.subr.mxu0 %v773
        %902 = vmatpush2.msra.mxu0 %v772
        %903 = vmatprep.subr.mxu0 %v771
        %904 = vmatpush2.msra.mxu0 %v770
        %905 = vmatprep.subr.mxu0 %v769
        %906 = vmatpush2.msra.mxu0 %v768
        %907 = vmatprep.subr.mxu0 %v767
        %908 = vmatpush2.msra.mxu0 %v766
        %909 = vmatprep.subr.mxu0 %v765
        %910 = vmatpush2.msra.mxu0 %v764
        %911 = vmatprep.subr.mxu0 %v763
        %912 = vmatpush2.msra.mxu0 %v762
        %913 = vmatprep.subr.mxu0 %v761
        %914 = vmatpush2.msra.mxu0 %v760
        %915 = vmatprep.subr.mxu0 %v759
        %916 = vmatpush2.msra.mxu0 %v758
        %917 = vmatprep.subr.mxu0 %v757
        %918 = vmatpush2.msra.mxu0 %v756
        %919 = vmatprep.subr.mxu0 %v755
        %920 = vmatpush2.msra.mxu0 %v754
        %921 = vmatprep.mubr.f32.mxu0 %v657
        %922 = vmatmul.mubr.f32.gmra.mxu0 %v656
        %v923 = vpop.f32.mrf.mxu0
        %v924 = vadd.f32 %v853, %v923
        %v925 = vpop.f32.mrf.mxu0
        %v926 = vadd.f32 %v855, %v925
        %927 = vdwg.mxu0
        %v928 = vadd.f32 %v652, %v924
        %v929 = vadd.f32 %v653, %v926
        %930 = vst [vmem:[#allocation2] sm:$0xff] %v928
        %931 = vst [vmem:[#allocation2 + $0x8] sm:$0xff] %v929
        %p932 = scmp.eq.s32.totalorder %s23, 8
        // Predicated region
        $region68: #{_lambda_.26} parent=58 // pred_check
          %p933 = pneg %p932
        $region69: #{_lambda_.26} parent=58 // pred_check_branch
          %935 = sbr.rel (%p933) target = $region71
        $region70: #{_lambda_.26} parent=58 // pred_region
          %v936 = vld [vmem:[#allocation2] sm:$0xff]
          %v937 = vld [vmem:[#allocation2 + $0x8] sm:$0xff]
          %v938 = vld [vmem:[%s619] sm:$0x3]
          %v940 = vlaneseq
          %v941 = vshrl.u32 %v940, 7
          %v942 = vsub.s32 0, %v941
          %v943 = vrot.slane %v938, %v942
          %v944 = vlaneseq
          %v945 = vshrl.u32 %v944, 7
          %v946 = vsub.s32 1, %v945
          %v947 = vrot.slane %v938, %v946
          %v950 = vmul.f32 %v936, %v943
          %v951 = vmul.f32 %v937, %v947
          %v952 = vld [vmem:[%s624] sm:$0x3]
          %v954 = vlaneseq
          %v955 = vshrl.u32 %v954, 7
          %v956 = vsub.s32 0, %v955
          %v957 = vrot.slane %v952, %v956
          %v958 = vlaneseq
          %v959 = vshrl.u32 %v958, 7
          %v960 = vsub.s32 1, %v959
          %v961 = vrot.slane %v952, %v960
          %v964 = vadd.f32 %v950, %v957
          %v965 = vadd.f32 %v951, %v961
          %v966 = vld [vmem:[%s634] sm:$0xff]
          %v967 = vld [vmem:[%s634 + $0x8] sm:$0xff]
          %v968 = vadd.f32 %v964, %v966
          %v969 = vadd.f32 %v965, %v967
          %v970 = vmax.f32 %v968, 0.0
          %v971 = vmax.f32 %v969, 0.0
          %972 = vst [vmem:[%s644] sm:$0xff] %v970
          %973 = vst [vmem:[%s644 + $0x8] sm:$0xff] %v971
        $region71: #{_lambda_.26} parent=58 // pred_fallthru
          _
        %s974 = smul.u32 2, %s22
        %p975 = scmp.lt.s32.totalorder %s21, 0
        %s976 = scalar_select %p975, %s21, 0
        %p977 = scmp.lt.s32.totalorder %s974, 3
        %s978 = scalar_select %p977, %s974, 3
        %s979 = smul.addr %s976, 4
        %s980 = sadd.s32 %s978, %s979
        %s981 = smul.addr %s980, 8
        %s982 = scalar_lea.vmem %s5, %s981
        // Predicated region
        $region72: #{_lambda_.26} parent=58 // pred_check
          %p983 = pneg %p191
        $region73: #{_lambda_.26} parent=58 // pred_check_branch
          %985 = sbr.rel (%p983) target = $region75
        $region74: #{_lambda_.26} parent=58 // pred_region
          %s986 = smul.u32 2, %s22
        $region75: #{_lambda_.26} parent=58 // pred_fallthru
          _
      $region59: #{_lambda_.26} parent=5 // pred_fallthru
        _
      %p987 = scmp.le.s32.totalorder 2, %s11
      // Predicated region
      $region76: #{_lambda_.26} parent=5 // pred_check
        %p988 = pneg %p987
      $region77: #{_lambda_.26} parent=5 // pred_check_branch
        %990 = sbr.rel (%p988) target = $region79
      $region78: #{_lambda_.26} parent=5 // pred_region
        %s991 = ssub.s32 %s11, 2
        // Predicated region
        $region80: #{_lambda_.26} parent=78 // pred_check
          %p992 = pneg %p197
        $region81: #{_lambda_.26} parent=78 // pred_check_branch
          %994 = sbr.rel (%p992) target = $region83
        $region82: #{_lambda_.26} parent=78 // pred_region
          %s995 = smul.u32 2, %s25
          %p996 = scmp.lt.s32.totalorder %s24, 0
          %s997 = scalar_select %p996, %s24, 0
          %p998 = scmp.lt.s32.totalorder %s995, 3
          %s999 = scalar_select %p998, %s995, 3
          %s1000 = smul.addr %s997, 4
          %s1001 = sadd.s32 %s999, %s1000
          %s1002 = smul.addr %s1001, 8
          %s1003 = scalar_lea.vmem %s5, %s1002
        $region83: #{_lambda_.26} parent=78 // pred_fallthru
          _
      $region79: #{_lambda_.26} parent=5 // pred_fallthru
        _
    $region6: #{_lambda_.26} parent=1 // loop_footer
      %s15 = sadd.s32 1, %s11
    $region7: #{_lambda_.26} parent=1 // loop_footer_branch
      %10 = sbr.rel target = $region3
    $region8: #{_lambda_.26} parent=1 // loop_exit
      _

// kernel: _lambda_.27
$region0: #{_lambda_.27}
  #allocation0 [shape = 'u32[]', space=smem, size = 0x4, offset = 0x4, fixed_abs, tag = 'smem constant byte address 0x4 - core index']
  #allocation1 [shape = 'u32[144,128]{1,0:T(1,128)}', space=vmem, size = 0x12000, scoped, tag = 'internal scratch']
  %s0 = inlined_call_operand.vmem [shape: f32[2,1,512], index: 0, kind: input, shape index: {}]
  %s1 = inlined_call_operand.hbm [shape: f32[2,512], index: 1, kind: output, shape index: {}]
  %s2 = sld [smem:[#allocation0]]
  $region14: #{_lambda_.27} parent=0
    _
  %s4 = ssub.s32 1, %s2
  %s5 = scalar_select 0, %s4, %s2
  $region1: #{_lambda_.27} parent=0
    #allocation2 [shape = 'u8[4096]{0}', space=vmem, size = 0x1000, scoped, tag = 'output window, operand 0, single buffered']
    #allocation3 [shape = 's32[1]{0}', space=sflag, size = 0x4, scoped, tag = 'scoped memory for _lambda_.27']
    %6 = vsyncpa [#allocation3], 0
    // Predicated region
    $region2: #{_lambda_.27} parent=1 // pred_check
      _
    $region3: #{_lambda_.27} parent=1 // pred_check_branch
      %8 = sbr.rel (0) target = $region5
    $region4: #{_lambda_.27} parent=1 // pred_region
      _
    $region5: #{_lambda_.27} parent=1 // pred_fallthru
      _
    %v9 = vld [vmem:[%s0] sm:$0xf]
    %v10 = vld [vmem:[%s0 + $0x4] sm:$0xf]
    %v11 = vadd.f32 %v9, 0.0
    %v12 = vadd.f32 %v10, 0.0
    %v15 = vcombine.low %v11, %v12
    %v17 = vunpack.c.l.s4 1935823168
    %v18 = vunpack.c.0.s8 %v17
    %v19 = vlaneseq
    %v20 = vshrl.u32 %v19, 7
    %v21 = vsub.s32 %v18, %v20
    %v22 = vrot.slane %v15, %v21
    %24 = vst [vmem:[#allocation2] sm:$0xff] %v22
    // Predicated region
    $region6: #{_lambda_.27} parent=1 // pred_check
      _
    $region7: #{_lambda_.27} parent=1 // pred_check_branch
      %26 = sbr.rel (0) target = $region9
    $region8: #{_lambda_.27} parent=1 // pred_region
      %s28 = ssub.s32 128, 128
      %29 = vsyncadd [#allocation3], %s28
      %s31 = sshll.u32 [#allocation2], 4
      %s32 = int_to_ptr.vmem [resolvable:$true] %s31
      %34 = dma.vmem_to_hbm [thread:$0]  %s32, 128, %s1, [#allocation3]
    $region9: #{_lambda_.27} parent=1 // pred_fallthru
      _
    // Predicated region
    $region10: #{_lambda_.27} parent=1 // pred_check
      _
    $region11: #{_lambda_.27} parent=1 // pred_check_branch
      %36 = sbr.rel (0) target = $region13
    $region12: #{_lambda_.27} parent=1 // pred_region
      %37 = dma.done [#allocation3], 128
    $region13: #{_lambda_.27} parent=1 // pred_fallthru
      _
    %38 = vsyncpa [#allocation3], 1

</llo_original>
